<compile_context>
chip_gen: v7x
topology: tpu7x:2x2x1
jax: 0.10.0
libtpu: 0.0.40
codegen_flags: <defaults>
</compile_context>

<pallas_src>
import functools

import jax
import jax.numpy as jnp
from jax.experimental import pallas as pl
from jax.experimental.pallas import tpu as pltpu

_SUBLANES = 16  # bf16 sublane pack; batch is padded to a multiple of this


def _erf(x):
    # Abramowitz & Stegun 7.1.26; fp32-accurate erf using only exp + arithmetic.
    a1, a2, a3, a4, a5 = (0.254829592, -0.284496736, 1.421413741,
                          -1.453152027, 1.061405429)
    p = 0.3275911
    s = jnp.where(x >= 0.0, 1.0, -1.0)
    ax = jnp.abs(x)
    t = 1.0 / (1.0 + p * ax)
    poly = ((((a5 * t + a4) * t + a3) * t + a2) * t + a1) * t
    return s * (1.0 - poly * jnp.exp(-ax * ax))


def _gelu(x):
    # exact GELU (erf form), matching torch.nn.GELU() default
    return 0.5 * x * (1.0 + _erf(x * 0.7071067811865476))


def _actor_critic_lstm_kernel(
    # ---- inputs ----
    x_ref,                                   # (T*Bp, F) f32, time-major
    wih0_ref, whh0_ref, b0_ref,              # (F,4H) bf16, (H,4H) bf16, (1,4H) f32
    wih1_ref, whh1_ref, b1_ref,              # (H,4H) bf16, (H,4H) bf16, (1,4H) f32
    hw1_hbm, hw2_hbm, hw3_hbm, hw4_hbm,      # fused head weights, bf16, in HBM (ANY)
    hb1_ref, hb2_ref, hb3_ref, hb4_ref,      # fused head biases, f32, in VMEM
    # ---- outputs ----
    out_ref,                                 # (Bp, Ap) f32: [logits | value | 0-pad]
    # ---- scratch ----
    hw1_v, hw2_v, hw3_v, hw4_v,              # VMEM landing buffers for head weights
    dma_sem,                                 # DMA semaphores (4,)
    *, n_valid, n_actions,
):
    bf16 = jnp.bfloat16

    # Kick off the head-weight DMAs immediately; they complete under the
    # T-step recurrence and are only waited on right before the epilogue.
    head_copies = [
        pltpu.make_async_copy(src, dst, dma_sem.at[i])
        for i, (src, dst) in enumerate(
            [(hw1_hbm, hw1_v), (hw2_hbm, hw2_v), (hw3_hbm, hw3_v), (hw4_hbm, hw4_v)])
    ]
    for cp in head_copies:
        cp.start()

    TBp, _ = x_ref.shape
    Bp = out_ref.shape[0]
    T = TBp // Bp
    H = whh0_ref.shape[0]

    # --- input sanitation (nan_to_num + clamp) + hoisted layer-0 input proj.
    x = x_ref[...]
    x = jnp.where(jnp.isnan(x), 0.0, x)
    x = jnp.clip(x, -10.0, 10.0).astype(bf16)
    g0_all = (jnp.dot(x, wih0_ref[...], preferred_element_type=jnp.float32)
              + b0_ref[...])                                    # (T*Bp, 4H) f32

    b1b = jnp.broadcast_to(b1_ref[...], (Bp, 4 * H))            # hoisted broadcast

    def cell(gates, c):
        # torch gate order: i, f, g, o
        i = jax.nn.sigmoid(gates[:, 0 * H:1 * H])
        f = jax.nn.sigmoid(gates[:, 1 * H:2 * H])
        g = jnp.tanh(gates[:, 2 * H:3 * H])
        o = jax.nn.sigmoid(gates[:, 3 * H:4 * H])
        c_new = f * c + i * g
        h_new = o * jnp.tanh(c_new)
        return h_new, c_new

    z = jnp.zeros((Bp, H), jnp.float32)
    h0, c0, h1, c1 = z, z, z, z
    g1_hh = b1b                      # h1_{-1} = 0 -> hh contribution is just the bias
    nan_acc = jnp.zeros((Bp, H), jnp.float32)

    # Fully unrolled recurrence (T static). Per step only two small bf16
    # matmuls sit on the serial path: h0 @ W_hh0 and h0 @ W_ih1; the
    # h1 @ W_hh1 part for the *next* step is issued as soon as h1 exists so it
    # can overlap with layer-0 of step t+1.
    # TODO(synk): LSTM inter-layer dropout + head nn.Dropout are identity
    # (eval mode); train-mode stochastic dropout is not reproduced.
    # TODO(synk): stateful hidden carried across forward() calls is not
    # reproduced; every call starts from zeros (== reset_hidden=True).
    for t in range(T):
        h0_bf = h0.astype(bf16)
        g0 = g0_all[t * Bp:(t + 1) * Bp, :] + jnp.dot(
            h0_bf, whh0_ref[...], preferred_element_type=jnp.float32)
        h0, c0 = cell(g0, c0)

        g1 = g1_hh + jnp.dot(h0.astype(bf16), wih1_ref[...],
                             preferred_element_type=jnp.float32)
        h1, c1 = cell(g1, c1)
        nan_acc = jnp.maximum(nan_acc, jnp.isnan(h1).astype(jnp.float32))

        if t + 1 < T:
            g1_hh = b1b + jnp.dot(h1.astype(bf16), whh1_ref[...],
                                  preferred_element_type=jnp.float32)

    # torch: NaN anywhere in lstm_out (top-layer output, any timestep)
    # -> lstm_out zeroed before the heads. Restrict to real batch rows so
    # padding rows can never poison the result.
    row = jax.lax.broadcasted_iota(jnp.int32, (Bp, H), 0)
    has_nan = jnp.max(jnp.where(row < n_valid, nan_acc, 0.0)) > 0.0
    last = jnp.where(has_nan, jnp.zeros_like(h1), h1)           # (Bp, H) f32

    # Head weights must have landed by now; the DMA ran under the recurrence.
    for cp in head_copies:
        cp.wait()

    # --- fused actor+critic heads (block-diagonal packed weights) ---
    z1 = _gelu(jnp.dot(last.astype(bf16), hw1_v[...],
                       preferred_element_type=jnp.float32) + hb1_ref[...])
    z2 = _gelu(jnp.dot(z1.astype(bf16), hw2_v[...],
                       preferred_element_type=jnp.float32) + hb2_ref[...])
    z3 = _gelu(jnp.dot(z2.astype(bf16), hw3_v[...],
                       preferred_element_type=jnp.float32) + hb3_ref[...])
    out = (jnp.dot(z3.astype(bf16), hw4_v[...],
                   preferred_element_type=jnp.float32) + hb4_ref[...])   # (Bp, Ap)

    # Lane-wise clamp: lanes [0, A) are logits (+-50), lane A is the value
    # (+-100); padding lanes are exact zeros and unaffected. One lane-dense
    # unmasked store.
    lane = jax.lax.broadcasted_iota(jnp.int32, out.shape, 1)
    lo = jnp.where(lane < n_actions, -50.0, -100.0)
    hi = jnp.where(lane < n_actions, 50.0, 100.0)
    out_ref[...] = jnp.clip(out, lo, hi)


def _block_diag(a, b):
    za = jnp.zeros((a.shape[0], b.shape[1]), a.dtype)
    zb = jnp.zeros((b.shape[0], a.shape[1]), b.dtype)
    return jnp.concatenate([jnp.concatenate([a, za], axis=1),
                            jnp.concatenate([zb, b], axis=1)], axis=0)


def _pad2(w, rows, cols):
    return jnp.pad(w, ((0, rows - w.shape[0]), (0, cols - w.shape[1])))


def prepare_params(params):
    """One-time weight packing/fusion/bf16-casting. Call ONCE at load time,
    not inside the per-step forward."""
    bf16 = jnp.bfloat16
    A = params["aw4"].shape[1]
    P = 64                                     # 57-wide layer padded to 64
    Ap = max(128, ((A + 1 + 127) // 128) * 128)  # lane-dense packed output width

    # fused actor/critic head weights (block-diagonal, zero padded)
    hw1 = jnp.concatenate([params["aw1"], params["cw1"]], axis=1)        # (H,256)
    hb1 = jnp.concatenate([params["ab1"], params["cb1"]], axis=1)
    hw2 = _block_diag(params["aw2"], params["cw2"])                      # (256,512)
    hb2 = jnp.concatenate([params["ab2"], params["cb2"]], axis=1)
    hw3 = _block_diag(_pad2(params["aw3"], 256, P),
                      _pad2(params["cw3"], 256, P))                      # (512,128)
    hb3 = jnp.concatenate([_pad2(params["ab3"], 1, P),
                           _pad2(params["cb3"], 1, P)], axis=1)
    hw4 = _pad2(_block_diag(_pad2(params["aw4"], P, A),
                            _pad2(params["cw4"], P, 1)), 128, Ap)        # (128,Ap)
    hb4 = _pad2(jnp.concatenate([params["ab4"], params["cb4"]], axis=1), 1, Ap)

    f32 = jnp.float32
    return dict(
        wih0=params["wih0"].astype(bf16), whh0=params["whh0"].astype(bf16),
        b0=params["b0"].astype(f32),
        wih1=params["wih1"].astype(bf16), whh1=params["whh1"].astype(bf16),
        b1=params["b1"].astype(f32),
        hw1=hw1.astype(bf16), hb1=hb1.astype(f32),
        hw2=hw2.astype(bf16), hb2=hb2.astype(f32),
        hw3=hw3.astype(bf16), hb3=hb3.astype(f32),
        hw4=hw4.astype(bf16), hb4=hb4.astype(f32),
    )


def actor_critic_lstm_forward(x, packed, action_dim):
    """x: (batch, window, features) float32; packed: prepare_params(...) output.
    Returns (action_logits (B, A), values (B, 1))."""
    B, T, F = x.shape
    A = action_dim
    Ap = packed["hw4"].shape[1]
    Bp = ((B + _SUBLANES - 1) // _SUBLANES) * _SUBLANES

    # Pad batch with zero rows (zero-input LSTM rows stay finite, sliced off
    # at the end), go time-major, flatten to (T*Bp, F).
    x_p = jnp.pad(x.astype(jnp.float32), ((0, Bp - B), (0, 0), (0, 0)))
    x_2d = jnp.transpose(x_p, (1, 0, 2)).reshape(T * Bp, F)

    vmem = pl.BlockSpec(memory_space=pltpu.MemorySpace.VMEM)
    hbm = pl.BlockSpec(memory_space=pl.ANY)      # head weights: DMA'd manually

    kernel = functools.partial(_actor_critic_lstm_kernel,
                               n_valid=B, n_actions=A)

    # NOTE: for throughput, batch many envs/sequences into one call (Bp toward
    # 128/256) and, on v7x, add a leading parallel grid axis over batch groups.
    out = pl.pallas_call(
        kernel,
        out_shape=jax.ShapeDtypeStruct((Bp, Ap), jnp.float32),
        in_specs=[vmem,                          # x
                  vmem, vmem, vmem,              # wih0, whh0, b0
                  vmem, vmem, vmem,              # wih1, whh1, b1
                  hbm, hbm, hbm, hbm,            # hw1..hw4 (HBM, async-copied)
                  vmem, vmem, vmem, vmem],       # hb1..hb4
        out_specs=vmem,
        scratch_shapes=[
            pltpu.VMEM(packed["hw1"].shape, jnp.bfloat16),
            pltpu.VMEM(packed["hw2"].shape, jnp.bfloat16),
            pltpu.VMEM(packed["hw3"].shape, jnp.bfloat16),
            pltpu.VMEM(packed["hw4"].shape, jnp.bfloat16),
            pltpu.SemaphoreType.DMA((4,)),
        ],
    )(x_2d,
      packed["wih0"], packed["whh0"], packed["b0"],
      packed["wih1"], packed["whh1"], packed["b1"],
      packed["hw1"], packed["hw2"], packed["hw3"], packed["hw4"],
      packed["hb1"], packed["hb2"], packed["hb3"], packed["hb4"])

    logits = out[:B, :A]
    values = out[:B, A:A + 1]
    return logits, values


def init_params(key, n_features, hidden_dim, action_dim):
    """Deterministic init mirroring the module: orthogonal weights, zero biases."""
    H = hidden_dim
    f32 = jnp.float32
    orth = jax.nn.initializers.orthogonal(scale=1.0)
    keys = jax.random.split(key, 12)

    def lin(k, in_dim, out_dim):
        # torch nn.Linear weight is (out, in); stored transposed as (in, out)
        w = orth(k, (out_dim, in_dim), f32).T
        b = jnp.zeros((1, out_dim), f32)
        return w, b

    # LSTM: torch weight_ih_l{k}: (4H, in), weight_hh_l{k}: (4H, H), biases zero.
    # b0/b1 hold b_ih + b_hh pre-summed (both zero here; sum before loading
    # trained PyTorch checkpoints).
    wih0 = orth(keys[0], (4 * H, n_features), f32).T     # (F, 4H)
    whh0 = orth(keys[1], (4 * H, H), f32).T              # (H, 4H)
    b0 = jnp.zeros((1, 4 * H), f32)
    wih1 = orth(keys[2], (4 * H, H), f32).T
    whh1 = orth(keys[3], (4 * H, H), f32).T
    b1 = jnp.zeros((1, 4 * H), f32)

    aw1, ab1 = lin(keys[4], H, 128)
    aw2, ab2 = lin(keys[5], 128, 256)
    aw3, ab3 = lin(keys[6], 256, 57)
    aw4, ab4 = lin(keys[7], 57, action_dim)

    cw1, cb1 = lin(keys[8], H, 128)
    cw2, cb2 = lin(keys[9], 128, 256)
    cw3, cb3 = lin(keys[10], 256, 57)
    cw4, cb4 = lin(keys[11], 57, 1)

    return dict(
        wih0=wih0, whh0=whh0, b0=b0, wih1=wih1, whh1=whh1, b1=b1,
        aw1=aw1, ab1=ab1, aw2=aw2, ab2=ab2, aw3=aw3, ab3=ab3, aw4=aw4, ab4=ab4,
        cw1=cw1, cb1=cb1, cw2=cw2, cb2=cb2, cw3=cw3, cb3=cb3, cw4=cw4, cb4=cb4,
    )


if __name__ == "__main__":
    B, T, F = 2, 8, 16          # batch, window_size, n_features
    H = 128                     # hidden_dim (module default)
    A = 4                       # action_dim

    key = jax.random.PRNGKey(0)
    kx, kp = jax.random.split(key)
    x = jax.random.normal(kx, (B, T, F), jnp.float32)
    params = init_params(kp, F, H, A)

    # One-time weight packing / bf16 cast (outside the per-call jitted forward).
    packed = prepare_params(params)
    packed = jax.block_until_ready(packed)

    fwd = jax.jit(actor_critic_lstm_forward, static_argnames=("action_dim",))
    logits, values = fwd(x, packed, action_dim=A)
    jax.block_until_ready((logits, values))

    assert logits.shape == (B, A) and values.shape == (B, 1)
    assert bool(jnp.all(jnp.isfinite(logits))) and bool(jnp.all(jnp.isfinite(values)))
    print("KERNEL_OK")
</pallas_src>

<mosaic_0001>
module attributes {stable_mosaic.version = 11 : i64} {
  func.func @_actor_critic_lstm_kernel(%arg0: memref<128x16xf32, #tpu.memory_space<vmem>>, %arg1: memref<16x512xbf16, #tpu.memory_space<vmem>>, %arg2: memref<128x512xbf16, #tpu.memory_space<vmem>>, %arg3: memref<1x512xf32, #tpu.memory_space<vmem>>, %arg4: memref<128x512xbf16, #tpu.memory_space<vmem>>, %arg5: memref<128x512xbf16, #tpu.memory_space<vmem>>, %arg6: memref<1x512xf32, #tpu.memory_space<vmem>>, %arg7: memref<128x256xbf16, #tpu.memory_space<any>>, %arg8: memref<256x512xbf16, #tpu.memory_space<any>>, %arg9: memref<512x128xbf16, #tpu.memory_space<any>>, %arg10: memref<128x128xbf16, #tpu.memory_space<any>>, %arg11: memref<1x256xf32, #tpu.memory_space<vmem>>, %arg12: memref<1x512xf32, #tpu.memory_space<vmem>>, %arg13: memref<1x128xf32, #tpu.memory_space<vmem>>, %arg14: memref<1x128xf32, #tpu.memory_space<vmem>>, %arg15: memref<16x128xf32, #tpu.memory_space<vmem>>, %arg16: memref<128x256xbf16, #tpu.memory_space<vmem>>, %arg17: memref<256x512xbf16, #tpu.memory_space<vmem>>, %arg18: memref<512x128xbf16, #tpu.memory_space<vmem>>, %arg19: memref<128x128xbf16, #tpu.memory_space<vmem>>, %arg20: memref<4x!tpu.dma_semaphore, #tpu.memory_space<semaphore_mem>>) attributes {dimension_semantics = [], scalar_prefetch = 0 : i64, scratch_operands = 5 : i64, tpu.core_type = #tpu.core_type<tc>} {
    %c0_i32 = arith.constant 0 : i32
    %0 = tpu.memref_slice %arg20[%c0_i32] : memref<4x!tpu.dma_semaphore, #tpu.memory_space<semaphore_mem>> -> memref<1x!tpu.dma_semaphore, #tpu.memory_space<semaphore_mem>>
    %1 = tpu.memref_squeeze %0 : memref<1x!tpu.dma_semaphore, #tpu.memory_space<semaphore_mem>> -> memref<!tpu.dma_semaphore, #tpu.memory_space<semaphore_mem>>
    tpu.enqueue_dma source(%arg7 : memref<128x256xbf16, #tpu.memory_space<any>>) target(%arg16 : memref<128x256xbf16, #tpu.memory_space<vmem>>) target_semaphore(%1 : memref<!tpu.dma_semaphore, #tpu.memory_space<semaphore_mem>>)
    %c1_i32 = arith.constant 1 : i32
    %2 = tpu.memref_slice %arg20[%c1_i32] : memref<4x!tpu.dma_semaphore, #tpu.memory_space<semaphore_mem>> -> memref<1x!tpu.dma_semaphore, #tpu.memory_space<semaphore_mem>>
    %3 = tpu.memref_squeeze %2 : memref<1x!tpu.dma_semaphore, #tpu.memory_space<semaphore_mem>> -> memref<!tpu.dma_semaphore, #tpu.memory_space<semaphore_mem>>
    tpu.enqueue_dma source(%arg8 : memref<256x512xbf16, #tpu.memory_space<any>>) target(%arg17 : memref<256x512xbf16, #tpu.memory_space<vmem>>) target_semaphore(%3 : memref<!tpu.dma_semaphore, #tpu.memory_space<semaphore_mem>>)
    %c2_i32 = arith.constant 2 : i32
    %4 = tpu.memref_slice %arg20[%c2_i32] : memref<4x!tpu.dma_semaphore, #tpu.memory_space<semaphore_mem>> -> memref<1x!tpu.dma_semaphore, #tpu.memory_space<semaphore_mem>>
    %5 = tpu.memref_squeeze %4 : memref<1x!tpu.dma_semaphore, #tpu.memory_space<semaphore_mem>> -> memref<!tpu.dma_semaphore, #tpu.memory_space<semaphore_mem>>
    tpu.enqueue_dma source(%arg9 : memref<512x128xbf16, #tpu.memory_space<any>>) target(%arg18 : memref<512x128xbf16, #tpu.memory_space<vmem>>) target_semaphore(%5 : memref<!tpu.dma_semaphore, #tpu.memory_space<semaphore_mem>>)
    %c3_i32 = arith.constant 3 : i32
    %6 = tpu.memref_slice %arg20[%c3_i32] : memref<4x!tpu.dma_semaphore, #tpu.memory_space<semaphore_mem>> -> memref<1x!tpu.dma_semaphore, #tpu.memory_space<semaphore_mem>>
    %7 = tpu.memref_squeeze %6 : memref<1x!tpu.dma_semaphore, #tpu.memory_space<semaphore_mem>> -> memref<!tpu.dma_semaphore, #tpu.memory_space<semaphore_mem>>
    tpu.enqueue_dma source(%arg10 : memref<128x128xbf16, #tpu.memory_space<any>>) target(%arg19 : memref<128x128xbf16, #tpu.memory_space<vmem>>) target_semaphore(%7 : memref<!tpu.dma_semaphore, #tpu.memory_space<semaphore_mem>>)
    %c0 = arith.constant 0 : index
    %c0_0 = arith.constant 0 : index
    %8 = vector.load %arg0[%c0, %c0_0] : memref<128x16xf32, #tpu.memory_space<vmem>>, vector<128x16xf32>
    %9 = arith.cmpf one, %8, %8 : vector<128x16xf32>
    %cst = arith.constant 0.000000e+00 : f32
    %10 = vector.broadcast %cst : f32 to vector<128x16xf32>
    %11 = arith.select %9, %10, %8 : vector<128x16xi1>, vector<128x16xf32>
    %cst_1 = arith.constant -1.000000e+01 : f32
    %cst_2 = arith.constant 1.000000e+01 : f32
    %12 = vector.broadcast %cst_1 : f32 to vector<128x16xf32>
    %13 = arith.maximumf %12, %11 : vector<128x16xf32>
    %14 = vector.broadcast %cst_2 : f32 to vector<128x16xf32>
    %15 = arith.minimumf %14, %13 : vector<128x16xf32>
    %16 = arith.truncf %15 : vector<128x16xf32> to vector<128x16xbf16>
    %c0_3 = arith.constant 0 : index
    %c0_4 = arith.constant 0 : index
    %17 = vector.load %arg1[%c0_3, %c0_4] : memref<16x512xbf16, #tpu.memory_space<vmem>>, vector<16x512xbf16>
    %cst_5 = arith.constant dense<0.000000e+00> : vector<128x512xf32>
    %18 = tpu.matmul %16, %17, %cst_5 {dimension_numbers = #tpu.dot_dimension_numbers<[1], [0], [0], [1], [0, 0, 1, 1], [], []>} : vector<128x16xbf16>, vector<16x512xbf16>, vector<128x512xf32> -> vector<128x512xf32>
    %c0_6 = arith.constant 0 : index
    %c0_7 = arith.constant 0 : index
    %19 = vector.load %arg3[%c0_6, %c0_7] : memref<1x512xf32, #tpu.memory_space<vmem>>, vector<1x512xf32>
    %20 = vector.broadcast %19 : vector<1x512xf32> to vector<128x512xf32>
    %21 = arith.addf %18, %20 : vector<128x512xf32>
    %c0_8 = arith.constant 0 : index
    %c0_9 = arith.constant 0 : index
    %22 = vector.load %arg6[%c0_8, %c0_9] : memref<1x512xf32, #tpu.memory_space<vmem>>, vector<1x512xf32>
    %23 = vector.shape_cast %22 : vector<1x512xf32> to vector<1x512xf32>
    %24 = vector.broadcast %23 : vector<1x512xf32> to vector<16x512xf32>
    %cst_10 = arith.constant 0.000000e+00 : f32
    %25 = vector.broadcast %cst_10 : f32 to vector<16x128xf32>
    %cst_11 = arith.constant 0.000000e+00 : f32
    %26 = vector.broadcast %cst_11 : f32 to vector<16x128xf32>
    %27 = arith.truncf %25 : vector<16x128xf32> to vector<16x128xbf16>
    %28 = vector.extract_strided_slice %21 {offsets = [0, 0], sizes = [16, 512], strides = [1, 1]} : vector<128x512xf32> to vector<16x512xf32>
    %c0_12 = arith.constant 0 : index
    %c0_13 = arith.constant 0 : index
    %29 = vector.load %arg2[%c0_12, %c0_13] : memref<128x512xbf16, #tpu.memory_space<vmem>>, vector<128x512xbf16>
    %cst_14 = arith.constant dense<0.000000e+00> : vector<16x512xf32>
    %30 = tpu.matmul %27, %29, %cst_14 {dimension_numbers = #tpu.dot_dimension_numbers<[1], [0], [0], [1], [0, 0, 1, 1], [], []>} : vector<16x128xbf16>, vector<128x512xbf16>, vector<16x512xf32> -> vector<16x512xf32>
    %31 = arith.addf %28, %30 : vector<16x512xf32>
    %32 = vector.extract_strided_slice %31 {offsets = [0, 0], sizes = [16, 128], strides = [1, 1]} : vector<16x512xf32> to vector<16x128xf32>
    %33 = arith.negf %32 : vector<16x128xf32>
    %34 = math.exp %33 : vector<16x128xf32>
    %cst_15 = arith.constant 1.000000e+00 : f32
    %35 = vector.broadcast %cst_15 : f32 to vector<16x128xf32>
    %36 = arith.addf %35, %34 : vector<16x128xf32>
    %37 = arith.divf %35, %36 : vector<16x128xf32>
    %38 = vector.extract_strided_slice %31 {offsets = [0, 128], sizes = [16, 128], strides = [1, 1]} : vector<16x512xf32> to vector<16x128xf32>
    %39 = arith.negf %38 : vector<16x128xf32>
    %40 = math.exp %39 : vector<16x128xf32>
    %cst_16 = arith.constant 1.000000e+00 : f32
    %41 = vector.broadcast %cst_16 : f32 to vector<16x128xf32>
    %42 = arith.addf %41, %40 : vector<16x128xf32>
    %43 = arith.divf %41, %42 : vector<16x128xf32>
    %44 = vector.extract_strided_slice %31 {offsets = [0, 256], sizes = [16, 128], strides = [1, 1]} : vector<16x512xf32> to vector<16x128xf32>
    %45 = math.tanh %44 : vector<16x128xf32>
    %46 = vector.extract_strided_slice %31 {offsets = [0, 384], sizes = [16, 128], strides = [1, 1]} : vector<16x512xf32> to vector<16x128xf32>
    %47 = arith.negf %46 : vector<16x128xf32>
    %48 = math.exp %47 : vector<16x128xf32>
    %cst_17 = arith.constant 1.000000e+00 : f32
    %49 = vector.broadcast %cst_17 : f32 to vector<16x128xf32>
    %50 = arith.addf %49, %48 : vector<16x128xf32>
    %51 = arith.divf %49, %50 : vector<16x128xf32>
    %52 = arith.mulf %43, %25 : vector<16x128xf32>
    %53 = arith.mulf %37, %45 : vector<16x128xf32>
    %54 = arith.addf %52, %53 : vector<16x128xf32>
    %55 = math.tanh %54 : vector<16x128xf32>
    %56 = arith.mulf %51, %55 : vector<16x128xf32>
    %57 = arith.truncf %56 : vector<16x128xf32> to vector<16x128xbf16>
    %c0_18 = arith.constant 0 : index
    %c0_19 = arith.constant 0 : index
    %58 = vector.load %arg4[%c0_18, %c0_19] : memref<128x512xbf16, #tpu.memory_space<vmem>>, vector<128x512xbf16>
    %cst_20 = arith.constant dense<0.000000e+00> : vector<16x512xf32>
    %59 = tpu.matmul %57, %58, %cst_20 {dimension_numbers = #tpu.dot_dimension_numbers<[1], [0], [0], [1], [0, 0, 1, 1], [], []>} : vector<16x128xbf16>, vector<128x512xbf16>, vector<16x512xf32> -> vector<16x512xf32>
    %60 = arith.addf %24, %59 : vector<16x512xf32>
    %61 = vector.extract_strided_slice %60 {offsets = [0, 0], sizes = [16, 128], strides = [1, 1]} : vector<16x512xf32> to vector<16x128xf32>
    %62 = arith.negf %61 : vector<16x128xf32>
    %63 = math.exp %62 : vector<16x128xf32>
    %cst_21 = arith.constant 1.000000e+00 : f32
    %64 = vector.broadcast %cst_21 : f32 to vector<16x128xf32>
    %65 = arith.addf %64, %63 : vector<16x128xf32>
    %66 = arith.divf %64, %65 : vector<16x128xf32>
    %67 = vector.extract_strided_slice %60 {offsets = [0, 128], sizes = [16, 128], strides = [1, 1]} : vector<16x512xf32> to vector<16x128xf32>
    %68 = arith.negf %67 : vector<16x128xf32>
    %69 = math.exp %68 : vector<16x128xf32>
    %cst_22 = arith.constant 1.000000e+00 : f32
    %70 = vector.broadcast %cst_22 : f32 to vector<16x128xf32>
    %71 = arith.addf %70, %69 : vector<16x128xf32>
    %72 = arith.divf %70, %71 : vector<16x128xf32>
    %73 = vector.extract_strided_slice %60 {offsets = [0, 256], sizes = [16, 128], strides = [1, 1]} : vector<16x512xf32> to vector<16x128xf32>
    %74 = math.tanh %73 : vector<16x128xf32>
    %75 = vector.extract_strided_slice %60 {offsets = [0, 384], sizes = [16, 128], strides = [1, 1]} : vector<16x512xf32> to vector<16x128xf32>
    %76 = arith.negf %75 : vector<16x128xf32>
    %77 = math.exp %76 : vector<16x128xf32>
    %cst_23 = arith.constant 1.000000e+00 : f32
    %78 = vector.broadcast %cst_23 : f32 to vector<16x128xf32>
    %79 = arith.addf %78, %77 : vector<16x128xf32>
    %80 = arith.divf %78, %79 : vector<16x128xf32>
    %81 = arith.mulf %72, %25 : vector<16x128xf32>
    %82 = arith.mulf %66, %74 : vector<16x128xf32>
    %83 = arith.addf %81, %82 : vector<16x128xf32>
    %84 = math.tanh %83 : vector<16x128xf32>
    %85 = arith.mulf %80, %84 : vector<16x128xf32>
    %86 = arith.cmpf one, %85, %85 : vector<16x128xf32>
    %87 = arith.extui %86 : vector<16x128xi1> to vector<16x128xi32>
    %88 = arith.sitofp %87 : vector<16x128xi32> to vector<16x128xf32>
    %89 = arith.maximumf %26, %88 : vector<16x128xf32>
    %90 = arith.truncf %85 : vector<16x128xf32> to vector<16x128xbf16>
    %c0_24 = arith.constant 0 : index
    %c0_25 = arith.constant 0 : index
    %91 = vector.load %arg5[%c0_24, %c0_25] : memref<128x512xbf16, #tpu.memory_space<vmem>>, vector<128x512xbf16>
    %cst_26 = arith.constant dense<0.000000e+00> : vector<16x512xf32>
    %92 = tpu.matmul %90, %91, %cst_26 {dimension_numbers = #tpu.dot_dimension_numbers<[1], [0], [0], [1], [0, 0, 1, 1], [], []>} : vector<16x128xbf16>, vector<128x512xbf16>, vector<16x512xf32> -> vector<16x512xf32>
    %93 = arith.addf %24, %92 : vector<16x512xf32>
    %94 = arith.truncf %56 : vector<16x128xf32> to vector<16x128xbf16>
    %95 = vector.extract_strided_slice %21 {offsets = [16, 0], sizes = [16, 512], strides = [1, 1]} : vector<128x512xf32> to vector<16x512xf32>
    %c0_27 = arith.constant 0 : index
    %c0_28 = arith.constant 0 : index
    %96 = vector.load %arg2[%c0_27, %c0_28] : memref<128x512xbf16, #tpu.memory_space<vmem>>, vector<128x512xbf16>
    %cst_29 = arith.constant dense<0.000000e+00> : vector<16x512xf32>
    %97 = tpu.matmul %94, %96, %cst_29 {dimension_numbers = #tpu.dot_dimension_numbers<[1], [0], [0], [1], [0, 0, 1, 1], [], []>} : vector<16x128xbf16>, vector<128x512xbf16>, vector<16x512xf32> -> vector<16x512xf32>
    %98 = arith.addf %95, %97 : vector<16x512xf32>
    %99 = vector.extract_strided_slice %98 {offsets = [0, 0], sizes = [16, 128], strides = [1, 1]} : vector<16x512xf32> to vector<16x128xf32>
    %100 = arith.negf %99 : vector<16x128xf32>
    %101 = math.exp %100 : vector<16x128xf32>
    %cst_30 = arith.constant 1.000000e+00 : f32
    %102 = vector.broadcast %cst_30 : f32 to vector<16x128xf32>
    %103 = arith.addf %102, %101 : vector<16x128xf32>
    %104 = arith.divf %102, %103 : vector<16x128xf32>
    %105 = vector.extract_strided_slice %98 {offsets = [0, 128], sizes = [16, 128], strides = [1, 1]} : vector<16x512xf32> to vector<16x128xf32>
    %106 = arith.negf %105 : vector<16x128xf32>
    %107 = math.exp %106 : vector<16x128xf32>
    %cst_31 = arith.constant 1.000000e+00 : f32
    %108 = vector.broadcast %cst_31 : f32 to vector<16x128xf32>
    %109 = arith.addf %108, %107 : vector<16x128xf32>
    %110 = arith.divf %108, %109 : vector<16x128xf32>
    %111 = vector.extract_strided_slice %98 {offsets = [0, 256], sizes = [16, 128], strides = [1, 1]} : vector<16x512xf32> to vector<16x128xf32>
    %112 = math.tanh %111 : vector<16x128xf32>
    %113 = vector.extract_strided_slice %98 {offsets = [0, 384], sizes = [16, 128], strides = [1, 1]} : vector<16x512xf32> to vector<16x128xf32>
    %114 = arith.negf %113 : vector<16x128xf32>
    %115 = math.exp %114 : vector<16x128xf32>
    %cst_32 = arith.constant 1.000000e+00 : f32
    %116 = vector.broadcast %cst_32 : f32 to vector<16x128xf32>
    %117 = arith.addf %116, %115 : vector<16x128xf32>
    %118 = arith.divf %116, %117 : vector<16x128xf32>
    %119 = arith.mulf %110, %54 : vector<16x128xf32>
    %120 = arith.mulf %104, %112 : vector<16x128xf32>
    %121 = arith.addf %119, %120 : vector<16x128xf32>
    %122 = math.tanh %121 : vector<16x128xf32>
    %123 = arith.mulf %118, %122 : vector<16x128xf32>
    %124 = arith.truncf %123 : vector<16x128xf32> to vector<16x128xbf16>
    %c0_33 = arith.constant 0 : index
    %c0_34 = arith.constant 0 : index
    %125 = vector.load %arg4[%c0_33, %c0_34] : memref<128x512xbf16, #tpu.memory_space<vmem>>, vector<128x512xbf16>
    %cst_35 = arith.constant dense<0.000000e+00> : vector<16x512xf32>
    %126 = tpu.matmul %124, %125, %cst_35 {dimension_numbers = #tpu.dot_dimension_numbers<[1], [0], [0], [1], [0, 0, 1, 1], [], []>} : vector<16x128xbf16>, vector<128x512xbf16>, vector<16x512xf32> -> vector<16x512xf32>
    %127 = arith.addf %93, %126 : vector<16x512xf32>
    %128 = vector.extract_strided_slice %127 {offsets = [0, 0], sizes = [16, 128], strides = [1, 1]} : vector<16x512xf32> to vector<16x128xf32>
    %129 = arith.negf %128 : vector<16x128xf32>
    %130 = math.exp %129 : vector<16x128xf32>
    %cst_36 = arith.constant 1.000000e+00 : f32
    %131 = vector.broadcast %cst_36 : f32 to vector<16x128xf32>
    %132 = arith.addf %131, %130 : vector<16x128xf32>
    %133 = arith.divf %131, %132 : vector<16x128xf32>
    %134 = vector.extract_strided_slice %127 {offsets = [0, 128], sizes = [16, 128], strides = [1, 1]} : vector<16x512xf32> to vector<16x128xf32>
    %135 = arith.negf %134 : vector<16x128xf32>
    %136 = math.exp %135 : vector<16x128xf32>
    %cst_37 = arith.constant 1.000000e+00 : f32
    %137 = vector.broadcast %cst_37 : f32 to vector<16x128xf32>
    %138 = arith.addf %137, %136 : vector<16x128xf32>
    %139 = arith.divf %137, %138 : vector<16x128xf32>
    %140 = vector.extract_strided_slice %127 {offsets = [0, 256], sizes = [16, 128], strides = [1, 1]} : vector<16x512xf32> to vector<16x128xf32>
    %141 = math.tanh %140 : vector<16x128xf32>
    %142 = vector.extract_strided_slice %127 {offsets = [0, 384], sizes = [16, 128], strides = [1, 1]} : vector<16x512xf32> to vector<16x128xf32>
    %143 = arith.negf %142 : vector<16x128xf32>
    %144 = math.exp %143 : vector<16x128xf32>
    %cst_38 = arith.constant 1.000000e+00 : f32
    %145 = vector.broadcast %cst_38 : f32 to vector<16x128xf32>
    %146 = arith.addf %145, %144 : vector<16x128xf32>
    %147 = arith.divf %145, %146 : vector<16x128xf32>
    %148 = arith.mulf %139, %83 : vector<16x128xf32>
    %149 = arith.mulf %133, %141 : vector<16x128xf32>
    %150 = arith.addf %148, %149 : vector<16x128xf32>
    %151 = math.tanh %150 : vector<16x128xf32>
    %152 = arith.mulf %147, %151 : vector<16x128xf32>
    %153 = arith.cmpf one, %152, %152 : vector<16x128xf32>
    %154 = arith.extui %153 : vector<16x128xi1> to vector<16x128xi32>
    %155 = arith.sitofp %154 : vector<16x128xi32> to vector<16x128xf32>
    %156 = arith.maximumf %89, %155 : vector<16x128xf32>
    %157 = arith.truncf %152 : vector<16x128xf32> to vector<16x128xbf16>
    %c0_39 = arith.constant 0 : index
    %c0_40 = arith.constant 0 : index
    %158 = vector.load %arg5[%c0_39, %c0_40] : memref<128x512xbf16, #tpu.memory_space<vmem>>, vector<128x512xbf16>
    %cst_41 = arith.constant dense<0.000000e+00> : vector<16x512xf32>
    %159 = tpu.matmul %157, %158, %cst_41 {dimension_numbers = #tpu.dot_dimension_numbers<[1], [0], [0], [1], [0, 0, 1, 1], [], []>} : vector<16x128xbf16>, vector<128x512xbf16>, vector<16x512xf32> -> vector<16x512xf32>
    %160 = arith.addf %24, %159 : vector<16x512xf32>
    %161 = arith.truncf %123 : vector<16x128xf32> to vector<16x128xbf16>
    %162 = vector.extract_strided_slice %21 {offsets = [32, 0], sizes = [16, 512], strides = [1, 1]} : vector<128x512xf32> to vector<16x512xf32>
    %c0_42 = arith.constant 0 : index
    %c0_43 = arith.constant 0 : index
    %163 = vector.load %arg2[%c0_42, %c0_43] : memref<128x512xbf16, #tpu.memory_space<vmem>>, vector<128x512xbf16>
    %cst_44 = arith.constant dense<0.000000e+00> : vector<16x512xf32>
    %164 = tpu.matmul %161, %163, %cst_44 {dimension_numbers = #tpu.dot_dimension_numbers<[1], [0], [0], [1], [0, 0, 1, 1], [], []>} : vector<16x128xbf16>, vector<128x512xbf16>, vector<16x512xf32> -> vector<16x512xf32>
    %165 = arith.addf %162, %164 : vector<16x512xf32>
    %166 = vector.extract_strided_slice %165 {offsets = [0, 0], sizes = [16, 128], strides = [1, 1]} : vector<16x512xf32> to vector<16x128xf32>
    %167 = arith.negf %166 : vector<16x128xf32>
    %168 = math.exp %167 : vector<16x128xf32>
    %cst_45 = arith.constant 1.000000e+00 : f32
    %169 = vector.broadcast %cst_45 : f32 to vector<16x128xf32>
    %170 = arith.addf %169, %168 : vector<16x128xf32>
    %171 = arith.divf %169, %170 : vector<16x128xf32>
    %172 = vector.extract_strided_slice %165 {offsets = [0, 128], sizes = [16, 128], strides = [1, 1]} : vector<16x512xf32> to vector<16x128xf32>
    %173 = arith.negf %172 : vector<16x128xf32>
    %174 = math.exp %173 : vector<16x128xf32>
    %cst_46 = arith.constant 1.000000e+00 : f32
    %175 = vector.broadcast %cst_46 : f32 to vector<16x128xf32>
    %176 = arith.addf %175, %174 : vector<16x128xf32>
    %177 = arith.divf %175, %176 : vector<16x128xf32>
    %178 = vector.extract_strided_slice %165 {offsets = [0, 256], sizes = [16, 128], strides = [1, 1]} : vector<16x512xf32> to vector<16x128xf32>
    %179 = math.tanh %178 : vector<16x128xf32>
    %180 = vector.extract_strided_slice %165 {offsets = [0, 384], sizes = [16, 128], strides = [1, 1]} : vector<16x512xf32> to vector<16x128xf32>
    %181 = arith.negf %180 : vector<16x128xf32>
    %182 = math.exp %181 : vector<16x128xf32>
    %cst_47 = arith.constant 1.000000e+00 : f32
    %183 = vector.broadcast %cst_47 : f32 to vector<16x128xf32>
    %184 = arith.addf %183, %182 : vector<16x128xf32>
    %185 = arith.divf %183, %184 : vector<16x128xf32>
    %186 = arith.mulf %177, %121 : vector<16x128xf32>
    %187 = arith.mulf %171, %179 : vector<16x128xf32>
    %188 = arith.addf %186, %187 : vector<16x128xf32>
    %189 = math.tanh %188 : vector<16x128xf32>
    %190 = arith.mulf %185, %189 : vector<16x128xf32>
    %191 = arith.truncf %190 : vector<16x128xf32> to vector<16x128xbf16>
    %c0_48 = arith.constant 0 : index
    %c0_49 = arith.constant 0 : index
    %192 = vector.load %arg4[%c0_48, %c0_49] : memref<128x512xbf16, #tpu.memory_space<vmem>>, vector<128x512xbf16>
    %cst_50 = arith.constant dense<0.000000e+00> : vector<16x512xf32>
    %193 = tpu.matmul %191, %192, %cst_50 {dimension_numbers = #tpu.dot_dimension_numbers<[1], [0], [0], [1], [0, 0, 1, 1], [], []>} : vector<16x128xbf16>, vector<128x512xbf16>, vector<16x512xf32> -> vector<16x512xf32>
    %194 = arith.addf %160, %193 : vector<16x512xf32>
    %195 = vector.extract_strided_slice %194 {offsets = [0, 0], sizes = [16, 128], strides = [1, 1]} : vector<16x512xf32> to vector<16x128xf32>
    %196 = arith.negf %195 : vector<16x128xf32>
    %197 = math.exp %196 : vector<16x128xf32>
    %cst_51 = arith.constant 1.000000e+00 : f32
    %198 = vector.broadcast %cst_51 : f32 to vector<16x128xf32>
    %199 = arith.addf %198, %197 : vector<16x128xf32>
    %200 = arith.divf %198, %199 : vector<16x128xf32>
    %201 = vector.extract_strided_slice %194 {offsets = [0, 128], sizes = [16, 128], strides = [1, 1]} : vector<16x512xf32> to vector<16x128xf32>
    %202 = arith.negf %201 : vector<16x128xf32>
    %203 = math.exp %202 : vector<16x128xf32>
    %cst_52 = arith.constant 1.000000e+00 : f32
    %204 = vector.broadcast %cst_52 : f32 to vector<16x128xf32>
    %205 = arith.addf %204, %203 : vector<16x128xf32>
    %206 = arith.divf %204, %205 : vector<16x128xf32>
    %207 = vector.extract_strided_slice %194 {offsets = [0, 256], sizes = [16, 128], strides = [1, 1]} : vector<16x512xf32> to vector<16x128xf32>
    %208 = math.tanh %207 : vector<16x128xf32>
    %209 = vector.extract_strided_slice %194 {offsets = [0, 384], sizes = [16, 128], strides = [1, 1]} : vector<16x512xf32> to vector<16x128xf32>
    %210 = arith.negf %209 : vector<16x128xf32>
    %211 = math.exp %210 : vector<16x128xf32>
    %cst_53 = arith.constant 1.000000e+00 : f32
    %212 = vector.broadcast %cst_53 : f32 to vector<16x128xf32>
    %213 = arith.addf %212, %211 : vector<16x128xf32>
    %214 = arith.divf %212, %213 : vector<16x128xf32>
    %215 = arith.mulf %206, %150 : vector<16x128xf32>
    %216 = arith.mulf %200, %208 : vector<16x128xf32>
    %217 = arith.addf %215, %216 : vector<16x128xf32>
    %218 = math.tanh %217 : vector<16x128xf32>
    %219 = arith.mulf %214, %218 : vector<16x128xf32>
    %220 = arith.cmpf one, %219, %219 : vector<16x128xf32>
    %221 = arith.extui %220 : vector<16x128xi1> to vector<16x128xi32>
    %222 = arith.sitofp %221 : vector<16x128xi32> to vector<16x128xf32>
    %223 = arith.maximumf %156, %222 : vector<16x128xf32>
    %224 = arith.truncf %219 : vector<16x128xf32> to vector<16x128xbf16>
    %c0_54 = arith.constant 0 : index
    %c0_55 = arith.constant 0 : index
    %225 = vector.load %arg5[%c0_54, %c0_55] : memref<128x512xbf16, #tpu.memory_space<vmem>>, vector<128x512xbf16>
    %cst_56 = arith.constant dense<0.000000e+00> : vector<16x512xf32>
    %226 = tpu.matmul %224, %225, %cst_56 {dimension_numbers = #tpu.dot_dimension_numbers<[1], [0], [0], [1], [0, 0, 1, 1], [], []>} : vector<16x128xbf16>, vector<128x512xbf16>, vector<16x512xf32> -> vector<16x512xf32>
    %227 = arith.addf %24, %226 : vector<16x512xf32>
    %228 = arith.truncf %190 : vector<16x128xf32> to vector<16x128xbf16>
    %229 = vector.extract_strided_slice %21 {offsets = [48, 0], sizes = [16, 512], strides = [1, 1]} : vector<128x512xf32> to vector<16x512xf32>
    %c0_57 = arith.constant 0 : index
    %c0_58 = arith.constant 0 : index
    %230 = vector.load %arg2[%c0_57, %c0_58] : memref<128x512xbf16, #tpu.memory_space<vmem>>, vector<128x512xbf16>
    %cst_59 = arith.constant dense<0.000000e+00> : vector<16x512xf32>
    %231 = tpu.matmul %228, %230, %cst_59 {dimension_numbers = #tpu.dot_dimension_numbers<[1], [0], [0], [1], [0, 0, 1, 1], [], []>} : vector<16x128xbf16>, vector<128x512xbf16>, vector<16x512xf32> -> vector<16x512xf32>
    %232 = arith.addf %229, %231 : vector<16x512xf32>
    %233 = vector.extract_strided_slice %232 {offsets = [0, 0], sizes = [16, 128], strides = [1, 1]} : vector<16x512xf32> to vector<16x128xf32>
    %234 = arith.negf %233 : vector<16x128xf32>
    %235 = math.exp %234 : vector<16x128xf32>
    %cst_60 = arith.constant 1.000000e+00 : f32
    %236 = vector.broadcast %cst_60 : f32 to vector<16x128xf32>
    %237 = arith.addf %236, %235 : vector<16x128xf32>
    %238 = arith.divf %236, %237 : vector<16x128xf32>
    %239 = vector.extract_strided_slice %232 {offsets = [0, 128], sizes = [16, 128], strides = [1, 1]} : vector<16x512xf32> to vector<16x128xf32>
    %240 = arith.negf %239 : vector<16x128xf32>
    %241 = math.exp %240 : vector<16x128xf32>
    %cst_61 = arith.constant 1.000000e+00 : f32
    %242 = vector.broadcast %cst_61 : f32 to vector<16x128xf32>
    %243 = arith.addf %242, %241 : vector<16x128xf32>
    %244 = arith.divf %242, %243 : vector<16x128xf32>
    %245 = vector.extract_strided_slice %232 {offsets = [0, 256], sizes = [16, 128], strides = [1, 1]} : vector<16x512xf32> to vector<16x128xf32>
    %246 = math.tanh %245 : vector<16x128xf32>
    %247 = vector.extract_strided_slice %232 {offsets = [0, 384], sizes = [16, 128], strides = [1, 1]} : vector<16x512xf32> to vector<16x128xf32>
    %248 = arith.negf %247 : vector<16x128xf32>
    %249 = math.exp %248 : vector<16x128xf32>
    %cst_62 = arith.constant 1.000000e+00 : f32
    %250 = vector.broadcast %cst_62 : f32 to vector<16x128xf32>
    %251 = arith.addf %250, %249 : vector<16x128xf32>
    %252 = arith.divf %250, %251 : vector<16x128xf32>
    %253 = arith.mulf %244, %188 : vector<16x128xf32>
    %254 = arith.mulf %238, %246 : vector<16x128xf32>
    %255 = arith.addf %253, %254 : vector<16x128xf32>
    %256 = math.tanh %255 : vector<16x128xf32>
    %257 = arith.mulf %252, %256 : vector<16x128xf32>
    %258 = arith.truncf %257 : vector<16x128xf32> to vector<16x128xbf16>
    %c0_63 = arith.constant 0 : index
    %c0_64 = arith.constant 0 : index
    %259 = vector.load %arg4[%c0_63, %c0_64] : memref<128x512xbf16, #tpu.memory_space<vmem>>, vector<128x512xbf16>
    %cst_65 = arith.constant dense<0.000000e+00> : vector<16x512xf32>
    %260 = tpu.matmul %258, %259, %cst_65 {dimension_numbers = #tpu.dot_dimension_numbers<[1], [0], [0], [1], [0, 0, 1, 1], [], []>} : vector<16x128xbf16>, vector<128x512xbf16>, vector<16x512xf32> -> vector<16x512xf32>
    %261 = arith.addf %227, %260 : vector<16x512xf32>
    %262 = vector.extract_strided_slice %261 {offsets = [0, 0], sizes = [16, 128], strides = [1, 1]} : vector<16x512xf32> to vector<16x128xf32>
    %263 = arith.negf %262 : vector<16x128xf32>
    %264 = math.exp %263 : vector<16x128xf32>
    %cst_66 = arith.constant 1.000000e+00 : f32
    %265 = vector.broadcast %cst_66 : f32 to vector<16x128xf32>
    %266 = arith.addf %265, %264 : vector<16x128xf32>
    %267 = arith.divf %265, %266 : vector<16x128xf32>
    %268 = vector.extract_strided_slice %261 {offsets = [0, 128], sizes = [16, 128], strides = [1, 1]} : vector<16x512xf32> to vector<16x128xf32>
    %269 = arith.negf %268 : vector<16x128xf32>
    %270 = math.exp %269 : vector<16x128xf32>
    %cst_67 = arith.constant 1.000000e+00 : f32
    %271 = vector.broadcast %cst_67 : f32 to vector<16x128xf32>
    %272 = arith.addf %271, %270 : vector<16x128xf32>
    %273 = arith.divf %271, %272 : vector<16x128xf32>
    %274 = vector.extract_strided_slice %261 {offsets = [0, 256], sizes = [16, 128], strides = [1, 1]} : vector<16x512xf32> to vector<16x128xf32>
    %275 = math.tanh %274 : vector<16x128xf32>
    %276 = vector.extract_strided_slice %261 {offsets = [0, 384], sizes = [16, 128], strides = [1, 1]} : vector<16x512xf32> to vector<16x128xf32>
    %277 = arith.negf %276 : vector<16x128xf32>
    %278 = math.exp %277 : vector<16x128xf32>
    %cst_68 = arith.constant 1.000000e+00 : f32
    %279 = vector.broadcast %cst_68 : f32 to vector<16x128xf32>
    %280 = arith.addf %279, %278 : vector<16x128xf32>
    %281 = arith.divf %279, %280 : vector<16x128xf32>
    %282 = arith.mulf %273, %217 : vector<16x128xf32>
    %283 = arith.mulf %267, %275 : vector<16x128xf32>
    %284 = arith.addf %282, %283 : vector<16x128xf32>
    %285 = math.tanh %284 : vector<16x128xf32>
    %286 = arith.mulf %281, %285 : vector<16x128xf32>
    %287 = arith.cmpf one, %286, %286 : vector<16x128xf32>
    %288 = arith.extui %287 : vector<16x128xi1> to vector<16x128xi32>
    %289 = arith.sitofp %288 : vector<16x128xi32> to vector<16x128xf32>
    %290 = arith.maximumf %223, %289 : vector<16x128xf32>
    %291 = arith.truncf %286 : vector<16x128xf32> to vector<16x128xbf16>
    %c0_69 = arith.constant 0 : index
    %c0_70 = arith.constant 0 : index
    %292 = vector.load %arg5[%c0_69, %c0_70] : memref<128x512xbf16, #tpu.memory_space<vmem>>, vector<128x512xbf16>
    %cst_71 = arith.constant dense<0.000000e+00> : vector<16x512xf32>
    %293 = tpu.matmul %291, %292, %cst_71 {dimension_numbers = #tpu.dot_dimension_numbers<[1], [0], [0], [1], [0, 0, 1, 1], [], []>} : vector<16x128xbf16>, vector<128x512xbf16>, vector<16x512xf32> -> vector<16x512xf32>
    %294 = arith.addf %24, %293 : vector<16x512xf32>
    %295 = arith.truncf %257 : vector<16x128xf32> to vector<16x128xbf16>
    %296 = vector.extract_strided_slice %21 {offsets = [64, 0], sizes = [16, 512], strides = [1, 1]} : vector<128x512xf32> to vector<16x512xf32>
    %c0_72 = arith.constant 0 : index
    %c0_73 = arith.constant 0 : index
    %297 = vector.load %arg2[%c0_72, %c0_73] : memref<128x512xbf16, #tpu.memory_space<vmem>>, vector<128x512xbf16>
    %cst_74 = arith.constant dense<0.000000e+00> : vector<16x512xf32>
    %298 = tpu.matmul %295, %297, %cst_74 {dimension_numbers = #tpu.dot_dimension_numbers<[1], [0], [0], [1], [0, 0, 1, 1], [], []>} : vector<16x128xbf16>, vector<128x512xbf16>, vector<16x512xf32> -> vector<16x512xf32>
    %299 = arith.addf %296, %298 : vector<16x512xf32>
    %300 = vector.extract_strided_slice %299 {offsets = [0, 0], sizes = [16, 128], strides = [1, 1]} : vector<16x512xf32> to vector<16x128xf32>
    %301 = arith.negf %300 : vector<16x128xf32>
    %302 = math.exp %301 : vector<16x128xf32>
    %cst_75 = arith.constant 1.000000e+00 : f32
    %303 = vector.broadcast %cst_75 : f32 to vector<16x128xf32>
    %304 = arith.addf %303, %302 : vector<16x128xf32>
    %305 = arith.divf %303, %304 : vector<16x128xf32>
    %306 = vector.extract_strided_slice %299 {offsets = [0, 128], sizes = [16, 128], strides = [1, 1]} : vector<16x512xf32> to vector<16x128xf32>
    %307 = arith.negf %306 : vector<16x128xf32>
    %308 = math.exp %307 : vector<16x128xf32>
    %cst_76 = arith.constant 1.000000e+00 : f32
    %309 = vector.broadcast %cst_76 : f32 to vector<16x128xf32>
    %310 = arith.addf %309, %308 : vector<16x128xf32>
    %311 = arith.divf %309, %310 : vector<16x128xf32>
    %312 = vector.extract_strided_slice %299 {offsets = [0, 256], sizes = [16, 128], strides = [1, 1]} : vector<16x512xf32> to vector<16x128xf32>
    %313 = math.tanh %312 : vector<16x128xf32>
    %314 = vector.extract_strided_slice %299 {offsets = [0, 384], sizes = [16, 128], strides = [1, 1]} : vector<16x512xf32> to vector<16x128xf32>
    %315 = arith.negf %314 : vector<16x128xf32>
    %316 = math.exp %315 : vector<16x128xf32>
    %cst_77 = arith.constant 1.000000e+00 : f32
    %317 = vector.broadcast %cst_77 : f32 to vector<16x128xf32>
    %318 = arith.addf %317, %316 : vector<16x128xf32>
    %319 = arith.divf %317, %318 : vector<16x128xf32>
    %320 = arith.mulf %311, %255 : vector<16x128xf32>
    %321 = arith.mulf %305, %313 : vector<16x128xf32>
    %322 = arith.addf %320, %321 : vector<16x128xf32>
    %323 = math.tanh %322 : vector<16x128xf32>
    %324 = arith.mulf %319, %323 : vector<16x128xf32>
    %325 = arith.truncf %324 : vector<16x128xf32> to vector<16x128xbf16>
    %c0_78 = arith.constant 0 : index
    %c0_79 = arith.constant 0 : index
    %326 = vector.load %arg4[%c0_78, %c0_79] : memref<128x512xbf16, #tpu.memory_space<vmem>>, vector<128x512xbf16>
    %cst_80 = arith.constant dense<0.000000e+00> : vector<16x512xf32>
    %327 = tpu.matmul %325, %326, %cst_80 {dimension_numbers = #tpu.dot_dimension_numbers<[1], [0], [0], [1], [0, 0, 1, 1], [], []>} : vector<16x128xbf16>, vector<128x512xbf16>, vector<16x512xf32> -> vector<16x512xf32>
    %328 = arith.addf %294, %327 : vector<16x512xf32>
    %329 = vector.extract_strided_slice %328 {offsets = [0, 0], sizes = [16, 128], strides = [1, 1]} : vector<16x512xf32> to vector<16x128xf32>
    %330 = arith.negf %329 : vector<16x128xf32>
    %331 = math.exp %330 : vector<16x128xf32>
    %cst_81 = arith.constant 1.000000e+00 : f32
    %332 = vector.broadcast %cst_81 : f32 to vector<16x128xf32>
    %333 = arith.addf %332, %331 : vector<16x128xf32>
    %334 = arith.divf %332, %333 : vector<16x128xf32>
    %335 = vector.extract_strided_slice %328 {offsets = [0, 128], sizes = [16, 128], strides = [1, 1]} : vector<16x512xf32> to vector<16x128xf32>
    %336 = arith.negf %335 : vector<16x128xf32>
    %337 = math.exp %336 : vector<16x128xf32>
    %cst_82 = arith.constant 1.000000e+00 : f32
    %338 = vector.broadcast %cst_82 : f32 to vector<16x128xf32>
    %339 = arith.addf %338, %337 : vector<16x128xf32>
    %340 = arith.divf %338, %339 : vector<16x128xf32>
    %341 = vector.extract_strided_slice %328 {offsets = [0, 256], sizes = [16, 128], strides = [1, 1]} : vector<16x512xf32> to vector<16x128xf32>
    %342 = math.tanh %341 : vector<16x128xf32>
    %343 = vector.extract_strided_slice %328 {offsets = [0, 384], sizes = [16, 128], strides = [1, 1]} : vector<16x512xf32> to vector<16x128xf32>
    %344 = arith.negf %343 : vector<16x128xf32>
    %345 = math.exp %344 : vector<16x128xf32>
    %cst_83 = arith.constant 1.000000e+00 : f32
    %346 = vector.broadcast %cst_83 : f32 to vector<16x128xf32>
    %347 = arith.addf %346, %345 : vector<16x128xf32>
    %348 = arith.divf %346, %347 : vector<16x128xf32>
    %349 = arith.mulf %340, %284 : vector<16x128xf32>
    %350 = arith.mulf %334, %342 : vector<16x128xf32>
    %351 = arith.addf %349, %350 : vector<16x128xf32>
    %352 = math.tanh %351 : vector<16x128xf32>
    %353 = arith.mulf %348, %352 : vector<16x128xf32>
    %354 = arith.cmpf one, %353, %353 : vector<16x128xf32>
    %355 = arith.extui %354 : vector<16x128xi1> to vector<16x128xi32>
    %356 = arith.sitofp %355 : vector<16x128xi32> to vector<16x128xf32>
    %357 = arith.maximumf %290, %356 : vector<16x128xf32>
    %358 = arith.truncf %353 : vector<16x128xf32> to vector<16x128xbf16>
    %c0_84 = arith.constant 0 : index
    %c0_85 = arith.constant 0 : index
    %359 = vector.load %arg5[%c0_84, %c0_85] : memref<128x512xbf16, #tpu.memory_space<vmem>>, vector<128x512xbf16>
    %cst_86 = arith.constant dense<0.000000e+00> : vector<16x512xf32>
    %360 = tpu.matmul %358, %359, %cst_86 {dimension_numbers = #tpu.dot_dimension_numbers<[1], [0], [0], [1], [0, 0, 1, 1], [], []>} : vector<16x128xbf16>, vector<128x512xbf16>, vector<16x512xf32> -> vector<16x512xf32>
    %361 = arith.addf %24, %360 : vector<16x512xf32>
    %362 = arith.truncf %324 : vector<16x128xf32> to vector<16x128xbf16>
    %363 = vector.extract_strided_slice %21 {offsets = [80, 0], sizes = [16, 512], strides = [1, 1]} : vector<128x512xf32> to vector<16x512xf32>
    %c0_87 = arith.constant 0 : index
    %c0_88 = arith.constant 0 : index
    %364 = vector.load %arg2[%c0_87, %c0_88] : memref<128x512xbf16, #tpu.memory_space<vmem>>, vector<128x512xbf16>
    %cst_89 = arith.constant dense<0.000000e+00> : vector<16x512xf32>
    %365 = tpu.matmul %362, %364, %cst_89 {dimension_numbers = #tpu.dot_dimension_numbers<[1], [0], [0], [1], [0, 0, 1, 1], [], []>} : vector<16x128xbf16>, vector<128x512xbf16>, vector<16x512xf32> -> vector<16x512xf32>
    %366 = arith.addf %363, %365 : vector<16x512xf32>
    %367 = vector.extract_strided_slice %366 {offsets = [0, 0], sizes = [16, 128], strides = [1, 1]} : vector<16x512xf32> to vector<16x128xf32>
    %368 = arith.negf %367 : vector<16x128xf32>
    %369 = math.exp %368 : vector<16x128xf32>
    %cst_90 = arith.constant 1.000000e+00 : f32
    %370 = vector.broadcast %cst_90 : f32 to vector<16x128xf32>
    %371 = arith.addf %370, %369 : vector<16x128xf32>
    %372 = arith.divf %370, %371 : vector<16x128xf32>
    %373 = vector.extract_strided_slice %366 {offsets = [0, 128], sizes = [16, 128], strides = [1, 1]} : vector<16x512xf32> to vector<16x128xf32>
    %374 = arith.negf %373 : vector<16x128xf32>
    %375 = math.exp %374 : vector<16x128xf32>
    %cst_91 = arith.constant 1.000000e+00 : f32
    %376 = vector.broadcast %cst_91 : f32 to vector<16x128xf32>
    %377 = arith.addf %376, %375 : vector<16x128xf32>
    %378 = arith.divf %376, %377 : vector<16x128xf32>
    %379 = vector.extract_strided_slice %366 {offsets = [0, 256], sizes = [16, 128], strides = [1, 1]} : vector<16x512xf32> to vector<16x128xf32>
    %380 = math.tanh %379 : vector<16x128xf32>
    %381 = vector.extract_strided_slice %366 {offsets = [0, 384], sizes = [16, 128], strides = [1, 1]} : vector<16x512xf32> to vector<16x128xf32>
    %382 = arith.negf %381 : vector<16x128xf32>
    %383 = math.exp %382 : vector<16x128xf32>
    %cst_92 = arith.constant 1.000000e+00 : f32
    %384 = vector.broadcast %cst_92 : f32 to vector<16x128xf32>
    %385 = arith.addf %384, %383 : vector<16x128xf32>
    %386 = arith.divf %384, %385 : vector<16x128xf32>
    %387 = arith.mulf %378, %322 : vector<16x128xf32>
    %388 = arith.mulf %372, %380 : vector<16x128xf32>
    %389 = arith.addf %387, %388 : vector<16x128xf32>
    %390 = math.tanh %389 : vector<16x128xf32>
    %391 = arith.mulf %386, %390 : vector<16x128xf32>
    %392 = arith.truncf %391 : vector<16x128xf32> to vector<16x128xbf16>
    %c0_93 = arith.constant 0 : index
    %c0_94 = arith.constant 0 : index
    %393 = vector.load %arg4[%c0_93, %c0_94] : memref<128x512xbf16, #tpu.memory_space<vmem>>, vector<128x512xbf16>
    %cst_95 = arith.constant dense<0.000000e+00> : vector<16x512xf32>
    %394 = tpu.matmul %392, %393, %cst_95 {dimension_numbers = #tpu.dot_dimension_numbers<[1], [0], [0], [1], [0, 0, 1, 1], [], []>} : vector<16x128xbf16>, vector<128x512xbf16>, vector<16x512xf32> -> vector<16x512xf32>
    %395 = arith.addf %361, %394 : vector<16x512xf32>
    %396 = vector.extract_strided_slice %395 {offsets = [0, 0], sizes = [16, 128], strides = [1, 1]} : vector<16x512xf32> to vector<16x128xf32>
    %397 = arith.negf %396 : vector<16x128xf32>
    %398 = math.exp %397 : vector<16x128xf32>
    %cst_96 = arith.constant 1.000000e+00 : f32
    %399 = vector.broadcast %cst_96 : f32 to vector<16x128xf32>
    %400 = arith.addf %399, %398 : vector<16x128xf32>
    %401 = arith.divf %399, %400 : vector<16x128xf32>
    %402 = vector.extract_strided_slice %395 {offsets = [0, 128], sizes = [16, 128], strides = [1, 1]} : vector<16x512xf32> to vector<16x128xf32>
    %403 = arith.negf %402 : vector<16x128xf32>
    %404 = math.exp %403 : vector<16x128xf32>
    %cst_97 = arith.constant 1.000000e+00 : f32
    %405 = vector.broadcast %cst_97 : f32 to vector<16x128xf32>
    %406 = arith.addf %405, %404 : vector<16x128xf32>
    %407 = arith.divf %405, %406 : vector<16x128xf32>
    %408 = vector.extract_strided_slice %395 {offsets = [0, 256], sizes = [16, 128], strides = [1, 1]} : vector<16x512xf32> to vector<16x128xf32>
    %409 = math.tanh %408 : vector<16x128xf32>
    %410 = vector.extract_strided_slice %395 {offsets = [0, 384], sizes = [16, 128], strides = [1, 1]} : vector<16x512xf32> to vector<16x128xf32>
    %411 = arith.negf %410 : vector<16x128xf32>
    %412 = math.exp %411 : vector<16x128xf32>
    %cst_98 = arith.constant 1.000000e+00 : f32
    %413 = vector.broadcast %cst_98 : f32 to vector<16x128xf32>
    %414 = arith.addf %413, %412 : vector<16x128xf32>
    %415 = arith.divf %413, %414 : vector<16x128xf32>
    %416 = arith.mulf %407, %351 : vector<16x128xf32>
    %417 = arith.mulf %401, %409 : vector<16x128xf32>
    %418 = arith.addf %416, %417 : vector<16x128xf32>
    %419 = math.tanh %418 : vector<16x128xf32>
    %420 = arith.mulf %415, %419 : vector<16x128xf32>
    %421 = arith.cmpf one, %420, %420 : vector<16x128xf32>
    %422 = arith.extui %421 : vector<16x128xi1> to vector<16x128xi32>
    %423 = arith.sitofp %422 : vector<16x128xi32> to vector<16x128xf32>
    %424 = arith.maximumf %357, %423 : vector<16x128xf32>
    %425 = arith.truncf %420 : vector<16x128xf32> to vector<16x128xbf16>
    %c0_99 = arith.constant 0 : index
    %c0_100 = arith.constant 0 : index
    %426 = vector.load %arg5[%c0_99, %c0_100] : memref<128x512xbf16, #tpu.memory_space<vmem>>, vector<128x512xbf16>
    %cst_101 = arith.constant dense<0.000000e+00> : vector<16x512xf32>
    %427 = tpu.matmul %425, %426, %cst_101 {dimension_numbers = #tpu.dot_dimension_numbers<[1], [0], [0], [1], [0, 0, 1, 1], [], []>} : vector<16x128xbf16>, vector<128x512xbf16>, vector<16x512xf32> -> vector<16x512xf32>
    %428 = arith.addf %24, %427 : vector<16x512xf32>
    %429 = arith.truncf %391 : vector<16x128xf32> to vector<16x128xbf16>
    %430 = vector.extract_strided_slice %21 {offsets = [96, 0], sizes = [16, 512], strides = [1, 1]} : vector<128x512xf32> to vector<16x512xf32>
    %c0_102 = arith.constant 0 : index
    %c0_103 = arith.constant 0 : index
    %431 = vector.load %arg2[%c0_102, %c0_103] : memref<128x512xbf16, #tpu.memory_space<vmem>>, vector<128x512xbf16>
    %cst_104 = arith.constant dense<0.000000e+00> : vector<16x512xf32>
    %432 = tpu.matmul %429, %431, %cst_104 {dimension_numbers = #tpu.dot_dimension_numbers<[1], [0], [0], [1], [0, 0, 1, 1], [], []>} : vector<16x128xbf16>, vector<128x512xbf16>, vector<16x512xf32> -> vector<16x512xf32>
    %433 = arith.addf %430, %432 : vector<16x512xf32>
    %434 = vector.extract_strided_slice %433 {offsets = [0, 0], sizes = [16, 128], strides = [1, 1]} : vector<16x512xf32> to vector<16x128xf32>
    %435 = arith.negf %434 : vector<16x128xf32>
    %436 = math.exp %435 : vector<16x128xf32>
    %cst_105 = arith.constant 1.000000e+00 : f32
    %437 = vector.broadcast %cst_105 : f32 to vector<16x128xf32>
    %438 = arith.addf %437, %436 : vector<16x128xf32>
    %439 = arith.divf %437, %438 : vector<16x128xf32>
    %440 = vector.extract_strided_slice %433 {offsets = [0, 128], sizes = [16, 128], strides = [1, 1]} : vector<16x512xf32> to vector<16x128xf32>
    %441 = arith.negf %440 : vector<16x128xf32>
    %442 = math.exp %441 : vector<16x128xf32>
    %cst_106 = arith.constant 1.000000e+00 : f32
    %443 = vector.broadcast %cst_106 : f32 to vector<16x128xf32>
    %444 = arith.addf %443, %442 : vector<16x128xf32>
    %445 = arith.divf %443, %444 : vector<16x128xf32>
    %446 = vector.extract_strided_slice %433 {offsets = [0, 256], sizes = [16, 128], strides = [1, 1]} : vector<16x512xf32> to vector<16x128xf32>
    %447 = math.tanh %446 : vector<16x128xf32>
    %448 = vector.extract_strided_slice %433 {offsets = [0, 384], sizes = [16, 128], strides = [1, 1]} : vector<16x512xf32> to vector<16x128xf32>
    %449 = arith.negf %448 : vector<16x128xf32>
    %450 = math.exp %449 : vector<16x128xf32>
    %cst_107 = arith.constant 1.000000e+00 : f32
    %451 = vector.broadcast %cst_107 : f32 to vector<16x128xf32>
    %452 = arith.addf %451, %450 : vector<16x128xf32>
    %453 = arith.divf %451, %452 : vector<16x128xf32>
    %454 = arith.mulf %445, %389 : vector<16x128xf32>
    %455 = arith.mulf %439, %447 : vector<16x128xf32>
    %456 = arith.addf %454, %455 : vector<16x128xf32>
    %457 = math.tanh %456 : vector<16x128xf32>
    %458 = arith.mulf %453, %457 : vector<16x128xf32>
    %459 = arith.truncf %458 : vector<16x128xf32> to vector<16x128xbf16>
    %c0_108 = arith.constant 0 : index
    %c0_109 = arith.constant 0 : index
    %460 = vector.load %arg4[%c0_108, %c0_109] : memref<128x512xbf16, #tpu.memory_space<vmem>>, vector<128x512xbf16>
    %cst_110 = arith.constant dense<0.000000e+00> : vector<16x512xf32>
    %461 = tpu.matmul %459, %460, %cst_110 {dimension_numbers = #tpu.dot_dimension_numbers<[1], [0], [0], [1], [0, 0, 1, 1], [], []>} : vector<16x128xbf16>, vector<128x512xbf16>, vector<16x512xf32> -> vector<16x512xf32>
    %462 = arith.addf %428, %461 : vector<16x512xf32>
    %463 = vector.extract_strided_slice %462 {offsets = [0, 0], sizes = [16, 128], strides = [1, 1]} : vector<16x512xf32> to vector<16x128xf32>
    %464 = arith.negf %463 : vector<16x128xf32>
    %465 = math.exp %464 : vector<16x128xf32>
    %cst_111 = arith.constant 1.000000e+00 : f32
    %466 = vector.broadcast %cst_111 : f32 to vector<16x128xf32>
    %467 = arith.addf %466, %465 : vector<16x128xf32>
    %468 = arith.divf %466, %467 : vector<16x128xf32>
    %469 = vector.extract_strided_slice %462 {offsets = [0, 128], sizes = [16, 128], strides = [1, 1]} : vector<16x512xf32> to vector<16x128xf32>
    %470 = arith.negf %469 : vector<16x128xf32>
    %471 = math.exp %470 : vector<16x128xf32>
    %cst_112 = arith.constant 1.000000e+00 : f32
    %472 = vector.broadcast %cst_112 : f32 to vector<16x128xf32>
    %473 = arith.addf %472, %471 : vector<16x128xf32>
    %474 = arith.divf %472, %473 : vector<16x128xf32>
    %475 = vector.extract_strided_slice %462 {offsets = [0, 256], sizes = [16, 128], strides = [1, 1]} : vector<16x512xf32> to vector<16x128xf32>
    %476 = math.tanh %475 : vector<16x128xf32>
    %477 = vector.extract_strided_slice %462 {offsets = [0, 384], sizes = [16, 128], strides = [1, 1]} : vector<16x512xf32> to vector<16x128xf32>
    %478 = arith.negf %477 : vector<16x128xf32>
    %479 = math.exp %478 : vector<16x128xf32>
    %cst_113 = arith.constant 1.000000e+00 : f32
    %480 = vector.broadcast %cst_113 : f32 to vector<16x128xf32>
    %481 = arith.addf %480, %479 : vector<16x128xf32>
    %482 = arith.divf %480, %481 : vector<16x128xf32>
    %483 = arith.mulf %474, %418 : vector<16x128xf32>
    %484 = arith.mulf %468, %476 : vector<16x128xf32>
    %485 = arith.addf %483, %484 : vector<16x128xf32>
    %486 = math.tanh %485 : vector<16x128xf32>
    %487 = arith.mulf %482, %486 : vector<16x128xf32>
    %488 = arith.cmpf one, %487, %487 : vector<16x128xf32>
    %489 = arith.extui %488 : vector<16x128xi1> to vector<16x128xi32>
    %490 = arith.sitofp %489 : vector<16x128xi32> to vector<16x128xf32>
    %491 = arith.maximumf %424, %490 : vector<16x128xf32>
    %492 = arith.truncf %487 : vector<16x128xf32> to vector<16x128xbf16>
    %c0_114 = arith.constant 0 : index
    %c0_115 = arith.constant 0 : index
    %493 = vector.load %arg5[%c0_114, %c0_115] : memref<128x512xbf16, #tpu.memory_space<vmem>>, vector<128x512xbf16>
    %cst_116 = arith.constant dense<0.000000e+00> : vector<16x512xf32>
    %494 = tpu.matmul %492, %493, %cst_116 {dimension_numbers = #tpu.dot_dimension_numbers<[1], [0], [0], [1], [0, 0, 1, 1], [], []>} : vector<16x128xbf16>, vector<128x512xbf16>, vector<16x512xf32> -> vector<16x512xf32>
    %495 = arith.addf %24, %494 : vector<16x512xf32>
    %496 = arith.truncf %458 : vector<16x128xf32> to vector<16x128xbf16>
    %497 = vector.extract_strided_slice %21 {offsets = [112, 0], sizes = [16, 512], strides = [1, 1]} : vector<128x512xf32> to vector<16x512xf32>
    %c0_117 = arith.constant 0 : index
    %c0_118 = arith.constant 0 : index
    %498 = vector.load %arg2[%c0_117, %c0_118] : memref<128x512xbf16, #tpu.memory_space<vmem>>, vector<128x512xbf16>
    %cst_119 = arith.constant dense<0.000000e+00> : vector<16x512xf32>
    %499 = tpu.matmul %496, %498, %cst_119 {dimension_numbers = #tpu.dot_dimension_numbers<[1], [0], [0], [1], [0, 0, 1, 1], [], []>} : vector<16x128xbf16>, vector<128x512xbf16>, vector<16x512xf32> -> vector<16x512xf32>
    %500 = arith.addf %497, %499 : vector<16x512xf32>
    %501 = vector.extract_strided_slice %500 {offsets = [0, 0], sizes = [16, 128], strides = [1, 1]} : vector<16x512xf32> to vector<16x128xf32>
    %502 = arith.negf %501 : vector<16x128xf32>
    %503 = math.exp %502 : vector<16x128xf32>
    %cst_120 = arith.constant 1.000000e+00 : f32
    %504 = vector.broadcast %cst_120 : f32 to vector<16x128xf32>
    %505 = arith.addf %504, %503 : vector<16x128xf32>
    %506 = arith.divf %504, %505 : vector<16x128xf32>
    %507 = vector.extract_strided_slice %500 {offsets = [0, 128], sizes = [16, 128], strides = [1, 1]} : vector<16x512xf32> to vector<16x128xf32>
    %508 = arith.negf %507 : vector<16x128xf32>
    %509 = math.exp %508 : vector<16x128xf32>
    %cst_121 = arith.constant 1.000000e+00 : f32
    %510 = vector.broadcast %cst_121 : f32 to vector<16x128xf32>
    %511 = arith.addf %510, %509 : vector<16x128xf32>
    %512 = arith.divf %510, %511 : vector<16x128xf32>
    %513 = vector.extract_strided_slice %500 {offsets = [0, 256], sizes = [16, 128], strides = [1, 1]} : vector<16x512xf32> to vector<16x128xf32>
    %514 = math.tanh %513 : vector<16x128xf32>
    %515 = vector.extract_strided_slice %500 {offsets = [0, 384], sizes = [16, 128], strides = [1, 1]} : vector<16x512xf32> to vector<16x128xf32>
    %516 = arith.negf %515 : vector<16x128xf32>
    %517 = math.exp %516 : vector<16x128xf32>
    %cst_122 = arith.constant 1.000000e+00 : f32
    %518 = vector.broadcast %cst_122 : f32 to vector<16x128xf32>
    %519 = arith.addf %518, %517 : vector<16x128xf32>
    %520 = arith.divf %518, %519 : vector<16x128xf32>
    %521 = arith.mulf %512, %456 : vector<16x128xf32>
    %522 = arith.mulf %506, %514 : vector<16x128xf32>
    %523 = arith.addf %521, %522 : vector<16x128xf32>
    %524 = math.tanh %523 : vector<16x128xf32>
    %525 = arith.mulf %520, %524 : vector<16x128xf32>
    %526 = arith.truncf %525 : vector<16x128xf32> to vector<16x128xbf16>
    %c0_123 = arith.constant 0 : index
    %c0_124 = arith.constant 0 : index
    %527 = vector.load %arg4[%c0_123, %c0_124] : memref<128x512xbf16, #tpu.memory_space<vmem>>, vector<128x512xbf16>
    %cst_125 = arith.constant dense<0.000000e+00> : vector<16x512xf32>
    %528 = tpu.matmul %526, %527, %cst_125 {dimension_numbers = #tpu.dot_dimension_numbers<[1], [0], [0], [1], [0, 0, 1, 1], [], []>} : vector<16x128xbf16>, vector<128x512xbf16>, vector<16x512xf32> -> vector<16x512xf32>
    %529 = arith.addf %495, %528 : vector<16x512xf32>
    %530 = vector.extract_strided_slice %529 {offsets = [0, 0], sizes = [16, 128], strides = [1, 1]} : vector<16x512xf32> to vector<16x128xf32>
    %531 = arith.negf %530 : vector<16x128xf32>
    %532 = math.exp %531 : vector<16x128xf32>
    %cst_126 = arith.constant 1.000000e+00 : f32
    %533 = vector.broadcast %cst_126 : f32 to vector<16x128xf32>
    %534 = arith.addf %533, %532 : vector<16x128xf32>
    %535 = arith.divf %533, %534 : vector<16x128xf32>
    %536 = vector.extract_strided_slice %529 {offsets = [0, 128], sizes = [16, 128], strides = [1, 1]} : vector<16x512xf32> to vector<16x128xf32>
    %537 = arith.negf %536 : vector<16x128xf32>
    %538 = math.exp %537 : vector<16x128xf32>
    %cst_127 = arith.constant 1.000000e+00 : f32
    %539 = vector.broadcast %cst_127 : f32 to vector<16x128xf32>
    %540 = arith.addf %539, %538 : vector<16x128xf32>
    %541 = arith.divf %539, %540 : vector<16x128xf32>
    %542 = vector.extract_strided_slice %529 {offsets = [0, 256], sizes = [16, 128], strides = [1, 1]} : vector<16x512xf32> to vector<16x128xf32>
    %543 = math.tanh %542 : vector<16x128xf32>
    %544 = vector.extract_strided_slice %529 {offsets = [0, 384], sizes = [16, 128], strides = [1, 1]} : vector<16x512xf32> to vector<16x128xf32>
    %545 = arith.negf %544 : vector<16x128xf32>
    %546 = math.exp %545 : vector<16x128xf32>
    %cst_128 = arith.constant 1.000000e+00 : f32
    %547 = vector.broadcast %cst_128 : f32 to vector<16x128xf32>
    %548 = arith.addf %547, %546 : vector<16x128xf32>
    %549 = arith.divf %547, %548 : vector<16x128xf32>
    %550 = arith.mulf %541, %485 : vector<16x128xf32>
    %551 = arith.mulf %535, %543 : vector<16x128xf32>
    %552 = arith.addf %550, %551 : vector<16x128xf32>
    %553 = math.tanh %552 : vector<16x128xf32>
    %554 = arith.mulf %549, %553 : vector<16x128xf32>
    %555 = arith.cmpf one, %554, %554 : vector<16x128xf32>
    %556 = arith.extui %555 : vector<16x128xi1> to vector<16x128xi32>
    %557 = arith.sitofp %556 : vector<16x128xi32> to vector<16x128xf32>
    %558 = arith.maximumf %491, %557 : vector<16x128xf32>
    %559 = tpu.iota {dimensions = array<i32: 0>} : vector<16x128xi32>
    %c2_i32_129 = arith.constant 2 : i32
    %560 = vector.broadcast %c2_i32_129 : i32 to vector<16x128xi32>
    %561 = arith.cmpi slt, %559, %560 : vector<16x128xi32>
    %cst_130 = arith.constant 0.000000e+00 : f32
    %562 = vector.broadcast %cst_130 : f32 to vector<16x128xf32>
    %563 = arith.select %561, %558, %562 : vector<16x128xi1>, vector<16x128xf32>
    %564 = vector.shape_cast %563 : vector<16x128xf32> to vector<1x16x128xf32>
    %cst_131 = arith.constant dense<0xFF800000> : vector<1xf32>
    %565 = vector.multi_reduction <maximumf>, %564, %cst_131 [1, 2] : vector<1x16x128xf32> to vector<1xf32>
    %566 = vector.shape_cast %565 : vector<1xf32> to vector<1x1x1xf32>
    %567 = vector.extract %566[0, 0, 0] : f32 from vector<1x1x1xf32>
    %cst_132 = arith.constant 0.000000e+00 : f32
    %568 = arith.cmpf ogt, %567, %cst_132 : f32
    %cst_133 = arith.constant 0.000000e+00 : f32
    %569 = vector.broadcast %cst_133 : f32 to vector<16x128xf32>
    %570 = arith.select %568, %569, %554 : vector<16x128xf32>
    %c0_i32_134 = arith.constant 0 : i32
    %571 = tpu.memref_slice %arg20[%c0_i32_134] : memref<4x!tpu.dma_semaphore, #tpu.memory_space<semaphore_mem>> -> memref<1x!tpu.dma_semaphore, #tpu.memory_space<semaphore_mem>>
    %572 = tpu.memref_squeeze %571 : memref<1x!tpu.dma_semaphore, #tpu.memory_space<semaphore_mem>> -> memref<!tpu.dma_semaphore, #tpu.memory_space<semaphore_mem>>
    tpu.wait_dma2 semaphore(%572 : memref<!tpu.dma_semaphore, #tpu.memory_space<semaphore_mem>>) src(%arg7 : memref<128x256xbf16, #tpu.memory_space<any>>) dst(%arg16 : memref<128x256xbf16, #tpu.memory_space<vmem>>)
    %c1_i32_135 = arith.constant 1 : i32
    %573 = tpu.memref_slice %arg20[%c1_i32_135] : memref<4x!tpu.dma_semaphore, #tpu.memory_space<semaphore_mem>> -> memref<1x!tpu.dma_semaphore, #tpu.memory_space<semaphore_mem>>
    %574 = tpu.memref_squeeze %573 : memref<1x!tpu.dma_semaphore, #tpu.memory_space<semaphore_mem>> -> memref<!tpu.dma_semaphore, #tpu.memory_space<semaphore_mem>>
    tpu.wait_dma2 semaphore(%574 : memref<!tpu.dma_semaphore, #tpu.memory_space<semaphore_mem>>) src(%arg8 : memref<256x512xbf16, #tpu.memory_space<any>>) dst(%arg17 : memref<256x512xbf16, #tpu.memory_space<vmem>>)
    %c2_i32_136 = arith.constant 2 : i32
    %575 = tpu.memref_slice %arg20[%c2_i32_136] : memref<4x!tpu.dma_semaphore, #tpu.memory_space<semaphore_mem>> -> memref<1x!tpu.dma_semaphore, #tpu.memory_space<semaphore_mem>>
    %576 = tpu.memref_squeeze %575 : memref<1x!tpu.dma_semaphore, #tpu.memory_space<semaphore_mem>> -> memref<!tpu.dma_semaphore, #tpu.memory_space<semaphore_mem>>
    tpu.wait_dma2 semaphore(%576 : memref<!tpu.dma_semaphore, #tpu.memory_space<semaphore_mem>>) src(%arg9 : memref<512x128xbf16, #tpu.memory_space<any>>) dst(%arg18 : memref<512x128xbf16, #tpu.memory_space<vmem>>)
    %c3_i32_137 = arith.constant 3 : i32
    %577 = tpu.memref_slice %arg20[%c3_i32_137] : memref<4x!tpu.dma_semaphore, #tpu.memory_space<semaphore_mem>> -> memref<1x!tpu.dma_semaphore, #tpu.memory_space<semaphore_mem>>
    %578 = tpu.memref_squeeze %577 : memref<1x!tpu.dma_semaphore, #tpu.memory_space<semaphore_mem>> -> memref<!tpu.dma_semaphore, #tpu.memory_space<semaphore_mem>>
    tpu.wait_dma2 semaphore(%578 : memref<!tpu.dma_semaphore, #tpu.memory_space<semaphore_mem>>) src(%arg10 : memref<128x128xbf16, #tpu.memory_space<any>>) dst(%arg19 : memref<128x128xbf16, #tpu.memory_space<vmem>>)
    %579 = arith.truncf %570 : vector<16x128xf32> to vector<16x128xbf16>
    %c0_138 = arith.constant 0 : index
    %c0_139 = arith.constant 0 : index
    %580 = vector.load %arg16[%c0_138, %c0_139] : memref<128x256xbf16, #tpu.memory_space<vmem>>, vector<128x256xbf16>
    %cst_140 = arith.constant dense<0.000000e+00> : vector<16x256xf32>
    %581 = tpu.matmul %579, %580, %cst_140 {dimension_numbers = #tpu.dot_dimension_numbers<[1], [0], [0], [1], [0, 0, 1, 1], [], []>} : vector<16x128xbf16>, vector<128x256xbf16>, vector<16x256xf32> -> vector<16x256xf32>
    %c0_141 = arith.constant 0 : index
    %c0_142 = arith.constant 0 : index
    %582 = vector.load %arg11[%c0_141, %c0_142] : memref<1x256xf32, #tpu.memory_space<vmem>>, vector<1x256xf32>
    %583 = vector.broadcast %582 : vector<1x256xf32> to vector<16x256xf32>
    %584 = arith.addf %581, %583 : vector<16x256xf32>
    %cst_143 = arith.constant 5.000000e-01 : f32
    %585 = vector.broadcast %cst_143 : f32 to vector<16x256xf32>
    %586 = arith.mulf %585, %584 : vector<16x256xf32>
    %cst_144 = arith.constant 0.707106769 : f32
    %587 = vector.broadcast %cst_144 : f32 to vector<16x256xf32>
    %588 = arith.mulf %584, %587 : vector<16x256xf32>
    %cst_145 = arith.constant 0.000000e+00 : f32
    %589 = vector.broadcast %cst_145 : f32 to vector<16x256xf32>
    %590 = arith.cmpf oge, %588, %589 : vector<16x256xf32>
    %cst_146 = arith.constant 1.000000e+00 : f32
    %cst_147 = arith.constant -1.000000e+00 : f32
    %591 = vector.broadcast %cst_146 : f32 to vector<16x256xf32>
    %592 = vector.broadcast %cst_147 : f32 to vector<16x256xf32>
    %593 = arith.select %590, %591, %592 : vector<16x256xi1>, vector<16x256xf32>
    %594 = math.absf %588 : vector<16x256xf32>
    %cst_148 = arith.constant 0.327591091 : f32
    %595 = vector.broadcast %cst_148 : f32 to vector<16x256xf32>
    %596 = arith.mulf %595, %594 : vector<16x256xf32>
    %cst_149 = arith.constant 1.000000e+00 : f32
    %597 = vector.broadcast %cst_149 : f32 to vector<16x256xf32>
    %598 = arith.addf %597, %596 : vector<16x256xf32>
    %cst_150 = arith.constant 1.000000e+00 : f32
    %599 = vector.broadcast %cst_150 : f32 to vector<16x256xf32>
    %600 = arith.divf %599, %598 : vector<16x256xf32>
    %cst_151 = arith.constant 1.06140542 : f32
    %601 = vector.broadcast %cst_151 : f32 to vector<16x256xf32>
    %602 = arith.mulf %601, %600 : vector<16x256xf32>
    %cst_152 = arith.constant -1.45315206 : f32
    %603 = vector.broadcast %cst_152 : f32 to vector<16x256xf32>
    %604 = arith.addf %602, %603 : vector<16x256xf32>
    %605 = arith.mulf %604, %600 : vector<16x256xf32>
    %cst_153 = arith.constant 1.42141378 : f32
    %606 = vector.broadcast %cst_153 : f32 to vector<16x256xf32>
    %607 = arith.addf %605, %606 : vector<16x256xf32>
    %608 = arith.mulf %607, %600 : vector<16x256xf32>
    %cst_154 = arith.constant -0.284496725 : f32
    %609 = vector.broadcast %cst_154 : f32 to vector<16x256xf32>
    %610 = arith.addf %608, %609 : vector<16x256xf32>
    %611 = arith.mulf %610, %600 : vector<16x256xf32>
    %cst_155 = arith.constant 0.254829586 : f32
    %612 = vector.broadcast %cst_155 : f32 to vector<16x256xf32>
    %613 = arith.addf %611, %612 : vector<16x256xf32>
    %614 = arith.mulf %613, %600 : vector<16x256xf32>
    %cst_156 = arith.constant 0.000000e+00 : f32
    %615 = vector.broadcast %cst_156 : f32 to vector<16x256xf32>
    %616 = arith.subf %615, %594 : vector<16x256xf32>
    %617 = arith.mulf %616, %594 : vector<16x256xf32>
    %618 = math.exp %617 : vector<16x256xf32>
    %619 = arith.mulf %614, %618 : vector<16x256xf32>
    %cst_157 = arith.constant 1.000000e+00 : f32
    %620 = vector.broadcast %cst_157 : f32 to vector<16x256xf32>
    %621 = arith.subf %620, %619 : vector<16x256xf32>
    %622 = arith.mulf %593, %621 : vector<16x256xf32>
    %cst_158 = arith.constant 1.000000e+00 : f32
    %623 = vector.broadcast %cst_158 : f32 to vector<16x256xf32>
    %624 = arith.addf %623, %622 : vector<16x256xf32>
    %625 = arith.mulf %586, %624 : vector<16x256xf32>
    %626 = arith.truncf %625 : vector<16x256xf32> to vector<16x256xbf16>
    %c0_159 = arith.constant 0 : index
    %c0_160 = arith.constant 0 : index
    %627 = vector.load %arg17[%c0_159, %c0_160] : memref<256x512xbf16, #tpu.memory_space<vmem>>, vector<256x512xbf16>
    %cst_161 = arith.constant dense<0.000000e+00> : vector<16x512xf32>
    %628 = tpu.matmul %626, %627, %cst_161 {dimension_numbers = #tpu.dot_dimension_numbers<[1], [0], [0], [1], [0, 0, 1, 1], [], []>} : vector<16x256xbf16>, vector<256x512xbf16>, vector<16x512xf32> -> vector<16x512xf32>
    %c0_162 = arith.constant 0 : index
    %c0_163 = arith.constant 0 : index
    %629 = vector.load %arg12[%c0_162, %c0_163] : memref<1x512xf32, #tpu.memory_space<vmem>>, vector<1x512xf32>
    %630 = vector.broadcast %629 : vector<1x512xf32> to vector<16x512xf32>
    %631 = arith.addf %628, %630 : vector<16x512xf32>
    %cst_164 = arith.constant 5.000000e-01 : f32
    %632 = vector.broadcast %cst_164 : f32 to vector<16x512xf32>
    %633 = arith.mulf %632, %631 : vector<16x512xf32>
    %cst_165 = arith.constant 0.707106769 : f32
    %634 = vector.broadcast %cst_165 : f32 to vector<16x512xf32>
    %635 = arith.mulf %631, %634 : vector<16x512xf32>
    %cst_166 = arith.constant 0.000000e+00 : f32
    %636 = vector.broadcast %cst_166 : f32 to vector<16x512xf32>
    %637 = arith.cmpf oge, %635, %636 : vector<16x512xf32>
    %cst_167 = arith.constant 1.000000e+00 : f32
    %cst_168 = arith.constant -1.000000e+00 : f32
    %638 = vector.broadcast %cst_167 : f32 to vector<16x512xf32>
    %639 = vector.broadcast %cst_168 : f32 to vector<16x512xf32>
    %640 = arith.select %637, %638, %639 : vector<16x512xi1>, vector<16x512xf32>
    %641 = math.absf %635 : vector<16x512xf32>
    %cst_169 = arith.constant 0.327591091 : f32
    %642 = vector.broadcast %cst_169 : f32 to vector<16x512xf32>
    %643 = arith.mulf %642, %641 : vector<16x512xf32>
    %cst_170 = arith.constant 1.000000e+00 : f32
    %644 = vector.broadcast %cst_170 : f32 to vector<16x512xf32>
    %645 = arith.addf %644, %643 : vector<16x512xf32>
    %cst_171 = arith.constant 1.000000e+00 : f32
    %646 = vector.broadcast %cst_171 : f32 to vector<16x512xf32>
    %647 = arith.divf %646, %645 : vector<16x512xf32>
    %cst_172 = arith.constant 1.06140542 : f32
    %648 = vector.broadcast %cst_172 : f32 to vector<16x512xf32>
    %649 = arith.mulf %648, %647 : vector<16x512xf32>
    %cst_173 = arith.constant -1.45315206 : f32
    %650 = vector.broadcast %cst_173 : f32 to vector<16x512xf32>
    %651 = arith.addf %649, %650 : vector<16x512xf32>
    %652 = arith.mulf %651, %647 : vector<16x512xf32>
    %cst_174 = arith.constant 1.42141378 : f32
    %653 = vector.broadcast %cst_174 : f32 to vector<16x512xf32>
    %654 = arith.addf %652, %653 : vector<16x512xf32>
    %655 = arith.mulf %654, %647 : vector<16x512xf32>
    %cst_175 = arith.constant -0.284496725 : f32
    %656 = vector.broadcast %cst_175 : f32 to vector<16x512xf32>
    %657 = arith.addf %655, %656 : vector<16x512xf32>
    %658 = arith.mulf %657, %647 : vector<16x512xf32>
    %cst_176 = arith.constant 0.254829586 : f32
    %659 = vector.broadcast %cst_176 : f32 to vector<16x512xf32>
    %660 = arith.addf %658, %659 : vector<16x512xf32>
    %661 = arith.mulf %660, %647 : vector<16x512xf32>
    %cst_177 = arith.constant 0.000000e+00 : f32
    %662 = vector.broadcast %cst_177 : f32 to vector<16x512xf32>
    %663 = arith.subf %662, %641 : vector<16x512xf32>
    %664 = arith.mulf %663, %641 : vector<16x512xf32>
    %665 = math.exp %664 : vector<16x512xf32>
    %666 = arith.mulf %661, %665 : vector<16x512xf32>
    %cst_178 = arith.constant 1.000000e+00 : f32
    %667 = vector.broadcast %cst_178 : f32 to vector<16x512xf32>
    %668 = arith.subf %667, %666 : vector<16x512xf32>
    %669 = arith.mulf %640, %668 : vector<16x512xf32>
    %cst_179 = arith.constant 1.000000e+00 : f32
    %670 = vector.broadcast %cst_179 : f32 to vector<16x512xf32>
    %671 = arith.addf %670, %669 : vector<16x512xf32>
    %672 = arith.mulf %633, %671 : vector<16x512xf32>
    %673 = arith.truncf %672 : vector<16x512xf32> to vector<16x512xbf16>
    %c0_180 = arith.constant 0 : index
    %c0_181 = arith.constant 0 : index
    %674 = vector.load %arg18[%c0_180, %c0_181] : memref<512x128xbf16, #tpu.memory_space<vmem>>, vector<512x128xbf16>
    %cst_182 = arith.constant dense<0.000000e+00> : vector<16x128xf32>
    %675 = tpu.matmul %673, %674, %cst_182 {dimension_numbers = #tpu.dot_dimension_numbers<[1], [0], [0], [1], [0, 0, 1, 1], [], []>} : vector<16x512xbf16>, vector<512x128xbf16>, vector<16x128xf32> -> vector<16x128xf32>
    %c0_183 = arith.constant 0 : index
    %c0_184 = arith.constant 0 : index
    %676 = vector.load %arg13[%c0_183, %c0_184] : memref<1x128xf32, #tpu.memory_space<vmem>>, vector<1x128xf32>
    %677 = vector.broadcast %676 : vector<1x128xf32> to vector<16x128xf32>
    %678 = arith.addf %675, %677 : vector<16x128xf32>
    %cst_185 = arith.constant 5.000000e-01 : f32
    %679 = vector.broadcast %cst_185 : f32 to vector<16x128xf32>
    %680 = arith.mulf %679, %678 : vector<16x128xf32>
    %cst_186 = arith.constant 0.707106769 : f32
    %681 = vector.broadcast %cst_186 : f32 to vector<16x128xf32>
    %682 = arith.mulf %678, %681 : vector<16x128xf32>
    %cst_187 = arith.constant 0.000000e+00 : f32
    %683 = vector.broadcast %cst_187 : f32 to vector<16x128xf32>
    %684 = arith.cmpf oge, %682, %683 : vector<16x128xf32>
    %cst_188 = arith.constant 1.000000e+00 : f32
    %cst_189 = arith.constant -1.000000e+00 : f32
    %685 = vector.broadcast %cst_188 : f32 to vector<16x128xf32>
    %686 = vector.broadcast %cst_189 : f32 to vector<16x128xf32>
    %687 = arith.select %684, %685, %686 : vector<16x128xi1>, vector<16x128xf32>
    %688 = math.absf %682 : vector<16x128xf32>
    %cst_190 = arith.constant 0.327591091 : f32
    %689 = vector.broadcast %cst_190 : f32 to vector<16x128xf32>
    %690 = arith.mulf %689, %688 : vector<16x128xf32>
    %cst_191 = arith.constant 1.000000e+00 : f32
    %691 = vector.broadcast %cst_191 : f32 to vector<16x128xf32>
    %692 = arith.addf %691, %690 : vector<16x128xf32>
    %cst_192 = arith.constant 1.000000e+00 : f32
    %693 = vector.broadcast %cst_192 : f32 to vector<16x128xf32>
    %694 = arith.divf %693, %692 : vector<16x128xf32>
    %cst_193 = arith.constant 1.06140542 : f32
    %695 = vector.broadcast %cst_193 : f32 to vector<16x128xf32>
    %696 = arith.mulf %695, %694 : vector<16x128xf32>
    %cst_194 = arith.constant -1.45315206 : f32
    %697 = vector.broadcast %cst_194 : f32 to vector<16x128xf32>
    %698 = arith.addf %696, %697 : vector<16x128xf32>
    %699 = arith.mulf %698, %694 : vector<16x128xf32>
    %cst_195 = arith.constant 1.42141378 : f32
    %700 = vector.broadcast %cst_195 : f32 to vector<16x128xf32>
    %701 = arith.addf %699, %700 : vector<16x128xf32>
    %702 = arith.mulf %701, %694 : vector<16x128xf32>
    %cst_196 = arith.constant -0.284496725 : f32
    %703 = vector.broadcast %cst_196 : f32 to vector<16x128xf32>
    %704 = arith.addf %702, %703 : vector<16x128xf32>
    %705 = arith.mulf %704, %694 : vector<16x128xf32>
    %cst_197 = arith.constant 0.254829586 : f32
    %706 = vector.broadcast %cst_197 : f32 to vector<16x128xf32>
    %707 = arith.addf %705, %706 : vector<16x128xf32>
    %708 = arith.mulf %707, %694 : vector<16x128xf32>
    %cst_198 = arith.constant 0.000000e+00 : f32
    %709 = vector.broadcast %cst_198 : f32 to vector<16x128xf32>
    %710 = arith.subf %709, %688 : vector<16x128xf32>
    %711 = arith.mulf %710, %688 : vector<16x128xf32>
    %712 = math.exp %711 : vector<16x128xf32>
    %713 = arith.mulf %708, %712 : vector<16x128xf32>
    %cst_199 = arith.constant 1.000000e+00 : f32
    %714 = vector.broadcast %cst_199 : f32 to vector<16x128xf32>
    %715 = arith.subf %714, %713 : vector<16x128xf32>
    %716 = arith.mulf %687, %715 : vector<16x128xf32>
    %cst_200 = arith.constant 1.000000e+00 : f32
    %717 = vector.broadcast %cst_200 : f32 to vector<16x128xf32>
    %718 = arith.addf %717, %716 : vector<16x128xf32>
    %719 = arith.mulf %680, %718 : vector<16x128xf32>
    %720 = arith.truncf %719 : vector<16x128xf32> to vector<16x128xbf16>
    %c0_201 = arith.constant 0 : index
    %c0_202 = arith.constant 0 : index
    %721 = vector.load %arg19[%c0_201, %c0_202] : memref<128x128xbf16, #tpu.memory_space<vmem>>, vector<128x128xbf16>
    %cst_203 = arith.constant dense<0.000000e+00> : vector<16x128xf32>
    %722 = tpu.matmul %720, %721, %cst_203 {dimension_numbers = #tpu.dot_dimension_numbers<[1], [0], [0], [1], [0, 0, 1, 1], [], []>} : vector<16x128xbf16>, vector<128x128xbf16>, vector<16x128xf32> -> vector<16x128xf32>
    %c0_204 = arith.constant 0 : index
    %c0_205 = arith.constant 0 : index
    %723 = vector.load %arg14[%c0_204, %c0_205] : memref<1x128xf32, #tpu.memory_space<vmem>>, vector<1x128xf32>
    %724 = vector.broadcast %723 : vector<1x128xf32> to vector<16x128xf32>
    %725 = arith.addf %722, %724 : vector<16x128xf32>
    %726 = tpu.iota {dimensions = array<i32: 1>} : vector<16x128xi32>
    %c4_i32 = arith.constant 4 : i32
    %727 = vector.broadcast %c4_i32 : i32 to vector<16x128xi32>
    %728 = arith.cmpi slt, %726, %727 : vector<16x128xi32>
    %cst_206 = arith.constant -5.000000e+01 : f32
    %cst_207 = arith.constant -1.000000e+02 : f32
    %729 = vector.broadcast %cst_206 : f32 to vector<16x128xf32>
    %730 = vector.broadcast %cst_207 : f32 to vector<16x128xf32>
    %731 = arith.select %728, %729, %730 : vector<16x128xi1>, vector<16x128xf32>
    %c4_i32_208 = arith.constant 4 : i32
    %732 = vector.broadcast %c4_i32_208 : i32 to vector<16x128xi32>
    %733 = arith.cmpi slt, %726, %732 : vector<16x128xi32>
    %cst_209 = arith.constant 5.000000e+01 : f32
    %cst_210 = arith.constant 1.000000e+02 : f32
    %734 = vector.broadcast %cst_209 : f32 to vector<16x128xf32>
    %735 = vector.broadcast %cst_210 : f32 to vector<16x128xf32>
    %736 = arith.select %733, %734, %735 : vector<16x128xi1>, vector<16x128xf32>
    %737 = arith.maximumf %731, %725 : vector<16x128xf32>
    %738 = arith.minimumf %736, %737 : vector<16x128xf32>
    %c0_211 = arith.constant 0 : index
    %c0_212 = arith.constant 0 : index
    %739 = vector.load %arg15[%c0_211, %c0_212] : memref<16x128xf32, #tpu.memory_space<vmem>>, vector<16x128xf32>
    tpu.vector_store %arg15[%c0_211, %c0_212], %738 {strides = array<i32>} : memref<16x128xf32, #tpu.memory_space<vmem>>, vector<16x128xf32>,
    return
  }
}

</mosaic_0001>

<llo_original>
// kernel: actor_critic_lstm_forward.1
$region0: #{actor_critic_lstm_forward.1}
  #allocation0 [shape = 'u32[]', space=smem, size = 0x4, offset = 0x4, fixed_abs, tag = 'smem constant byte address 0x4 - core index']
  #allocation1 [shape = 'u32[144,128]{1,0:T(1,128)}', space=vmem, size = 0x12000, scoped, tag = 'internal scratch']
  #allocation2 [shape = 'bf16[128,256]{1,0:T(16,128)(2,1)}', space=vmem, size = 0x10000, scoped, tag = 'scratch operand']
  #allocation3 [shape = 'bf16[256,512]{1,0:T(16,128)(2,1)}', space=vmem, size = 0x40000, scoped, tag = 'scratch operand']
  #allocation4 [shape = 'bf16[512,128]{1,0:T(16,128)(2,1)}', space=vmem, size = 0x20000, scoped, tag = 'scratch operand']
  #allocation5 [shape = 'bf16[128,128]{1,0:T(16,128)(2,1)}', space=vmem, size = 0x8000, scoped, tag = 'scratch operand']
  #allocation6 [shape = 's32[4]{0}', space=sflag, size = 0x10, scoped, tag = 'scratch operand']
  #allocation11 [shape = 's32[]', space=sflag, size = 0x4, offset = 0, fixed_abs, tag = 'sflag constant byte address 0x0 - dummy sync flag']
  #allocation12 [shape = 's32[]', space=sflag, size = 0x4, offset = 0, fixed_abs, tag = 'sflag constant byte address 0x0 - dummy sync flag']
  #allocation14 [shape = 's32[]', space=sflag, size = 0x4, offset = 0, fixed_abs, tag = 'sflag constant byte address 0x0 - dummy sync flag']
  #allocation15 [shape = 's32[]', space=sflag, size = 0x4, offset = 0, fixed_abs, tag = 'sflag constant byte address 0x0 - dummy sync flag']
  #allocation16 [shape = 'u32[]', space=smem, size = 0x4, offset = 0x44, fixed_abs, tag = 'smem constant byte address 0x44 - assertion arg 0']
  #allocation17 [shape = 'u32[]', space=smem, size = 0x4, offset = 0x48, fixed_abs, tag = 'smem constant byte address 0x48 - assertion arg 1']
  #allocation18 [shape = 's32[]', space=sflag, size = 0x4, offset = 0, fixed_abs, tag = 'sflag constant byte address 0x0 - dummy sync flag']
  #allocation19 [shape = 's32[]', space=sflag, size = 0x4, offset = 0, fixed_abs, tag = 'sflag constant byte address 0x0 - dummy sync flag']
  %s0 = inlined_call_operand.vmem [shape: f32[128,16], index: 0, kind: input, shape index: {}]
  %s1 = inlined_call_operand.vmem [shape: bf16[16,512], index: 1, kind: input, shape index: {}]
  %s2 = inlined_call_operand.vmem [shape: bf16[128,512], index: 2, kind: input, shape index: {}]
  %s3 = inlined_call_operand.vmem [shape: f32[1,512], index: 3, kind: input, shape index: {}]
  %s4 = inlined_call_operand.hbm [shape: bf16[128,512], index: 4, kind: input, shape index: {}]
  %s5 = inlined_call_operand.hbm [shape: bf16[128,512], index: 5, kind: input, shape index: {}]
  %s6 = inlined_call_operand.vmem [shape: f32[1,512], index: 6, kind: input, shape index: {}]
  %s7 = inlined_call_operand.vmem [shape: bf16[128,256], index: 7, kind: input, shape index: {}]
  %s8 = inlined_call_operand.hbm [shape: bf16[256,512], index: 8, kind: input, shape index: {}]
  %s9 = inlined_call_operand.hbm [shape: bf16[512,128], index: 9, kind: input, shape index: {}]
  %s10 = inlined_call_operand.hbm [shape: bf16[128,128], index: 10, kind: input, shape index: {}]
  %s11 = inlined_call_operand.vmem [shape: f32[1,256], index: 11, kind: input, shape index: {}]
  %s12 = inlined_call_operand.vmem [shape: f32[1,512], index: 12, kind: input, shape index: {}]
  %s13 = inlined_call_operand.vmem [shape: f32[1,128], index: 13, kind: input, shape index: {}]
  %s14 = inlined_call_operand.vmem [shape: f32[1,128], index: 14, kind: input, shape index: {}]
  %s15 = inlined_call_operand.vmem [shape: f32[16,128], index: 15, kind: output, shape index: {}]
  %s16 = sld [smem:[#allocation0]]
  $region107: #{actor_critic_lstm_forward.1} parent=0
    _
  %s18 = ssub.s32 1, %s16
  %s19 = scalar_select 0, %s18, %s16
  $region1: #{actor_critic_lstm_forward.1} parent=0
    #allocation7 [shape = 'u8[131072]{0}', space=vmem, size = 0x20000, scoped, tag = 'input window, operand 4, single buffered']
    #allocation8 [shape = 's32[1]{0}', space=sflag, size = 0x4, scoped, tag = 'scoped memory for actor_critic_lstm_forward.1']
    #allocation9 [shape = 'u8[131072]{0}', space=vmem, size = 0x20000, scoped, tag = 'input window, operand 5, single buffered']
    #allocation10 [shape = 's32[1]{0}', space=sflag, size = 0x4, scoped, tag = 'scoped memory for actor_critic_lstm_forward.1']
    #allocation13 [shape = 'u32[9]{0}', space=smem, size = 0x24, scoped, tag = 'DMA stride descriptor']
    %20 = vsyncpa [#allocation8], 0
    %21 = vsyncpa [#allocation10], 0
    // Predicated region
    $region2: #{actor_critic_lstm_forward.1} parent=1 // pred_check
      _
    $region3: #{actor_critic_lstm_forward.1} parent=1 // pred_check_branch
      %23 = sbr.rel (0) target = $region5
    $region4: #{actor_critic_lstm_forward.1} parent=1 // pred_region
      _
    $region5: #{actor_critic_lstm_forward.1} parent=1 // pred_fallthru
      _
    // Predicated region
    $region6: #{actor_critic_lstm_forward.1} parent=1 // pred_check
      _
    $region7: #{actor_critic_lstm_forward.1} parent=1 // pred_check_branch
      %25 = sbr.rel (0) target = $region9
    $region8: #{actor_critic_lstm_forward.1} parent=1 // pred_region
      _
    $region9: #{actor_critic_lstm_forward.1} parent=1 // pred_fallthru
      _
    // Predicated region
    $region10: #{actor_critic_lstm_forward.1} parent=1 // pred_check
      _
    $region11: #{actor_critic_lstm_forward.1} parent=1 // pred_check_branch
      %27 = sbr.rel (0) target = $region13
    $region12: #{actor_critic_lstm_forward.1} parent=1 // pred_region
      _
    $region13: #{actor_critic_lstm_forward.1} parent=1 // pred_fallthru
      _
    // Predicated region
    $region14: #{actor_critic_lstm_forward.1} parent=1 // pred_check
      _
    $region15: #{actor_critic_lstm_forward.1} parent=1 // pred_check_branch
      %29 = sbr.rel (0) target = $region17
    $region16: #{actor_critic_lstm_forward.1} parent=1 // pred_region
      _
    $region17: #{actor_critic_lstm_forward.1} parent=1 // pred_fallthru
      _
    // Predicated region
    $region18: #{actor_critic_lstm_forward.1} parent=1 // pred_check
      _
    $region19: #{actor_critic_lstm_forward.1} parent=1 // pred_check_branch
      %31 = sbr.rel (0) target = $region21
    $region20: #{actor_critic_lstm_forward.1} parent=1 // pred_region
      %s33 = ssub.s32 4096, 4096
      %34 = vsyncadd [#allocation8], %s33
      %s35 = sshll.u32 [#allocation7], 4
      %s36 = int_to_ptr.vmem [resolvable:$true] %s35
      %41 = dma.hbm_to_vmem [thread:$0]  %s4, 4096, %s36, [#allocation8], 256, 256, 16
    $region21: #{actor_critic_lstm_forward.1} parent=1 // pred_fallthru
      _
    // Predicated region
    $region22: #{actor_critic_lstm_forward.1} parent=1 // pred_check
      _
    $region23: #{actor_critic_lstm_forward.1} parent=1 // pred_check_branch
      %43 = sbr.rel (0) target = $region25
    $region24: #{actor_critic_lstm_forward.1} parent=1 // pred_region
      %s45 = ssub.s32 4096, 4096
      %46 = vsyncadd [#allocation10], %s45
      %s47 = sshll.u32 [#allocation9], 4
      %s48 = int_to_ptr.vmem [resolvable:$true] %s47
      %53 = dma.hbm_to_vmem [thread:$0]  %s5, 4096, %s48, [#allocation10], 256, 256, 16
    $region25: #{actor_critic_lstm_forward.1} parent=1 // pred_fallthru
      _
    // Predicated region
    $region26: #{actor_critic_lstm_forward.1} parent=1 // pred_check
      _
    $region27: #{actor_critic_lstm_forward.1} parent=1 // pred_check_branch
      %55 = sbr.rel (0) target = $region29
    $region28: #{actor_critic_lstm_forward.1} parent=1 // pred_region
      _
    $region29: #{actor_critic_lstm_forward.1} parent=1 // pred_fallthru
      _
    // Predicated region
    $region30: #{actor_critic_lstm_forward.1} parent=1 // pred_check
      _
    $region31: #{actor_critic_lstm_forward.1} parent=1 // pred_check_branch
      %57 = sbr.rel (0) target = $region33
    $region32: #{actor_critic_lstm_forward.1} parent=1 // pred_region
      _
    $region33: #{actor_critic_lstm_forward.1} parent=1 // pred_fallthru
      _
    // Predicated region
    $region34: #{actor_critic_lstm_forward.1} parent=1 // pred_check
      _
    $region35: #{actor_critic_lstm_forward.1} parent=1 // pred_check_branch
      %59 = sbr.rel (0) target = $region37
    $region36: #{actor_critic_lstm_forward.1} parent=1 // pred_region
      _
    $region37: #{actor_critic_lstm_forward.1} parent=1 // pred_fallthru
      _
    // Predicated region
    $region38: #{actor_critic_lstm_forward.1} parent=1 // pred_check
      _
    $region39: #{actor_critic_lstm_forward.1} parent=1 // pred_check_branch
      %61 = sbr.rel (0) target = $region41
    $region40: #{actor_critic_lstm_forward.1} parent=1 // pred_region
      _
    $region41: #{actor_critic_lstm_forward.1} parent=1 // pred_fallthru
      _
    // Predicated region
    $region42: #{actor_critic_lstm_forward.1} parent=1 // pred_check
      _
    $region43: #{actor_critic_lstm_forward.1} parent=1 // pred_check_branch
      %63 = sbr.rel (0) target = $region45
    $region44: #{actor_critic_lstm_forward.1} parent=1 // pred_region
      _
    $region45: #{actor_critic_lstm_forward.1} parent=1 // pred_fallthru
      _
    // Predicated region
    $region46: #{actor_critic_lstm_forward.1} parent=1 // pred_check
      _
    $region47: #{actor_critic_lstm_forward.1} parent=1 // pred_check_branch
      %65 = sbr.rel (0) target = $region49
    $region48: #{actor_critic_lstm_forward.1} parent=1 // pred_region
      %66 = dma.done [#allocation8], 4096
    $region49: #{actor_critic_lstm_forward.1} parent=1 // pred_fallthru
      _
    // Predicated region
    $region50: #{actor_critic_lstm_forward.1} parent=1 // pred_check
      _
    $region51: #{actor_critic_lstm_forward.1} parent=1 // pred_check_branch
      %68 = sbr.rel (0) target = $region53
    $region52: #{actor_critic_lstm_forward.1} parent=1 // pred_region
      %69 = dma.done [#allocation10], 4096
    $region53: #{actor_critic_lstm_forward.1} parent=1 // pred_fallthru
      _
    %p72 = scmp.lt.u32.totalorder 4, 8
    %p73 = pneg %p72
    // Predicated region
    $region54: #{actor_critic_lstm_forward.1} parent=1 // pred_check
      _
    $region55: #{actor_critic_lstm_forward.1} parent=1 // pred_check_branch
      %75 = sbr.rel (%p72) target = $region57
    $region56: #{actor_critic_lstm_forward.1} parent=1 // pred_region
      %s152 = sand.u32 4, 7
      %p153 = scmp.eq.s32.totalorder %s152, 0
      %p154 = pneg %p153
      // Predicated region
      $region69: #{actor_critic_lstm_forward.1} parent=56 // pred_check
        _
      $region70: #{actor_critic_lstm_forward.1} parent=56 // pred_check_branch
        %156 = sbr.rel (%p153) target = $region72
      $region71: #{actor_critic_lstm_forward.1} parent=56 // pred_region
        %s157 = sand.u32 4, 7
        %s158 = ssub.s32 4, %s157
        %s159 = scalar_lea.vmem %s7, %s158
        %s160 = ssub.s32 4, %s157
        %s161 = scalar_lea.vmem [#allocation2], %s160
        loop: start=0, step=1, limit=1
        $region73: #{actor_critic_lstm_forward.1} parent=71 // loop_pre_header
          _
        $region74: #{actor_critic_lstm_forward.1} parent=71 // loop_header
          %s163 = sphi 0, %s167
          %p164 = scmp.ge.s32.totalorder %s163, 1
          %s168 = sphi %s7, %s7
          %s169 = sphi [#allocation2], [#allocation2]
        $region75: #{actor_critic_lstm_forward.1} parent=71 // loop_header_branch
          %166 = sbr.rel (%p164) target = $region79
        $region76: #{actor_critic_lstm_forward.1} parent=71 // loop_body
          _
        $region77: #{actor_critic_lstm_forward.1} parent=71 // loop_footer
          %s167 = sadd.s32 1, %s163
        $region78: #{actor_critic_lstm_forward.1} parent=71 // loop_footer_branch
          %162 = sbr.rel target = $region74
        $region79: #{actor_critic_lstm_forward.1} parent=71 // loop_exit
          _
        %s170 = sshllo.u32 0, %s157
        loop: start=0, step=1, limit=1
        $region80: #{actor_critic_lstm_forward.1} parent=71 // loop_pre_header
          _
        $region81: #{actor_critic_lstm_forward.1} parent=71 // loop_header
          %s172 = sphi 0, %s176
          %p173 = scmp.ge.s32.totalorder %s172, 1
          %s177 = sphi %s159, %s159
          %s178 = sphi %s161, %s161
        $region82: #{actor_critic_lstm_forward.1} parent=71 // loop_header_branch
          %175 = sbr.rel (%p173) target = $region86
        $region83: #{actor_critic_lstm_forward.1} parent=71 // loop_body
          %v179 = vld [vmem:[%s177] sm:%s170]
          %180 = vst [vmem:[%s178] sm:%s170] %v179
          %v181 = vld [vmem:[%s177 + $0x8] sm:%s170]
          %182 = vst [vmem:[%s178 + $0x4] sm:%s170] %v181
          %v183 = vld [vmem:[%s177 + $0x4] sm:%s170]
          %184 = vst [vmem:[%s178 + $0x8] sm:%s170] %v183
          %v185 = vld [vmem:[%s177 + $0xc] sm:%s170]
          %186 = vst [vmem:[%s178 + $0xc] sm:%s170] %v185
          %v187 = vld [vmem:[%s177 + $0x10] sm:%s170]
          %188 = vst [vmem:[%s178 + $0x10] sm:%s170] %v187
          %v189 = vld [vmem:[%s177 + $0x18] sm:%s170]
          %190 = vst [vmem:[%s178 + $0x14] sm:%s170] %v189
          %v191 = vld [vmem:[%s177 + $0x14] sm:%s170]
          %192 = vst [vmem:[%s178 + $0x18] sm:%s170] %v191
          %v193 = vld [vmem:[%s177 + $0x1c] sm:%s170]
          %194 = vst [vmem:[%s178 + $0x1c] sm:%s170] %v193
          %v195 = vld [vmem:[%s177 + $0x20] sm:%s170]
          %196 = vst [vmem:[%s178 + $0x20] sm:%s170] %v195
          %v197 = vld [vmem:[%s177 + $0x28] sm:%s170]
          %198 = vst [vmem:[%s178 + $0x24] sm:%s170] %v197
          %v199 = vld [vmem:[%s177 + $0x24] sm:%s170]
          %200 = vst [vmem:[%s178 + $0x28] sm:%s170] %v199
          %v201 = vld [vmem:[%s177 + $0x2c] sm:%s170]
          %202 = vst [vmem:[%s178 + $0x2c] sm:%s170] %v201
          %v203 = vld [vmem:[%s177 + $0x30] sm:%s170]
          %204 = vst [vmem:[%s178 + $0x30] sm:%s170] %v203
          %v205 = vld [vmem:[%s177 + $0x38] sm:%s170]
          %206 = vst [vmem:[%s178 + $0x34] sm:%s170] %v205
          %v207 = vld [vmem:[%s177 + $0x34] sm:%s170]
          %208 = vst [vmem:[%s178 + $0x38] sm:%s170] %v207
          %v209 = vld [vmem:[%s177 + $0x3c] sm:%s170]
          %210 = vst [vmem:[%s178 + $0x3c] sm:%s170] %v209
          %v211 = vld [vmem:[%s177 + $0x40] sm:%s170]
          %212 = vst [vmem:[%s178 + $0x40] sm:%s170] %v211
          %v213 = vld [vmem:[%s177 + $0x48] sm:%s170]
          %214 = vst [vmem:[%s178 + $0x44] sm:%s170] %v213
          %v215 = vld [vmem:[%s177 + $0x44] sm:%s170]
          %216 = vst [vmem:[%s178 + $0x48] sm:%s170] %v215
          %v217 = vld [vmem:[%s177 + $0x4c] sm:%s170]
          %218 = vst [vmem:[%s178 + $0x4c] sm:%s170] %v217
          %v219 = vld [vmem:[%s177 + $0x50] sm:%s170]
          %220 = vst [vmem:[%s178 + $0x50] sm:%s170] %v219
          %v221 = vld [vmem:[%s177 + $0x58] sm:%s170]
          %222 = vst [vmem:[%s178 + $0x54] sm:%s170] %v221
          %v223 = vld [vmem:[%s177 + $0x54] sm:%s170]
          %224 = vst [vmem:[%s178 + $0x58] sm:%s170] %v223
          %v225 = vld [vmem:[%s177 + $0x5c] sm:%s170]
          %226 = vst [vmem:[%s178 + $0x5c] sm:%s170] %v225
          %v227 = vld [vmem:[%s177 + $0x60] sm:%s170]
          %228 = vst [vmem:[%s178 + $0x60] sm:%s170] %v227
          %v229 = vld [vmem:[%s177 + $0x68] sm:%s170]
          %230 = vst [vmem:[%s178 + $0x64] sm:%s170] %v229
          %v231 = vld [vmem:[%s177 + $0x64] sm:%s170]
          %232 = vst [vmem:[%s178 + $0x68] sm:%s170] %v231
          %v233 = vld [vmem:[%s177 + $0x6c] sm:%s170]
          %234 = vst [vmem:[%s178 + $0x6c] sm:%s170] %v233
          %v235 = vld [vmem:[%s177 + $0x70] sm:%s170]
          %236 = vst [vmem:[%s178 + $0x70] sm:%s170] %v235
          %v237 = vld [vmem:[%s177 + $0x78] sm:%s170]
          %238 = vst [vmem:[%s178 + $0x74] sm:%s170] %v237
          %v239 = vld [vmem:[%s177 + $0x74] sm:%s170]
          %240 = vst [vmem:[%s178 + $0x78] sm:%s170] %v239
          %v241 = vld [vmem:[%s177 + $0x7c] sm:%s170]
          %242 = vst [vmem:[%s178 + $0x7c] sm:%s170] %v241
        $region84: #{actor_critic_lstm_forward.1} parent=71 // loop_footer
          %s176 = sadd.s32 1, %s172
        $region85: #{actor_critic_lstm_forward.1} parent=71 // loop_footer_branch
          %171 = sbr.rel target = $region81
        $region86: #{actor_critic_lstm_forward.1} parent=71 // loop_exit
          _
      $region72: #{actor_critic_lstm_forward.1} parent=56 // pred_fallthru
        _
    $region57: #{actor_critic_lstm_forward.1} parent=1 // pred_fallthru
      _
    // Predicated region
    $region58: #{actor_critic_lstm_forward.1} parent=1 // pred_check
      %p76 = pneg %p72
    $region59: #{actor_critic_lstm_forward.1} parent=1 // pred_check_branch
      %78 = sbr.rel (%p76) target = $region61
    $region60: #{actor_critic_lstm_forward.1} parent=1 // pred_region
      %s79 = sshllo.u32 0, 4
      loop: start=0, step=1, limit=1
      $region62: #{actor_critic_lstm_forward.1} parent=60 // loop_pre_header
        _
      $region63: #{actor_critic_lstm_forward.1} parent=60 // loop_header
        %s81 = sphi 0, %s85
        %p82 = scmp.ge.s32.totalorder %s81, 1
        %s86 = sphi %s7, %s7
        %s87 = sphi [#allocation2], [#allocation2]
      $region64: #{actor_critic_lstm_forward.1} parent=60 // loop_header_branch
        %84 = sbr.rel (%p82) target = $region68
      $region65: #{actor_critic_lstm_forward.1} parent=60 // loop_body
        %v88 = vld [vmem:[%s86] sm:%s79]
        %89 = vst [vmem:[%s87] sm:%s79] %v88
        %v90 = vld [vmem:[%s86 + $0x8] sm:%s79]
        %91 = vst [vmem:[%s87 + $0x4] sm:%s79] %v90
        %v92 = vld [vmem:[%s86 + $0x4] sm:%s79]
        %93 = vst [vmem:[%s87 + $0x8] sm:%s79] %v92
        %v94 = vld [vmem:[%s86 + $0xc] sm:%s79]
        %95 = vst [vmem:[%s87 + $0xc] sm:%s79] %v94
        %v96 = vld [vmem:[%s86 + $0x10] sm:%s79]
        %97 = vst [vmem:[%s87 + $0x10] sm:%s79] %v96
        %v98 = vld [vmem:[%s86 + $0x18] sm:%s79]
        %99 = vst [vmem:[%s87 + $0x14] sm:%s79] %v98
        %v100 = vld [vmem:[%s86 + $0x14] sm:%s79]
        %101 = vst [vmem:[%s87 + $0x18] sm:%s79] %v100
        %v102 = vld [vmem:[%s86 + $0x1c] sm:%s79]
        %103 = vst [vmem:[%s87 + $0x1c] sm:%s79] %v102
        %v104 = vld [vmem:[%s86 + $0x20] sm:%s79]
        %105 = vst [vmem:[%s87 + $0x20] sm:%s79] %v104
        %v106 = vld [vmem:[%s86 + $0x28] sm:%s79]
        %107 = vst [vmem:[%s87 + $0x24] sm:%s79] %v106
        %v108 = vld [vmem:[%s86 + $0x24] sm:%s79]
        %109 = vst [vmem:[%s87 + $0x28] sm:%s79] %v108
        %v110 = vld [vmem:[%s86 + $0x2c] sm:%s79]
        %111 = vst [vmem:[%s87 + $0x2c] sm:%s79] %v110
        %v112 = vld [vmem:[%s86 + $0x30] sm:%s79]
        %113 = vst [vmem:[%s87 + $0x30] sm:%s79] %v112
        %v114 = vld [vmem:[%s86 + $0x38] sm:%s79]
        %115 = vst [vmem:[%s87 + $0x34] sm:%s79] %v114
        %v116 = vld [vmem:[%s86 + $0x34] sm:%s79]
        %117 = vst [vmem:[%s87 + $0x38] sm:%s79] %v116
        %v118 = vld [vmem:[%s86 + $0x3c] sm:%s79]
        %119 = vst [vmem:[%s87 + $0x3c] sm:%s79] %v118
        %v120 = vld [vmem:[%s86 + $0x40] sm:%s79]
        %121 = vst [vmem:[%s87 + $0x40] sm:%s79] %v120
        %v122 = vld [vmem:[%s86 + $0x48] sm:%s79]
        %123 = vst [vmem:[%s87 + $0x44] sm:%s79] %v122
        %v124 = vld [vmem:[%s86 + $0x44] sm:%s79]
        %125 = vst [vmem:[%s87 + $0x48] sm:%s79] %v124
        %v126 = vld [vmem:[%s86 + $0x4c] sm:%s79]
        %127 = vst [vmem:[%s87 + $0x4c] sm:%s79] %v126
        %v128 = vld [vmem:[%s86 + $0x50] sm:%s79]
        %129 = vst [vmem:[%s87 + $0x50] sm:%s79] %v128
        %v130 = vld [vmem:[%s86 + $0x58] sm:%s79]
        %131 = vst [vmem:[%s87 + $0x54] sm:%s79] %v130
        %v132 = vld [vmem:[%s86 + $0x54] sm:%s79]
        %133 = vst [vmem:[%s87 + $0x58] sm:%s79] %v132
        %v134 = vld [vmem:[%s86 + $0x5c] sm:%s79]
        %135 = vst [vmem:[%s87 + $0x5c] sm:%s79] %v134
        %v136 = vld [vmem:[%s86 + $0x60] sm:%s79]
        %137 = vst [vmem:[%s87 + $0x60] sm:%s79] %v136
        %v138 = vld [vmem:[%s86 + $0x68] sm:%s79]
        %139 = vst [vmem:[%s87 + $0x64] sm:%s79] %v138
        %v140 = vld [vmem:[%s86 + $0x64] sm:%s79]
        %141 = vst [vmem:[%s87 + $0x68] sm:%s79] %v140
        %v142 = vld [vmem:[%s86 + $0x6c] sm:%s79]
        %143 = vst [vmem:[%s87 + $0x6c] sm:%s79] %v142
        %v144 = vld [vmem:[%s86 + $0x70] sm:%s79]
        %145 = vst [vmem:[%s87 + $0x70] sm:%s79] %v144
        %v146 = vld [vmem:[%s86 + $0x78] sm:%s79]
        %147 = vst [vmem:[%s87 + $0x74] sm:%s79] %v146
        %v148 = vld [vmem:[%s86 + $0x74] sm:%s79]
        %149 = vst [vmem:[%s87 + $0x78] sm:%s79] %v148
        %v150 = vld [vmem:[%s86 + $0x7c] sm:%s79]
        %151 = vst [vmem:[%s87 + $0x7c] sm:%s79] %v150
      $region66: #{actor_critic_lstm_forward.1} parent=60 // loop_footer
        %s85 = sadd.s32 1, %s81
      $region67: #{actor_critic_lstm_forward.1} parent=60 // loop_footer_branch
        %80 = sbr.rel target = $region63
      $region68: #{actor_critic_lstm_forward.1} parent=60 // loop_exit
        _
    $region61: #{actor_critic_lstm_forward.1} parent=1 // pred_fallthru
      _
    // Predicated region
    $region87: #{actor_critic_lstm_forward.1} parent=1 // pred_check
      _
    $region88: #{actor_critic_lstm_forward.1} parent=1 // pred_check_branch
      %245 = sbr.rel (0) target = $region90
    $region89: #{actor_critic_lstm_forward.1} parent=1 // pred_region
      %246 = vsyncadd [#allocation6], 2048
    $region90: #{actor_critic_lstm_forward.1} parent=1 // pred_fallthru
      _
    %s247 = scalar_lea.sflag [#allocation6], 1
    %s249 = sshll.u32 1, 14
    %s250 = sxor.u32 4294967295, %s249
    %s252 = sld [smem:[#allocation0]]
    %s253 = sadd.s32 2, %s252
    %s255 = sshll.u32 7, 26
    %s256 = sxor.u32 4294967295, %s255
    %s257 = sand.u32 0, %s256
    %s258 = sshll.u32 %s253, 26
    %s259 = sor.u32 %s257, %s258
    %s260 = sshll.u32 [#allocation3], 4
    %s261 = int_to_ptr.vmem [resolvable:$true] %s260
    %264 = sst [smem:[#allocation13]] 512
    %s265 = scalar_lea.smem [#allocation13], 1
    %266 = sst [smem:[%s265]] 512
    %s267 = scalar_lea.smem [#allocation13], 2
    %268 = sst [smem:[%s267]] 4
    %s269 = scalar_lea.smem [#allocation13], 3
    %270 = sst [smem:[%s269]] 64
    %s271 = scalar_lea.smem [#allocation13], 4
    %272 = sst [smem:[%s271]] 128
    %s273 = scalar_lea.smem [#allocation13], 5
    %274 = sst [smem:[%s273]] 2
    %s275 = scalar_lea.smem [#allocation13], 6
    %276 = sst [smem:[%s275]] 256
    %s277 = scalar_lea.smem [#allocation13], 7
    %278 = sst [smem:[%s277]] 64
    %s279 = scalar_lea.smem [#allocation13], 8
    %280 = sst [smem:[%s279]] 4
    %282 = dma.general %s8, 8192, %s261, %s247, [#allocation12], [#allocation13], %s259, 0
    %s283 = scalar_lea.sflag [#allocation6], 2
    // Predicated region
    $region91: #{actor_critic_lstm_forward.1} parent=1 // pred_check
      _
    $region92: #{actor_critic_lstm_forward.1} parent=1 // pred_check_branch
      %285 = sbr.rel target = $region94
    $region93: #{actor_critic_lstm_forward.1} parent=1 // pred_region
      %286 = sst [smem:[#allocation16]] [#allocation15]
      %287 = sst [smem:[#allocation17]] [#allocation14]
    $region94: #{actor_critic_lstm_forward.1} parent=1 // pred_fallthru
      _
    %289 = shalt.err (0)
    %s291 = sshll.u32 [#allocation4], 4
    %s292 = int_to_ptr.vmem [resolvable:$true] %s291
    %294 = dma.hbm_to_vmem [thread:$0]  %s9, 4096, %s292, %s283
    %s295 = scalar_lea.sflag [#allocation6], 3
    // Predicated region
    $region95: #{actor_critic_lstm_forward.1} parent=1 // pred_check
      _
    $region96: #{actor_critic_lstm_forward.1} parent=1 // pred_check_branch
      %297 = sbr.rel target = $region98
    $region97: #{actor_critic_lstm_forward.1} parent=1 // pred_region
      %298 = sst [smem:[#allocation16]] [#allocation19]
      %299 = sst [smem:[#allocation17]] [#allocation18]
    $region98: #{actor_critic_lstm_forward.1} parent=1 // pred_fallthru
      _
    %301 = shalt.err (0)
    %s303 = sshll.u32 [#allocation5], 4
    %s304 = int_to_ptr.vmem [resolvable:$true] %s303
    %306 = dma.hbm_to_vmem [thread:$0]  %s10, 1024, %s304, %s295
    %v307 = vld [vmem:[%s0] sm:$0xff]
    %v308 = vld [vmem:[%s0 + $0x8] sm:$0xff]
    %v309 = vld [vmem:[%s0 + $0x10] sm:$0xff]
    %v310 = vld [vmem:[%s0 + $0x18] sm:$0xff]
    %v311 = vld [vmem:[%s0 + $0x20] sm:$0xff]
    %v312 = vld [vmem:[%s0 + $0x28] sm:$0xff]
    %v313 = vld [vmem:[%s0 + $0x30] sm:$0xff]
    %v314 = vld [vmem:[%s0 + $0x38] sm:$0xff]
    %v315 = vld [vmem:[%s0 + $0x40] sm:$0xff]
    %v316 = vld [vmem:[%s0 + $0x48] sm:$0xff]
    %v317 = vld [vmem:[%s0 + $0x50] sm:$0xff]
    %v318 = vld [vmem:[%s0 + $0x58] sm:$0xff]
    %v319 = vld [vmem:[%s0 + $0x60] sm:$0xff]
    %v320 = vld [vmem:[%s0 + $0x68] sm:$0xff]
    %v321 = vld [vmem:[%s0 + $0x70] sm:$0xff]
    %v322 = vld [vmem:[%s0 + $0x78] sm:$0xff]
    %vm323 = vcmp.ne.f32.partialorder %v307, %v307
    %vm324 = vcmp.ne.f32.partialorder %v308, %v308
    %vm325 = vcmp.ne.f32.partialorder %v309, %v309
    %vm326 = vcmp.ne.f32.partialorder %v310, %v310
    %vm327 = vcmp.ne.f32.partialorder %v311, %v311
    %vm328 = vcmp.ne.f32.partialorder %v312, %v312
    %vm329 = vcmp.ne.f32.partialorder %v313, %v313
    %vm330 = vcmp.ne.f32.partialorder %v314, %v314
    %vm331 = vcmp.ne.f32.partialorder %v315, %v315
    %vm332 = vcmp.ne.f32.partialorder %v316, %v316
    %vm333 = vcmp.ne.f32.partialorder %v317, %v317
    %vm334 = vcmp.ne.f32.partialorder %v318, %v318
    %vm335 = vcmp.ne.f32.partialorder %v319, %v319
    %vm336 = vcmp.ne.f32.partialorder %v320, %v320
    %vm337 = vcmp.ne.f32.partialorder %v321, %v321
    %vm338 = vcmp.ne.f32.partialorder %v322, %v322
    %v339 = vsel %vm323, 0.0, %v307
    %v340 = vsel %vm324, 0.0, %v308
    %v341 = vsel %vm325, 0.0, %v309
    %v342 = vsel %vm326, 0.0, %v310
    %v343 = vsel %vm327, 0.0, %v311
    %v344 = vsel %vm328, 0.0, %v312
    %v345 = vsel %vm329, 0.0, %v313
    %v346 = vsel %vm330, 0.0, %v314
    %v347 = vsel %vm331, 0.0, %v315
    %v348 = vsel %vm332, 0.0, %v316
    %v349 = vsel %vm333, 0.0, %v317
    %v350 = vsel %vm334, 0.0, %v318
    %v351 = vsel %vm335, 0.0, %v319
    %v352 = vsel %vm336, 0.0, %v320
    %v353 = vsel %vm337, 0.0, %v321
    %v354 = vsel %vm338, 0.0, %v322
    %v355 = vmax.f32 %v339, -10.0
    %v356 = vmax.f32 %v340, -10.0
    %v357 = vmax.f32 %v341, -10.0
    %v358 = vmax.f32 %v342, -10.0
    %v359 = vmax.f32 %v343, -10.0
    %v360 = vmax.f32 %v344, -10.0
    %v361 = vmax.f32 %v345, -10.0
    %v362 = vmax.f32 %v346, -10.0
    %v363 = vmax.f32 %v347, -10.0
    %v364 = vmax.f32 %v348, -10.0
    %v365 = vmax.f32 %v349, -10.0
    %v366 = vmax.f32 %v350, -10.0
    %v367 = vmax.f32 %v351, -10.0
    %v368 = vmax.f32 %v352, -10.0
    %v369 = vmax.f32 %v353, -10.0
    %v370 = vmax.f32 %v354, -10.0
    %v371 = vmin.f32 %v355, 10.0
    %v372 = vmin.f32 %v356, 10.0
    %v373 = vmin.f32 %v357, 10.0
    %v374 = vmin.f32 %v358, 10.0
    %v375 = vmin.f32 %v359, 10.0
    %v376 = vmin.f32 %v360, 10.0
    %v377 = vmin.f32 %v361, 10.0
    %v378 = vmin.f32 %v362, 10.0
    %v379 = vmin.f32 %v363, 10.0
    %v380 = vmin.f32 %v364, 10.0
    %v381 = vmin.f32 %v365, 10.0
    %v382 = vmin.f32 %v366, 10.0
    %v383 = vmin.f32 %v367, 10.0
    %v384 = vmin.f32 %v368, 10.0
    %v385 = vmin.f32 %v369, 10.0
    %v386 = vmin.f32 %v370, 10.0
    %v387 = vpack.c.bf16 %v372, %v371
    %v388 = vpack.c.bf16 %v374, %v373
    %v389 = vpack.c.bf16 %v376, %v375
    %v390 = vpack.c.bf16 %v378, %v377
    %v391 = vpack.c.bf16 %v380, %v379
    %v392 = vpack.c.bf16 %v382, %v381
    %v393 = vpack.c.bf16 %v384, %v383
    %v394 = vpack.c.bf16 %v386, %v385
    %v395 = vld [vmem:[%s1] sm:$0xff]
    %v396 = vld [vmem:[%s1 + $0x8] sm:$0xff]
    %v397 = vld [vmem:[%s1 + $0x10] sm:$0xff]
    %v398 = vld [vmem:[%s1 + $0x18] sm:$0xff]
    %v399 = vld [vmem:[%s3] sm:$0xf]
    %v401 = vlaneseq
    %v402 = vshrl.u32 %v401, 7
    %v403 = vsub.s32 0, %v402
    %v404 = vrot.slane %v399, %v403
    %v405 = vlaneseq
    %v406 = vshrl.u32 %v405, 7
    %v407 = vsub.s32 1, %v406
    %v408 = vrot.slane %v399, %v407
    %v409 = vlaneseq
    %v410 = vshrl.u32 %v409, 7
    %v411 = vsub.s32 2, %v410
    %v412 = vrot.slane %v399, %v411
    %v413 = vlaneseq
    %v414 = vshrl.u32 %v413, 7
    %v415 = vsub.s32 3, %v414
    %v416 = vrot.slane %v399, %v415
    %v425 = vunpack.c.l.b16 %v395
    %v426 = vunpack.c.h.b16 %v395
    %v427 = vunpack.c.l.b16 %v396
    %v428 = vunpack.c.h.b16 %v396
    %v429 = vunpack.c.l.b16 %v397
    %v430 = vunpack.c.h.b16 %v397
    %v431 = vunpack.c.l.b16 %v398
    %v432 = vunpack.c.h.b16 %v398
    %v433 = vpack.c.b16 %v429, %v425
    %v434 = vpack.c.b16 %v430, %v426
    %v435 = vpack.c.b16 %v431, %v427
    %v436 = vpack.c.b16 %v432, %v428
    %vm441 = vcmask 130048
    %v443 = vsel %vm441, %v387, 0
    %v446 = vsel %vm441, %v388, 0
    %v449 = vsel %vm441, %v389, 0
    %v452 = vsel %vm441, %v390, 0
    %v455 = vsel %vm441, %v391, 0
    %v458 = vsel %vm441, %v392, 0
    %v461 = vsel %vm441, %v393, 0
    %v464 = vsel %vm441, %v394, 0
    %466 = vmatprep.subr.bf16.mxu0 %v434
    %467 = vmatpush1.bf16.msra.mxu0 %v433
    %468 = vmatprep.subr.bf16.mxu0 0
    %469 = vmatpush1.bf16.msra.mxu0 0
    %470 = vmatprep.subr.bf16.mxu0 0
    %471 = vmatpush1.bf16.msra.mxu0 0
    %472 = vmatprep.subr.bf16.mxu0 0
    %473 = vmatpush1.bf16.msra.mxu0 0
    %474 = vmatprep.subr.bf16.mxu0 0
    %475 = vmatpush1.bf16.msra.mxu0 0
    %476 = vmatprep.subr.bf16.mxu0 0
    %477 = vmatpush1.bf16.msra.mxu0 0
    %478 = vmatprep.subr.bf16.mxu0 0
    %479 = vmatpush1.bf16.msra.mxu0 0
    %480 = vmatprep.subr.bf16.mxu0 0
    %481 = vmatpush1.bf16.msra.mxu0 0
    %482 = vmatprep.subr.bf16.mxu0 0
    %483 = vmatpush1.bf16.msra.mxu0 0
    %484 = vmatprep.subr.bf16.mxu0 0
    %485 = vmatpush1.bf16.msra.mxu0 0
    %486 = vmatprep.subr.bf16.mxu0 0
    %487 = vmatpush1.bf16.msra.mxu0 0
    %488 = vmatprep.subr.bf16.mxu0 0
    %489 = vmatpush1.bf16.msra.mxu0 0
    %490 = vmatprep.subr.bf16.mxu0 0
    %491 = vmatpush1.bf16.msra.mxu0 0
    %492 = vmatprep.subr.bf16.mxu0 0
    %493 = vmatpush1.bf16.msra.mxu0 0
    %494 = vmatprep.subr.bf16.mxu0 0
    %495 = vmatpush1.bf16.msra.mxu0 0
    %496 = vmatprep.subr.bf16.mxu0 0
    %497 = vmatpush1.bf16.msra.mxu0 0
    %498 = vmatprep.mubr.bf16.mxu0 0
    %499 = vmatmul.mubr.bf16.gmra.mrb[0].mxu0 %v443
    %v500 = vpop.f32.mrb[0].mxu0
    %v501 = vadd.f32 %v404, %v500
    %v502 = vpop.f32.mrb[0].mxu0
    %v503 = vadd.f32 %v408, %v502
    %v504 = vpop.f32.mrb[0].mxu0
    %v505 = vadd.f32 %v404, %v504
    %v506 = vpop.f32.mrb[0].mxu0
    %v507 = vadd.f32 %v408, %v506
    %508 = vmatprep.mubr.bf16.mxu0 0
    %509 = vmatmul.mubr.bf16.gmra.mrb[0].mxu0 %v446
    %v510 = vpop.f32.mrb[0].mxu0
    %v511 = vadd.f32 %v404, %v510
    %v512 = vpop.f32.mrb[0].mxu0
    %v513 = vadd.f32 %v408, %v512
    %v514 = vpop.f32.mrb[0].mxu0
    %v515 = vadd.f32 %v404, %v514
    %v516 = vpop.f32.mrb[0].mxu0
    %v517 = vadd.f32 %v408, %v516
    %518 = vmatprep.mubr.bf16.mxu0 0
    %519 = vmatmul.mubr.bf16.gmra.mrb[0].mxu0 %v449
    %v520 = vpop.f32.mrb[0].mxu0
    %v521 = vadd.f32 %v404, %v520
    %v522 = vpop.f32.mrb[0].mxu0
    %v523 = vadd.f32 %v408, %v522
    %v524 = vpop.f32.mrb[0].mxu0
    %v525 = vadd.f32 %v404, %v524
    %v526 = vpop.f32.mrb[0].mxu0
    %v527 = vadd.f32 %v408, %v526
    %528 = vmatprep.mubr.bf16.mxu0 0
    %529 = vmatmul.mubr.bf16.gmra.mrb[0].mxu0 %v452
    %v530 = vpop.f32.mrb[0].mxu0
    %v531 = vadd.f32 %v404, %v530
    %v532 = vpop.f32.mrb[0].mxu0
    %v533 = vadd.f32 %v408, %v532
    %v534 = vpop.f32.mrb[0].mxu0
    %v535 = vadd.f32 %v404, %v534
    %v536 = vpop.f32.mrb[0].mxu0
    %v537 = vadd.f32 %v408, %v536
    %538 = vmatprep.mubr.bf16.mxu0 0
    %539 = vmatmul.mubr.bf16.gmra.mrb[0].mxu0 %v455
    %v540 = vpop.f32.mrb[0].mxu0
    %v541 = vadd.f32 %v404, %v540
    %v542 = vpop.f32.mrb[0].mxu0
    %v543 = vadd.f32 %v408, %v542
    %v544 = vpop.f32.mrb[0].mxu0
    %v545 = vadd.f32 %v404, %v544
    %v546 = vpop.f32.mrb[0].mxu0
    %v547 = vadd.f32 %v408, %v546
    %548 = vmatprep.mubr.bf16.mxu0 0
    %549 = vmatmul.mubr.bf16.gmra.mrb[0].mxu0 %v458
    %v550 = vpop.f32.mrb[0].mxu0
    %v551 = vadd.f32 %v404, %v550
    %v552 = vpop.f32.mrb[0].mxu0
    %v553 = vadd.f32 %v408, %v552
    %v554 = vpop.f32.mrb[0].mxu0
    %v555 = vadd.f32 %v404, %v554
    %v556 = vpop.f32.mrb[0].mxu0
    %v557 = vadd.f32 %v408, %v556
    %558 = vmatprep.mubr.bf16.mxu0 0
    %559 = vmatmul.mubr.bf16.gmra.mrb[0].mxu0 %v461
    %v560 = vpop.f32.mrb[0].mxu0
    %v561 = vadd.f32 %v404, %v560
    %v562 = vpop.f32.mrb[0].mxu0
    %v563 = vadd.f32 %v408, %v562
    %v564 = vpop.f32.mrb[0].mxu0
    %v565 = vadd.f32 %v404, %v564
    %v566 = vpop.f32.mrb[0].mxu0
    %v567 = vadd.f32 %v408, %v566
    %568 = vmatprep.mubr.bf16.mxu0 0
    %569 = vmatmul.mubr.bf16.gmra.mrb[0].mxu0 %v464
    %v570 = vpop.f32.mrb[0].mxu0
    %v571 = vadd.f32 %v404, %v570
    %v572 = vpop.f32.mrb[0].mxu0
    %v573 = vadd.f32 %v408, %v572
    %v574 = vpop.f32.mrb[0].mxu0
    %v575 = vadd.f32 %v404, %v574
    %v576 = vpop.f32.mrb[0].mxu0
    %v577 = vadd.f32 %v408, %v576
    %578 = vdwg.mxu0
    %579 = vmatprep.subr.bf16.mxu0 %v436
    %580 = vmatpush1.bf16.msra.mxu0 %v435
    %581 = vmatprep.subr.bf16.mxu0 0
    %582 = vmatpush1.bf16.msra.mxu0 0
    %583 = vmatprep.subr.bf16.mxu0 0
    %584 = vmatpush1.bf16.msra.mxu0 0
    %585 = vmatprep.subr.bf16.mxu0 0
    %586 = vmatpush1.bf16.msra.mxu0 0
    %587 = vmatprep.subr.bf16.mxu0 0
    %588 = vmatpush1.bf16.msra.mxu0 0
    %589 = vmatprep.subr.bf16.mxu0 0
    %590 = vmatpush1.bf16.msra.mxu0 0
    %591 = vmatprep.subr.bf16.mxu0 0
    %592 = vmatpush1.bf16.msra.mxu0 0
    %593 = vmatprep.subr.bf16.mxu0 0
    %594 = vmatpush1.bf16.msra.mxu0 0
    %595 = vmatprep.subr.bf16.mxu0 0
    %596 = vmatpush1.bf16.msra.mxu0 0
    %597 = vmatprep.subr.bf16.mxu0 0
    %598 = vmatpush1.bf16.msra.mxu0 0
    %599 = vmatprep.subr.bf16.mxu0 0
    %600 = vmatpush1.bf16.msra.mxu0 0
    %601 = vmatprep.subr.bf16.mxu0 0
    %602 = vmatpush1.bf16.msra.mxu0 0
    %603 = vmatprep.subr.bf16.mxu0 0
    %604 = vmatpush1.bf16.msra.mxu0 0
    %605 = vmatprep.subr.bf16.mxu0 0
    %606 = vmatpush1.bf16.msra.mxu0 0
    %607 = vmatprep.subr.bf16.mxu0 0
    %608 = vmatpush1.bf16.msra.mxu0 0
    %609 = vmatprep.subr.bf16.mxu0 0
    %610 = vmatpush1.bf16.msra.mxu0 0
    %611 = vmatprep.mubr.bf16.mxu0 0
    %612 = vmatmul.mubr.bf16.gmra.mrb[0].mxu0 %v443
    %v613 = vpop.f32.mrb[0].mxu0
    %v614 = vadd.f32 %v412, %v613
    %v615 = vpop.f32.mrb[0].mxu0
    %v616 = vadd.f32 %v416, %v615
    %v617 = vpop.f32.mrb[0].mxu0
    %v618 = vadd.f32 %v412, %v617
    %v619 = vpop.f32.mrb[0].mxu0
    %v620 = vadd.f32 %v416, %v619
    %621 = vmatprep.mubr.bf16.mxu0 0
    %622 = vmatmul.mubr.bf16.gmra.mrb[0].mxu0 %v446
    %v623 = vpop.f32.mrb[0].mxu0
    %v624 = vadd.f32 %v412, %v623
    %v625 = vpop.f32.mrb[0].mxu0
    %v626 = vadd.f32 %v416, %v625
    %v627 = vpop.f32.mrb[0].mxu0
    %v628 = vadd.f32 %v412, %v627
    %v629 = vpop.f32.mrb[0].mxu0
    %v630 = vadd.f32 %v416, %v629
    %631 = vmatprep.mubr.bf16.mxu0 0
    %632 = vmatmul.mubr.bf16.gmra.mrb[0].mxu0 %v449
    %v633 = vpop.f32.mrb[0].mxu0
    %v634 = vadd.f32 %v412, %v633
    %v635 = vpop.f32.mrb[0].mxu0
    %v636 = vadd.f32 %v416, %v635
    %v637 = vpop.f32.mrb[0].mxu0
    %v638 = vadd.f32 %v412, %v637
    %v639 = vpop.f32.mrb[0].mxu0
    %v640 = vadd.f32 %v416, %v639
    %641 = vmatprep.mubr.bf16.mxu0 0
    %642 = vmatmul.mubr.bf16.gmra.mrb[0].mxu0 %v452
    %v643 = vpop.f32.mrb[0].mxu0
    %v644 = vadd.f32 %v412, %v643
    %v645 = vpop.f32.mrb[0].mxu0
    %v646 = vadd.f32 %v416, %v645
    %v647 = vpop.f32.mrb[0].mxu0
    %v648 = vadd.f32 %v412, %v647
    %v649 = vpop.f32.mrb[0].mxu0
    %v650 = vadd.f32 %v416, %v649
    %651 = vmatprep.mubr.bf16.mxu0 0
    %652 = vmatmul.mubr.bf16.gmra.mrb[0].mxu0 %v455
    %v653 = vpop.f32.mrb[0].mxu0
    %v654 = vadd.f32 %v412, %v653
    %v655 = vpop.f32.mrb[0].mxu0
    %v656 = vadd.f32 %v416, %v655
    %v657 = vpop.f32.mrb[0].mxu0
    %v658 = vadd.f32 %v412, %v657
    %v659 = vpop.f32.mrb[0].mxu0
    %v660 = vadd.f32 %v416, %v659
    %661 = vmatprep.mubr.bf16.mxu0 0
    %662 = vmatmul.mubr.bf16.gmra.mrb[0].mxu0 %v458
    %v663 = vpop.f32.mrb[0].mxu0
    %v664 = vadd.f32 %v412, %v663
    %v665 = vpop.f32.mrb[0].mxu0
    %v666 = vadd.f32 %v416, %v665
    %v667 = vpop.f32.mrb[0].mxu0
    %v668 = vadd.f32 %v412, %v667
    %v669 = vpop.f32.mrb[0].mxu0
    %v670 = vadd.f32 %v416, %v669
    %671 = vmatprep.mubr.bf16.mxu0 0
    %672 = vmatmul.mubr.bf16.gmra.mrb[0].mxu0 %v461
    %v673 = vpop.f32.mrb[0].mxu0
    %v674 = vadd.f32 %v412, %v673
    %v675 = vpop.f32.mrb[0].mxu0
    %v676 = vadd.f32 %v416, %v675
    %v677 = vpop.f32.mrb[0].mxu0
    %v678 = vadd.f32 %v412, %v677
    %v679 = vpop.f32.mrb[0].mxu0
    %v680 = vadd.f32 %v416, %v679
    %681 = vmatprep.mubr.bf16.mxu0 0
    %682 = vmatmul.mubr.bf16.gmra.mrb[0].mxu0 %v464
    %v683 = vpop.f32.mrb[0].mxu0
    %v684 = vadd.f32 %v412, %v683
    %v685 = vpop.f32.mrb[0].mxu0
    %v686 = vadd.f32 %v416, %v685
    %v687 = vpop.f32.mrb[0].mxu0
    %v688 = vadd.f32 %v412, %v687
    %v689 = vpop.f32.mrb[0].mxu0
    %v690 = vadd.f32 %v416, %v689
    %691 = vdwg.mxu0
    %v692 = vld [vmem:[%s6] sm:$0xf]
    %v694 = vlaneseq
    %v695 = vshrl.u32 %v694, 7
    %v696 = vsub.s32 0, %v695
    %v697 = vrot.slane %v692, %v696
    %v698 = vlaneseq
    %v699 = vshrl.u32 %v698, 7
    %v700 = vsub.s32 1, %v699
    %v701 = vrot.slane %v692, %v700
    %v702 = vlaneseq
    %v703 = vshrl.u32 %v702, 7
    %v704 = vsub.s32 2, %v703
    %v705 = vrot.slane %v692, %v704
    %v706 = vlaneseq
    %v707 = vshrl.u32 %v706, 7
    %v708 = vsub.s32 3, %v707
    %v709 = vrot.slane %v692, %v708
    %v714 = vld [vmem:[%s2] sm:$0xff]
    %v715 = vld [vmem:[%s2 + $0x8] sm:$0xff]
    %v716 = vld [vmem:[%s2 + $0x10] sm:$0xff]
    %v717 = vld [vmem:[%s2 + $0x18] sm:$0xff]
    %v718 = vld [vmem:[%s2 + $0x20] sm:$0xff]
    %v719 = vld [vmem:[%s2 + $0x28] sm:$0xff]
    %v720 = vld [vmem:[%s2 + $0x30] sm:$0xff]
    %v721 = vld [vmem:[%s2 + $0x38] sm:$0xff]
    %v722 = vld [vmem:[%s2 + $0x40] sm:$0xff]
    %v723 = vld [vmem:[%s2 + $0x48] sm:$0xff]
    %v724 = vld [vmem:[%s2 + $0x50] sm:$0xff]
    %v725 = vld [vmem:[%s2 + $0x58] sm:$0xff]
    %v726 = vld [vmem:[%s2 + $0x60] sm:$0xff]
    %v727 = vld [vmem:[%s2 + $0x68] sm:$0xff]
    %v728 = vld [vmem:[%s2 + $0x70] sm:$0xff]
    %v729 = vld [vmem:[%s2 + $0x78] sm:$0xff]
    %v730 = vld [vmem:[%s2 + $0x80] sm:$0xff]
    %v731 = vld [vmem:[%s2 + $0x88] sm:$0xff]
    %v732 = vld [vmem:[%s2 + $0x90] sm:$0xff]
    %v733 = vld [vmem:[%s2 + $0x98] sm:$0xff]
    %v734 = vld [vmem:[%s2 + $0xa0] sm:$0xff]
    %v735 = vld [vmem:[%s2 + $0xa8] sm:$0xff]
    %v736 = vld [vmem:[%s2 + $0xb0] sm:$0xff]
    %v737 = vld [vmem:[%s2 + $0xb8] sm:$0xff]
    %v738 = vld [vmem:[%s2 + $0xc0] sm:$0xff]
    %v739 = vld [vmem:[%s2 + $0xc8] sm:$0xff]
    %v740 = vld [vmem:[%s2 + $0xd0] sm:$0xff]
    %v741 = vld [vmem:[%s2 + $0xd8] sm:$0xff]
    %v742 = vld [vmem:[%s2 + $0xe0] sm:$0xff]
    %v743 = vld [vmem:[%s2 + $0xe8] sm:$0xff]
    %v744 = vld [vmem:[%s2 + $0xf0] sm:$0xff]
    %v745 = vld [vmem:[%s2 + $0xf8] sm:$0xff]
    %v778 = vunpack.c.l.b16 %v714
    %v779 = vunpack.c.h.b16 %v714
    %v780 = vunpack.c.l.b16 %v715
    %v781 = vunpack.c.h.b16 %v715
    %v782 = vunpack.c.l.b16 %v716
    %v783 = vunpack.c.h.b16 %v716
    %v784 = vunpack.c.l.b16 %v717
    %v785 = vunpack.c.h.b16 %v717
    %v786 = vunpack.c.l.b16 %v718
    %v787 = vunpack.c.h.b16 %v718
    %v788 = vunpack.c.l.b16 %v719
    %v789 = vunpack.c.h.b16 %v719
    %v790 = vunpack.c.l.b16 %v720
    %v791 = vunpack.c.h.b16 %v720
    %v792 = vunpack.c.l.b16 %v721
    %v793 = vunpack.c.h.b16 %v721
    %v794 = vunpack.c.l.b16 %v722
    %v795 = vunpack.c.h.b16 %v722
    %v796 = vunpack.c.l.b16 %v723
    %v797 = vunpack.c.h.b16 %v723
    %v798 = vunpack.c.l.b16 %v724
    %v799 = vunpack.c.h.b16 %v724
    %v800 = vunpack.c.l.b16 %v725
    %v801 = vunpack.c.h.b16 %v725
    %v802 = vunpack.c.l.b16 %v726
    %v803 = vunpack.c.h.b16 %v726
    %v804 = vunpack.c.l.b16 %v727
    %v805 = vunpack.c.h.b16 %v727
    %v806 = vunpack.c.l.b16 %v728
    %v807 = vunpack.c.h.b16 %v728
    %v808 = vunpack.c.l.b16 %v729
    %v809 = vunpack.c.h.b16 %v729
    %v810 = vunpack.c.l.b16 %v730
    %v811 = vunpack.c.h.b16 %v730
    %v812 = vunpack.c.l.b16 %v731
    %v813 = vunpack.c.h.b16 %v731
    %v814 = vunpack.c.l.b16 %v732
    %v815 = vunpack.c.h.b16 %v732
    %v816 = vunpack.c.l.b16 %v733
    %v817 = vunpack.c.h.b16 %v733
    %v818 = vunpack.c.l.b16 %v734
    %v819 = vunpack.c.h.b16 %v734
    %v820 = vunpack.c.l.b16 %v735
    %v821 = vunpack.c.h.b16 %v735
    %v822 = vunpack.c.l.b16 %v736
    %v823 = vunpack.c.h.b16 %v736
    %v824 = vunpack.c.l.b16 %v737
    %v825 = vunpack.c.h.b16 %v737
    %v826 = vunpack.c.l.b16 %v738
    %v827 = vunpack.c.h.b16 %v738
    %v828 = vunpack.c.l.b16 %v739
    %v829 = vunpack.c.h.b16 %v739
    %v830 = vunpack.c.l.b16 %v740
    %v831 = vunpack.c.h.b16 %v740
    %v832 = vunpack.c.l.b16 %v741
    %v833 = vunpack.c.h.b16 %v741
    %v834 = vunpack.c.l.b16 %v742
    %v835 = vunpack.c.h.b16 %v742
    %v836 = vunpack.c.l.b16 %v743
    %v837 = vunpack.c.h.b16 %v743
    %v838 = vunpack.c.l.b16 %v744
    %v839 = vunpack.c.h.b16 %v744
    %v840 = vunpack.c.l.b16 %v745
    %v841 = vunpack.c.h.b16 %v745
    %v842 = vpack.c.b16 %v782, %v778
    %v843 = vpack.c.b16 %v783, %v779
    %v844 = vpack.c.b16 %v784, %v780
    %v845 = vpack.c.b16 %v785, %v781
    %v846 = vpack.c.b16 %v790, %v786
    %v847 = vpack.c.b16 %v791, %v787
    %v848 = vpack.c.b16 %v792, %v788
    %v849 = vpack.c.b16 %v793, %v789
    %v850 = vpack.c.b16 %v798, %v794
    %v851 = vpack.c.b16 %v799, %v795
    %v852 = vpack.c.b16 %v800, %v796
    %v853 = vpack.c.b16 %v801, %v797
    %v854 = vpack.c.b16 %v806, %v802
    %v855 = vpack.c.b16 %v807, %v803
    %v856 = vpack.c.b16 %v808, %v804
    %v857 = vpack.c.b16 %v809, %v805
    %v858 = vpack.c.b16 %v814, %v810
    %v859 = vpack.c.b16 %v815, %v811
    %v860 = vpack.c.b16 %v816, %v812
    %v861 = vpack.c.b16 %v817, %v813
    %v862 = vpack.c.b16 %v822, %v818
    %v863 = vpack.c.b16 %v823, %v819
    %v864 = vpack.c.b16 %v824, %v820
    %v865 = vpack.c.b16 %v825, %v821
    %v866 = vpack.c.b16 %v830, %v826
    %v867 = vpack.c.b16 %v831, %v827
    %v868 = vpack.c.b16 %v832, %v828
    %v869 = vpack.c.b16 %v833, %v829
    %v870 = vpack.c.b16 %v838, %v834
    %v871 = vpack.c.b16 %v839, %v835
    %v872 = vpack.c.b16 %v840, %v836
    %v873 = vpack.c.b16 %v841, %v837
    %906 = vmatprep.subr.bf16.mxu0 %v843
    %907 = vmatpush1.bf16.msra.mxu0 %v842
    %908 = vmatprep.subr.bf16.mxu0 %v847
    %909 = vmatpush1.bf16.msra.mxu0 %v846
    %910 = vmatprep.subr.bf16.mxu0 %v851
    %911 = vmatpush1.bf16.msra.mxu0 %v850
    %912 = vmatprep.subr.bf16.mxu0 %v855
    %913 = vmatpush1.bf16.msra.mxu0 %v854
    %914 = vmatprep.subr.bf16.mxu0 %v859
    %915 = vmatpush1.bf16.msra.mxu0 %v858
    %916 = vmatprep.subr.bf16.mxu0 %v863
    %917 = vmatpush1.bf16.msra.mxu0 %v862
    %918 = vmatprep.subr.bf16.mxu0 %v867
    %919 = vmatpush1.bf16.msra.mxu0 %v866
    %920 = vmatprep.subr.bf16.mxu0 %v871
    %921 = vmatpush1.bf16.msra.mxu0 %v870
    %922 = vmatprep.subr.bf16.mxu0 0
    %923 = vmatpush1.bf16.msra.mxu0 0
    %924 = vmatprep.subr.bf16.mxu0 0
    %925 = vmatpush1.bf16.msra.mxu0 0
    %926 = vmatprep.subr.bf16.mxu0 0
    %927 = vmatpush1.bf16.msra.mxu0 0
    %928 = vmatprep.subr.bf16.mxu0 0
    %929 = vmatpush1.bf16.msra.mxu0 0
    %930 = vmatprep.subr.bf16.mxu0 0
    %931 = vmatpush1.bf16.msra.mxu0 0
    %932 = vmatprep.subr.bf16.mxu0 0
    %933 = vmatpush1.bf16.msra.mxu0 0
    %934 = vmatprep.subr.bf16.mxu0 0
    %935 = vmatpush1.bf16.msra.mxu0 0
    %936 = vmatprep.subr.bf16.mxu0 0
    %937 = vmatpush1.bf16.msra.mxu0 0
    %938 = vmatprep.mubr.bf16.mxu0 0
    %939 = vmatmul.mubr.bf16.gmra.mrb[0].mxu0 0
    %v940 = vpop.f32.mrb[0].mxu0
    %v941 = vadd.f32 0.0, %v940
    %v942 = vpop.f32.mrb[0].mxu0
    %v943 = vadd.f32 0.0, %v942
    %v944 = vpop.f32.mrb[0].mxu0
    %v945 = vadd.f32 0.0, %v944
    %v946 = vpop.f32.mrb[0].mxu0
    %v947 = vadd.f32 0.0, %v946
    %948 = vdwg.mxu0
    %949 = vmatprep.subr.bf16.mxu0 %v845
    %950 = vmatpush1.bf16.msra.mxu0 %v844
    %951 = vmatprep.subr.bf16.mxu0 %v849
    %952 = vmatpush1.bf16.msra.mxu0 %v848
    %953 = vmatprep.subr.bf16.mxu0 %v853
    %954 = vmatpush1.bf16.msra.mxu0 %v852
    %955 = vmatprep.subr.bf16.mxu0 %v857
    %956 = vmatpush1.bf16.msra.mxu0 %v856
    %957 = vmatprep.subr.bf16.mxu0 %v861
    %958 = vmatpush1.bf16.msra.mxu0 %v860
    %959 = vmatprep.subr.bf16.mxu0 %v865
    %960 = vmatpush1.bf16.msra.mxu0 %v864
    %961 = vmatprep.subr.bf16.mxu0 %v869
    %962 = vmatpush1.bf16.msra.mxu0 %v868
    %963 = vmatprep.subr.bf16.mxu0 %v873
    %964 = vmatpush1.bf16.msra.mxu0 %v872
    %965 = vmatprep.subr.bf16.mxu0 0
    %966 = vmatpush1.bf16.msra.mxu0 0
    %967 = vmatprep.subr.bf16.mxu0 0
    %968 = vmatpush1.bf16.msra.mxu0 0
    %969 = vmatprep.subr.bf16.mxu0 0
    %970 = vmatpush1.bf16.msra.mxu0 0
    %971 = vmatprep.subr.bf16.mxu0 0
    %972 = vmatpush1.bf16.msra.mxu0 0
    %973 = vmatprep.subr.bf16.mxu0 0
    %974 = vmatpush1.bf16.msra.mxu0 0
    %975 = vmatprep.subr.bf16.mxu0 0
    %976 = vmatpush1.bf16.msra.mxu0 0
    %977 = vmatprep.subr.bf16.mxu0 0
    %978 = vmatpush1.bf16.msra.mxu0 0
    %979 = vmatprep.subr.bf16.mxu0 0
    %980 = vmatpush1.bf16.msra.mxu0 0
    %981 = vmatprep.mubr.bf16.mxu0 0
    %982 = vmatmul.mubr.bf16.gmra.mrb[0].mxu0 0
    %v983 = vpop.f32.mrb[0].mxu0
    %v984 = vadd.f32 0.0, %v983
    %v985 = vpop.f32.mrb[0].mxu0
    %v986 = vadd.f32 0.0, %v985
    %v987 = vpop.f32.mrb[0].mxu0
    %v988 = vadd.f32 0.0, %v987
    %v989 = vpop.f32.mrb[0].mxu0
    %v990 = vadd.f32 0.0, %v989
    %991 = vdwg.mxu0
    %v992 = vadd.f32 %v501, %v941
    %v993 = vadd.f32 %v503, %v943
    %v994 = vadd.f32 %v614, %v984
    %v995 = vadd.f32 %v616, %v986
    %v996 = vadd.f32 %v505, %v945
    %v997 = vadd.f32 %v507, %v947
    %v998 = vadd.f32 %v618, %v988
    %v999 = vadd.f32 %v620, %v990
    %v1000 = vxor.u32 %v992, 2147483648
    %v1001 = vxor.u32 %v996, 2147483648
    %v1002 = vmul.f32 %v1000, 1.442695
    %v1003 = vpow.pop %v1002
    %v1004 = vmul.f32 %v1001, 1.442695
    %v1005 = vpow.pop %v1004
    %v1006 = vadd.f32 %v1003, 1.0
    %v1007 = vadd.f32 %v1005, 1.0
    %v1008 = vrcp.pop %v1006
    %v1009 = vmul.f32 1.0, %v1008
    %v1010 = vrcp.pop %v1007
    %v1011 = vmul.f32 1.0, %v1010
    %v1012 = vxor.u32 %v993, 2147483648
    %v1013 = vxor.u32 %v997, 2147483648
    %v1014 = vmul.f32 %v1012, 1.442695
    %v1015 = vpow.pop %v1014
    %v1016 = vmul.f32 %v1013, 1.442695
    %v1017 = vpow.pop %v1016
    %v1018 = vadd.f32 %v1015, 1.0
    %v1019 = vadd.f32 %v1017, 1.0
    %v1020 = vrcp.pop %v1018
    %v1021 = vmul.f32 1.0, %v1020
    %v1022 = vrcp.pop %v1019
    %v1023 = vmul.f32 1.0, %v1022
    %v1024 = vtanh.pop %v994
    %v1025 = vtanh.pop %v998
    %v1026 = vxor.u32 %v995, 2147483648
    %v1027 = vxor.u32 %v999, 2147483648
    %v1028 = vmul.f32 %v1026, 1.442695
    %v1029 = vpow.pop %v1028
    %v1030 = vmul.f32 %v1027, 1.442695
    %v1031 = vpow.pop %v1030
    %v1032 = vadd.f32 %v1029, 1.0
    %v1033 = vadd.f32 %v1031, 1.0
    %v1034 = vrcp.pop %v1032
    %v1035 = vmul.f32 1.0, %v1034
    %v1036 = vrcp.pop %v1033
    %v1037 = vmul.f32 1.0, %v1036
    %v1038 = vmul.f32 %v1021, 0.0
    %v1039 = vmul.f32 %v1023, 0.0
    %v1040 = vmul.f32 %v1009, %v1024
    %v1041 = vmul.f32 %v1011, %v1025
    %v1042 = vadd.f32 %v1038, %v1040
    %v1043 = vadd.f32 %v1039, %v1041
    %v1044 = vtanh.pop %v1042
    %v1045 = vtanh.pop %v1043
    %v1046 = vmul.f32 %v1035, %v1044
    %v1047 = vmul.f32 %v1037, %v1045
    %v1048 = vpack.c.bf16 %v1047, %v1046
    %v1049 = vld [vmem:[#allocation7] sm:$0xff]
    %v1050 = vld [vmem:[#allocation7 + $0x8] sm:$0xff]
    %v1051 = vld [vmem:[#allocation7 + $0x10] sm:$0xff]
    %v1052 = vld [vmem:[#allocation7 + $0x18] sm:$0xff]
    %v1053 = vld [vmem:[#allocation7 + $0x20] sm:$0xff]
    %v1054 = vld [vmem:[#allocation7 + $0x28] sm:$0xff]
    %v1055 = vld [vmem:[#allocation7 + $0x30] sm:$0xff]
    %v1056 = vld [vmem:[#allocation7 + $0x38] sm:$0xff]
    %v1057 = vld [vmem:[#allocation7 + $0x40] sm:$0xff]
    %v1058 = vld [vmem:[#allocation7 + $0x48] sm:$0xff]
    %v1059 = vld [vmem:[#allocation7 + $0x50] sm:$0xff]
    %v1060 = vld [vmem:[#allocation7 + $0x58] sm:$0xff]
    %v1061 = vld [vmem:[#allocation7 + $0x60] sm:$0xff]
    %v1062 = vld [vmem:[#allocation7 + $0x68] sm:$0xff]
    %v1063 = vld [vmem:[#allocation7 + $0x70] sm:$0xff]
    %v1064 = vld [vmem:[#allocation7 + $0x78] sm:$0xff]
    %v1065 = vld [vmem:[#allocation7 + $0x80] sm:$0xff]
    %v1066 = vld [vmem:[#allocation7 + $0x88] sm:$0xff]
    %v1067 = vld [vmem:[#allocation7 + $0x90] sm:$0xff]
    %v1068 = vld [vmem:[#allocation7 + $0x98] sm:$0xff]
    %v1069 = vld [vmem:[#allocation7 + $0xa0] sm:$0xff]
    %v1070 = vld [vmem:[#allocation7 + $0xa8] sm:$0xff]
    %v1071 = vld [vmem:[#allocation7 + $0xb0] sm:$0xff]
    %v1072 = vld [vmem:[#allocation7 + $0xb8] sm:$0xff]
    %v1073 = vld [vmem:[#allocation7 + $0xc0] sm:$0xff]
    %v1074 = vld [vmem:[#allocation7 + $0xc8] sm:$0xff]
    %v1075 = vld [vmem:[#allocation7 + $0xd0] sm:$0xff]
    %v1076 = vld [vmem:[#allocation7 + $0xd8] sm:$0xff]
    %v1077 = vld [vmem:[#allocation7 + $0xe0] sm:$0xff]
    %v1078 = vld [vmem:[#allocation7 + $0xe8] sm:$0xff]
    %v1079 = vld [vmem:[#allocation7 + $0xf0] sm:$0xff]
    %v1080 = vld [vmem:[#allocation7 + $0xf8] sm:$0xff]
    %v1113 = vunpack.c.l.b16 %v1049
    %v1114 = vunpack.c.h.b16 %v1049
    %v1115 = vunpack.c.l.b16 %v1050
    %v1116 = vunpack.c.h.b16 %v1050
    %v1117 = vunpack.c.l.b16 %v1051
    %v1118 = vunpack.c.h.b16 %v1051
    %v1119 = vunpack.c.l.b16 %v1052
    %v1120 = vunpack.c.h.b16 %v1052
    %v1121 = vunpack.c.l.b16 %v1053
    %v1122 = vunpack.c.h.b16 %v1053
    %v1123 = vunpack.c.l.b16 %v1054
    %v1124 = vunpack.c.h.b16 %v1054
    %v1125 = vunpack.c.l.b16 %v1055
    %v1126 = vunpack.c.h.b16 %v1055
    %v1127 = vunpack.c.l.b16 %v1056
    %v1128 = vunpack.c.h.b16 %v1056
    %v1129 = vunpack.c.l.b16 %v1057
    %v1130 = vunpack.c.h.b16 %v1057
    %v1131 = vunpack.c.l.b16 %v1058
    %v1132 = vunpack.c.h.b16 %v1058
    %v1133 = vunpack.c.l.b16 %v1059
    %v1134 = vunpack.c.h.b16 %v1059
    %v1135 = vunpack.c.l.b16 %v1060
    %v1136 = vunpack.c.h.b16 %v1060
    %v1137 = vunpack.c.l.b16 %v1061
    %v1138 = vunpack.c.h.b16 %v1061
    %v1139 = vunpack.c.l.b16 %v1062
    %v1140 = vunpack.c.h.b16 %v1062
    %v1141 = vunpack.c.l.b16 %v1063
    %v1142 = vunpack.c.h.b16 %v1063
    %v1143 = vunpack.c.l.b16 %v1064
    %v1144 = vunpack.c.h.b16 %v1064
    %v1145 = vunpack.c.l.b16 %v1065
    %v1146 = vunpack.c.h.b16 %v1065
    %v1147 = vunpack.c.l.b16 %v1066
    %v1148 = vunpack.c.h.b16 %v1066
    %v1149 = vunpack.c.l.b16 %v1067
    %v1150 = vunpack.c.h.b16 %v1067
    %v1151 = vunpack.c.l.b16 %v1068
    %v1152 = vunpack.c.h.b16 %v1068
    %v1153 = vunpack.c.l.b16 %v1069
    %v1154 = vunpack.c.h.b16 %v1069
    %v1155 = vunpack.c.l.b16 %v1070
    %v1156 = vunpack.c.h.b16 %v1070
    %v1157 = vunpack.c.l.b16 %v1071
    %v1158 = vunpack.c.h.b16 %v1071
    %v1159 = vunpack.c.l.b16 %v1072
    %v1160 = vunpack.c.h.b16 %v1072
    %v1161 = vunpack.c.l.b16 %v1073
    %v1162 = vunpack.c.h.b16 %v1073
    %v1163 = vunpack.c.l.b16 %v1074
    %v1164 = vunpack.c.h.b16 %v1074
    %v1165 = vunpack.c.l.b16 %v1075
    %v1166 = vunpack.c.h.b16 %v1075
    %v1167 = vunpack.c.l.b16 %v1076
    %v1168 = vunpack.c.h.b16 %v1076
    %v1169 = vunpack.c.l.b16 %v1077
    %v1170 = vunpack.c.h.b16 %v1077
    %v1171 = vunpack.c.l.b16 %v1078
    %v1172 = vunpack.c.h.b16 %v1078
    %v1173 = vunpack.c.l.b16 %v1079
    %v1174 = vunpack.c.h.b16 %v1079
    %v1175 = vunpack.c.l.b16 %v1080
    %v1176 = vunpack.c.h.b16 %v1080
    %v1177 = vpack.c.b16 %v1117, %v1113
    %v1178 = vpack.c.b16 %v1118, %v1114
    %v1179 = vpack.c.b16 %v1119, %v1115
    %v1180 = vpack.c.b16 %v1120, %v1116
    %v1181 = vpack.c.b16 %v1125, %v1121
    %v1182 = vpack.c.b16 %v1126, %v1122
    %v1183 = vpack.c.b16 %v1127, %v1123
    %v1184 = vpack.c.b16 %v1128, %v1124
    %v1185 = vpack.c.b16 %v1133, %v1129
    %v1186 = vpack.c.b16 %v1134, %v1130
    %v1187 = vpack.c.b16 %v1135, %v1131
    %v1188 = vpack.c.b16 %v1136, %v1132
    %v1189 = vpack.c.b16 %v1141, %v1137
    %v1190 = vpack.c.b16 %v1142, %v1138
    %v1191 = vpack.c.b16 %v1143, %v1139
    %v1192 = vpack.c.b16 %v1144, %v1140
    %v1193 = vpack.c.b16 %v1149, %v1145
    %v1194 = vpack.c.b16 %v1150, %v1146
    %v1195 = vpack.c.b16 %v1151, %v1147
    %v1196 = vpack.c.b16 %v1152, %v1148
    %v1197 = vpack.c.b16 %v1157, %v1153
    %v1198 = vpack.c.b16 %v1158, %v1154
    %v1199 = vpack.c.b16 %v1159, %v1155
    %v1200 = vpack.c.b16 %v1160, %v1156
    %v1201 = vpack.c.b16 %v1165, %v1161
    %v1202 = vpack.c.b16 %v1166, %v1162
    %v1203 = vpack.c.b16 %v1167, %v1163
    %v1204 = vpack.c.b16 %v1168, %v1164
    %v1205 = vpack.c.b16 %v1173, %v1169
    %v1206 = vpack.c.b16 %v1174, %v1170
    %v1207 = vpack.c.b16 %v1175, %v1171
    %v1208 = vpack.c.b16 %v1176, %v1172
    %1241 = vmatprep.subr.bf16.mxu0 %v1178
    %1242 = vmatpush1.bf16.msra.mxu0 %v1177
    %1243 = vmatprep.subr.bf16.mxu0 %v1182
    %1244 = vmatpush1.bf16.msra.mxu0 %v1181
    %1245 = vmatprep.subr.bf16.mxu0 %v1186
    %1246 = vmatpush1.bf16.msra.mxu0 %v1185
    %1247 = vmatprep.subr.bf16.mxu0 %v1190
    %1248 = vmatpush1.bf16.msra.mxu0 %v1189
    %1249 = vmatprep.subr.bf16.mxu0 %v1194
    %1250 = vmatpush1.bf16.msra.mxu0 %v1193
    %1251 = vmatprep.subr.bf16.mxu0 %v1198
    %1252 = vmatpush1.bf16.msra.mxu0 %v1197
    %1253 = vmatprep.subr.bf16.mxu0 %v1202
    %1254 = vmatpush1.bf16.msra.mxu0 %v1201
    %1255 = vmatprep.subr.bf16.mxu0 %v1206
    %1256 = vmatpush1.bf16.msra.mxu0 %v1205
    %1257 = vmatprep.subr.bf16.mxu0 0
    %1258 = vmatpush1.bf16.msra.mxu0 0
    %1259 = vmatprep.subr.bf16.mxu0 0
    %1260 = vmatpush1.bf16.msra.mxu0 0
    %1261 = vmatprep.subr.bf16.mxu0 0
    %1262 = vmatpush1.bf16.msra.mxu0 0
    %1263 = vmatprep.subr.bf16.mxu0 0
    %1264 = vmatpush1.bf16.msra.mxu0 0
    %1265 = vmatprep.subr.bf16.mxu0 0
    %1266 = vmatpush1.bf16.msra.mxu0 0
    %1267 = vmatprep.subr.bf16.mxu0 0
    %1268 = vmatpush1.bf16.msra.mxu0 0
    %1269 = vmatprep.subr.bf16.mxu0 0
    %1270 = vmatpush1.bf16.msra.mxu0 0
    %1271 = vmatprep.subr.bf16.mxu0 0
    %1272 = vmatpush1.bf16.msra.mxu0 0
    %1273 = vmatprep.mubr.bf16.mxu0 0
    %1274 = vmatmul.mubr.bf16.gmra.mrb[0].mxu0 %v1048
    %v1275 = vpop.f32.mrb[0].mxu0
    %v1276 = vadd.f32 0.0, %v1275
    %v1277 = vpop.f32.mrb[0].mxu0
    %v1278 = vadd.f32 0.0, %v1277
    %v1279 = vpop.f32.mrb[0].mxu0
    %v1280 = vadd.f32 0.0, %v1279
    %v1281 = vpop.f32.mrb[0].mxu0
    %v1282 = vadd.f32 0.0, %v1281
    %1283 = vdwg.mxu0
    %1284 = vmatprep.subr.bf16.mxu0 %v1180
    %1285 = vmatpush1.bf16.msra.mxu0 %v1179
    %1286 = vmatprep.subr.bf16.mxu0 %v1184
    %1287 = vmatpush1.bf16.msra.mxu0 %v1183
    %1288 = vmatprep.subr.bf16.mxu0 %v1188
    %1289 = vmatpush1.bf16.msra.mxu0 %v1187
    %1290 = vmatprep.subr.bf16.mxu0 %v1192
    %1291 = vmatpush1.bf16.msra.mxu0 %v1191
    %1292 = vmatprep.subr.bf16.mxu0 %v1196
    %1293 = vmatpush1.bf16.msra.mxu0 %v1195
    %1294 = vmatprep.subr.bf16.mxu0 %v1200
    %1295 = vmatpush1.bf16.msra.mxu0 %v1199
    %1296 = vmatprep.subr.bf16.mxu0 %v1204
    %1297 = vmatpush1.bf16.msra.mxu0 %v1203
    %1298 = vmatprep.subr.bf16.mxu0 %v1208
    %1299 = vmatpush1.bf16.msra.mxu0 %v1207
    %1300 = vmatprep.subr.bf16.mxu0 0
    %1301 = vmatpush1.bf16.msra.mxu0 0
    %1302 = vmatprep.subr.bf16.mxu0 0
    %1303 = vmatpush1.bf16.msra.mxu0 0
    %1304 = vmatprep.subr.bf16.mxu0 0
    %1305 = vmatpush1.bf16.msra.mxu0 0
    %1306 = vmatprep.subr.bf16.mxu0 0
    %1307 = vmatpush1.bf16.msra.mxu0 0
    %1308 = vmatprep.subr.bf16.mxu0 0
    %1309 = vmatpush1.bf16.msra.mxu0 0
    %1310 = vmatprep.subr.bf16.mxu0 0
    %1311 = vmatpush1.bf16.msra.mxu0 0
    %1312 = vmatprep.subr.bf16.mxu0 0
    %1313 = vmatpush1.bf16.msra.mxu0 0
    %1314 = vmatprep.subr.bf16.mxu0 0
    %1315 = vmatpush1.bf16.msra.mxu0 0
    %1316 = vmatprep.mubr.bf16.mxu0 0
    %1317 = vmatmul.mubr.bf16.gmra.mrb[0].mxu0 %v1048
    %v1318 = vpop.f32.mrb[0].mxu0
    %v1319 = vadd.f32 0.0, %v1318
    %v1320 = vpop.f32.mrb[0].mxu0
    %v1321 = vadd.f32 0.0, %v1320
    %v1322 = vpop.f32.mrb[0].mxu0
    %v1323 = vadd.f32 0.0, %v1322
    %v1324 = vpop.f32.mrb[0].mxu0
    %v1325 = vadd.f32 0.0, %v1324
    %1326 = vdwg.mxu0
    %v1327 = vadd.f32 %v697, %v1276
    %v1328 = vadd.f32 %v701, %v1278
    %v1329 = vadd.f32 %v705, %v1319
    %v1330 = vadd.f32 %v709, %v1321
    %v1331 = vadd.f32 %v697, %v1280
    %v1332 = vadd.f32 %v701, %v1282
    %v1333 = vadd.f32 %v705, %v1323
    %v1334 = vadd.f32 %v709, %v1325
    %v1335 = vxor.u32 %v1327, 2147483648
    %v1336 = vxor.u32 %v1331, 2147483648
    %v1337 = vmul.f32 %v1335, 1.442695
    %v1338 = vpow.pop %v1337
    %v1339 = vmul.f32 %v1336, 1.442695
    %v1340 = vpow.pop %v1339
    %v1341 = vadd.f32 %v1338, 1.0
    %v1342 = vadd.f32 %v1340, 1.0
    %v1343 = vrcp.pop %v1341
    %v1344 = vmul.f32 1.0, %v1343
    %v1345 = vrcp.pop %v1342
    %v1346 = vmul.f32 1.0, %v1345
    %v1347 = vxor.u32 %v1328, 2147483648
    %v1348 = vxor.u32 %v1332, 2147483648
    %v1349 = vmul.f32 %v1347, 1.442695
    %v1350 = vpow.pop %v1349
    %v1351 = vmul.f32 %v1348, 1.442695
    %v1352 = vpow.pop %v1351
    %v1353 = vadd.f32 %v1350, 1.0
    %v1354 = vadd.f32 %v1352, 1.0
    %v1355 = vrcp.pop %v1353
    %v1356 = vmul.f32 1.0, %v1355
    %v1357 = vrcp.pop %v1354
    %v1358 = vmul.f32 1.0, %v1357
    %v1359 = vtanh.pop %v1329
    %v1360 = vtanh.pop %v1333
    %v1361 = vxor.u32 %v1330, 2147483648
    %v1362 = vxor.u32 %v1334, 2147483648
    %v1363 = vmul.f32 %v1361, 1.442695
    %v1364 = vpow.pop %v1363
    %v1365 = vmul.f32 %v1362, 1.442695
    %v1366 = vpow.pop %v1365
    %v1367 = vadd.f32 %v1364, 1.0
    %v1368 = vadd.f32 %v1366, 1.0
    %v1369 = vrcp.pop %v1367
    %v1370 = vmul.f32 1.0, %v1369
    %v1371 = vrcp.pop %v1368
    %v1372 = vmul.f32 1.0, %v1371
    %v1373 = vmul.f32 %v1356, 0.0
    %v1374 = vmul.f32 %v1358, 0.0
    %v1375 = vmul.f32 %v1344, %v1359
    %v1376 = vmul.f32 %v1346, %v1360
    %v1377 = vadd.f32 %v1373, %v1375
    %v1378 = vadd.f32 %v1374, %v1376
    %v1379 = vtanh.pop %v1377
    %v1380 = vtanh.pop %v1378
    %v1381 = vmul.f32 %v1370, %v1379
    %v1382 = vmul.f32 %v1372, %v1380
    %vm1383 = vcmp.ne.f32.partialorder %v1381, %v1381
    %vm1384 = vcmp.ne.f32.partialorder %v1382, %v1382
    %v1385 = vsel %vm1383, 1, 0
    %v1386 = vsel %vm1384, 1, 0
    %v1387 = vcvt.s32.f32 %v1385
    %v1388 = vcvt.s32.f32 %v1386
    %v1389 = vmax.f32 %v1387, 0.0
    %v1390 = vmax.f32 %v1388, 0.0
    %v1391 = vpack.c.bf16 %v1382, %v1381
    %v1392 = vld [vmem:[#allocation9] sm:$0xff]
    %v1393 = vld [vmem:[#allocation9 + $0x8] sm:$0xff]
    %v1394 = vld [vmem:[#allocation9 + $0x10] sm:$0xff]
    %v1395 = vld [vmem:[#allocation9 + $0x18] sm:$0xff]
    %v1396 = vld [vmem:[#allocation9 + $0x20] sm:$0xff]
    %v1397 = vld [vmem:[#allocation9 + $0x28] sm:$0xff]
    %v1398 = vld [vmem:[#allocation9 + $0x30] sm:$0xff]
    %v1399 = vld [vmem:[#allocation9 + $0x38] sm:$0xff]
    %v1400 = vld [vmem:[#allocation9 + $0x40] sm:$0xff]
    %v1401 = vld [vmem:[#allocation9 + $0x48] sm:$0xff]
    %v1402 = vld [vmem:[#allocation9 + $0x50] sm:$0xff]
    %v1403 = vld [vmem:[#allocation9 + $0x58] sm:$0xff]
    %v1404 = vld [vmem:[#allocation9 + $0x60] sm:$0xff]
    %v1405 = vld [vmem:[#allocation9 + $0x68] sm:$0xff]
    %v1406 = vld [vmem:[#allocation9 + $0x70] sm:$0xff]
    %v1407 = vld [vmem:[#allocation9 + $0x78] sm:$0xff]
    %v1408 = vld [vmem:[#allocation9 + $0x80] sm:$0xff]
    %v1409 = vld [vmem:[#allocation9 + $0x88] sm:$0xff]
    %v1410 = vld [vmem:[#allocation9 + $0x90] sm:$0xff]
    %v1411 = vld [vmem:[#allocation9 + $0x98] sm:$0xff]
    %v1412 = vld [vmem:[#allocation9 + $0xa0] sm:$0xff]
    %v1413 = vld [vmem:[#allocation9 + $0xa8] sm:$0xff]
    %v1414 = vld [vmem:[#allocation9 + $0xb0] sm:$0xff]
    %v1415 = vld [vmem:[#allocation9 + $0xb8] sm:$0xff]
    %v1416 = vld [vmem:[#allocation9 + $0xc0] sm:$0xff]
    %v1417 = vld [vmem:[#allocation9 + $0xc8] sm:$0xff]
    %v1418 = vld [vmem:[#allocation9 + $0xd0] sm:$0xff]
    %v1419 = vld [vmem:[#allocation9 + $0xd8] sm:$0xff]
    %v1420 = vld [vmem:[#allocation9 + $0xe0] sm:$0xff]
    %v1421 = vld [vmem:[#allocation9 + $0xe8] sm:$0xff]
    %v1422 = vld [vmem:[#allocation9 + $0xf0] sm:$0xff]
    %v1423 = vld [vmem:[#allocation9 + $0xf8] sm:$0xff]
    %v1456 = vunpack.c.l.b16 %v1392
    %v1457 = vunpack.c.h.b16 %v1392
    %v1458 = vunpack.c.l.b16 %v1393
    %v1459 = vunpack.c.h.b16 %v1393
    %v1460 = vunpack.c.l.b16 %v1394
    %v1461 = vunpack.c.h.b16 %v1394
    %v1462 = vunpack.c.l.b16 %v1395
    %v1463 = vunpack.c.h.b16 %v1395
    %v1464 = vunpack.c.l.b16 %v1396
    %v1465 = vunpack.c.h.b16 %v1396
    %v1466 = vunpack.c.l.b16 %v1397
    %v1467 = vunpack.c.h.b16 %v1397
    %v1468 = vunpack.c.l.b16 %v1398
    %v1469 = vunpack.c.h.b16 %v1398
    %v1470 = vunpack.c.l.b16 %v1399
    %v1471 = vunpack.c.h.b16 %v1399
    %v1472 = vunpack.c.l.b16 %v1400
    %v1473 = vunpack.c.h.b16 %v1400
    %v1474 = vunpack.c.l.b16 %v1401
    %v1475 = vunpack.c.h.b16 %v1401
    %v1476 = vunpack.c.l.b16 %v1402
    %v1477 = vunpack.c.h.b16 %v1402
    %v1478 = vunpack.c.l.b16 %v1403
    %v1479 = vunpack.c.h.b16 %v1403
    %v1480 = vunpack.c.l.b16 %v1404
    %v1481 = vunpack.c.h.b16 %v1404
    %v1482 = vunpack.c.l.b16 %v1405
    %v1483 = vunpack.c.h.b16 %v1405
    %v1484 = vunpack.c.l.b16 %v1406
    %v1485 = vunpack.c.h.b16 %v1406
    %v1486 = vunpack.c.l.b16 %v1407
    %v1487 = vunpack.c.h.b16 %v1407
    %v1488 = vunpack.c.l.b16 %v1408
    %v1489 = vunpack.c.h.b16 %v1408
    %v1490 = vunpack.c.l.b16 %v1409
    %v1491 = vunpack.c.h.b16 %v1409
    %v1492 = vunpack.c.l.b16 %v1410
    %v1493 = vunpack.c.h.b16 %v1410
    %v1494 = vunpack.c.l.b16 %v1411
    %v1495 = vunpack.c.h.b16 %v1411
    %v1496 = vunpack.c.l.b16 %v1412
    %v1497 = vunpack.c.h.b16 %v1412
    %v1498 = vunpack.c.l.b16 %v1413
    %v1499 = vunpack.c.h.b16 %v1413
    %v1500 = vunpack.c.l.b16 %v1414
    %v1501 = vunpack.c.h.b16 %v1414
    %v1502 = vunpack.c.l.b16 %v1415
    %v1503 = vunpack.c.h.b16 %v1415
    %v1504 = vunpack.c.l.b16 %v1416
    %v1505 = vunpack.c.h.b16 %v1416
    %v1506 = vunpack.c.l.b16 %v1417
    %v1507 = vunpack.c.h.b16 %v1417
    %v1508 = vunpack.c.l.b16 %v1418
    %v1509 = vunpack.c.h.b16 %v1418
    %v1510 = vunpack.c.l.b16 %v1419
    %v1511 = vunpack.c.h.b16 %v1419
    %v1512 = vunpack.c.l.b16 %v1420
    %v1513 = vunpack.c.h.b16 %v1420
    %v1514 = vunpack.c.l.b16 %v1421
    %v1515 = vunpack.c.h.b16 %v1421
    %v1516 = vunpack.c.l.b16 %v1422
    %v1517 = vunpack.c.h.b16 %v1422
    %v1518 = vunpack.c.l.b16 %v1423
    %v1519 = vunpack.c.h.b16 %v1423
    %v1520 = vpack.c.b16 %v1460, %v1456
    %v1521 = vpack.c.b16 %v1461, %v1457
    %v1522 = vpack.c.b16 %v1462, %v1458
    %v1523 = vpack.c.b16 %v1463, %v1459
    %v1524 = vpack.c.b16 %v1468, %v1464
    %v1525 = vpack.c.b16 %v1469, %v1465
    %v1526 = vpack.c.b16 %v1470, %v1466
    %v1527 = vpack.c.b16 %v1471, %v1467
    %v1528 = vpack.c.b16 %v1476, %v1472
    %v1529 = vpack.c.b16 %v1477, %v1473
    %v1530 = vpack.c.b16 %v1478, %v1474
    %v1531 = vpack.c.b16 %v1479, %v1475
    %v1532 = vpack.c.b16 %v1484, %v1480
    %v1533 = vpack.c.b16 %v1485, %v1481
    %v1534 = vpack.c.b16 %v1486, %v1482
    %v1535 = vpack.c.b16 %v1487, %v1483
    %v1536 = vpack.c.b16 %v1492, %v1488
    %v1537 = vpack.c.b16 %v1493, %v1489
    %v1538 = vpack.c.b16 %v1494, %v1490
    %v1539 = vpack.c.b16 %v1495, %v1491
    %v1540 = vpack.c.b16 %v1500, %v1496
    %v1541 = vpack.c.b16 %v1501, %v1497
    %v1542 = vpack.c.b16 %v1502, %v1498
    %v1543 = vpack.c.b16 %v1503, %v1499
    %v1544 = vpack.c.b16 %v1508, %v1504
    %v1545 = vpack.c.b16 %v1509, %v1505
    %v1546 = vpack.c.b16 %v1510, %v1506
    %v1547 = vpack.c.b16 %v1511, %v1507
    %v1548 = vpack.c.b16 %v1516, %v1512
    %v1549 = vpack.c.b16 %v1517, %v1513
    %v1550 = vpack.c.b16 %v1518, %v1514
    %v1551 = vpack.c.b16 %v1519, %v1515
    %1584 = vmatprep.subr.bf16.mxu0 %v1521
    %1585 = vmatpush1.bf16.msra.mxu0 %v1520
    %1586 = vmatprep.subr.bf16.mxu0 %v1525
    %1587 = vmatpush1.bf16.msra.mxu0 %v1524
    %1588 = vmatprep.subr.bf16.mxu0 %v1529
    %1589 = vmatpush1.bf16.msra.mxu0 %v1528
    %1590 = vmatprep.subr.bf16.mxu0 %v1533
    %1591 = vmatpush1.bf16.msra.mxu0 %v1532
    %1592 = vmatprep.subr.bf16.mxu0 %v1537
    %1593 = vmatpush1.bf16.msra.mxu0 %v1536
    %1594 = vmatprep.subr.bf16.mxu0 %v1541
    %1595 = vmatpush1.bf16.msra.mxu0 %v1540
    %1596 = vmatprep.subr.bf16.mxu0 %v1545
    %1597 = vmatpush1.bf16.msra.mxu0 %v1544
    %1598 = vmatprep.subr.bf16.mxu0 %v1549
    %1599 = vmatpush1.bf16.msra.mxu0 %v1548
    %1600 = vmatprep.subr.bf16.mxu0 0
    %1601 = vmatpush1.bf16.msra.mxu0 0
    %1602 = vmatprep.subr.bf16.mxu0 0
    %1603 = vmatpush1.bf16.msra.mxu0 0
    %1604 = vmatprep.subr.bf16.mxu0 0
    %1605 = vmatpush1.bf16.msra.mxu0 0
    %1606 = vmatprep.subr.bf16.mxu0 0
    %1607 = vmatpush1.bf16.msra.mxu0 0
    %1608 = vmatprep.subr.bf16.mxu0 0
    %1609 = vmatpush1.bf16.msra.mxu0 0
    %1610 = vmatprep.subr.bf16.mxu0 0
    %1611 = vmatpush1.bf16.msra.mxu0 0
    %1612 = vmatprep.subr.bf16.mxu0 0
    %1613 = vmatpush1.bf16.msra.mxu0 0
    %1614 = vmatprep.subr.bf16.mxu0 0
    %1615 = vmatpush1.bf16.msra.mxu0 0
    %1616 = vmatprep.mubr.bf16.mxu0 0
    %1617 = vmatmul.mubr.bf16.gmra.mrb[0].mxu0 %v1391
    %v1618 = vpop.f32.mrb[0].mxu0
    %v1619 = vadd.f32 0.0, %v1618
    %v1620 = vpop.f32.mrb[0].mxu0
    %v1621 = vadd.f32 0.0, %v1620
    %v1622 = vpop.f32.mrb[0].mxu0
    %v1623 = vadd.f32 0.0, %v1622
    %v1624 = vpop.f32.mrb[0].mxu0
    %v1625 = vadd.f32 0.0, %v1624
    %1626 = vdwg.mxu0
    %1627 = vmatprep.subr.bf16.mxu0 %v1523
    %1628 = vmatpush1.bf16.msra.mxu0 %v1522
    %1629 = vmatprep.subr.bf16.mxu0 %v1527
    %1630 = vmatpush1.bf16.msra.mxu0 %v1526
    %1631 = vmatprep.subr.bf16.mxu0 %v1531
    %1632 = vmatpush1.bf16.msra.mxu0 %v1530
    %1633 = vmatprep.subr.bf16.mxu0 %v1535
    %1634 = vmatpush1.bf16.msra.mxu0 %v1534
    %1635 = vmatprep.subr.bf16.mxu0 %v1539
    %1636 = vmatpush1.bf16.msra.mxu0 %v1538
    %1637 = vmatprep.subr.bf16.mxu0 %v1543
    %1638 = vmatpush1.bf16.msra.mxu0 %v1542
    %1639 = vmatprep.subr.bf16.mxu0 %v1547
    %1640 = vmatpush1.bf16.msra.mxu0 %v1546
    %1641 = vmatprep.subr.bf16.mxu0 %v1551
    %1642 = vmatpush1.bf16.msra.mxu0 %v1550
    %1643 = vmatprep.subr.bf16.mxu0 0
    %1644 = vmatpush1.bf16.msra.mxu0 0
    %1645 = vmatprep.subr.bf16.mxu0 0
    %1646 = vmatpush1.bf16.msra.mxu0 0
    %1647 = vmatprep.subr.bf16.mxu0 0
    %1648 = vmatpush1.bf16.msra.mxu0 0
    %1649 = vmatprep.subr.bf16.mxu0 0
    %1650 = vmatpush1.bf16.msra.mxu0 0
    %1651 = vmatprep.subr.bf16.mxu0 0
    %1652 = vmatpush1.bf16.msra.mxu0 0
    %1653 = vmatprep.subr.bf16.mxu0 0
    %1654 = vmatpush1.bf16.msra.mxu0 0
    %1655 = vmatprep.subr.bf16.mxu0 0
    %1656 = vmatpush1.bf16.msra.mxu0 0
    %1657 = vmatprep.subr.bf16.mxu0 0
    %1658 = vmatpush1.bf16.msra.mxu0 0
    %1659 = vmatprep.mubr.bf16.mxu0 0
    %1660 = vmatmul.mubr.bf16.gmra.mrb[0].mxu0 %v1391
    %v1661 = vpop.f32.mrb[0].mxu0
    %v1662 = vadd.f32 0.0, %v1661
    %v1663 = vpop.f32.mrb[0].mxu0
    %v1664 = vadd.f32 0.0, %v1663
    %v1665 = vpop.f32.mrb[0].mxu0
    %v1666 = vadd.f32 0.0, %v1665
    %v1667 = vpop.f32.mrb[0].mxu0
    %v1668 = vadd.f32 0.0, %v1667
    %1669 = vdwg.mxu0
    %v1670 = vadd.f32 %v697, %v1619
    %v1671 = vadd.f32 %v701, %v1621
    %v1672 = vadd.f32 %v705, %v1662
    %v1673 = vadd.f32 %v709, %v1664
    %v1674 = vadd.f32 %v697, %v1623
    %v1675 = vadd.f32 %v701, %v1625
    %v1676 = vadd.f32 %v705, %v1666
    %v1677 = vadd.f32 %v709, %v1668
    %1678 = vmatprep.subr.bf16.mxu0 %v843
    %1679 = vmatpush1.bf16.msra.mxu0 %v842
    %1680 = vmatprep.subr.bf16.mxu0 %v847
    %1681 = vmatpush1.bf16.msra.mxu0 %v846
    %1682 = vmatprep.subr.bf16.mxu0 %v851
    %1683 = vmatpush1.bf16.msra.mxu0 %v850
    %1684 = vmatprep.subr.bf16.mxu0 %v855
    %1685 = vmatpush1.bf16.msra.mxu0 %v854
    %1686 = vmatprep.subr.bf16.mxu0 %v859
    %1687 = vmatpush1.bf16.msra.mxu0 %v858
    %1688 = vmatprep.subr.bf16.mxu0 %v863
    %1689 = vmatpush1.bf16.msra.mxu0 %v862
    %1690 = vmatprep.subr.bf16.mxu0 %v867
    %1691 = vmatpush1.bf16.msra.mxu0 %v866
    %1692 = vmatprep.subr.bf16.mxu0 %v871
    %1693 = vmatpush1.bf16.msra.mxu0 %v870
    %1694 = vmatprep.subr.bf16.mxu0 0
    %1695 = vmatpush1.bf16.msra.mxu0 0
    %1696 = vmatprep.subr.bf16.mxu0 0
    %1697 = vmatpush1.bf16.msra.mxu0 0
    %1698 = vmatprep.subr.bf16.mxu0 0
    %1699 = vmatpush1.bf16.msra.mxu0 0
    %1700 = vmatprep.subr.bf16.mxu0 0
    %1701 = vmatpush1.bf16.msra.mxu0 0
    %1702 = vmatprep.subr.bf16.mxu0 0
    %1703 = vmatpush1.bf16.msra.mxu0 0
    %1704 = vmatprep.subr.bf16.mxu0 0
    %1705 = vmatpush1.bf16.msra.mxu0 0
    %1706 = vmatprep.subr.bf16.mxu0 0
    %1707 = vmatpush1.bf16.msra.mxu0 0
    %1708 = vmatprep.subr.bf16.mxu0 0
    %1709 = vmatpush1.bf16.msra.mxu0 0
    %1710 = vmatprep.mubr.bf16.mxu0 0
    %1711 = vmatmul.mubr.bf16.gmra.mrb[0].mxu0 %v1048
    %v1712 = vpop.f32.mrb[0].mxu0
    %v1713 = vadd.f32 0.0, %v1712
    %v1714 = vpop.f32.mrb[0].mxu0
    %v1715 = vadd.f32 0.0, %v1714
    %v1716 = vpop.f32.mrb[0].mxu0
    %v1717 = vadd.f32 0.0, %v1716
    %v1718 = vpop.f32.mrb[0].mxu0
    %v1719 = vadd.f32 0.0, %v1718
    %1720 = vdwg.mxu0
    %1721 = vmatprep.subr.bf16.mxu0 %v845
    %1722 = vmatpush1.bf16.msra.mxu0 %v844
    %1723 = vmatprep.subr.bf16.mxu0 %v849
    %1724 = vmatpush1.bf16.msra.mxu0 %v848
    %1725 = vmatprep.subr.bf16.mxu0 %v853
    %1726 = vmatpush1.bf16.msra.mxu0 %v852
    %1727 = vmatprep.subr.bf16.mxu0 %v857
    %1728 = vmatpush1.bf16.msra.mxu0 %v856
    %1729 = vmatprep.subr.bf16.mxu0 %v861
    %1730 = vmatpush1.bf16.msra.mxu0 %v860
    %1731 = vmatprep.subr.bf16.mxu0 %v865
    %1732 = vmatpush1.bf16.msra.mxu0 %v864
    %1733 = vmatprep.subr.bf16.mxu0 %v869
    %1734 = vmatpush1.bf16.msra.mxu0 %v868
    %1735 = vmatprep.subr.bf16.mxu0 %v873
    %1736 = vmatpush1.bf16.msra.mxu0 %v872
    %1737 = vmatprep.subr.bf16.mxu0 0
    %1738 = vmatpush1.bf16.msra.mxu0 0
    %1739 = vmatprep.subr.bf16.mxu0 0
    %1740 = vmatpush1.bf16.msra.mxu0 0
    %1741 = vmatprep.subr.bf16.mxu0 0
    %1742 = vmatpush1.bf16.msra.mxu0 0
    %1743 = vmatprep.subr.bf16.mxu0 0
    %1744 = vmatpush1.bf16.msra.mxu0 0
    %1745 = vmatprep.subr.bf16.mxu0 0
    %1746 = vmatpush1.bf16.msra.mxu0 0
    %1747 = vmatprep.subr.bf16.mxu0 0
    %1748 = vmatpush1.bf16.msra.mxu0 0
    %1749 = vmatprep.subr.bf16.mxu0 0
    %1750 = vmatpush1.bf16.msra.mxu0 0
    %1751 = vmatprep.subr.bf16.mxu0 0
    %1752 = vmatpush1.bf16.msra.mxu0 0
    %1753 = vmatprep.mubr.bf16.mxu0 0
    %1754 = vmatmul.mubr.bf16.gmra.mrb[0].mxu0 %v1048
    %v1755 = vpop.f32.mrb[0].mxu0
    %v1756 = vadd.f32 0.0, %v1755
    %v1757 = vpop.f32.mrb[0].mxu0
    %v1758 = vadd.f32 0.0, %v1757
    %v1759 = vpop.f32.mrb[0].mxu0
    %v1760 = vadd.f32 0.0, %v1759
    %v1761 = vpop.f32.mrb[0].mxu0
    %v1762 = vadd.f32 0.0, %v1761
    %1763 = vdwg.mxu0
    %v1764 = vadd.f32 %v511, %v1713
    %v1765 = vadd.f32 %v513, %v1715
    %v1766 = vadd.f32 %v624, %v1756
    %v1767 = vadd.f32 %v626, %v1758
    %v1768 = vadd.f32 %v515, %v1717
    %v1769 = vadd.f32 %v517, %v1719
    %v1770 = vadd.f32 %v628, %v1760
    %v1771 = vadd.f32 %v630, %v1762
    %v1772 = vxor.u32 %v1764, 2147483648
    %v1773 = vxor.u32 %v1768, 2147483648
    %v1774 = vmul.f32 %v1772, 1.442695
    %v1775 = vpow.pop %v1774
    %v1776 = vmul.f32 %v1773, 1.442695
    %v1777 = vpow.pop %v1776
    %v1778 = vadd.f32 %v1775, 1.0
    %v1779 = vadd.f32 %v1777, 1.0
    %v1780 = vrcp.pop %v1778
    %v1781 = vmul.f32 1.0, %v1780
    %v1782 = vrcp.pop %v1779
    %v1783 = vmul.f32 1.0, %v1782
    %v1784 = vxor.u32 %v1765, 2147483648
    %v1785 = vxor.u32 %v1769, 2147483648
    %v1786 = vmul.f32 %v1784, 1.442695
    %v1787 = vpow.pop %v1786
    %v1788 = vmul.f32 %v1785, 1.442695
    %v1789 = vpow.pop %v1788
    %v1790 = vadd.f32 %v1787, 1.0
    %v1791 = vadd.f32 %v1789, 1.0
    %v1792 = vrcp.pop %v1790
    %v1793 = vmul.f32 1.0, %v1792
    %v1794 = vrcp.pop %v1791
    %v1795 = vmul.f32 1.0, %v1794
    %v1796 = vtanh.pop %v1766
    %v1797 = vtanh.pop %v1770
    %v1798 = vxor.u32 %v1767, 2147483648
    %v1799 = vxor.u32 %v1771, 2147483648
    %v1800 = vmul.f32 %v1798, 1.442695
    %v1801 = vpow.pop %v1800
    %v1802 = vmul.f32 %v1799, 1.442695
    %v1803 = vpow.pop %v1802
    %v1804 = vadd.f32 %v1801, 1.0
    %v1805 = vadd.f32 %v1803, 1.0
    %v1806 = vrcp.pop %v1804
    %v1807 = vmul.f32 1.0, %v1806
    %v1808 = vrcp.pop %v1805
    %v1809 = vmul.f32 1.0, %v1808
    %v1810 = vmul.f32 %v1793, %v1042
    %v1811 = vmul.f32 %v1795, %v1043
    %v1812 = vmul.f32 %v1781, %v1796
    %v1813 = vmul.f32 %v1783, %v1797
    %v1814 = vadd.f32 %v1810, %v1812
    %v1815 = vadd.f32 %v1811, %v1813
    %v1816 = vtanh.pop %v1814
    %v1817 = vtanh.pop %v1815
    %v1818 = vmul.f32 %v1807, %v1816
    %v1819 = vmul.f32 %v1809, %v1817
    %v1820 = vpack.c.bf16 %v1819, %v1818
    %1821 = vmatprep.subr.bf16.mxu0 %v1178
    %1822 = vmatpush1.bf16.msra.mxu0 %v1177
    %1823 = vmatprep.subr.bf16.mxu0 %v1182
    %1824 = vmatpush1.bf16.msra.mxu0 %v1181
    %1825 = vmatprep.subr.bf16.mxu0 %v1186
    %1826 = vmatpush1.bf16.msra.mxu0 %v1185
    %1827 = vmatprep.subr.bf16.mxu0 %v1190
    %1828 = vmatpush1.bf16.msra.mxu0 %v1189
    %1829 = vmatprep.subr.bf16.mxu0 %v1194
    %1830 = vmatpush1.bf16.msra.mxu0 %v1193
    %1831 = vmatprep.subr.bf16.mxu0 %v1198
    %1832 = vmatpush1.bf16.msra.mxu0 %v1197
    %1833 = vmatprep.subr.bf16.mxu0 %v1202
    %1834 = vmatpush1.bf16.msra.mxu0 %v1201
    %1835 = vmatprep.subr.bf16.mxu0 %v1206
    %1836 = vmatpush1.bf16.msra.mxu0 %v1205
    %1837 = vmatprep.subr.bf16.mxu0 0
    %1838 = vmatpush1.bf16.msra.mxu0 0
    %1839 = vmatprep.subr.bf16.mxu0 0
    %1840 = vmatpush1.bf16.msra.mxu0 0
    %1841 = vmatprep.subr.bf16.mxu0 0
    %1842 = vmatpush1.bf16.msra.mxu0 0
    %1843 = vmatprep.subr.bf16.mxu0 0
    %1844 = vmatpush1.bf16.msra.mxu0 0
    %1845 = vmatprep.subr.bf16.mxu0 0
    %1846 = vmatpush1.bf16.msra.mxu0 0
    %1847 = vmatprep.subr.bf16.mxu0 0
    %1848 = vmatpush1.bf16.msra.mxu0 0
    %1849 = vmatprep.subr.bf16.mxu0 0
    %1850 = vmatpush1.bf16.msra.mxu0 0
    %1851 = vmatprep.subr.bf16.mxu0 0
    %1852 = vmatpush1.bf16.msra.mxu0 0
    %1853 = vmatprep.mubr.bf16.mxu0 0
    %1854 = vmatmul.mubr.bf16.gmra.mrb[0].mxu0 %v1820
    %v1855 = vpop.f32.mrb[0].mxu0
    %v1856 = vadd.f32 0.0, %v1855
    %v1857 = vpop.f32.mrb[0].mxu0
    %v1858 = vadd.f32 0.0, %v1857
    %v1859 = vpop.f32.mrb[0].mxu0
    %v1860 = vadd.f32 0.0, %v1859
    %v1861 = vpop.f32.mrb[0].mxu0
    %v1862 = vadd.f32 0.0, %v1861
    %1863 = vdwg.mxu0
    %1864 = vmatprep.subr.bf16.mxu0 %v1180
    %1865 = vmatpush1.bf16.msra.mxu0 %v1179
    %1866 = vmatprep.subr.bf16.mxu0 %v1184
    %1867 = vmatpush1.bf16.msra.mxu0 %v1183
    %1868 = vmatprep.subr.bf16.mxu0 %v1188
    %1869 = vmatpush1.bf16.msra.mxu0 %v1187
    %1870 = vmatprep.subr.bf16.mxu0 %v1192
    %1871 = vmatpush1.bf16.msra.mxu0 %v1191
    %1872 = vmatprep.subr.bf16.mxu0 %v1196
    %1873 = vmatpush1.bf16.msra.mxu0 %v1195
    %1874 = vmatprep.subr.bf16.mxu0 %v1200
    %1875 = vmatpush1.bf16.msra.mxu0 %v1199
    %1876 = vmatprep.subr.bf16.mxu0 %v1204
    %1877 = vmatpush1.bf16.msra.mxu0 %v1203
    %1878 = vmatprep.subr.bf16.mxu0 %v1208
    %1879 = vmatpush1.bf16.msra.mxu0 %v1207
    %1880 = vmatprep.subr.bf16.mxu0 0
    %1881 = vmatpush1.bf16.msra.mxu0 0
    %1882 = vmatprep.subr.bf16.mxu0 0
    %1883 = vmatpush1.bf16.msra.mxu0 0
    %1884 = vmatprep.subr.bf16.mxu0 0
    %1885 = vmatpush1.bf16.msra.mxu0 0
    %1886 = vmatprep.subr.bf16.mxu0 0
    %1887 = vmatpush1.bf16.msra.mxu0 0
    %1888 = vmatprep.subr.bf16.mxu0 0
    %1889 = vmatpush1.bf16.msra.mxu0 0
    %1890 = vmatprep.subr.bf16.mxu0 0
    %1891 = vmatpush1.bf16.msra.mxu0 0
    %1892 = vmatprep.subr.bf16.mxu0 0
    %1893 = vmatpush1.bf16.msra.mxu0 0
    %1894 = vmatprep.subr.bf16.mxu0 0
    %1895 = vmatpush1.bf16.msra.mxu0 0
    %1896 = vmatprep.mubr.bf16.mxu0 0
    %1897 = vmatmul.mubr.bf16.gmra.mrb[0].mxu0 %v1820
    %v1898 = vpop.f32.mrb[0].mxu0
    %v1899 = vadd.f32 0.0, %v1898
    %v1900 = vpop.f32.mrb[0].mxu0
    %v1901 = vadd.f32 0.0, %v1900
    %v1902 = vpop.f32.mrb[0].mxu0
    %v1903 = vadd.f32 0.0, %v1902
    %v1904 = vpop.f32.mrb[0].mxu0
    %v1905 = vadd.f32 0.0, %v1904
    %1906 = vdwg.mxu0
    %v1907 = vadd.f32 %v1670, %v1856
    %v1908 = vadd.f32 %v1671, %v1858
    %v1909 = vadd.f32 %v1672, %v1899
    %v1910 = vadd.f32 %v1673, %v1901
    %v1911 = vadd.f32 %v1674, %v1860
    %v1912 = vadd.f32 %v1675, %v1862
    %v1913 = vadd.f32 %v1676, %v1903
    %v1914 = vadd.f32 %v1677, %v1905
    %v1915 = vxor.u32 %v1907, 2147483648
    %v1916 = vxor.u32 %v1911, 2147483648
    %v1917 = vmul.f32 %v1915, 1.442695
    %v1918 = vpow.pop %v1917
    %v1919 = vmul.f32 %v1916, 1.442695
    %v1920 = vpow.pop %v1919
    %v1921 = vadd.f32 %v1918, 1.0
    %v1922 = vadd.f32 %v1920, 1.0
    %v1923 = vrcp.pop %v1921
    %v1924 = vmul.f32 1.0, %v1923
    %v1925 = vrcp.pop %v1922
    %v1926 = vmul.f32 1.0, %v1925
    %v1927 = vxor.u32 %v1908, 2147483648
    %v1928 = vxor.u32 %v1912, 2147483648
    %v1929 = vmul.f32 %v1927, 1.442695
    %v1930 = vpow.pop %v1929
    %v1931 = vmul.f32 %v1928, 1.442695
    %v1932 = vpow.pop %v1931
    %v1933 = vadd.f32 %v1930, 1.0
    %v1934 = vadd.f32 %v1932, 1.0
    %v1935 = vrcp.pop %v1933
    %v1936 = vmul.f32 1.0, %v1935
    %v1937 = vrcp.pop %v1934
    %v1938 = vmul.f32 1.0, %v1937
    %v1939 = vtanh.pop %v1909
    %v1940 = vtanh.pop %v1913
    %v1941 = vxor.u32 %v1910, 2147483648
    %v1942 = vxor.u32 %v1914, 2147483648
    %v1943 = vmul.f32 %v1941, 1.442695
    %v1944 = vpow.pop %v1943
    %v1945 = vmul.f32 %v1942, 1.442695
    %v1946 = vpow.pop %v1945
    %v1947 = vadd.f32 %v1944, 1.0
    %v1948 = vadd.f32 %v1946, 1.0
    %v1949 = vrcp.pop %v1947
    %v1950 = vmul.f32 1.0, %v1949
    %v1951 = vrcp.pop %v1948
    %v1952 = vmul.f32 1.0, %v1951
    %v1953 = vmul.f32 %v1936, %v1377
    %v1954 = vmul.f32 %v1938, %v1378
    %v1955 = vmul.f32 %v1924, %v1939
    %v1956 = vmul.f32 %v1926, %v1940
    %v1957 = vadd.f32 %v1953, %v1955
    %v1958 = vadd.f32 %v1954, %v1956
    %v1959 = vtanh.pop %v1957
    %v1960 = vtanh.pop %v1958
    %v1961 = vmul.f32 %v1950, %v1959
    %v1962 = vmul.f32 %v1952, %v1960
    %vm1963 = vcmp.ne.f32.partialorder %v1961, %v1961
    %vm1964 = vcmp.ne.f32.partialorder %v1962, %v1962
    %v1965 = vsel %vm1963, 1, 0
    %v1966 = vsel %vm1964, 1, 0
    %v1967 = vcvt.s32.f32 %v1965
    %v1968 = vcvt.s32.f32 %v1966
    %v1969 = vmax.f32 %v1389, %v1967
    %v1970 = vmax.f32 %v1390, %v1968
    %v1971 = vpack.c.bf16 %v1962, %v1961
    %1972 = vmatprep.subr.bf16.mxu0 %v1521
    %1973 = vmatpush1.bf16.msra.mxu0 %v1520
    %1974 = vmatprep.subr.bf16.mxu0 %v1525
    %1975 = vmatpush1.bf16.msra.mxu0 %v1524
    %1976 = vmatprep.subr.bf16.mxu0 %v1529
    %1977 = vmatpush1.bf16.msra.mxu0 %v1528
    %1978 = vmatprep.subr.bf16.mxu0 %v1533
    %1979 = vmatpush1.bf16.msra.mxu0 %v1532
    %1980 = vmatprep.subr.bf16.mxu0 %v1537
    %1981 = vmatpush1.bf16.msra.mxu0 %v1536
    %1982 = vmatprep.subr.bf16.mxu0 %v1541
    %1983 = vmatpush1.bf16.msra.mxu0 %v1540
    %1984 = vmatprep.subr.bf16.mxu0 %v1545
    %1985 = vmatpush1.bf16.msra.mxu0 %v1544
    %1986 = vmatprep.subr.bf16.mxu0 %v1549
    %1987 = vmatpush1.bf16.msra.mxu0 %v1548
    %1988 = vmatprep.subr.bf16.mxu0 0
    %1989 = vmatpush1.bf16.msra.mxu0 0
    %1990 = vmatprep.subr.bf16.mxu0 0
    %1991 = vmatpush1.bf16.msra.mxu0 0
    %1992 = vmatprep.subr.bf16.mxu0 0
    %1993 = vmatpush1.bf16.msra.mxu0 0
    %1994 = vmatprep.subr.bf16.mxu0 0
    %1995 = vmatpush1.bf16.msra.mxu0 0
    %1996 = vmatprep.subr.bf16.mxu0 0
    %1997 = vmatpush1.bf16.msra.mxu0 0
    %1998 = vmatprep.subr.bf16.mxu0 0
    %1999 = vmatpush1.bf16.msra.mxu0 0
    %2000 = vmatprep.subr.bf16.mxu0 0
    %2001 = vmatpush1.bf16.msra.mxu0 0
    %2002 = vmatprep.subr.bf16.mxu0 0
    %2003 = vmatpush1.bf16.msra.mxu0 0
    %2004 = vmatprep.mubr.bf16.mxu0 0
    %2005 = vmatmul.mubr.bf16.gmra.mrb[0].mxu0 %v1971
    %v2006 = vpop.f32.mrb[0].mxu0
    %v2007 = vadd.f32 0.0, %v2006
    %v2008 = vpop.f32.mrb[0].mxu0
    %v2009 = vadd.f32 0.0, %v2008
    %v2010 = vpop.f32.mrb[0].mxu0
    %v2011 = vadd.f32 0.0, %v2010
    %v2012 = vpop.f32.mrb[0].mxu0
    %v2013 = vadd.f32 0.0, %v2012
    %2014 = vdwg.mxu0
    %2015 = vmatprep.subr.bf16.mxu0 %v1523
    %2016 = vmatpush1.bf16.msra.mxu0 %v1522
    %2017 = vmatprep.subr.bf16.mxu0 %v1527
    %2018 = vmatpush1.bf16.msra.mxu0 %v1526
    %2019 = vmatprep.subr.bf16.mxu0 %v1531
    %2020 = vmatpush1.bf16.msra.mxu0 %v1530
    %2021 = vmatprep.subr.bf16.mxu0 %v1535
    %2022 = vmatpush1.bf16.msra.mxu0 %v1534
    %2023 = vmatprep.subr.bf16.mxu0 %v1539
    %2024 = vmatpush1.bf16.msra.mxu0 %v1538
    %2025 = vmatprep.subr.bf16.mxu0 %v1543
    %2026 = vmatpush1.bf16.msra.mxu0 %v1542
    %2027 = vmatprep.subr.bf16.mxu0 %v1547
    %2028 = vmatpush1.bf16.msra.mxu0 %v1546
    %2029 = vmatprep.subr.bf16.mxu0 %v1551
    %2030 = vmatpush1.bf16.msra.mxu0 %v1550
    %2031 = vmatprep.subr.bf16.mxu0 0
    %2032 = vmatpush1.bf16.msra.mxu0 0
    %2033 = vmatprep.subr.bf16.mxu0 0
    %2034 = vmatpush1.bf16.msra.mxu0 0
    %2035 = vmatprep.subr.bf16.mxu0 0
    %2036 = vmatpush1.bf16.msra.mxu0 0
    %2037 = vmatprep.subr.bf16.mxu0 0
    %2038 = vmatpush1.bf16.msra.mxu0 0
    %2039 = vmatprep.subr.bf16.mxu0 0
    %2040 = vmatpush1.bf16.msra.mxu0 0
    %2041 = vmatprep.subr.bf16.mxu0 0
    %2042 = vmatpush1.bf16.msra.mxu0 0
    %2043 = vmatprep.subr.bf16.mxu0 0
    %2044 = vmatpush1.bf16.msra.mxu0 0
    %2045 = vmatprep.subr.bf16.mxu0 0
    %2046 = vmatpush1.bf16.msra.mxu0 0
    %2047 = vmatprep.mubr.bf16.mxu0 0
    %2048 = vmatmul.mubr.bf16.gmra.mrb[0].mxu0 %v1971
    %v2049 = vpop.f32.mrb[0].mxu0
    %v2050 = vadd.f32 0.0, %v2049
    %v2051 = vpop.f32.mrb[0].mxu0
    %v2052 = vadd.f32 0.0, %v2051
    %v2053 = vpop.f32.mrb[0].mxu0
    %v2054 = vadd.f32 0.0, %v2053
    %v2055 = vpop.f32.mrb[0].mxu0
    %v2056 = vadd.f32 0.0, %v2055
    %2057 = vdwg.mxu0
    %v2058 = vadd.f32 %v697, %v2007
    %v2059 = vadd.f32 %v701, %v2009
    %v2060 = vadd.f32 %v705, %v2050
    %v2061 = vadd.f32 %v709, %v2052
    %v2062 = vadd.f32 %v697, %v2011
    %v2063 = vadd.f32 %v701, %v2013
    %v2064 = vadd.f32 %v705, %v2054
    %v2065 = vadd.f32 %v709, %v2056
    %2066 = vmatprep.subr.bf16.mxu0 %v843
    %2067 = vmatpush1.bf16.msra.mxu0 %v842
    %2068 = vmatprep.subr.bf16.mxu0 %v847
    %2069 = vmatpush1.bf16.msra.mxu0 %v846
    %2070 = vmatprep.subr.bf16.mxu0 %v851
    %2071 = vmatpush1.bf16.msra.mxu0 %v850
    %2072 = vmatprep.subr.bf16.mxu0 %v855
    %2073 = vmatpush1.bf16.msra.mxu0 %v854
    %2074 = vmatprep.subr.bf16.mxu0 %v859
    %2075 = vmatpush1.bf16.msra.mxu0 %v858
    %2076 = vmatprep.subr.bf16.mxu0 %v863
    %2077 = vmatpush1.bf16.msra.mxu0 %v862
    %2078 = vmatprep.subr.bf16.mxu0 %v867
    %2079 = vmatpush1.bf16.msra.mxu0 %v866
    %2080 = vmatprep.subr.bf16.mxu0 %v871
    %2081 = vmatpush1.bf16.msra.mxu0 %v870
    %2082 = vmatprep.subr.bf16.mxu0 0
    %2083 = vmatpush1.bf16.msra.mxu0 0
    %2084 = vmatprep.subr.bf16.mxu0 0
    %2085 = vmatpush1.bf16.msra.mxu0 0
    %2086 = vmatprep.subr.bf16.mxu0 0
    %2087 = vmatpush1.bf16.msra.mxu0 0
    %2088 = vmatprep.subr.bf16.mxu0 0
    %2089 = vmatpush1.bf16.msra.mxu0 0
    %2090 = vmatprep.subr.bf16.mxu0 0
    %2091 = vmatpush1.bf16.msra.mxu0 0
    %2092 = vmatprep.subr.bf16.mxu0 0
    %2093 = vmatpush1.bf16.msra.mxu0 0
    %2094 = vmatprep.subr.bf16.mxu0 0
    %2095 = vmatpush1.bf16.msra.mxu0 0
    %2096 = vmatprep.subr.bf16.mxu0 0
    %2097 = vmatpush1.bf16.msra.mxu0 0
    %2098 = vmatprep.mubr.bf16.mxu0 0
    %2099 = vmatmul.mubr.bf16.gmra.mrb[0].mxu0 %v1820
    %v2100 = vpop.f32.mrb[0].mxu0
    %v2101 = vadd.f32 0.0, %v2100
    %v2102 = vpop.f32.mrb[0].mxu0
    %v2103 = vadd.f32 0.0, %v2102
    %v2104 = vpop.f32.mrb[0].mxu0
    %v2105 = vadd.f32 0.0, %v2104
    %v2106 = vpop.f32.mrb[0].mxu0
    %v2107 = vadd.f32 0.0, %v2106
    %2108 = vdwg.mxu0
    %2109 = vmatprep.subr.bf16.mxu0 %v845
    %2110 = vmatpush1.bf16.msra.mxu0 %v844
    %2111 = vmatprep.subr.bf16.mxu0 %v849
    %2112 = vmatpush1.bf16.msra.mxu0 %v848
    %2113 = vmatprep.subr.bf16.mxu0 %v853
    %2114 = vmatpush1.bf16.msra.mxu0 %v852
    %2115 = vmatprep.subr.bf16.mxu0 %v857
    %2116 = vmatpush1.bf16.msra.mxu0 %v856
    %2117 = vmatprep.subr.bf16.mxu0 %v861
    %2118 = vmatpush1.bf16.msra.mxu0 %v860
    %2119 = vmatprep.subr.bf16.mxu0 %v865
    %2120 = vmatpush1.bf16.msra.mxu0 %v864
    %2121 = vmatprep.subr.bf16.mxu0 %v869
    %2122 = vmatpush1.bf16.msra.mxu0 %v868
    %2123 = vmatprep.subr.bf16.mxu0 %v873
    %2124 = vmatpush1.bf16.msra.mxu0 %v872
    %2125 = vmatprep.subr.bf16.mxu0 0
    %2126 = vmatpush1.bf16.msra.mxu0 0
    %2127 = vmatprep.subr.bf16.mxu0 0
    %2128 = vmatpush1.bf16.msra.mxu0 0
    %2129 = vmatprep.subr.bf16.mxu0 0
    %2130 = vmatpush1.bf16.msra.mxu0 0
    %2131 = vmatprep.subr.bf16.mxu0 0
    %2132 = vmatpush1.bf16.msra.mxu0 0
    %2133 = vmatprep.subr.bf16.mxu0 0
    %2134 = vmatpush1.bf16.msra.mxu0 0
    %2135 = vmatprep.subr.bf16.mxu0 0
    %2136 = vmatpush1.bf16.msra.mxu0 0
    %2137 = vmatprep.subr.bf16.mxu0 0
    %2138 = vmatpush1.bf16.msra.mxu0 0
    %2139 = vmatprep.subr.bf16.mxu0 0
    %2140 = vmatpush1.bf16.msra.mxu0 0
    %2141 = vmatprep.mubr.bf16.mxu0 0
    %2142 = vmatmul.mubr.bf16.gmra.mrb[0].mxu0 %v1820
    %v2143 = vpop.f32.mrb[0].mxu0
    %v2144 = vadd.f32 0.0, %v2143
    %v2145 = vpop.f32.mrb[0].mxu0
    %v2146 = vadd.f32 0.0, %v2145
    %v2147 = vpop.f32.mrb[0].mxu0
    %v2148 = vadd.f32 0.0, %v2147
    %v2149 = vpop.f32.mrb[0].mxu0
    %v2150 = vadd.f32 0.0, %v2149
    %2151 = vdwg.mxu0
    %v2152 = vadd.f32 %v521, %v2101
    %v2153 = vadd.f32 %v523, %v2103
    %v2154 = vadd.f32 %v634, %v2144
    %v2155 = vadd.f32 %v636, %v2146
    %v2156 = vadd.f32 %v525, %v2105
    %v2157 = vadd.f32 %v527, %v2107
    %v2158 = vadd.f32 %v638, %v2148
    %v2159 = vadd.f32 %v640, %v2150
    %v2160 = vxor.u32 %v2152, 2147483648
    %v2161 = vxor.u32 %v2156, 2147483648
    %v2162 = vmul.f32 %v2160, 1.442695
    %v2163 = vpow.pop %v2162
    %v2164 = vmul.f32 %v2161, 1.442695
    %v2165 = vpow.pop %v2164
    %v2166 = vadd.f32 %v2163, 1.0
    %v2167 = vadd.f32 %v2165, 1.0
    %v2168 = vrcp.pop %v2166
    %v2169 = vmul.f32 1.0, %v2168
    %v2170 = vrcp.pop %v2167
    %v2171 = vmul.f32 1.0, %v2170
    %v2172 = vxor.u32 %v2153, 2147483648
    %v2173 = vxor.u32 %v2157, 2147483648
    %v2174 = vmul.f32 %v2172, 1.442695
    %v2175 = vpow.pop %v2174
    %v2176 = vmul.f32 %v2173, 1.442695
    %v2177 = vpow.pop %v2176
    %v2178 = vadd.f32 %v2175, 1.0
    %v2179 = vadd.f32 %v2177, 1.0
    %v2180 = vrcp.pop %v2178
    %v2181 = vmul.f32 1.0, %v2180
    %v2182 = vrcp.pop %v2179
    %v2183 = vmul.f32 1.0, %v2182
    %v2184 = vtanh.pop %v2154
    %v2185 = vtanh.pop %v2158
    %v2186 = vxor.u32 %v2155, 2147483648
    %v2187 = vxor.u32 %v2159, 2147483648
    %v2188 = vmul.f32 %v2186, 1.442695
    %v2189 = vpow.pop %v2188
    %v2190 = vmul.f32 %v2187, 1.442695
    %v2191 = vpow.pop %v2190
    %v2192 = vadd.f32 %v2189, 1.0
    %v2193 = vadd.f32 %v2191, 1.0
    %v2194 = vrcp.pop %v2192
    %v2195 = vmul.f32 1.0, %v2194
    %v2196 = vrcp.pop %v2193
    %v2197 = vmul.f32 1.0, %v2196
    %v2198 = vmul.f32 %v2181, %v1814
    %v2199 = vmul.f32 %v2183, %v1815
    %v2200 = vmul.f32 %v2169, %v2184
    %v2201 = vmul.f32 %v2171, %v2185
    %v2202 = vadd.f32 %v2198, %v2200
    %v2203 = vadd.f32 %v2199, %v2201
    %v2204 = vtanh.pop %v2202
    %v2205 = vtanh.pop %v2203
    %v2206 = vmul.f32 %v2195, %v2204
    %v2207 = vmul.f32 %v2197, %v2205
    %v2208 = vpack.c.bf16 %v2207, %v2206
    %2209 = vmatprep.subr.bf16.mxu0 %v1178
    %2210 = vmatpush1.bf16.msra.mxu0 %v1177
    %2211 = vmatprep.subr.bf16.mxu0 %v1182
    %2212 = vmatpush1.bf16.msra.mxu0 %v1181
    %2213 = vmatprep.subr.bf16.mxu0 %v1186
    %2214 = vmatpush1.bf16.msra.mxu0 %v1185
    %2215 = vmatprep.subr.bf16.mxu0 %v1190
    %2216 = vmatpush1.bf16.msra.mxu0 %v1189
    %2217 = vmatprep.subr.bf16.mxu0 %v1194
    %2218 = vmatpush1.bf16.msra.mxu0 %v1193
    %2219 = vmatprep.subr.bf16.mxu0 %v1198
    %2220 = vmatpush1.bf16.msra.mxu0 %v1197
    %2221 = vmatprep.subr.bf16.mxu0 %v1202
    %2222 = vmatpush1.bf16.msra.mxu0 %v1201
    %2223 = vmatprep.subr.bf16.mxu0 %v1206
    %2224 = vmatpush1.bf16.msra.mxu0 %v1205
    %2225 = vmatprep.subr.bf16.mxu0 0
    %2226 = vmatpush1.bf16.msra.mxu0 0
    %2227 = vmatprep.subr.bf16.mxu0 0
    %2228 = vmatpush1.bf16.msra.mxu0 0
    %2229 = vmatprep.subr.bf16.mxu0 0
    %2230 = vmatpush1.bf16.msra.mxu0 0
    %2231 = vmatprep.subr.bf16.mxu0 0
    %2232 = vmatpush1.bf16.msra.mxu0 0
    %2233 = vmatprep.subr.bf16.mxu0 0
    %2234 = vmatpush1.bf16.msra.mxu0 0
    %2235 = vmatprep.subr.bf16.mxu0 0
    %2236 = vmatpush1.bf16.msra.mxu0 0
    %2237 = vmatprep.subr.bf16.mxu0 0
    %2238 = vmatpush1.bf16.msra.mxu0 0
    %2239 = vmatprep.subr.bf16.mxu0 0
    %2240 = vmatpush1.bf16.msra.mxu0 0
    %2241 = vmatprep.mubr.bf16.mxu0 0
    %2242 = vmatmul.mubr.bf16.gmra.mrb[0].mxu0 %v2208
    %v2243 = vpop.f32.mrb[0].mxu0
    %v2244 = vadd.f32 0.0, %v2243
    %v2245 = vpop.f32.mrb[0].mxu0
    %v2246 = vadd.f32 0.0, %v2245
    %v2247 = vpop.f32.mrb[0].mxu0
    %v2248 = vadd.f32 0.0, %v2247
    %v2249 = vpop.f32.mrb[0].mxu0
    %v2250 = vadd.f32 0.0, %v2249
    %2251 = vdwg.mxu0
    %2252 = vmatprep.subr.bf16.mxu0 %v1180
    %2253 = vmatpush1.bf16.msra.mxu0 %v1179
    %2254 = vmatprep.subr.bf16.mxu0 %v1184
    %2255 = vmatpush1.bf16.msra.mxu0 %v1183
    %2256 = vmatprep.subr.bf16.mxu0 %v1188
    %2257 = vmatpush1.bf16.msra.mxu0 %v1187
    %2258 = vmatprep.subr.bf16.mxu0 %v1192
    %2259 = vmatpush1.bf16.msra.mxu0 %v1191
    %2260 = vmatprep.subr.bf16.mxu0 %v1196
    %2261 = vmatpush1.bf16.msra.mxu0 %v1195
    %2262 = vmatprep.subr.bf16.mxu0 %v1200
    %2263 = vmatpush1.bf16.msra.mxu0 %v1199
    %2264 = vmatprep.subr.bf16.mxu0 %v1204
    %2265 = vmatpush1.bf16.msra.mxu0 %v1203
    %2266 = vmatprep.subr.bf16.mxu0 %v1208
    %2267 = vmatpush1.bf16.msra.mxu0 %v1207
    %2268 = vmatprep.subr.bf16.mxu0 0
    %2269 = vmatpush1.bf16.msra.mxu0 0
    %2270 = vmatprep.subr.bf16.mxu0 0
    %2271 = vmatpush1.bf16.msra.mxu0 0
    %2272 = vmatprep.subr.bf16.mxu0 0
    %2273 = vmatpush1.bf16.msra.mxu0 0
    %2274 = vmatprep.subr.bf16.mxu0 0
    %2275 = vmatpush1.bf16.msra.mxu0 0
    %2276 = vmatprep.subr.bf16.mxu0 0
    %2277 = vmatpush1.bf16.msra.mxu0 0
    %2278 = vmatprep.subr.bf16.mxu0 0
    %2279 = vmatpush1.bf16.msra.mxu0 0
    %2280 = vmatprep.subr.bf16.mxu0 0
    %2281 = vmatpush1.bf16.msra.mxu0 0
    %2282 = vmatprep.subr.bf16.mxu0 0
    %2283 = vmatpush1.bf16.msra.mxu0 0
    %2284 = vmatprep.mubr.bf16.mxu0 0
    %2285 = vmatmul.mubr.bf16.gmra.mrb[0].mxu0 %v2208
    %v2286 = vpop.f32.mrb[0].mxu0
    %v2287 = vadd.f32 0.0, %v2286
    %v2288 = vpop.f32.mrb[0].mxu0
    %v2289 = vadd.f32 0.0, %v2288
    %v2290 = vpop.f32.mrb[0].mxu0
    %v2291 = vadd.f32 0.0, %v2290
    %v2292 = vpop.f32.mrb[0].mxu0
    %v2293 = vadd.f32 0.0, %v2292
    %2294 = vdwg.mxu0
    %v2295 = vadd.f32 %v2058, %v2244
    %v2296 = vadd.f32 %v2059, %v2246
    %v2297 = vadd.f32 %v2060, %v2287
    %v2298 = vadd.f32 %v2061, %v2289
    %v2299 = vadd.f32 %v2062, %v2248
    %v2300 = vadd.f32 %v2063, %v2250
    %v2301 = vadd.f32 %v2064, %v2291
    %v2302 = vadd.f32 %v2065, %v2293
    %v2303 = vxor.u32 %v2295, 2147483648
    %v2304 = vxor.u32 %v2299, 2147483648
    %v2305 = vmul.f32 %v2303, 1.442695
    %v2306 = vpow.pop %v2305
    %v2307 = vmul.f32 %v2304, 1.442695
    %v2308 = vpow.pop %v2307
    %v2309 = vadd.f32 %v2306, 1.0
    %v2310 = vadd.f32 %v2308, 1.0
    %v2311 = vrcp.pop %v2309
    %v2312 = vmul.f32 1.0, %v2311
    %v2313 = vrcp.pop %v2310
    %v2314 = vmul.f32 1.0, %v2313
    %v2315 = vxor.u32 %v2296, 2147483648
    %v2316 = vxor.u32 %v2300, 2147483648
    %v2317 = vmul.f32 %v2315, 1.442695
    %v2318 = vpow.pop %v2317
    %v2319 = vmul.f32 %v2316, 1.442695
    %v2320 = vpow.pop %v2319
    %v2321 = vadd.f32 %v2318, 1.0
    %v2322 = vadd.f32 %v2320, 1.0
    %v2323 = vrcp.pop %v2321
    %v2324 = vmul.f32 1.0, %v2323
    %v2325 = vrcp.pop %v2322
    %v2326 = vmul.f32 1.0, %v2325
    %v2327 = vtanh.pop %v2297
    %v2328 = vtanh.pop %v2301
    %v2329 = vxor.u32 %v2298, 2147483648
    %v2330 = vxor.u32 %v2302, 2147483648
    %v2331 = vmul.f32 %v2329, 1.442695
    %v2332 = vpow.pop %v2331
    %v2333 = vmul.f32 %v2330, 1.442695
    %v2334 = vpow.pop %v2333
    %v2335 = vadd.f32 %v2332, 1.0
    %v2336 = vadd.f32 %v2334, 1.0
    %v2337 = vrcp.pop %v2335
    %v2338 = vmul.f32 1.0, %v2337
    %v2339 = vrcp.pop %v2336
    %v2340 = vmul.f32 1.0, %v2339
    %v2341 = vmul.f32 %v2324, %v1957
    %v2342 = vmul.f32 %v2326, %v1958
    %v2343 = vmul.f32 %v2312, %v2327
    %v2344 = vmul.f32 %v2314, %v2328
    %v2345 = vadd.f32 %v2341, %v2343
    %v2346 = vadd.f32 %v2342, %v2344
    %v2347 = vtanh.pop %v2345
    %v2348 = vtanh.pop %v2346
    %v2349 = vmul.f32 %v2338, %v2347
    %v2350 = vmul.f32 %v2340, %v2348
    %vm2351 = vcmp.ne.f32.partialorder %v2349, %v2349
    %vm2352 = vcmp.ne.f32.partialorder %v2350, %v2350
    %v2353 = vsel %vm2351, 1, 0
    %v2354 = vsel %vm2352, 1, 0
    %v2355 = vcvt.s32.f32 %v2353
    %v2356 = vcvt.s32.f32 %v2354
    %v2357 = vmax.f32 %v1969, %v2355
    %v2358 = vmax.f32 %v1970, %v2356
    %v2359 = vpack.c.bf16 %v2350, %v2349
    %2360 = vmatprep.subr.bf16.mxu0 %v1521
    %2361 = vmatpush1.bf16.msra.mxu0 %v1520
    %2362 = vmatprep.subr.bf16.mxu0 %v1525
    %2363 = vmatpush1.bf16.msra.mxu0 %v1524
    %2364 = vmatprep.subr.bf16.mxu0 %v1529
    %2365 = vmatpush1.bf16.msra.mxu0 %v1528
    %2366 = vmatprep.subr.bf16.mxu0 %v1533
    %2367 = vmatpush1.bf16.msra.mxu0 %v1532
    %2368 = vmatprep.subr.bf16.mxu0 %v1537
    %2369 = vmatpush1.bf16.msra.mxu0 %v1536
    %2370 = vmatprep.subr.bf16.mxu0 %v1541
    %2371 = vmatpush1.bf16.msra.mxu0 %v1540
    %2372 = vmatprep.subr.bf16.mxu0 %v1545
    %2373 = vmatpush1.bf16.msra.mxu0 %v1544
    %2374 = vmatprep.subr.bf16.mxu0 %v1549
    %2375 = vmatpush1.bf16.msra.mxu0 %v1548
    %2376 = vmatprep.subr.bf16.mxu0 0
    %2377 = vmatpush1.bf16.msra.mxu0 0
    %2378 = vmatprep.subr.bf16.mxu0 0
    %2379 = vmatpush1.bf16.msra.mxu0 0
    %2380 = vmatprep.subr.bf16.mxu0 0
    %2381 = vmatpush1.bf16.msra.mxu0 0
    %2382 = vmatprep.subr.bf16.mxu0 0
    %2383 = vmatpush1.bf16.msra.mxu0 0
    %2384 = vmatprep.subr.bf16.mxu0 0
    %2385 = vmatpush1.bf16.msra.mxu0 0
    %2386 = vmatprep.subr.bf16.mxu0 0
    %2387 = vmatpush1.bf16.msra.mxu0 0
    %2388 = vmatprep.subr.bf16.mxu0 0
    %2389 = vmatpush1.bf16.msra.mxu0 0
    %2390 = vmatprep.subr.bf16.mxu0 0
    %2391 = vmatpush1.bf16.msra.mxu0 0
    %2392 = vmatprep.mubr.bf16.mxu0 0
    %2393 = vmatmul.mubr.bf16.gmra.mrb[0].mxu0 %v2359
    %v2394 = vpop.f32.mrb[0].mxu0
    %v2395 = vadd.f32 0.0, %v2394
    %v2396 = vpop.f32.mrb[0].mxu0
    %v2397 = vadd.f32 0.0, %v2396
    %v2398 = vpop.f32.mrb[0].mxu0
    %v2399 = vadd.f32 0.0, %v2398
    %v2400 = vpop.f32.mrb[0].mxu0
    %v2401 = vadd.f32 0.0, %v2400
    %2402 = vdwg.mxu0
    %2403 = vmatprep.subr.bf16.mxu0 %v1523
    %2404 = vmatpush1.bf16.msra.mxu0 %v1522
    %2405 = vmatprep.subr.bf16.mxu0 %v1527
    %2406 = vmatpush1.bf16.msra.mxu0 %v1526
    %2407 = vmatprep.subr.bf16.mxu0 %v1531
    %2408 = vmatpush1.bf16.msra.mxu0 %v1530
    %2409 = vmatprep.subr.bf16.mxu0 %v1535
    %2410 = vmatpush1.bf16.msra.mxu0 %v1534
    %2411 = vmatprep.subr.bf16.mxu0 %v1539
    %2412 = vmatpush1.bf16.msra.mxu0 %v1538
    %2413 = vmatprep.subr.bf16.mxu0 %v1543
    %2414 = vmatpush1.bf16.msra.mxu0 %v1542
    %2415 = vmatprep.subr.bf16.mxu0 %v1547
    %2416 = vmatpush1.bf16.msra.mxu0 %v1546
    %2417 = vmatprep.subr.bf16.mxu0 %v1551
    %2418 = vmatpush1.bf16.msra.mxu0 %v1550
    %2419 = vmatprep.subr.bf16.mxu0 0
    %2420 = vmatpush1.bf16.msra.mxu0 0
    %2421 = vmatprep.subr.bf16.mxu0 0
    %2422 = vmatpush1.bf16.msra.mxu0 0
    %2423 = vmatprep.subr.bf16.mxu0 0
    %2424 = vmatpush1.bf16.msra.mxu0 0
    %2425 = vmatprep.subr.bf16.mxu0 0
    %2426 = vmatpush1.bf16.msra.mxu0 0
    %2427 = vmatprep.subr.bf16.mxu0 0
    %2428 = vmatpush1.bf16.msra.mxu0 0
    %2429 = vmatprep.subr.bf16.mxu0 0
    %2430 = vmatpush1.bf16.msra.mxu0 0
    %2431 = vmatprep.subr.bf16.mxu0 0
    %2432 = vmatpush1.bf16.msra.mxu0 0
    %2433 = vmatprep.subr.bf16.mxu0 0
    %2434 = vmatpush1.bf16.msra.mxu0 0
    %2435 = vmatprep.mubr.bf16.mxu0 0
    %2436 = vmatmul.mubr.bf16.gmra.mrb[0].mxu0 %v2359
    %v2437 = vpop.f32.mrb[0].mxu0
    %v2438 = vadd.f32 0.0, %v2437
    %v2439 = vpop.f32.mrb[0].mxu0
    %v2440 = vadd.f32 0.0, %v2439
    %v2441 = vpop.f32.mrb[0].mxu0
    %v2442 = vadd.f32 0.0, %v2441
    %v2443 = vpop.f32.mrb[0].mxu0
    %v2444 = vadd.f32 0.0, %v2443
    %2445 = vdwg.mxu0
    %v2446 = vadd.f32 %v697, %v2395
    %v2447 = vadd.f32 %v701, %v2397
    %v2448 = vadd.f32 %v705, %v2438
    %v2449 = vadd.f32 %v709, %v2440
    %v2450 = vadd.f32 %v697, %v2399
    %v2451 = vadd.f32 %v701, %v2401
    %v2452 = vadd.f32 %v705, %v2442
    %v2453 = vadd.f32 %v709, %v2444
    %2454 = vmatprep.subr.bf16.mxu0 %v843
    %2455 = vmatpush1.bf16.msra.mxu0 %v842
    %2456 = vmatprep.subr.bf16.mxu0 %v847
    %2457 = vmatpush1.bf16.msra.mxu0 %v846
    %2458 = vmatprep.subr.bf16.mxu0 %v851
    %2459 = vmatpush1.bf16.msra.mxu0 %v850
    %2460 = vmatprep.subr.bf16.mxu0 %v855
    %2461 = vmatpush1.bf16.msra.mxu0 %v854
    %2462 = vmatprep.subr.bf16.mxu0 %v859
    %2463 = vmatpush1.bf16.msra.mxu0 %v858
    %2464 = vmatprep.subr.bf16.mxu0 %v863
    %2465 = vmatpush1.bf16.msra.mxu0 %v862
    %2466 = vmatprep.subr.bf16.mxu0 %v867
    %2467 = vmatpush1.bf16.msra.mxu0 %v866
    %2468 = vmatprep.subr.bf16.mxu0 %v871
    %2469 = vmatpush1.bf16.msra.mxu0 %v870
    %2470 = vmatprep.subr.bf16.mxu0 0
    %2471 = vmatpush1.bf16.msra.mxu0 0
    %2472 = vmatprep.subr.bf16.mxu0 0
    %2473 = vmatpush1.bf16.msra.mxu0 0
    %2474 = vmatprep.subr.bf16.mxu0 0
    %2475 = vmatpush1.bf16.msra.mxu0 0
    %2476 = vmatprep.subr.bf16.mxu0 0
    %2477 = vmatpush1.bf16.msra.mxu0 0
    %2478 = vmatprep.subr.bf16.mxu0 0
    %2479 = vmatpush1.bf16.msra.mxu0 0
    %2480 = vmatprep.subr.bf16.mxu0 0
    %2481 = vmatpush1.bf16.msra.mxu0 0
    %2482 = vmatprep.subr.bf16.mxu0 0
    %2483 = vmatpush1.bf16.msra.mxu0 0
    %2484 = vmatprep.subr.bf16.mxu0 0
    %2485 = vmatpush1.bf16.msra.mxu0 0
    %2486 = vmatprep.mubr.bf16.mxu0 0
    %2487 = vmatmul.mubr.bf16.gmra.mrb[0].mxu0 %v2208
    %v2488 = vpop.f32.mrb[0].mxu0
    %v2489 = vadd.f32 0.0, %v2488
    %v2490 = vpop.f32.mrb[0].mxu0
    %v2491 = vadd.f32 0.0, %v2490
    %v2492 = vpop.f32.mrb[0].mxu0
    %v2493 = vadd.f32 0.0, %v2492
    %v2494 = vpop.f32.mrb[0].mxu0
    %v2495 = vadd.f32 0.0, %v2494
    %2496 = vdwg.mxu0
    %2497 = vmatprep.subr.bf16.mxu0 %v845
    %2498 = vmatpush1.bf16.msra.mxu0 %v844
    %2499 = vmatprep.subr.bf16.mxu0 %v849
    %2500 = vmatpush1.bf16.msra.mxu0 %v848
    %2501 = vmatprep.subr.bf16.mxu0 %v853
    %2502 = vmatpush1.bf16.msra.mxu0 %v852
    %2503 = vmatprep.subr.bf16.mxu0 %v857
    %2504 = vmatpush1.bf16.msra.mxu0 %v856
    %2505 = vmatprep.subr.bf16.mxu0 %v861
    %2506 = vmatpush1.bf16.msra.mxu0 %v860
    %2507 = vmatprep.subr.bf16.mxu0 %v865
    %2508 = vmatpush1.bf16.msra.mxu0 %v864
    %2509 = vmatprep.subr.bf16.mxu0 %v869
    %2510 = vmatpush1.bf16.msra.mxu0 %v868
    %2511 = vmatprep.subr.bf16.mxu0 %v873
    %2512 = vmatpush1.bf16.msra.mxu0 %v872
    %2513 = vmatprep.subr.bf16.mxu0 0
    %2514 = vmatpush1.bf16.msra.mxu0 0
    %2515 = vmatprep.subr.bf16.mxu0 0
    %2516 = vmatpush1.bf16.msra.mxu0 0
    %2517 = vmatprep.subr.bf16.mxu0 0
    %2518 = vmatpush1.bf16.msra.mxu0 0
    %2519 = vmatprep.subr.bf16.mxu0 0
    %2520 = vmatpush1.bf16.msra.mxu0 0
    %2521 = vmatprep.subr.bf16.mxu0 0
    %2522 = vmatpush1.bf16.msra.mxu0 0
    %2523 = vmatprep.subr.bf16.mxu0 0
    %2524 = vmatpush1.bf16.msra.mxu0 0
    %2525 = vmatprep.subr.bf16.mxu0 0
    %2526 = vmatpush1.bf16.msra.mxu0 0
    %2527 = vmatprep.subr.bf16.mxu0 0
    %2528 = vmatpush1.bf16.msra.mxu0 0
    %2529 = vmatprep.mubr.bf16.mxu0 0
    %2530 = vmatmul.mubr.bf16.gmra.mrb[0].mxu0 %v2208
    %v2531 = vpop.f32.mrb[0].mxu0
    %v2532 = vadd.f32 0.0, %v2531
    %v2533 = vpop.f32.mrb[0].mxu0
    %v2534 = vadd.f32 0.0, %v2533
    %v2535 = vpop.f32.mrb[0].mxu0
    %v2536 = vadd.f32 0.0, %v2535
    %v2537 = vpop.f32.mrb[0].mxu0
    %v2538 = vadd.f32 0.0, %v2537
    %2539 = vdwg.mxu0
    %v2540 = vadd.f32 %v531, %v2489
    %v2541 = vadd.f32 %v533, %v2491
    %v2542 = vadd.f32 %v644, %v2532
    %v2543 = vadd.f32 %v646, %v2534
    %v2544 = vadd.f32 %v535, %v2493
    %v2545 = vadd.f32 %v537, %v2495
    %v2546 = vadd.f32 %v648, %v2536
    %v2547 = vadd.f32 %v650, %v2538
    %v2548 = vxor.u32 %v2540, 2147483648
    %v2549 = vxor.u32 %v2544, 2147483648
    %v2550 = vmul.f32 %v2548, 1.442695
    %v2551 = vpow.pop %v2550
    %v2552 = vmul.f32 %v2549, 1.442695
    %v2553 = vpow.pop %v2552
    %v2554 = vadd.f32 %v2551, 1.0
    %v2555 = vadd.f32 %v2553, 1.0
    %v2556 = vrcp.pop %v2554
    %v2557 = vmul.f32 1.0, %v2556
    %v2558 = vrcp.pop %v2555
    %v2559 = vmul.f32 1.0, %v2558
    %v2560 = vxor.u32 %v2541, 2147483648
    %v2561 = vxor.u32 %v2545, 2147483648
    %v2562 = vmul.f32 %v2560, 1.442695
    %v2563 = vpow.pop %v2562
    %v2564 = vmul.f32 %v2561, 1.442695
    %v2565 = vpow.pop %v2564
    %v2566 = vadd.f32 %v2563, 1.0
    %v2567 = vadd.f32 %v2565, 1.0
    %v2568 = vrcp.pop %v2566
    %v2569 = vmul.f32 1.0, %v2568
    %v2570 = vrcp.pop %v2567
    %v2571 = vmul.f32 1.0, %v2570
    %v2572 = vtanh.pop %v2542
    %v2573 = vtanh.pop %v2546
    %v2574 = vxor.u32 %v2543, 2147483648
    %v2575 = vxor.u32 %v2547, 2147483648
    %v2576 = vmul.f32 %v2574, 1.442695
    %v2577 = vpow.pop %v2576
    %v2578 = vmul.f32 %v2575, 1.442695
    %v2579 = vpow.pop %v2578
    %v2580 = vadd.f32 %v2577, 1.0
    %v2581 = vadd.f32 %v2579, 1.0
    %v2582 = vrcp.pop %v2580
    %v2583 = vmul.f32 1.0, %v2582
    %v2584 = vrcp.pop %v2581
    %v2585 = vmul.f32 1.0, %v2584
    %v2586 = vmul.f32 %v2569, %v2202
    %v2587 = vmul.f32 %v2571, %v2203
    %v2588 = vmul.f32 %v2557, %v2572
    %v2589 = vmul.f32 %v2559, %v2573
    %v2590 = vadd.f32 %v2586, %v2588
    %v2591 = vadd.f32 %v2587, %v2589
    %v2592 = vtanh.pop %v2590
    %v2593 = vtanh.pop %v2591
    %v2594 = vmul.f32 %v2583, %v2592
    %v2595 = vmul.f32 %v2585, %v2593
    %v2596 = vpack.c.bf16 %v2595, %v2594
    %2597 = vmatprep.subr.bf16.mxu0 %v1178
    %2598 = vmatpush1.bf16.msra.mxu0 %v1177
    %2599 = vmatprep.subr.bf16.mxu0 %v1182
    %2600 = vmatpush1.bf16.msra.mxu0 %v1181
    %2601 = vmatprep.subr.bf16.mxu0 %v1186
    %2602 = vmatpush1.bf16.msra.mxu0 %v1185
    %2603 = vmatprep.subr.bf16.mxu0 %v1190
    %2604 = vmatpush1.bf16.msra.mxu0 %v1189
    %2605 = vmatprep.subr.bf16.mxu0 %v1194
    %2606 = vmatpush1.bf16.msra.mxu0 %v1193
    %2607 = vmatprep.subr.bf16.mxu0 %v1198
    %2608 = vmatpush1.bf16.msra.mxu0 %v1197
    %2609 = vmatprep.subr.bf16.mxu0 %v1202
    %2610 = vmatpush1.bf16.msra.mxu0 %v1201
    %2611 = vmatprep.subr.bf16.mxu0 %v1206
    %2612 = vmatpush1.bf16.msra.mxu0 %v1205
    %2613 = vmatprep.subr.bf16.mxu0 0
    %2614 = vmatpush1.bf16.msra.mxu0 0
    %2615 = vmatprep.subr.bf16.mxu0 0
    %2616 = vmatpush1.bf16.msra.mxu0 0
    %2617 = vmatprep.subr.bf16.mxu0 0
    %2618 = vmatpush1.bf16.msra.mxu0 0
    %2619 = vmatprep.subr.bf16.mxu0 0
    %2620 = vmatpush1.bf16.msra.mxu0 0
    %2621 = vmatprep.subr.bf16.mxu0 0
    %2622 = vmatpush1.bf16.msra.mxu0 0
    %2623 = vmatprep.subr.bf16.mxu0 0
    %2624 = vmatpush1.bf16.msra.mxu0 0
    %2625 = vmatprep.subr.bf16.mxu0 0
    %2626 = vmatpush1.bf16.msra.mxu0 0
    %2627 = vmatprep.subr.bf16.mxu0 0
    %2628 = vmatpush1.bf16.msra.mxu0 0
    %2629 = vmatprep.mubr.bf16.mxu0 0
    %2630 = vmatmul.mubr.bf16.gmra.mrb[0].mxu0 %v2596
    %v2631 = vpop.f32.mrb[0].mxu0
    %v2632 = vadd.f32 0.0, %v2631
    %v2633 = vpop.f32.mrb[0].mxu0
    %v2634 = vadd.f32 0.0, %v2633
    %v2635 = vpop.f32.mrb[0].mxu0
    %v2636 = vadd.f32 0.0, %v2635
    %v2637 = vpop.f32.mrb[0].mxu0
    %v2638 = vadd.f32 0.0, %v2637
    %2639 = vdwg.mxu0
    %2640 = vmatprep.subr.bf16.mxu0 %v1180
    %2641 = vmatpush1.bf16.msra.mxu0 %v1179
    %2642 = vmatprep.subr.bf16.mxu0 %v1184
    %2643 = vmatpush1.bf16.msra.mxu0 %v1183
    %2644 = vmatprep.subr.bf16.mxu0 %v1188
    %2645 = vmatpush1.bf16.msra.mxu0 %v1187
    %2646 = vmatprep.subr.bf16.mxu0 %v1192
    %2647 = vmatpush1.bf16.msra.mxu0 %v1191
    %2648 = vmatprep.subr.bf16.mxu0 %v1196
    %2649 = vmatpush1.bf16.msra.mxu0 %v1195
    %2650 = vmatprep.subr.bf16.mxu0 %v1200
    %2651 = vmatpush1.bf16.msra.mxu0 %v1199
    %2652 = vmatprep.subr.bf16.mxu0 %v1204
    %2653 = vmatpush1.bf16.msra.mxu0 %v1203
    %2654 = vmatprep.subr.bf16.mxu0 %v1208
    %2655 = vmatpush1.bf16.msra.mxu0 %v1207
    %2656 = vmatprep.subr.bf16.mxu0 0
    %2657 = vmatpush1.bf16.msra.mxu0 0
    %2658 = vmatprep.subr.bf16.mxu0 0
    %2659 = vmatpush1.bf16.msra.mxu0 0
    %2660 = vmatprep.subr.bf16.mxu0 0
    %2661 = vmatpush1.bf16.msra.mxu0 0
    %2662 = vmatprep.subr.bf16.mxu0 0
    %2663 = vmatpush1.bf16.msra.mxu0 0
    %2664 = vmatprep.subr.bf16.mxu0 0
    %2665 = vmatpush1.bf16.msra.mxu0 0
    %2666 = vmatprep.subr.bf16.mxu0 0
    %2667 = vmatpush1.bf16.msra.mxu0 0
    %2668 = vmatprep.subr.bf16.mxu0 0
    %2669 = vmatpush1.bf16.msra.mxu0 0
    %2670 = vmatprep.subr.bf16.mxu0 0
    %2671 = vmatpush1.bf16.msra.mxu0 0
    %2672 = vmatprep.mubr.bf16.mxu0 0
    %2673 = vmatmul.mubr.bf16.gmra.mrb[0].mxu0 %v2596
    %v2674 = vpop.f32.mrb[0].mxu0
    %v2675 = vadd.f32 0.0, %v2674
    %v2676 = vpop.f32.mrb[0].mxu0
    %v2677 = vadd.f32 0.0, %v2676
    %v2678 = vpop.f32.mrb[0].mxu0
    %v2679 = vadd.f32 0.0, %v2678
    %v2680 = vpop.f32.mrb[0].mxu0
    %v2681 = vadd.f32 0.0, %v2680
    %2682 = vdwg.mxu0
    %v2683 = vadd.f32 %v2446, %v2632
    %v2684 = vadd.f32 %v2447, %v2634
    %v2685 = vadd.f32 %v2448, %v2675
    %v2686 = vadd.f32 %v2449, %v2677
    %v2687 = vadd.f32 %v2450, %v2636
    %v2688 = vadd.f32 %v2451, %v2638
    %v2689 = vadd.f32 %v2452, %v2679
    %v2690 = vadd.f32 %v2453, %v2681
    %v2691 = vxor.u32 %v2683, 2147483648
    %v2692 = vxor.u32 %v2687, 2147483648
    %v2693 = vmul.f32 %v2691, 1.442695
    %v2694 = vpow.pop %v2693
    %v2695 = vmul.f32 %v2692, 1.442695
    %v2696 = vpow.pop %v2695
    %v2697 = vadd.f32 %v2694, 1.0
    %v2698 = vadd.f32 %v2696, 1.0
    %v2699 = vrcp.pop %v2697
    %v2700 = vmul.f32 1.0, %v2699
    %v2701 = vrcp.pop %v2698
    %v2702 = vmul.f32 1.0, %v2701
    %v2703 = vxor.u32 %v2684, 2147483648
    %v2704 = vxor.u32 %v2688, 2147483648
    %v2705 = vmul.f32 %v2703, 1.442695
    %v2706 = vpow.pop %v2705
    %v2707 = vmul.f32 %v2704, 1.442695
    %v2708 = vpow.pop %v2707
    %v2709 = vadd.f32 %v2706, 1.0
    %v2710 = vadd.f32 %v2708, 1.0
    %v2711 = vrcp.pop %v2709
    %v2712 = vmul.f32 1.0, %v2711
    %v2713 = vrcp.pop %v2710
    %v2714 = vmul.f32 1.0, %v2713
    %v2715 = vtanh.pop %v2685
    %v2716 = vtanh.pop %v2689
    %v2717 = vxor.u32 %v2686, 2147483648
    %v2718 = vxor.u32 %v2690, 2147483648
    %v2719 = vmul.f32 %v2717, 1.442695
    %v2720 = vpow.pop %v2719
    %v2721 = vmul.f32 %v2718, 1.442695
    %v2722 = vpow.pop %v2721
    %v2723 = vadd.f32 %v2720, 1.0
    %v2724 = vadd.f32 %v2722, 1.0
    %v2725 = vrcp.pop %v2723
    %v2726 = vmul.f32 1.0, %v2725
    %v2727 = vrcp.pop %v2724
    %v2728 = vmul.f32 1.0, %v2727
    %v2729 = vmul.f32 %v2712, %v2345
    %v2730 = vmul.f32 %v2714, %v2346
    %v2731 = vmul.f32 %v2700, %v2715
    %v2732 = vmul.f32 %v2702, %v2716
    %v2733 = vadd.f32 %v2729, %v2731
    %v2734 = vadd.f32 %v2730, %v2732
    %v2735 = vtanh.pop %v2733
    %v2736 = vtanh.pop %v2734
    %v2737 = vmul.f32 %v2726, %v2735
    %v2738 = vmul.f32 %v2728, %v2736
    %vm2739 = vcmp.ne.f32.partialorder %v2737, %v2737
    %vm2740 = vcmp.ne.f32.partialorder %v2738, %v2738
    %v2741 = vsel %vm2739, 1, 0
    %v2742 = vsel %vm2740, 1, 0
    %v2743 = vcvt.s32.f32 %v2741
    %v2744 = vcvt.s32.f32 %v2742
    %v2745 = vmax.f32 %v2357, %v2743
    %v2746 = vmax.f32 %v2358, %v2744
    %v2747 = vpack.c.bf16 %v2738, %v2737
    %2748 = vmatprep.subr.bf16.mxu0 %v1521
    %2749 = vmatpush1.bf16.msra.mxu0 %v1520
    %2750 = vmatprep.subr.bf16.mxu0 %v1525
    %2751 = vmatpush1.bf16.msra.mxu0 %v1524
    %2752 = vmatprep.subr.bf16.mxu0 %v1529
    %2753 = vmatpush1.bf16.msra.mxu0 %v1528
    %2754 = vmatprep.subr.bf16.mxu0 %v1533
    %2755 = vmatpush1.bf16.msra.mxu0 %v1532
    %2756 = vmatprep.subr.bf16.mxu0 %v1537
    %2757 = vmatpush1.bf16.msra.mxu0 %v1536
    %2758 = vmatprep.subr.bf16.mxu0 %v1541
    %2759 = vmatpush1.bf16.msra.mxu0 %v1540
    %2760 = vmatprep.subr.bf16.mxu0 %v1545
    %2761 = vmatpush1.bf16.msra.mxu0 %v1544
    %2762 = vmatprep.subr.bf16.mxu0 %v1549
    %2763 = vmatpush1.bf16.msra.mxu0 %v1548
    %2764 = vmatprep.subr.bf16.mxu0 0
    %2765 = vmatpush1.bf16.msra.mxu0 0
    %2766 = vmatprep.subr.bf16.mxu0 0
    %2767 = vmatpush1.bf16.msra.mxu0 0
    %2768 = vmatprep.subr.bf16.mxu0 0
    %2769 = vmatpush1.bf16.msra.mxu0 0
    %2770 = vmatprep.subr.bf16.mxu0 0
    %2771 = vmatpush1.bf16.msra.mxu0 0
    %2772 = vmatprep.subr.bf16.mxu0 0
    %2773 = vmatpush1.bf16.msra.mxu0 0
    %2774 = vmatprep.subr.bf16.mxu0 0
    %2775 = vmatpush1.bf16.msra.mxu0 0
    %2776 = vmatprep.subr.bf16.mxu0 0
    %2777 = vmatpush1.bf16.msra.mxu0 0
    %2778 = vmatprep.subr.bf16.mxu0 0
    %2779 = vmatpush1.bf16.msra.mxu0 0
    %2780 = vmatprep.mubr.bf16.mxu0 0
    %2781 = vmatmul.mubr.bf16.gmra.mrb[0].mxu0 %v2747
    %v2782 = vpop.f32.mrb[0].mxu0
    %v2783 = vadd.f32 0.0, %v2782
    %v2784 = vpop.f32.mrb[0].mxu0
    %v2785 = vadd.f32 0.0, %v2784
    %v2786 = vpop.f32.mrb[0].mxu0
    %v2787 = vadd.f32 0.0, %v2786
    %v2788 = vpop.f32.mrb[0].mxu0
    %v2789 = vadd.f32 0.0, %v2788
    %2790 = vdwg.mxu0
    %2791 = vmatprep.subr.bf16.mxu0 %v1523
    %2792 = vmatpush1.bf16.msra.mxu0 %v1522
    %2793 = vmatprep.subr.bf16.mxu0 %v1527
    %2794 = vmatpush1.bf16.msra.mxu0 %v1526
    %2795 = vmatprep.subr.bf16.mxu0 %v1531
    %2796 = vmatpush1.bf16.msra.mxu0 %v1530
    %2797 = vmatprep.subr.bf16.mxu0 %v1535
    %2798 = vmatpush1.bf16.msra.mxu0 %v1534
    %2799 = vmatprep.subr.bf16.mxu0 %v1539
    %2800 = vmatpush1.bf16.msra.mxu0 %v1538
    %2801 = vmatprep.subr.bf16.mxu0 %v1543
    %2802 = vmatpush1.bf16.msra.mxu0 %v1542
    %2803 = vmatprep.subr.bf16.mxu0 %v1547
    %2804 = vmatpush1.bf16.msra.mxu0 %v1546
    %2805 = vmatprep.subr.bf16.mxu0 %v1551
    %2806 = vmatpush1.bf16.msra.mxu0 %v1550
    %2807 = vmatprep.subr.bf16.mxu0 0
    %2808 = vmatpush1.bf16.msra.mxu0 0
    %2809 = vmatprep.subr.bf16.mxu0 0
    %2810 = vmatpush1.bf16.msra.mxu0 0
    %2811 = vmatprep.subr.bf16.mxu0 0
    %2812 = vmatpush1.bf16.msra.mxu0 0
    %2813 = vmatprep.subr.bf16.mxu0 0
    %2814 = vmatpush1.bf16.msra.mxu0 0
    %2815 = vmatprep.subr.bf16.mxu0 0
    %2816 = vmatpush1.bf16.msra.mxu0 0
    %2817 = vmatprep.subr.bf16.mxu0 0
    %2818 = vmatpush1.bf16.msra.mxu0 0
    %2819 = vmatprep.subr.bf16.mxu0 0
    %2820 = vmatpush1.bf16.msra.mxu0 0
    %2821 = vmatprep.subr.bf16.mxu0 0
    %2822 = vmatpush1.bf16.msra.mxu0 0
    %2823 = vmatprep.mubr.bf16.mxu0 0
    %2824 = vmatmul.mubr.bf16.gmra.mrb[0].mxu0 %v2747
    %v2825 = vpop.f32.mrb[0].mxu0
    %v2826 = vadd.f32 0.0, %v2825
    %v2827 = vpop.f32.mrb[0].mxu0
    %v2828 = vadd.f32 0.0, %v2827
    %v2829 = vpop.f32.mrb[0].mxu0
    %v2830 = vadd.f32 0.0, %v2829
    %v2831 = vpop.f32.mrb[0].mxu0
    %v2832 = vadd.f32 0.0, %v2831
    %2833 = vdwg.mxu0
    %v2834 = vadd.f32 %v697, %v2783
    %v2835 = vadd.f32 %v701, %v2785
    %v2836 = vadd.f32 %v705, %v2826
    %v2837 = vadd.f32 %v709, %v2828
    %v2838 = vadd.f32 %v697, %v2787
    %v2839 = vadd.f32 %v701, %v2789
    %v2840 = vadd.f32 %v705, %v2830
    %v2841 = vadd.f32 %v709, %v2832
    %2842 = vmatprep.subr.bf16.mxu0 %v843
    %2843 = vmatpush1.bf16.msra.mxu0 %v842
    %2844 = vmatprep.subr.bf16.mxu0 %v847
    %2845 = vmatpush1.bf16.msra.mxu0 %v846
    %2846 = vmatprep.subr.bf16.mxu0 %v851
    %2847 = vmatpush1.bf16.msra.mxu0 %v850
    %2848 = vmatprep.subr.bf16.mxu0 %v855
    %2849 = vmatpush1.bf16.msra.mxu0 %v854
    %2850 = vmatprep.subr.bf16.mxu0 %v859
    %2851 = vmatpush1.bf16.msra.mxu0 %v858
    %2852 = vmatprep.subr.bf16.mxu0 %v863
    %2853 = vmatpush1.bf16.msra.mxu0 %v862
    %2854 = vmatprep.subr.bf16.mxu0 %v867
    %2855 = vmatpush1.bf16.msra.mxu0 %v866
    %2856 = vmatprep.subr.bf16.mxu0 %v871
    %2857 = vmatpush1.bf16.msra.mxu0 %v870
    %2858 = vmatprep.subr.bf16.mxu0 0
    %2859 = vmatpush1.bf16.msra.mxu0 0
    %2860 = vmatprep.subr.bf16.mxu0 0
    %2861 = vmatpush1.bf16.msra.mxu0 0
    %2862 = vmatprep.subr.bf16.mxu0 0
    %2863 = vmatpush1.bf16.msra.mxu0 0
    %2864 = vmatprep.subr.bf16.mxu0 0
    %2865 = vmatpush1.bf16.msra.mxu0 0
    %2866 = vmatprep.subr.bf16.mxu0 0
    %2867 = vmatpush1.bf16.msra.mxu0 0
    %2868 = vmatprep.subr.bf16.mxu0 0
    %2869 = vmatpush1.bf16.msra.mxu0 0
    %2870 = vmatprep.subr.bf16.mxu0 0
    %2871 = vmatpush1.bf16.msra.mxu0 0
    %2872 = vmatprep.subr.bf16.mxu0 0
    %2873 = vmatpush1.bf16.msra.mxu0 0
    %2874 = vmatprep.mubr.bf16.mxu0 0
    %2875 = vmatmul.mubr.bf16.gmra.mrb[0].mxu0 %v2596
    %v2876 = vpop.f32.mrb[0].mxu0
    %v2877 = vadd.f32 0.0, %v2876
    %v2878 = vpop.f32.mrb[0].mxu0
    %v2879 = vadd.f32 0.0, %v2878
    %v2880 = vpop.f32.mrb[0].mxu0
    %v2881 = vadd.f32 0.0, %v2880
    %v2882 = vpop.f32.mrb[0].mxu0
    %v2883 = vadd.f32 0.0, %v2882
    %2884 = vdwg.mxu0
    %2885 = vmatprep.subr.bf16.mxu0 %v845
    %2886 = vmatpush1.bf16.msra.mxu0 %v844
    %2887 = vmatprep.subr.bf16.mxu0 %v849
    %2888 = vmatpush1.bf16.msra.mxu0 %v848
    %2889 = vmatprep.subr.bf16.mxu0 %v853
    %2890 = vmatpush1.bf16.msra.mxu0 %v852
    %2891 = vmatprep.subr.bf16.mxu0 %v857
    %2892 = vmatpush1.bf16.msra.mxu0 %v856
    %2893 = vmatprep.subr.bf16.mxu0 %v861
    %2894 = vmatpush1.bf16.msra.mxu0 %v860
    %2895 = vmatprep.subr.bf16.mxu0 %v865
    %2896 = vmatpush1.bf16.msra.mxu0 %v864
    %2897 = vmatprep.subr.bf16.mxu0 %v869
    %2898 = vmatpush1.bf16.msra.mxu0 %v868
    %2899 = vmatprep.subr.bf16.mxu0 %v873
    %2900 = vmatpush1.bf16.msra.mxu0 %v872
    %2901 = vmatprep.subr.bf16.mxu0 0
    %2902 = vmatpush1.bf16.msra.mxu0 0
    %2903 = vmatprep.subr.bf16.mxu0 0
    %2904 = vmatpush1.bf16.msra.mxu0 0
    %2905 = vmatprep.subr.bf16.mxu0 0
    %2906 = vmatpush1.bf16.msra.mxu0 0
    %2907 = vmatprep.subr.bf16.mxu0 0
    %2908 = vmatpush1.bf16.msra.mxu0 0
    %2909 = vmatprep.subr.bf16.mxu0 0
    %2910 = vmatpush1.bf16.msra.mxu0 0
    %2911 = vmatprep.subr.bf16.mxu0 0
    %2912 = vmatpush1.bf16.msra.mxu0 0
    %2913 = vmatprep.subr.bf16.mxu0 0
    %2914 = vmatpush1.bf16.msra.mxu0 0
    %2915 = vmatprep.subr.bf16.mxu0 0
    %2916 = vmatpush1.bf16.msra.mxu0 0
    %2917 = vmatprep.mubr.bf16.mxu0 0
    %2918 = vmatmul.mubr.bf16.gmra.mrb[0].mxu0 %v2596
    %v2919 = vpop.f32.mrb[0].mxu0
    %v2920 = vadd.f32 0.0, %v2919
    %v2921 = vpop.f32.mrb[0].mxu0
    %v2922 = vadd.f32 0.0, %v2921
    %v2923 = vpop.f32.mrb[0].mxu0
    %v2924 = vadd.f32 0.0, %v2923
    %v2925 = vpop.f32.mrb[0].mxu0
    %v2926 = vadd.f32 0.0, %v2925
    %2927 = vdwg.mxu0
    %v2928 = vadd.f32 %v541, %v2877
    %v2929 = vadd.f32 %v543, %v2879
    %v2930 = vadd.f32 %v654, %v2920
    %v2931 = vadd.f32 %v656, %v2922
    %v2932 = vadd.f32 %v545, %v2881
    %v2933 = vadd.f32 %v547, %v2883
    %v2934 = vadd.f32 %v658, %v2924
    %v2935 = vadd.f32 %v660, %v2926
    %v2936 = vxor.u32 %v2928, 2147483648
    %v2937 = vxor.u32 %v2932, 2147483648
    %v2938 = vmul.f32 %v2936, 1.442695
    %v2939 = vpow.pop %v2938
    %v2940 = vmul.f32 %v2937, 1.442695
    %v2941 = vpow.pop %v2940
    %v2942 = vadd.f32 %v2939, 1.0
    %v2943 = vadd.f32 %v2941, 1.0
    %v2944 = vrcp.pop %v2942
    %v2945 = vmul.f32 1.0, %v2944
    %v2946 = vrcp.pop %v2943
    %v2947 = vmul.f32 1.0, %v2946
    %v2948 = vxor.u32 %v2929, 2147483648
    %v2949 = vxor.u32 %v2933, 2147483648
    %v2950 = vmul.f32 %v2948, 1.442695
    %v2951 = vpow.pop %v2950
    %v2952 = vmul.f32 %v2949, 1.442695
    %v2953 = vpow.pop %v2952
    %v2954 = vadd.f32 %v2951, 1.0
    %v2955 = vadd.f32 %v2953, 1.0
    %v2956 = vrcp.pop %v2954
    %v2957 = vmul.f32 1.0, %v2956
    %v2958 = vrcp.pop %v2955
    %v2959 = vmul.f32 1.0, %v2958
    %v2960 = vtanh.pop %v2930
    %v2961 = vtanh.pop %v2934
    %v2962 = vxor.u32 %v2931, 2147483648
    %v2963 = vxor.u32 %v2935, 2147483648
    %v2964 = vmul.f32 %v2962, 1.442695
    %v2965 = vpow.pop %v2964
    %v2966 = vmul.f32 %v2963, 1.442695
    %v2967 = vpow.pop %v2966
    %v2968 = vadd.f32 %v2965, 1.0
    %v2969 = vadd.f32 %v2967, 1.0
    %v2970 = vrcp.pop %v2968
    %v2971 = vmul.f32 1.0, %v2970
    %v2972 = vrcp.pop %v2969
    %v2973 = vmul.f32 1.0, %v2972
    %v2974 = vmul.f32 %v2957, %v2590
    %v2975 = vmul.f32 %v2959, %v2591
    %v2976 = vmul.f32 %v2945, %v2960
    %v2977 = vmul.f32 %v2947, %v2961
    %v2978 = vadd.f32 %v2974, %v2976
    %v2979 = vadd.f32 %v2975, %v2977
    %v2980 = vtanh.pop %v2978
    %v2981 = vtanh.pop %v2979
    %v2982 = vmul.f32 %v2971, %v2980
    %v2983 = vmul.f32 %v2973, %v2981
    %v2984 = vpack.c.bf16 %v2983, %v2982
    %2985 = vmatprep.subr.bf16.mxu0 %v1178
    %2986 = vmatpush1.bf16.msra.mxu0 %v1177
    %2987 = vmatprep.subr.bf16.mxu0 %v1182
    %2988 = vmatpush1.bf16.msra.mxu0 %v1181
    %2989 = vmatprep.subr.bf16.mxu0 %v1186
    %2990 = vmatpush1.bf16.msra.mxu0 %v1185
    %2991 = vmatprep.subr.bf16.mxu0 %v1190
    %2992 = vmatpush1.bf16.msra.mxu0 %v1189
    %2993 = vmatprep.subr.bf16.mxu0 %v1194
    %2994 = vmatpush1.bf16.msra.mxu0 %v1193
    %2995 = vmatprep.subr.bf16.mxu0 %v1198
    %2996 = vmatpush1.bf16.msra.mxu0 %v1197
    %2997 = vmatprep.subr.bf16.mxu0 %v1202
    %2998 = vmatpush1.bf16.msra.mxu0 %v1201
    %2999 = vmatprep.subr.bf16.mxu0 %v1206
    %3000 = vmatpush1.bf16.msra.mxu0 %v1205
    %3001 = vmatprep.subr.bf16.mxu0 0
    %3002 = vmatpush1.bf16.msra.mxu0 0
    %3003 = vmatprep.subr.bf16.mxu0 0
    %3004 = vmatpush1.bf16.msra.mxu0 0
    %3005 = vmatprep.subr.bf16.mxu0 0
    %3006 = vmatpush1.bf16.msra.mxu0 0
    %3007 = vmatprep.subr.bf16.mxu0 0
    %3008 = vmatpush1.bf16.msra.mxu0 0
    %3009 = vmatprep.subr.bf16.mxu0 0
    %3010 = vmatpush1.bf16.msra.mxu0 0
    %3011 = vmatprep.subr.bf16.mxu0 0
    %3012 = vmatpush1.bf16.msra.mxu0 0
    %3013 = vmatprep.subr.bf16.mxu0 0
    %3014 = vmatpush1.bf16.msra.mxu0 0
    %3015 = vmatprep.subr.bf16.mxu0 0
    %3016 = vmatpush1.bf16.msra.mxu0 0
    %3017 = vmatprep.mubr.bf16.mxu0 0
    %3018 = vmatmul.mubr.bf16.gmra.mrb[0].mxu0 %v2984
    %v3019 = vpop.f32.mrb[0].mxu0
    %v3020 = vadd.f32 0.0, %v3019
    %v3021 = vpop.f32.mrb[0].mxu0
    %v3022 = vadd.f32 0.0, %v3021
    %v3023 = vpop.f32.mrb[0].mxu0
    %v3024 = vadd.f32 0.0, %v3023
    %v3025 = vpop.f32.mrb[0].mxu0
    %v3026 = vadd.f32 0.0, %v3025
    %3027 = vdwg.mxu0
    %3028 = vmatprep.subr.bf16.mxu0 %v1180
    %3029 = vmatpush1.bf16.msra.mxu0 %v1179
    %3030 = vmatprep.subr.bf16.mxu0 %v1184
    %3031 = vmatpush1.bf16.msra.mxu0 %v1183
    %3032 = vmatprep.subr.bf16.mxu0 %v1188
    %3033 = vmatpush1.bf16.msra.mxu0 %v1187
    %3034 = vmatprep.subr.bf16.mxu0 %v1192
    %3035 = vmatpush1.bf16.msra.mxu0 %v1191
    %3036 = vmatprep.subr.bf16.mxu0 %v1196
    %3037 = vmatpush1.bf16.msra.mxu0 %v1195
    %3038 = vmatprep.subr.bf16.mxu0 %v1200
    %3039 = vmatpush1.bf16.msra.mxu0 %v1199
    %3040 = vmatprep.subr.bf16.mxu0 %v1204
    %3041 = vmatpush1.bf16.msra.mxu0 %v1203
    %3042 = vmatprep.subr.bf16.mxu0 %v1208
    %3043 = vmatpush1.bf16.msra.mxu0 %v1207
    %3044 = vmatprep.subr.bf16.mxu0 0
    %3045 = vmatpush1.bf16.msra.mxu0 0
    %3046 = vmatprep.subr.bf16.mxu0 0
    %3047 = vmatpush1.bf16.msra.mxu0 0
    %3048 = vmatprep.subr.bf16.mxu0 0
    %3049 = vmatpush1.bf16.msra.mxu0 0
    %3050 = vmatprep.subr.bf16.mxu0 0
    %3051 = vmatpush1.bf16.msra.mxu0 0
    %3052 = vmatprep.subr.bf16.mxu0 0
    %3053 = vmatpush1.bf16.msra.mxu0 0
    %3054 = vmatprep.subr.bf16.mxu0 0
    %3055 = vmatpush1.bf16.msra.mxu0 0
    %3056 = vmatprep.subr.bf16.mxu0 0
    %3057 = vmatpush1.bf16.msra.mxu0 0
    %3058 = vmatprep.subr.bf16.mxu0 0
    %3059 = vmatpush1.bf16.msra.mxu0 0
    %3060 = vmatprep.mubr.bf16.mxu0 0
    %3061 = vmatmul.mubr.bf16.gmra.mrb[0].mxu0 %v2984
    %v3062 = vpop.f32.mrb[0].mxu0
    %v3063 = vadd.f32 0.0, %v3062
    %v3064 = vpop.f32.mrb[0].mxu0
    %v3065 = vadd.f32 0.0, %v3064
    %v3066 = vpop.f32.mrb[0].mxu0
    %v3067 = vadd.f32 0.0, %v3066
    %v3068 = vpop.f32.mrb[0].mxu0
    %v3069 = vadd.f32 0.0, %v3068
    %3070 = vdwg.mxu0
    %v3071 = vadd.f32 %v2834, %v3020
    %v3072 = vadd.f32 %v2835, %v3022
    %v3073 = vadd.f32 %v2836, %v3063
    %v3074 = vadd.f32 %v2837, %v3065
    %v3075 = vadd.f32 %v2838, %v3024
    %v3076 = vadd.f32 %v2839, %v3026
    %v3077 = vadd.f32 %v2840, %v3067
    %v3078 = vadd.f32 %v2841, %v3069
    %v3079 = vxor.u32 %v3071, 2147483648
    %v3080 = vxor.u32 %v3075, 2147483648
    %v3081 = vmul.f32 %v3079, 1.442695
    %v3082 = vpow.pop %v3081
    %v3083 = vmul.f32 %v3080, 1.442695
    %v3084 = vpow.pop %v3083
    %v3085 = vadd.f32 %v3082, 1.0
    %v3086 = vadd.f32 %v3084, 1.0
    %v3087 = vrcp.pop %v3085
    %v3088 = vmul.f32 1.0, %v3087
    %v3089 = vrcp.pop %v3086
    %v3090 = vmul.f32 1.0, %v3089
    %v3091 = vxor.u32 %v3072, 2147483648
    %v3092 = vxor.u32 %v3076, 2147483648
    %v3093 = vmul.f32 %v3091, 1.442695
    %v3094 = vpow.pop %v3093
    %v3095 = vmul.f32 %v3092, 1.442695
    %v3096 = vpow.pop %v3095
    %v3097 = vadd.f32 %v3094, 1.0
    %v3098 = vadd.f32 %v3096, 1.0
    %v3099 = vrcp.pop %v3097
    %v3100 = vmul.f32 1.0, %v3099
    %v3101 = vrcp.pop %v3098
    %v3102 = vmul.f32 1.0, %v3101
    %v3103 = vtanh.pop %v3073
    %v3104 = vtanh.pop %v3077
    %v3105 = vxor.u32 %v3074, 2147483648
    %v3106 = vxor.u32 %v3078, 2147483648
    %v3107 = vmul.f32 %v3105, 1.442695
    %v3108 = vpow.pop %v3107
    %v3109 = vmul.f32 %v3106, 1.442695
    %v3110 = vpow.pop %v3109
    %v3111 = vadd.f32 %v3108, 1.0
    %v3112 = vadd.f32 %v3110, 1.0
    %v3113 = vrcp.pop %v3111
    %v3114 = vmul.f32 1.0, %v3113
    %v3115 = vrcp.pop %v3112
    %v3116 = vmul.f32 1.0, %v3115
    %v3117 = vmul.f32 %v3100, %v2733
    %v3118 = vmul.f32 %v3102, %v2734
    %v3119 = vmul.f32 %v3088, %v3103
    %v3120 = vmul.f32 %v3090, %v3104
    %v3121 = vadd.f32 %v3117, %v3119
    %v3122 = vadd.f32 %v3118, %v3120
    %v3123 = vtanh.pop %v3121
    %v3124 = vtanh.pop %v3122
    %v3125 = vmul.f32 %v3114, %v3123
    %v3126 = vmul.f32 %v3116, %v3124
    %vm3127 = vcmp.ne.f32.partialorder %v3125, %v3125
    %vm3128 = vcmp.ne.f32.partialorder %v3126, %v3126
    %v3129 = vsel %vm3127, 1, 0
    %v3130 = vsel %vm3128, 1, 0
    %v3131 = vcvt.s32.f32 %v3129
    %v3132 = vcvt.s32.f32 %v3130
    %v3133 = vmax.f32 %v2745, %v3131
    %v3134 = vmax.f32 %v2746, %v3132
    %v3135 = vpack.c.bf16 %v3126, %v3125
    %3136 = vmatprep.subr.bf16.mxu0 %v1521
    %3137 = vmatpush1.bf16.msra.mxu0 %v1520
    %3138 = vmatprep.subr.bf16.mxu0 %v1525
    %3139 = vmatpush1.bf16.msra.mxu0 %v1524
    %3140 = vmatprep.subr.bf16.mxu0 %v1529
    %3141 = vmatpush1.bf16.msra.mxu0 %v1528
    %3142 = vmatprep.subr.bf16.mxu0 %v1533
    %3143 = vmatpush1.bf16.msra.mxu0 %v1532
    %3144 = vmatprep.subr.bf16.mxu0 %v1537
    %3145 = vmatpush1.bf16.msra.mxu0 %v1536
    %3146 = vmatprep.subr.bf16.mxu0 %v1541
    %3147 = vmatpush1.bf16.msra.mxu0 %v1540
    %3148 = vmatprep.subr.bf16.mxu0 %v1545
    %3149 = vmatpush1.bf16.msra.mxu0 %v1544
    %3150 = vmatprep.subr.bf16.mxu0 %v1549
    %3151 = vmatpush1.bf16.msra.mxu0 %v1548
    %3152 = vmatprep.subr.bf16.mxu0 0
    %3153 = vmatpush1.bf16.msra.mxu0 0
    %3154 = vmatprep.subr.bf16.mxu0 0
    %3155 = vmatpush1.bf16.msra.mxu0 0
    %3156 = vmatprep.subr.bf16.mxu0 0
    %3157 = vmatpush1.bf16.msra.mxu0 0
    %3158 = vmatprep.subr.bf16.mxu0 0
    %3159 = vmatpush1.bf16.msra.mxu0 0
    %3160 = vmatprep.subr.bf16.mxu0 0
    %3161 = vmatpush1.bf16.msra.mxu0 0
    %3162 = vmatprep.subr.bf16.mxu0 0
    %3163 = vmatpush1.bf16.msra.mxu0 0
    %3164 = vmatprep.subr.bf16.mxu0 0
    %3165 = vmatpush1.bf16.msra.mxu0 0
    %3166 = vmatprep.subr.bf16.mxu0 0
    %3167 = vmatpush1.bf16.msra.mxu0 0
    %3168 = vmatprep.mubr.bf16.mxu0 0
    %3169 = vmatmul.mubr.bf16.gmra.mrb[0].mxu0 %v3135
    %v3170 = vpop.f32.mrb[0].mxu0
    %v3171 = vadd.f32 0.0, %v3170
    %v3172 = vpop.f32.mrb[0].mxu0
    %v3173 = vadd.f32 0.0, %v3172
    %v3174 = vpop.f32.mrb[0].mxu0
    %v3175 = vadd.f32 0.0, %v3174
    %v3176 = vpop.f32.mrb[0].mxu0
    %v3177 = vadd.f32 0.0, %v3176
    %3178 = vdwg.mxu0
    %3179 = vmatprep.subr.bf16.mxu0 %v1523
    %3180 = vmatpush1.bf16.msra.mxu0 %v1522
    %3181 = vmatprep.subr.bf16.mxu0 %v1527
    %3182 = vmatpush1.bf16.msra.mxu0 %v1526
    %3183 = vmatprep.subr.bf16.mxu0 %v1531
    %3184 = vmatpush1.bf16.msra.mxu0 %v1530
    %3185 = vmatprep.subr.bf16.mxu0 %v1535
    %3186 = vmatpush1.bf16.msra.mxu0 %v1534
    %3187 = vmatprep.subr.bf16.mxu0 %v1539
    %3188 = vmatpush1.bf16.msra.mxu0 %v1538
    %3189 = vmatprep.subr.bf16.mxu0 %v1543
    %3190 = vmatpush1.bf16.msra.mxu0 %v1542
    %3191 = vmatprep.subr.bf16.mxu0 %v1547
    %3192 = vmatpush1.bf16.msra.mxu0 %v1546
    %3193 = vmatprep.subr.bf16.mxu0 %v1551
    %3194 = vmatpush1.bf16.msra.mxu0 %v1550
    %3195 = vmatprep.subr.bf16.mxu0 0
    %3196 = vmatpush1.bf16.msra.mxu0 0
    %3197 = vmatprep.subr.bf16.mxu0 0
    %3198 = vmatpush1.bf16.msra.mxu0 0
    %3199 = vmatprep.subr.bf16.mxu0 0
    %3200 = vmatpush1.bf16.msra.mxu0 0
    %3201 = vmatprep.subr.bf16.mxu0 0
    %3202 = vmatpush1.bf16.msra.mxu0 0
    %3203 = vmatprep.subr.bf16.mxu0 0
    %3204 = vmatpush1.bf16.msra.mxu0 0
    %3205 = vmatprep.subr.bf16.mxu0 0
    %3206 = vmatpush1.bf16.msra.mxu0 0
    %3207 = vmatprep.subr.bf16.mxu0 0
    %3208 = vmatpush1.bf16.msra.mxu0 0
    %3209 = vmatprep.subr.bf16.mxu0 0
    %3210 = vmatpush1.bf16.msra.mxu0 0
    %3211 = vmatprep.mubr.bf16.mxu0 0
    %3212 = vmatmul.mubr.bf16.gmra.mrb[0].mxu0 %v3135
    %v3213 = vpop.f32.mrb[0].mxu0
    %v3214 = vadd.f32 0.0, %v3213
    %v3215 = vpop.f32.mrb[0].mxu0
    %v3216 = vadd.f32 0.0, %v3215
    %v3217 = vpop.f32.mrb[0].mxu0
    %v3218 = vadd.f32 0.0, %v3217
    %v3219 = vpop.f32.mrb[0].mxu0
    %v3220 = vadd.f32 0.0, %v3219
    %3221 = vdwg.mxu0
    %v3222 = vadd.f32 %v697, %v3171
    %v3223 = vadd.f32 %v701, %v3173
    %v3224 = vadd.f32 %v705, %v3214
    %v3225 = vadd.f32 %v709, %v3216
    %v3226 = vadd.f32 %v697, %v3175
    %v3227 = vadd.f32 %v701, %v3177
    %v3228 = vadd.f32 %v705, %v3218
    %v3229 = vadd.f32 %v709, %v3220
    %3230 = vmatprep.subr.bf16.mxu0 %v843
    %3231 = vmatpush1.bf16.msra.mxu0 %v842
    %3232 = vmatprep.subr.bf16.mxu0 %v847
    %3233 = vmatpush1.bf16.msra.mxu0 %v846
    %3234 = vmatprep.subr.bf16.mxu0 %v851
    %3235 = vmatpush1.bf16.msra.mxu0 %v850
    %3236 = vmatprep.subr.bf16.mxu0 %v855
    %3237 = vmatpush1.bf16.msra.mxu0 %v854
    %3238 = vmatprep.subr.bf16.mxu0 %v859
    %3239 = vmatpush1.bf16.msra.mxu0 %v858
    %3240 = vmatprep.subr.bf16.mxu0 %v863
    %3241 = vmatpush1.bf16.msra.mxu0 %v862
    %3242 = vmatprep.subr.bf16.mxu0 %v867
    %3243 = vmatpush1.bf16.msra.mxu0 %v866
    %3244 = vmatprep.subr.bf16.mxu0 %v871
    %3245 = vmatpush1.bf16.msra.mxu0 %v870
    %3246 = vmatprep.subr.bf16.mxu0 0
    %3247 = vmatpush1.bf16.msra.mxu0 0
    %3248 = vmatprep.subr.bf16.mxu0 0
    %3249 = vmatpush1.bf16.msra.mxu0 0
    %3250 = vmatprep.subr.bf16.mxu0 0
    %3251 = vmatpush1.bf16.msra.mxu0 0
    %3252 = vmatprep.subr.bf16.mxu0 0
    %3253 = vmatpush1.bf16.msra.mxu0 0
    %3254 = vmatprep.subr.bf16.mxu0 0
    %3255 = vmatpush1.bf16.msra.mxu0 0
    %3256 = vmatprep.subr.bf16.mxu0 0
    %3257 = vmatpush1.bf16.msra.mxu0 0
    %3258 = vmatprep.subr.bf16.mxu0 0
    %3259 = vmatpush1.bf16.msra.mxu0 0
    %3260 = vmatprep.subr.bf16.mxu0 0
    %3261 = vmatpush1.bf16.msra.mxu0 0
    %3262 = vmatprep.mubr.bf16.mxu0 0
    %3263 = vmatmul.mubr.bf16.gmra.mrb[0].mxu0 %v2984
    %v3264 = vpop.f32.mrb[0].mxu0
    %v3265 = vadd.f32 0.0, %v3264
    %v3266 = vpop.f32.mrb[0].mxu0
    %v3267 = vadd.f32 0.0, %v3266
    %v3268 = vpop.f32.mrb[0].mxu0
    %v3269 = vadd.f32 0.0, %v3268
    %v3270 = vpop.f32.mrb[0].mxu0
    %v3271 = vadd.f32 0.0, %v3270
    %3272 = vdwg.mxu0
    %3273 = vmatprep.subr.bf16.mxu0 %v845
    %3274 = vmatpush1.bf16.msra.mxu0 %v844
    %3275 = vmatprep.subr.bf16.mxu0 %v849
    %3276 = vmatpush1.bf16.msra.mxu0 %v848
    %3277 = vmatprep.subr.bf16.mxu0 %v853
    %3278 = vmatpush1.bf16.msra.mxu0 %v852
    %3279 = vmatprep.subr.bf16.mxu0 %v857
    %3280 = vmatpush1.bf16.msra.mxu0 %v856
    %3281 = vmatprep.subr.bf16.mxu0 %v861
    %3282 = vmatpush1.bf16.msra.mxu0 %v860
    %3283 = vmatprep.subr.bf16.mxu0 %v865
    %3284 = vmatpush1.bf16.msra.mxu0 %v864
    %3285 = vmatprep.subr.bf16.mxu0 %v869
    %3286 = vmatpush1.bf16.msra.mxu0 %v868
    %3287 = vmatprep.subr.bf16.mxu0 %v873
    %3288 = vmatpush1.bf16.msra.mxu0 %v872
    %3289 = vmatprep.subr.bf16.mxu0 0
    %3290 = vmatpush1.bf16.msra.mxu0 0
    %3291 = vmatprep.subr.bf16.mxu0 0
    %3292 = vmatpush1.bf16.msra.mxu0 0
    %3293 = vmatprep.subr.bf16.mxu0 0
    %3294 = vmatpush1.bf16.msra.mxu0 0
    %3295 = vmatprep.subr.bf16.mxu0 0
    %3296 = vmatpush1.bf16.msra.mxu0 0
    %3297 = vmatprep.subr.bf16.mxu0 0
    %3298 = vmatpush1.bf16.msra.mxu0 0
    %3299 = vmatprep.subr.bf16.mxu0 0
    %3300 = vmatpush1.bf16.msra.mxu0 0
    %3301 = vmatprep.subr.bf16.mxu0 0
    %3302 = vmatpush1.bf16.msra.mxu0 0
    %3303 = vmatprep.subr.bf16.mxu0 0
    %3304 = vmatpush1.bf16.msra.mxu0 0
    %3305 = vmatprep.mubr.bf16.mxu0 0
    %3306 = vmatmul.mubr.bf16.gmra.mrb[0].mxu0 %v2984
    %v3307 = vpop.f32.mrb[0].mxu0
    %v3308 = vadd.f32 0.0, %v3307
    %v3309 = vpop.f32.mrb[0].mxu0
    %v3310 = vadd.f32 0.0, %v3309
    %v3311 = vpop.f32.mrb[0].mxu0
    %v3312 = vadd.f32 0.0, %v3311
    %v3313 = vpop.f32.mrb[0].mxu0
    %v3314 = vadd.f32 0.0, %v3313
    %3315 = vdwg.mxu0
    %v3316 = vadd.f32 %v551, %v3265
    %v3317 = vadd.f32 %v553, %v3267
    %v3318 = vadd.f32 %v664, %v3308
    %v3319 = vadd.f32 %v666, %v3310
    %v3320 = vadd.f32 %v555, %v3269
    %v3321 = vadd.f32 %v557, %v3271
    %v3322 = vadd.f32 %v668, %v3312
    %v3323 = vadd.f32 %v670, %v3314
    %v3324 = vxor.u32 %v3316, 2147483648
    %v3325 = vxor.u32 %v3320, 2147483648
    %v3326 = vmul.f32 %v3324, 1.442695
    %v3327 = vpow.pop %v3326
    %v3328 = vmul.f32 %v3325, 1.442695
    %v3329 = vpow.pop %v3328
    %v3330 = vadd.f32 %v3327, 1.0
    %v3331 = vadd.f32 %v3329, 1.0
    %v3332 = vrcp.pop %v3330
    %v3333 = vmul.f32 1.0, %v3332
    %v3334 = vrcp.pop %v3331
    %v3335 = vmul.f32 1.0, %v3334
    %v3336 = vxor.u32 %v3317, 2147483648
    %v3337 = vxor.u32 %v3321, 2147483648
    %v3338 = vmul.f32 %v3336, 1.442695
    %v3339 = vpow.pop %v3338
    %v3340 = vmul.f32 %v3337, 1.442695
    %v3341 = vpow.pop %v3340
    %v3342 = vadd.f32 %v3339, 1.0
    %v3343 = vadd.f32 %v3341, 1.0
    %v3344 = vrcp.pop %v3342
    %v3345 = vmul.f32 1.0, %v3344
    %v3346 = vrcp.pop %v3343
    %v3347 = vmul.f32 1.0, %v3346
    %v3348 = vtanh.pop %v3318
    %v3349 = vtanh.pop %v3322
    %v3350 = vxor.u32 %v3319, 2147483648
    %v3351 = vxor.u32 %v3323, 2147483648
    %v3352 = vmul.f32 %v3350, 1.442695
    %v3353 = vpow.pop %v3352
    %v3354 = vmul.f32 %v3351, 1.442695
    %v3355 = vpow.pop %v3354
    %v3356 = vadd.f32 %v3353, 1.0
    %v3357 = vadd.f32 %v3355, 1.0
    %v3358 = vrcp.pop %v3356
    %v3359 = vmul.f32 1.0, %v3358
    %v3360 = vrcp.pop %v3357
    %v3361 = vmul.f32 1.0, %v3360
    %v3362 = vmul.f32 %v3345, %v2978
    %v3363 = vmul.f32 %v3347, %v2979
    %v3364 = vmul.f32 %v3333, %v3348
    %v3365 = vmul.f32 %v3335, %v3349
    %v3366 = vadd.f32 %v3362, %v3364
    %v3367 = vadd.f32 %v3363, %v3365
    %v3368 = vtanh.pop %v3366
    %v3369 = vtanh.pop %v3367
    %v3370 = vmul.f32 %v3359, %v3368
    %v3371 = vmul.f32 %v3361, %v3369
    %v3372 = vpack.c.bf16 %v3371, %v3370
    %3373 = vmatprep.subr.bf16.mxu0 %v1178
    %3374 = vmatpush1.bf16.msra.mxu0 %v1177
    %3375 = vmatprep.subr.bf16.mxu0 %v1182
    %3376 = vmatpush1.bf16.msra.mxu0 %v1181
    %3377 = vmatprep.subr.bf16.mxu0 %v1186
    %3378 = vmatpush1.bf16.msra.mxu0 %v1185
    %3379 = vmatprep.subr.bf16.mxu0 %v1190
    %3380 = vmatpush1.bf16.msra.mxu0 %v1189
    %3381 = vmatprep.subr.bf16.mxu0 %v1194
    %3382 = vmatpush1.bf16.msra.mxu0 %v1193
    %3383 = vmatprep.subr.bf16.mxu0 %v1198
    %3384 = vmatpush1.bf16.msra.mxu0 %v1197
    %3385 = vmatprep.subr.bf16.mxu0 %v1202
    %3386 = vmatpush1.bf16.msra.mxu0 %v1201
    %3387 = vmatprep.subr.bf16.mxu0 %v1206
    %3388 = vmatpush1.bf16.msra.mxu0 %v1205
    %3389 = vmatprep.subr.bf16.mxu0 0
    %3390 = vmatpush1.bf16.msra.mxu0 0
    %3391 = vmatprep.subr.bf16.mxu0 0
    %3392 = vmatpush1.bf16.msra.mxu0 0
    %3393 = vmatprep.subr.bf16.mxu0 0
    %3394 = vmatpush1.bf16.msra.mxu0 0
    %3395 = vmatprep.subr.bf16.mxu0 0
    %3396 = vmatpush1.bf16.msra.mxu0 0
    %3397 = vmatprep.subr.bf16.mxu0 0
    %3398 = vmatpush1.bf16.msra.mxu0 0
    %3399 = vmatprep.subr.bf16.mxu0 0
    %3400 = vmatpush1.bf16.msra.mxu0 0
    %3401 = vmatprep.subr.bf16.mxu0 0
    %3402 = vmatpush1.bf16.msra.mxu0 0
    %3403 = vmatprep.subr.bf16.mxu0 0
    %3404 = vmatpush1.bf16.msra.mxu0 0
    %3405 = vmatprep.mubr.bf16.mxu0 0
    %3406 = vmatmul.mubr.bf16.gmra.mrb[0].mxu0 %v3372
    %v3407 = vpop.f32.mrb[0].mxu0
    %v3408 = vadd.f32 0.0, %v3407
    %v3409 = vpop.f32.mrb[0].mxu0
    %v3410 = vadd.f32 0.0, %v3409
    %v3411 = vpop.f32.mrb[0].mxu0
    %v3412 = vadd.f32 0.0, %v3411
    %v3413 = vpop.f32.mrb[0].mxu0
    %v3414 = vadd.f32 0.0, %v3413
    %3415 = vdwg.mxu0
    %3416 = vmatprep.subr.bf16.mxu0 %v1180
    %3417 = vmatpush1.bf16.msra.mxu0 %v1179
    %3418 = vmatprep.subr.bf16.mxu0 %v1184
    %3419 = vmatpush1.bf16.msra.mxu0 %v1183
    %3420 = vmatprep.subr.bf16.mxu0 %v1188
    %3421 = vmatpush1.bf16.msra.mxu0 %v1187
    %3422 = vmatprep.subr.bf16.mxu0 %v1192
    %3423 = vmatpush1.bf16.msra.mxu0 %v1191
    %3424 = vmatprep.subr.bf16.mxu0 %v1196
    %3425 = vmatpush1.bf16.msra.mxu0 %v1195
    %3426 = vmatprep.subr.bf16.mxu0 %v1200
    %3427 = vmatpush1.bf16.msra.mxu0 %v1199
    %3428 = vmatprep.subr.bf16.mxu0 %v1204
    %3429 = vmatpush1.bf16.msra.mxu0 %v1203
    %3430 = vmatprep.subr.bf16.mxu0 %v1208
    %3431 = vmatpush1.bf16.msra.mxu0 %v1207
    %3432 = vmatprep.subr.bf16.mxu0 0
    %3433 = vmatpush1.bf16.msra.mxu0 0
    %3434 = vmatprep.subr.bf16.mxu0 0
    %3435 = vmatpush1.bf16.msra.mxu0 0
    %3436 = vmatprep.subr.bf16.mxu0 0
    %3437 = vmatpush1.bf16.msra.mxu0 0
    %3438 = vmatprep.subr.bf16.mxu0 0
    %3439 = vmatpush1.bf16.msra.mxu0 0
    %3440 = vmatprep.subr.bf16.mxu0 0
    %3441 = vmatpush1.bf16.msra.mxu0 0
    %3442 = vmatprep.subr.bf16.mxu0 0
    %3443 = vmatpush1.bf16.msra.mxu0 0
    %3444 = vmatprep.subr.bf16.mxu0 0
    %3445 = vmatpush1.bf16.msra.mxu0 0
    %3446 = vmatprep.subr.bf16.mxu0 0
    %3447 = vmatpush1.bf16.msra.mxu0 0
    %3448 = vmatprep.mubr.bf16.mxu0 0
    %3449 = vmatmul.mubr.bf16.gmra.mrb[0].mxu0 %v3372
    %v3450 = vpop.f32.mrb[0].mxu0
    %v3451 = vadd.f32 0.0, %v3450
    %v3452 = vpop.f32.mrb[0].mxu0
    %v3453 = vadd.f32 0.0, %v3452
    %v3454 = vpop.f32.mrb[0].mxu0
    %v3455 = vadd.f32 0.0, %v3454
    %v3456 = vpop.f32.mrb[0].mxu0
    %v3457 = vadd.f32 0.0, %v3456
    %3458 = vdwg.mxu0
    %v3459 = vadd.f32 %v3222, %v3408
    %v3460 = vadd.f32 %v3223, %v3410
    %v3461 = vadd.f32 %v3224, %v3451
    %v3462 = vadd.f32 %v3225, %v3453
    %v3463 = vadd.f32 %v3226, %v3412
    %v3464 = vadd.f32 %v3227, %v3414
    %v3465 = vadd.f32 %v3228, %v3455
    %v3466 = vadd.f32 %v3229, %v3457
    %v3467 = vxor.u32 %v3459, 2147483648
    %v3468 = vxor.u32 %v3463, 2147483648
    %v3469 = vmul.f32 %v3467, 1.442695
    %v3470 = vpow.pop %v3469
    %v3471 = vmul.f32 %v3468, 1.442695
    %v3472 = vpow.pop %v3471
    %v3473 = vadd.f32 %v3470, 1.0
    %v3474 = vadd.f32 %v3472, 1.0
    %v3475 = vrcp.pop %v3473
    %v3476 = vmul.f32 1.0, %v3475
    %v3477 = vrcp.pop %v3474
    %v3478 = vmul.f32 1.0, %v3477
    %v3479 = vxor.u32 %v3460, 2147483648
    %v3480 = vxor.u32 %v3464, 2147483648
    %v3481 = vmul.f32 %v3479, 1.442695
    %v3482 = vpow.pop %v3481
    %v3483 = vmul.f32 %v3480, 1.442695
    %v3484 = vpow.pop %v3483
    %v3485 = vadd.f32 %v3482, 1.0
    %v3486 = vadd.f32 %v3484, 1.0
    %v3487 = vrcp.pop %v3485
    %v3488 = vmul.f32 1.0, %v3487
    %v3489 = vrcp.pop %v3486
    %v3490 = vmul.f32 1.0, %v3489
    %v3491 = vtanh.pop %v3461
    %v3492 = vtanh.pop %v3465
    %v3493 = vxor.u32 %v3462, 2147483648
    %v3494 = vxor.u32 %v3466, 2147483648
    %v3495 = vmul.f32 %v3493, 1.442695
    %v3496 = vpow.pop %v3495
    %v3497 = vmul.f32 %v3494, 1.442695
    %v3498 = vpow.pop %v3497
    %v3499 = vadd.f32 %v3496, 1.0
    %v3500 = vadd.f32 %v3498, 1.0
    %v3501 = vrcp.pop %v3499
    %v3502 = vmul.f32 1.0, %v3501
    %v3503 = vrcp.pop %v3500
    %v3504 = vmul.f32 1.0, %v3503
    %v3505 = vmul.f32 %v3488, %v3121
    %v3506 = vmul.f32 %v3490, %v3122
    %v3507 = vmul.f32 %v3476, %v3491
    %v3508 = vmul.f32 %v3478, %v3492
    %v3509 = vadd.f32 %v3505, %v3507
    %v3510 = vadd.f32 %v3506, %v3508
    %v3511 = vtanh.pop %v3509
    %v3512 = vtanh.pop %v3510
    %v3513 = vmul.f32 %v3502, %v3511
    %v3514 = vmul.f32 %v3504, %v3512
    %vm3515 = vcmp.ne.f32.partialorder %v3513, %v3513
    %vm3516 = vcmp.ne.f32.partialorder %v3514, %v3514
    %v3517 = vsel %vm3515, 1, 0
    %v3518 = vsel %vm3516, 1, 0
    %v3519 = vcvt.s32.f32 %v3517
    %v3520 = vcvt.s32.f32 %v3518
    %v3521 = vmax.f32 %v3133, %v3519
    %v3522 = vmax.f32 %v3134, %v3520
    %v3523 = vpack.c.bf16 %v3514, %v3513
    %3524 = vmatprep.subr.bf16.mxu0 %v1521
    %3525 = vmatpush1.bf16.msra.mxu0 %v1520
    %3526 = vmatprep.subr.bf16.mxu0 %v1525
    %3527 = vmatpush1.bf16.msra.mxu0 %v1524
    %3528 = vmatprep.subr.bf16.mxu0 %v1529
    %3529 = vmatpush1.bf16.msra.mxu0 %v1528
    %3530 = vmatprep.subr.bf16.mxu0 %v1533
    %3531 = vmatpush1.bf16.msra.mxu0 %v1532
    %3532 = vmatprep.subr.bf16.mxu0 %v1537
    %3533 = vmatpush1.bf16.msra.mxu0 %v1536
    %3534 = vmatprep.subr.bf16.mxu0 %v1541
    %3535 = vmatpush1.bf16.msra.mxu0 %v1540
    %3536 = vmatprep.subr.bf16.mxu0 %v1545
    %3537 = vmatpush1.bf16.msra.mxu0 %v1544
    %3538 = vmatprep.subr.bf16.mxu0 %v1549
    %3539 = vmatpush1.bf16.msra.mxu0 %v1548
    %3540 = vmatprep.subr.bf16.mxu0 0
    %3541 = vmatpush1.bf16.msra.mxu0 0
    %3542 = vmatprep.subr.bf16.mxu0 0
    %3543 = vmatpush1.bf16.msra.mxu0 0
    %3544 = vmatprep.subr.bf16.mxu0 0
    %3545 = vmatpush1.bf16.msra.mxu0 0
    %3546 = vmatprep.subr.bf16.mxu0 0
    %3547 = vmatpush1.bf16.msra.mxu0 0
    %3548 = vmatprep.subr.bf16.mxu0 0
    %3549 = vmatpush1.bf16.msra.mxu0 0
    %3550 = vmatprep.subr.bf16.mxu0 0
    %3551 = vmatpush1.bf16.msra.mxu0 0
    %3552 = vmatprep.subr.bf16.mxu0 0
    %3553 = vmatpush1.bf16.msra.mxu0 0
    %3554 = vmatprep.subr.bf16.mxu0 0
    %3555 = vmatpush1.bf16.msra.mxu0 0
    %3556 = vmatprep.mubr.bf16.mxu0 0
    %3557 = vmatmul.mubr.bf16.gmra.mrb[0].mxu0 %v3523
    %v3558 = vpop.f32.mrb[0].mxu0
    %v3559 = vadd.f32 0.0, %v3558
    %v3560 = vpop.f32.mrb[0].mxu0
    %v3561 = vadd.f32 0.0, %v3560
    %v3562 = vpop.f32.mrb[0].mxu0
    %v3563 = vadd.f32 0.0, %v3562
    %v3564 = vpop.f32.mrb[0].mxu0
    %v3565 = vadd.f32 0.0, %v3564
    %3566 = vdwg.mxu0
    %3567 = vmatprep.subr.bf16.mxu0 %v1523
    %3568 = vmatpush1.bf16.msra.mxu0 %v1522
    %3569 = vmatprep.subr.bf16.mxu0 %v1527
    %3570 = vmatpush1.bf16.msra.mxu0 %v1526
    %3571 = vmatprep.subr.bf16.mxu0 %v1531
    %3572 = vmatpush1.bf16.msra.mxu0 %v1530
    %3573 = vmatprep.subr.bf16.mxu0 %v1535
    %3574 = vmatpush1.bf16.msra.mxu0 %v1534
    %3575 = vmatprep.subr.bf16.mxu0 %v1539
    %3576 = vmatpush1.bf16.msra.mxu0 %v1538
    %3577 = vmatprep.subr.bf16.mxu0 %v1543
    %3578 = vmatpush1.bf16.msra.mxu0 %v1542
    %3579 = vmatprep.subr.bf16.mxu0 %v1547
    %3580 = vmatpush1.bf16.msra.mxu0 %v1546
    %3581 = vmatprep.subr.bf16.mxu0 %v1551
    %3582 = vmatpush1.bf16.msra.mxu0 %v1550
    %3583 = vmatprep.subr.bf16.mxu0 0
    %3584 = vmatpush1.bf16.msra.mxu0 0
    %3585 = vmatprep.subr.bf16.mxu0 0
    %3586 = vmatpush1.bf16.msra.mxu0 0
    %3587 = vmatprep.subr.bf16.mxu0 0
    %3588 = vmatpush1.bf16.msra.mxu0 0
    %3589 = vmatprep.subr.bf16.mxu0 0
    %3590 = vmatpush1.bf16.msra.mxu0 0
    %3591 = vmatprep.subr.bf16.mxu0 0
    %3592 = vmatpush1.bf16.msra.mxu0 0
    %3593 = vmatprep.subr.bf16.mxu0 0
    %3594 = vmatpush1.bf16.msra.mxu0 0
    %3595 = vmatprep.subr.bf16.mxu0 0
    %3596 = vmatpush1.bf16.msra.mxu0 0
    %3597 = vmatprep.subr.bf16.mxu0 0
    %3598 = vmatpush1.bf16.msra.mxu0 0
    %3599 = vmatprep.mubr.bf16.mxu0 0
    %3600 = vmatmul.mubr.bf16.gmra.mrb[0].mxu0 %v3523
    %v3601 = vpop.f32.mrb[0].mxu0
    %v3602 = vadd.f32 0.0, %v3601
    %v3603 = vpop.f32.mrb[0].mxu0
    %v3604 = vadd.f32 0.0, %v3603
    %v3605 = vpop.f32.mrb[0].mxu0
    %v3606 = vadd.f32 0.0, %v3605
    %v3607 = vpop.f32.mrb[0].mxu0
    %v3608 = vadd.f32 0.0, %v3607
    %3609 = vdwg.mxu0
    %v3610 = vadd.f32 %v697, %v3559
    %v3611 = vadd.f32 %v701, %v3561
    %v3612 = vadd.f32 %v705, %v3602
    %v3613 = vadd.f32 %v709, %v3604
    %v3614 = vadd.f32 %v697, %v3563
    %v3615 = vadd.f32 %v701, %v3565
    %v3616 = vadd.f32 %v705, %v3606
    %v3617 = vadd.f32 %v709, %v3608
    %3618 = vmatprep.subr.bf16.mxu0 %v843
    %3619 = vmatpush1.bf16.msra.mxu0 %v842
    %3620 = vmatprep.subr.bf16.mxu0 %v847
    %3621 = vmatpush1.bf16.msra.mxu0 %v846
    %3622 = vmatprep.subr.bf16.mxu0 %v851
    %3623 = vmatpush1.bf16.msra.mxu0 %v850
    %3624 = vmatprep.subr.bf16.mxu0 %v855
    %3625 = vmatpush1.bf16.msra.mxu0 %v854
    %3626 = vmatprep.subr.bf16.mxu0 %v859
    %3627 = vmatpush1.bf16.msra.mxu0 %v858
    %3628 = vmatprep.subr.bf16.mxu0 %v863
    %3629 = vmatpush1.bf16.msra.mxu0 %v862
    %3630 = vmatprep.subr.bf16.mxu0 %v867
    %3631 = vmatpush1.bf16.msra.mxu0 %v866
    %3632 = vmatprep.subr.bf16.mxu0 %v871
    %3633 = vmatpush1.bf16.msra.mxu0 %v870
    %3634 = vmatprep.subr.bf16.mxu0 0
    %3635 = vmatpush1.bf16.msra.mxu0 0
    %3636 = vmatprep.subr.bf16.mxu0 0
    %3637 = vmatpush1.bf16.msra.mxu0 0
    %3638 = vmatprep.subr.bf16.mxu0 0
    %3639 = vmatpush1.bf16.msra.mxu0 0
    %3640 = vmatprep.subr.bf16.mxu0 0
    %3641 = vmatpush1.bf16.msra.mxu0 0
    %3642 = vmatprep.subr.bf16.mxu0 0
    %3643 = vmatpush1.bf16.msra.mxu0 0
    %3644 = vmatprep.subr.bf16.mxu0 0
    %3645 = vmatpush1.bf16.msra.mxu0 0
    %3646 = vmatprep.subr.bf16.mxu0 0
    %3647 = vmatpush1.bf16.msra.mxu0 0
    %3648 = vmatprep.subr.bf16.mxu0 0
    %3649 = vmatpush1.bf16.msra.mxu0 0
    %3650 = vmatprep.mubr.bf16.mxu0 0
    %3651 = vmatmul.mubr.bf16.gmra.mrb[0].mxu0 %v3372
    %v3652 = vpop.f32.mrb[0].mxu0
    %v3653 = vadd.f32 0.0, %v3652
    %v3654 = vpop.f32.mrb[0].mxu0
    %v3655 = vadd.f32 0.0, %v3654
    %v3656 = vpop.f32.mrb[0].mxu0
    %v3657 = vadd.f32 0.0, %v3656
    %v3658 = vpop.f32.mrb[0].mxu0
    %v3659 = vadd.f32 0.0, %v3658
    %3660 = vdwg.mxu0
    %3661 = vmatprep.subr.bf16.mxu0 %v845
    %3662 = vmatpush1.bf16.msra.mxu0 %v844
    %3663 = vmatprep.subr.bf16.mxu0 %v849
    %3664 = vmatpush1.bf16.msra.mxu0 %v848
    %3665 = vmatprep.subr.bf16.mxu0 %v853
    %3666 = vmatpush1.bf16.msra.mxu0 %v852
    %3667 = vmatprep.subr.bf16.mxu0 %v857
    %3668 = vmatpush1.bf16.msra.mxu0 %v856
    %3669 = vmatprep.subr.bf16.mxu0 %v861
    %3670 = vmatpush1.bf16.msra.mxu0 %v860
    %3671 = vmatprep.subr.bf16.mxu0 %v865
    %3672 = vmatpush1.bf16.msra.mxu0 %v864
    %3673 = vmatprep.subr.bf16.mxu0 %v869
    %3674 = vmatpush1.bf16.msra.mxu0 %v868
    %3675 = vmatprep.subr.bf16.mxu0 %v873
    %3676 = vmatpush1.bf16.msra.mxu0 %v872
    %3677 = vmatprep.subr.bf16.mxu0 0
    %3678 = vmatpush1.bf16.msra.mxu0 0
    %3679 = vmatprep.subr.bf16.mxu0 0
    %3680 = vmatpush1.bf16.msra.mxu0 0
    %3681 = vmatprep.subr.bf16.mxu0 0
    %3682 = vmatpush1.bf16.msra.mxu0 0
    %3683 = vmatprep.subr.bf16.mxu0 0
    %3684 = vmatpush1.bf16.msra.mxu0 0
    %3685 = vmatprep.subr.bf16.mxu0 0
    %3686 = vmatpush1.bf16.msra.mxu0 0
    %3687 = vmatprep.subr.bf16.mxu0 0
    %3688 = vmatpush1.bf16.msra.mxu0 0
    %3689 = vmatprep.subr.bf16.mxu0 0
    %3690 = vmatpush1.bf16.msra.mxu0 0
    %3691 = vmatprep.subr.bf16.mxu0 0
    %3692 = vmatpush1.bf16.msra.mxu0 0
    %3693 = vmatprep.mubr.bf16.mxu0 0
    %3694 = vmatmul.mubr.bf16.gmra.mrb[0].mxu0 %v3372
    %v3695 = vpop.f32.mrb[0].mxu0
    %v3696 = vadd.f32 0.0, %v3695
    %v3697 = vpop.f32.mrb[0].mxu0
    %v3698 = vadd.f32 0.0, %v3697
    %v3699 = vpop.f32.mrb[0].mxu0
    %v3700 = vadd.f32 0.0, %v3699
    %v3701 = vpop.f32.mrb[0].mxu0
    %v3702 = vadd.f32 0.0, %v3701
    %3703 = vdwg.mxu0
    %v3704 = vadd.f32 %v561, %v3653
    %v3705 = vadd.f32 %v563, %v3655
    %v3706 = vadd.f32 %v674, %v3696
    %v3707 = vadd.f32 %v676, %v3698
    %v3708 = vadd.f32 %v565, %v3657
    %v3709 = vadd.f32 %v567, %v3659
    %v3710 = vadd.f32 %v678, %v3700
    %v3711 = vadd.f32 %v680, %v3702
    %v3712 = vxor.u32 %v3704, 2147483648
    %v3713 = vxor.u32 %v3708, 2147483648
    %v3714 = vmul.f32 %v3712, 1.442695
    %v3715 = vpow.pop %v3714
    %v3716 = vmul.f32 %v3713, 1.442695
    %v3717 = vpow.pop %v3716
    %v3718 = vadd.f32 %v3715, 1.0
    %v3719 = vadd.f32 %v3717, 1.0
    %v3720 = vrcp.pop %v3718
    %v3721 = vmul.f32 1.0, %v3720
    %v3722 = vrcp.pop %v3719
    %v3723 = vmul.f32 1.0, %v3722
    %v3724 = vxor.u32 %v3705, 2147483648
    %v3725 = vxor.u32 %v3709, 2147483648
    %v3726 = vmul.f32 %v3724, 1.442695
    %v3727 = vpow.pop %v3726
    %v3728 = vmul.f32 %v3725, 1.442695
    %v3729 = vpow.pop %v3728
    %v3730 = vadd.f32 %v3727, 1.0
    %v3731 = vadd.f32 %v3729, 1.0
    %v3732 = vrcp.pop %v3730
    %v3733 = vmul.f32 1.0, %v3732
    %v3734 = vrcp.pop %v3731
    %v3735 = vmul.f32 1.0, %v3734
    %v3736 = vtanh.pop %v3706
    %v3737 = vtanh.pop %v3710
    %v3738 = vxor.u32 %v3707, 2147483648
    %v3739 = vxor.u32 %v3711, 2147483648
    %v3740 = vmul.f32 %v3738, 1.442695
    %v3741 = vpow.pop %v3740
    %v3742 = vmul.f32 %v3739, 1.442695
    %v3743 = vpow.pop %v3742
    %v3744 = vadd.f32 %v3741, 1.0
    %v3745 = vadd.f32 %v3743, 1.0
    %v3746 = vrcp.pop %v3744
    %v3747 = vmul.f32 1.0, %v3746
    %v3748 = vrcp.pop %v3745
    %v3749 = vmul.f32 1.0, %v3748
    %v3750 = vmul.f32 %v3733, %v3366
    %v3751 = vmul.f32 %v3735, %v3367
    %v3752 = vmul.f32 %v3721, %v3736
    %v3753 = vmul.f32 %v3723, %v3737
    %v3754 = vadd.f32 %v3750, %v3752
    %v3755 = vadd.f32 %v3751, %v3753
    %v3756 = vtanh.pop %v3754
    %v3757 = vtanh.pop %v3755
    %v3758 = vmul.f32 %v3747, %v3756
    %v3759 = vmul.f32 %v3749, %v3757
    %v3760 = vpack.c.bf16 %v3759, %v3758
    %3761 = vmatprep.subr.bf16.mxu0 %v1178
    %3762 = vmatpush1.bf16.msra.mxu0 %v1177
    %3763 = vmatprep.subr.bf16.mxu0 %v1182
    %3764 = vmatpush1.bf16.msra.mxu0 %v1181
    %3765 = vmatprep.subr.bf16.mxu0 %v1186
    %3766 = vmatpush1.bf16.msra.mxu0 %v1185
    %3767 = vmatprep.subr.bf16.mxu0 %v1190
    %3768 = vmatpush1.bf16.msra.mxu0 %v1189
    %3769 = vmatprep.subr.bf16.mxu0 %v1194
    %3770 = vmatpush1.bf16.msra.mxu0 %v1193
    %3771 = vmatprep.subr.bf16.mxu0 %v1198
    %3772 = vmatpush1.bf16.msra.mxu0 %v1197
    %3773 = vmatprep.subr.bf16.mxu0 %v1202
    %3774 = vmatpush1.bf16.msra.mxu0 %v1201
    %3775 = vmatprep.subr.bf16.mxu0 %v1206
    %3776 = vmatpush1.bf16.msra.mxu0 %v1205
    %3777 = vmatprep.subr.bf16.mxu0 0
    %3778 = vmatpush1.bf16.msra.mxu0 0
    %3779 = vmatprep.subr.bf16.mxu0 0
    %3780 = vmatpush1.bf16.msra.mxu0 0
    %3781 = vmatprep.subr.bf16.mxu0 0
    %3782 = vmatpush1.bf16.msra.mxu0 0
    %3783 = vmatprep.subr.bf16.mxu0 0
    %3784 = vmatpush1.bf16.msra.mxu0 0
    %3785 = vmatprep.subr.bf16.mxu0 0
    %3786 = vmatpush1.bf16.msra.mxu0 0
    %3787 = vmatprep.subr.bf16.mxu0 0
    %3788 = vmatpush1.bf16.msra.mxu0 0
    %3789 = vmatprep.subr.bf16.mxu0 0
    %3790 = vmatpush1.bf16.msra.mxu0 0
    %3791 = vmatprep.subr.bf16.mxu0 0
    %3792 = vmatpush1.bf16.msra.mxu0 0
    %3793 = vmatprep.mubr.bf16.mxu0 0
    %3794 = vmatmul.mubr.bf16.gmra.mrb[0].mxu0 %v3760
    %v3795 = vpop.f32.mrb[0].mxu0
    %v3796 = vadd.f32 0.0, %v3795
    %v3797 = vpop.f32.mrb[0].mxu0
    %v3798 = vadd.f32 0.0, %v3797
    %v3799 = vpop.f32.mrb[0].mxu0
    %v3800 = vadd.f32 0.0, %v3799
    %v3801 = vpop.f32.mrb[0].mxu0
    %v3802 = vadd.f32 0.0, %v3801
    %3803 = vdwg.mxu0
    %3804 = vmatprep.subr.bf16.mxu0 %v1180
    %3805 = vmatpush1.bf16.msra.mxu0 %v1179
    %3806 = vmatprep.subr.bf16.mxu0 %v1184
    %3807 = vmatpush1.bf16.msra.mxu0 %v1183
    %3808 = vmatprep.subr.bf16.mxu0 %v1188
    %3809 = vmatpush1.bf16.msra.mxu0 %v1187
    %3810 = vmatprep.subr.bf16.mxu0 %v1192
    %3811 = vmatpush1.bf16.msra.mxu0 %v1191
    %3812 = vmatprep.subr.bf16.mxu0 %v1196
    %3813 = vmatpush1.bf16.msra.mxu0 %v1195
    %3814 = vmatprep.subr.bf16.mxu0 %v1200
    %3815 = vmatpush1.bf16.msra.mxu0 %v1199
    %3816 = vmatprep.subr.bf16.mxu0 %v1204
    %3817 = vmatpush1.bf16.msra.mxu0 %v1203
    %3818 = vmatprep.subr.bf16.mxu0 %v1208
    %3819 = vmatpush1.bf16.msra.mxu0 %v1207
    %3820 = vmatprep.subr.bf16.mxu0 0
    %3821 = vmatpush1.bf16.msra.mxu0 0
    %3822 = vmatprep.subr.bf16.mxu0 0
    %3823 = vmatpush1.bf16.msra.mxu0 0
    %3824 = vmatprep.subr.bf16.mxu0 0
    %3825 = vmatpush1.bf16.msra.mxu0 0
    %3826 = vmatprep.subr.bf16.mxu0 0
    %3827 = vmatpush1.bf16.msra.mxu0 0
    %3828 = vmatprep.subr.bf16.mxu0 0
    %3829 = vmatpush1.bf16.msra.mxu0 0
    %3830 = vmatprep.subr.bf16.mxu0 0
    %3831 = vmatpush1.bf16.msra.mxu0 0
    %3832 = vmatprep.subr.bf16.mxu0 0
    %3833 = vmatpush1.bf16.msra.mxu0 0
    %3834 = vmatprep.subr.bf16.mxu0 0
    %3835 = vmatpush1.bf16.msra.mxu0 0
    %3836 = vmatprep.mubr.bf16.mxu0 0
    %3837 = vmatmul.mubr.bf16.gmra.mrb[0].mxu0 %v3760
    %v3838 = vpop.f32.mrb[0].mxu0
    %v3839 = vadd.f32 0.0, %v3838
    %v3840 = vpop.f32.mrb[0].mxu0
    %v3841 = vadd.f32 0.0, %v3840
    %v3842 = vpop.f32.mrb[0].mxu0
    %v3843 = vadd.f32 0.0, %v3842
    %v3844 = vpop.f32.mrb[0].mxu0
    %v3845 = vadd.f32 0.0, %v3844
    %3846 = vdwg.mxu0
    %v3847 = vadd.f32 %v3610, %v3796
    %v3848 = vadd.f32 %v3611, %v3798
    %v3849 = vadd.f32 %v3612, %v3839
    %v3850 = vadd.f32 %v3613, %v3841
    %v3851 = vadd.f32 %v3614, %v3800
    %v3852 = vadd.f32 %v3615, %v3802
    %v3853 = vadd.f32 %v3616, %v3843
    %v3854 = vadd.f32 %v3617, %v3845
    %v3855 = vxor.u32 %v3847, 2147483648
    %v3856 = vxor.u32 %v3851, 2147483648
    %v3857 = vmul.f32 %v3855, 1.442695
    %v3858 = vpow.pop %v3857
    %v3859 = vmul.f32 %v3856, 1.442695
    %v3860 = vpow.pop %v3859
    %v3861 = vadd.f32 %v3858, 1.0
    %v3862 = vadd.f32 %v3860, 1.0
    %v3863 = vrcp.pop %v3861
    %v3864 = vmul.f32 1.0, %v3863
    %v3865 = vrcp.pop %v3862
    %v3866 = vmul.f32 1.0, %v3865
    %v3867 = vxor.u32 %v3848, 2147483648
    %v3868 = vxor.u32 %v3852, 2147483648
    %v3869 = vmul.f32 %v3867, 1.442695
    %v3870 = vpow.pop %v3869
    %v3871 = vmul.f32 %v3868, 1.442695
    %v3872 = vpow.pop %v3871
    %v3873 = vadd.f32 %v3870, 1.0
    %v3874 = vadd.f32 %v3872, 1.0
    %v3875 = vrcp.pop %v3873
    %v3876 = vmul.f32 1.0, %v3875
    %v3877 = vrcp.pop %v3874
    %v3878 = vmul.f32 1.0, %v3877
    %v3879 = vtanh.pop %v3849
    %v3880 = vtanh.pop %v3853
    %v3881 = vxor.u32 %v3850, 2147483648
    %v3882 = vxor.u32 %v3854, 2147483648
    %v3883 = vmul.f32 %v3881, 1.442695
    %v3884 = vpow.pop %v3883
    %v3885 = vmul.f32 %v3882, 1.442695
    %v3886 = vpow.pop %v3885
    %v3887 = vadd.f32 %v3884, 1.0
    %v3888 = vadd.f32 %v3886, 1.0
    %v3889 = vrcp.pop %v3887
    %v3890 = vmul.f32 1.0, %v3889
    %v3891 = vrcp.pop %v3888
    %v3892 = vmul.f32 1.0, %v3891
    %v3893 = vmul.f32 %v3876, %v3509
    %v3894 = vmul.f32 %v3878, %v3510
    %v3895 = vmul.f32 %v3864, %v3879
    %v3896 = vmul.f32 %v3866, %v3880
    %v3897 = vadd.f32 %v3893, %v3895
    %v3898 = vadd.f32 %v3894, %v3896
    %v3899 = vtanh.pop %v3897
    %v3900 = vtanh.pop %v3898
    %v3901 = vmul.f32 %v3890, %v3899
    %v3902 = vmul.f32 %v3892, %v3900
    %vm3903 = vcmp.ne.f32.partialorder %v3901, %v3901
    %vm3904 = vcmp.ne.f32.partialorder %v3902, %v3902
    %v3905 = vsel %vm3903, 1, 0
    %v3906 = vsel %vm3904, 1, 0
    %v3907 = vcvt.s32.f32 %v3905
    %v3908 = vcvt.s32.f32 %v3906
    %v3909 = vmax.f32 %v3521, %v3907
    %v3910 = vmax.f32 %v3522, %v3908
    %v3911 = vpack.c.bf16 %v3902, %v3901
    %3912 = vmatprep.subr.bf16.mxu0 %v1521
    %3913 = vmatpush1.bf16.msra.mxu0 %v1520
    %3914 = vmatprep.subr.bf16.mxu0 %v1525
    %3915 = vmatpush1.bf16.msra.mxu0 %v1524
    %3916 = vmatprep.subr.bf16.mxu0 %v1529
    %3917 = vmatpush1.bf16.msra.mxu0 %v1528
    %3918 = vmatprep.subr.bf16.mxu0 %v1533
    %3919 = vmatpush1.bf16.msra.mxu0 %v1532
    %3920 = vmatprep.subr.bf16.mxu0 %v1537
    %3921 = vmatpush1.bf16.msra.mxu0 %v1536
    %3922 = vmatprep.subr.bf16.mxu0 %v1541
    %3923 = vmatpush1.bf16.msra.mxu0 %v1540
    %3924 = vmatprep.subr.bf16.mxu0 %v1545
    %3925 = vmatpush1.bf16.msra.mxu0 %v1544
    %3926 = vmatprep.subr.bf16.mxu0 %v1549
    %3927 = vmatpush1.bf16.msra.mxu0 %v1548
    %3928 = vmatprep.subr.bf16.mxu0 0
    %3929 = vmatpush1.bf16.msra.mxu0 0
    %3930 = vmatprep.subr.bf16.mxu0 0
    %3931 = vmatpush1.bf16.msra.mxu0 0
    %3932 = vmatprep.subr.bf16.mxu0 0
    %3933 = vmatpush1.bf16.msra.mxu0 0
    %3934 = vmatprep.subr.bf16.mxu0 0
    %3935 = vmatpush1.bf16.msra.mxu0 0
    %3936 = vmatprep.subr.bf16.mxu0 0
    %3937 = vmatpush1.bf16.msra.mxu0 0
    %3938 = vmatprep.subr.bf16.mxu0 0
    %3939 = vmatpush1.bf16.msra.mxu0 0
    %3940 = vmatprep.subr.bf16.mxu0 0
    %3941 = vmatpush1.bf16.msra.mxu0 0
    %3942 = vmatprep.subr.bf16.mxu0 0
    %3943 = vmatpush1.bf16.msra.mxu0 0
    %3944 = vmatprep.mubr.bf16.mxu0 0
    %3945 = vmatmul.mubr.bf16.gmra.mrb[0].mxu0 %v3911
    %v3946 = vpop.f32.mrb[0].mxu0
    %v3947 = vadd.f32 0.0, %v3946
    %v3948 = vpop.f32.mrb[0].mxu0
    %v3949 = vadd.f32 0.0, %v3948
    %v3950 = vpop.f32.mrb[0].mxu0
    %v3951 = vadd.f32 0.0, %v3950
    %v3952 = vpop.f32.mrb[0].mxu0
    %v3953 = vadd.f32 0.0, %v3952
    %3954 = vdwg.mxu0
    %3955 = vmatprep.subr.bf16.mxu0 %v1523
    %3956 = vmatpush1.bf16.msra.mxu0 %v1522
    %3957 = vmatprep.subr.bf16.mxu0 %v1527
    %3958 = vmatpush1.bf16.msra.mxu0 %v1526
    %3959 = vmatprep.subr.bf16.mxu0 %v1531
    %3960 = vmatpush1.bf16.msra.mxu0 %v1530
    %3961 = vmatprep.subr.bf16.mxu0 %v1535
    %3962 = vmatpush1.bf16.msra.mxu0 %v1534
    %3963 = vmatprep.subr.bf16.mxu0 %v1539
    %3964 = vmatpush1.bf16.msra.mxu0 %v1538
    %3965 = vmatprep.subr.bf16.mxu0 %v1543
    %3966 = vmatpush1.bf16.msra.mxu0 %v1542
    %3967 = vmatprep.subr.bf16.mxu0 %v1547
    %3968 = vmatpush1.bf16.msra.mxu0 %v1546
    %3969 = vmatprep.subr.bf16.mxu0 %v1551
    %3970 = vmatpush1.bf16.msra.mxu0 %v1550
    %3971 = vmatprep.subr.bf16.mxu0 0
    %3972 = vmatpush1.bf16.msra.mxu0 0
    %3973 = vmatprep.subr.bf16.mxu0 0
    %3974 = vmatpush1.bf16.msra.mxu0 0
    %3975 = vmatprep.subr.bf16.mxu0 0
    %3976 = vmatpush1.bf16.msra.mxu0 0
    %3977 = vmatprep.subr.bf16.mxu0 0
    %3978 = vmatpush1.bf16.msra.mxu0 0
    %3979 = vmatprep.subr.bf16.mxu0 0
    %3980 = vmatpush1.bf16.msra.mxu0 0
    %3981 = vmatprep.subr.bf16.mxu0 0
    %3982 = vmatpush1.bf16.msra.mxu0 0
    %3983 = vmatprep.subr.bf16.mxu0 0
    %3984 = vmatpush1.bf16.msra.mxu0 0
    %3985 = vmatprep.subr.bf16.mxu0 0
    %3986 = vmatpush1.bf16.msra.mxu0 0
    %3987 = vmatprep.mubr.bf16.mxu0 0
    %3988 = vmatmul.mubr.bf16.gmra.mrb[0].mxu0 %v3911
    %v3989 = vpop.f32.mrb[0].mxu0
    %v3990 = vadd.f32 0.0, %v3989
    %v3991 = vpop.f32.mrb[0].mxu0
    %v3992 = vadd.f32 0.0, %v3991
    %v3993 = vpop.f32.mrb[0].mxu0
    %v3994 = vadd.f32 0.0, %v3993
    %v3995 = vpop.f32.mrb[0].mxu0
    %v3996 = vadd.f32 0.0, %v3995
    %3997 = vdwg.mxu0
    %v3998 = vadd.f32 %v697, %v3947
    %v3999 = vadd.f32 %v701, %v3949
    %v4000 = vadd.f32 %v705, %v3990
    %v4001 = vadd.f32 %v709, %v3992
    %v4002 = vadd.f32 %v697, %v3951
    %v4003 = vadd.f32 %v701, %v3953
    %v4004 = vadd.f32 %v705, %v3994
    %v4005 = vadd.f32 %v709, %v3996
    %4006 = vmatprep.subr.bf16.mxu0 %v843
    %4007 = vmatpush1.bf16.msra.mxu0 %v842
    %4008 = vmatprep.subr.bf16.mxu0 %v847
    %4009 = vmatpush1.bf16.msra.mxu0 %v846
    %4010 = vmatprep.subr.bf16.mxu0 %v851
    %4011 = vmatpush1.bf16.msra.mxu0 %v850
    %4012 = vmatprep.subr.bf16.mxu0 %v855
    %4013 = vmatpush1.bf16.msra.mxu0 %v854
    %4014 = vmatprep.subr.bf16.mxu0 %v859
    %4015 = vmatpush1.bf16.msra.mxu0 %v858
    %4016 = vmatprep.subr.bf16.mxu0 %v863
    %4017 = vmatpush1.bf16.msra.mxu0 %v862
    %4018 = vmatprep.subr.bf16.mxu0 %v867
    %4019 = vmatpush1.bf16.msra.mxu0 %v866
    %4020 = vmatprep.subr.bf16.mxu0 %v871
    %4021 = vmatpush1.bf16.msra.mxu0 %v870
    %4022 = vmatprep.subr.bf16.mxu0 0
    %4023 = vmatpush1.bf16.msra.mxu0 0
    %4024 = vmatprep.subr.bf16.mxu0 0
    %4025 = vmatpush1.bf16.msra.mxu0 0
    %4026 = vmatprep.subr.bf16.mxu0 0
    %4027 = vmatpush1.bf16.msra.mxu0 0
    %4028 = vmatprep.subr.bf16.mxu0 0
    %4029 = vmatpush1.bf16.msra.mxu0 0
    %4030 = vmatprep.subr.bf16.mxu0 0
    %4031 = vmatpush1.bf16.msra.mxu0 0
    %4032 = vmatprep.subr.bf16.mxu0 0
    %4033 = vmatpush1.bf16.msra.mxu0 0
    %4034 = vmatprep.subr.bf16.mxu0 0
    %4035 = vmatpush1.bf16.msra.mxu0 0
    %4036 = vmatprep.subr.bf16.mxu0 0
    %4037 = vmatpush1.bf16.msra.mxu0 0
    %4038 = vmatprep.mubr.bf16.mxu0 0
    %4039 = vmatmul.mubr.bf16.gmra.mrb[0].mxu0 %v3760
    %v4040 = vpop.f32.mrb[0].mxu0
    %v4041 = vadd.f32 0.0, %v4040
    %v4042 = vpop.f32.mrb[0].mxu0
    %v4043 = vadd.f32 0.0, %v4042
    %v4044 = vpop.f32.mrb[0].mxu0
    %v4045 = vadd.f32 0.0, %v4044
    %v4046 = vpop.f32.mrb[0].mxu0
    %v4047 = vadd.f32 0.0, %v4046
    %4048 = vdwg.mxu0
    %4049 = vmatprep.subr.bf16.mxu0 %v845
    %4050 = vmatpush1.bf16.msra.mxu0 %v844
    %4051 = vmatprep.subr.bf16.mxu0 %v849
    %4052 = vmatpush1.bf16.msra.mxu0 %v848
    %4053 = vmatprep.subr.bf16.mxu0 %v853
    %4054 = vmatpush1.bf16.msra.mxu0 %v852
    %4055 = vmatprep.subr.bf16.mxu0 %v857
    %4056 = vmatpush1.bf16.msra.mxu0 %v856
    %4057 = vmatprep.subr.bf16.mxu0 %v861
    %4058 = vmatpush1.bf16.msra.mxu0 %v860
    %4059 = vmatprep.subr.bf16.mxu0 %v865
    %4060 = vmatpush1.bf16.msra.mxu0 %v864
    %4061 = vmatprep.subr.bf16.mxu0 %v869
    %4062 = vmatpush1.bf16.msra.mxu0 %v868
    %4063 = vmatprep.subr.bf16.mxu0 %v873
    %4064 = vmatpush1.bf16.msra.mxu0 %v872
    %4065 = vmatprep.subr.bf16.mxu0 0
    %4066 = vmatpush1.bf16.msra.mxu0 0
    %4067 = vmatprep.subr.bf16.mxu0 0
    %4068 = vmatpush1.bf16.msra.mxu0 0
    %4069 = vmatprep.subr.bf16.mxu0 0
    %4070 = vmatpush1.bf16.msra.mxu0 0
    %4071 = vmatprep.subr.bf16.mxu0 0
    %4072 = vmatpush1.bf16.msra.mxu0 0
    %4073 = vmatprep.subr.bf16.mxu0 0
    %4074 = vmatpush1.bf16.msra.mxu0 0
    %4075 = vmatprep.subr.bf16.mxu0 0
    %4076 = vmatpush1.bf16.msra.mxu0 0
    %4077 = vmatprep.subr.bf16.mxu0 0
    %4078 = vmatpush1.bf16.msra.mxu0 0
    %4079 = vmatprep.subr.bf16.mxu0 0
    %4080 = vmatpush1.bf16.msra.mxu0 0
    %4081 = vmatprep.mubr.bf16.mxu0 0
    %4082 = vmatmul.mubr.bf16.gmra.mrb[0].mxu0 %v3760
    %v4083 = vpop.f32.mrb[0].mxu0
    %v4084 = vadd.f32 0.0, %v4083
    %v4085 = vpop.f32.mrb[0].mxu0
    %v4086 = vadd.f32 0.0, %v4085
    %v4087 = vpop.f32.mrb[0].mxu0
    %v4088 = vadd.f32 0.0, %v4087
    %v4089 = vpop.f32.mrb[0].mxu0
    %v4090 = vadd.f32 0.0, %v4089
    %4091 = vdwg.mxu0
    %v4092 = vadd.f32 %v571, %v4041
    %v4093 = vadd.f32 %v573, %v4043
    %v4094 = vadd.f32 %v684, %v4084
    %v4095 = vadd.f32 %v686, %v4086
    %v4096 = vadd.f32 %v575, %v4045
    %v4097 = vadd.f32 %v577, %v4047
    %v4098 = vadd.f32 %v688, %v4088
    %v4099 = vadd.f32 %v690, %v4090
    %v4100 = vxor.u32 %v4092, 2147483648
    %v4101 = vxor.u32 %v4096, 2147483648
    %v4102 = vmul.f32 %v4100, 1.442695
    %v4103 = vpow.pop %v4102
    %v4104 = vmul.f32 %v4101, 1.442695
    %v4105 = vpow.pop %v4104
    %v4106 = vadd.f32 %v4103, 1.0
    %v4107 = vadd.f32 %v4105, 1.0
    %v4108 = vrcp.pop %v4106
    %v4109 = vmul.f32 1.0, %v4108
    %v4110 = vrcp.pop %v4107
    %v4111 = vmul.f32 1.0, %v4110
    %v4112 = vxor.u32 %v4093, 2147483648
    %v4113 = vxor.u32 %v4097, 2147483648
    %v4114 = vmul.f32 %v4112, 1.442695
    %v4115 = vpow.pop %v4114
    %v4116 = vmul.f32 %v4113, 1.442695
    %v4117 = vpow.pop %v4116
    %v4118 = vadd.f32 %v4115, 1.0
    %v4119 = vadd.f32 %v4117, 1.0
    %v4120 = vrcp.pop %v4118
    %v4121 = vmul.f32 1.0, %v4120
    %v4122 = vrcp.pop %v4119
    %v4123 = vmul.f32 1.0, %v4122
    %v4124 = vtanh.pop %v4094
    %v4125 = vtanh.pop %v4098
    %v4126 = vxor.u32 %v4095, 2147483648
    %v4127 = vxor.u32 %v4099, 2147483648
    %v4128 = vmul.f32 %v4126, 1.442695
    %v4129 = vpow.pop %v4128
    %v4130 = vmul.f32 %v4127, 1.442695
    %v4131 = vpow.pop %v4130
    %v4132 = vadd.f32 %v4129, 1.0
    %v4133 = vadd.f32 %v4131, 1.0
    %v4134 = vrcp.pop %v4132
    %v4135 = vmul.f32 1.0, %v4134
    %v4136 = vrcp.pop %v4133
    %v4137 = vmul.f32 1.0, %v4136
    %v4138 = vmul.f32 %v4121, %v3754
    %v4139 = vmul.f32 %v4123, %v3755
    %v4140 = vmul.f32 %v4109, %v4124
    %v4141 = vmul.f32 %v4111, %v4125
    %v4142 = vadd.f32 %v4138, %v4140
    %v4143 = vadd.f32 %v4139, %v4141
    %v4144 = vtanh.pop %v4142
    %v4145 = vtanh.pop %v4143
    %v4146 = vmul.f32 %v4135, %v4144
    %v4147 = vmul.f32 %v4137, %v4145
    %v4148 = vpack.c.bf16 %v4147, %v4146
    %4149 = vmatprep.subr.bf16.mxu0 %v1178
    %4150 = vmatpush1.bf16.msra.mxu0 %v1177
    %4151 = vmatprep.subr.bf16.mxu0 %v1182
    %4152 = vmatpush1.bf16.msra.mxu0 %v1181
    %4153 = vmatprep.subr.bf16.mxu0 %v1186
    %4154 = vmatpush1.bf16.msra.mxu0 %v1185
    %4155 = vmatprep.subr.bf16.mxu0 %v1190
    %4156 = vmatpush1.bf16.msra.mxu0 %v1189
    %4157 = vmatprep.subr.bf16.mxu0 %v1194
    %4158 = vmatpush1.bf16.msra.mxu0 %v1193
    %4159 = vmatprep.subr.bf16.mxu0 %v1198
    %4160 = vmatpush1.bf16.msra.mxu0 %v1197
    %4161 = vmatprep.subr.bf16.mxu0 %v1202
    %4162 = vmatpush1.bf16.msra.mxu0 %v1201
    %4163 = vmatprep.subr.bf16.mxu0 %v1206
    %4164 = vmatpush1.bf16.msra.mxu0 %v1205
    %4165 = vmatprep.subr.bf16.mxu0 0
    %4166 = vmatpush1.bf16.msra.mxu0 0
    %4167 = vmatprep.subr.bf16.mxu0 0
    %4168 = vmatpush1.bf16.msra.mxu0 0
    %4169 = vmatprep.subr.bf16.mxu0 0
    %4170 = vmatpush1.bf16.msra.mxu0 0
    %4171 = vmatprep.subr.bf16.mxu0 0
    %4172 = vmatpush1.bf16.msra.mxu0 0
    %4173 = vmatprep.subr.bf16.mxu0 0
    %4174 = vmatpush1.bf16.msra.mxu0 0
    %4175 = vmatprep.subr.bf16.mxu0 0
    %4176 = vmatpush1.bf16.msra.mxu0 0
    %4177 = vmatprep.subr.bf16.mxu0 0
    %4178 = vmatpush1.bf16.msra.mxu0 0
    %4179 = vmatprep.subr.bf16.mxu0 0
    %4180 = vmatpush1.bf16.msra.mxu0 0
    %4181 = vmatprep.mubr.bf16.mxu0 0
    %4182 = vmatmul.mubr.bf16.gmra.mrb[0].mxu0 %v4148
    %v4183 = vpop.f32.mrb[0].mxu0
    %v4184 = vadd.f32 0.0, %v4183
    %v4185 = vpop.f32.mrb[0].mxu0
    %v4186 = vadd.f32 0.0, %v4185
    %v4187 = vpop.f32.mrb[0].mxu0
    %v4188 = vadd.f32 0.0, %v4187
    %v4189 = vpop.f32.mrb[0].mxu0
    %v4190 = vadd.f32 0.0, %v4189
    %4191 = vdwg.mxu0
    %4192 = vmatprep.subr.bf16.mxu0 %v1180
    %4193 = vmatpush1.bf16.msra.mxu0 %v1179
    %4194 = vmatprep.subr.bf16.mxu0 %v1184
    %4195 = vmatpush1.bf16.msra.mxu0 %v1183
    %4196 = vmatprep.subr.bf16.mxu0 %v1188
    %4197 = vmatpush1.bf16.msra.mxu0 %v1187
    %4198 = vmatprep.subr.bf16.mxu0 %v1192
    %4199 = vmatpush1.bf16.msra.mxu0 %v1191
    %4200 = vmatprep.subr.bf16.mxu0 %v1196
    %4201 = vmatpush1.bf16.msra.mxu0 %v1195
    %4202 = vmatprep.subr.bf16.mxu0 %v1200
    %4203 = vmatpush1.bf16.msra.mxu0 %v1199
    %4204 = vmatprep.subr.bf16.mxu0 %v1204
    %4205 = vmatpush1.bf16.msra.mxu0 %v1203
    %4206 = vmatprep.subr.bf16.mxu0 %v1208
    %4207 = vmatpush1.bf16.msra.mxu0 %v1207
    %4208 = vmatprep.subr.bf16.mxu0 0
    %4209 = vmatpush1.bf16.msra.mxu0 0
    %4210 = vmatprep.subr.bf16.mxu0 0
    %4211 = vmatpush1.bf16.msra.mxu0 0
    %4212 = vmatprep.subr.bf16.mxu0 0
    %4213 = vmatpush1.bf16.msra.mxu0 0
    %4214 = vmatprep.subr.bf16.mxu0 0
    %4215 = vmatpush1.bf16.msra.mxu0 0
    %4216 = vmatprep.subr.bf16.mxu0 0
    %4217 = vmatpush1.bf16.msra.mxu0 0
    %4218 = vmatprep.subr.bf16.mxu0 0
    %4219 = vmatpush1.bf16.msra.mxu0 0
    %4220 = vmatprep.subr.bf16.mxu0 0
    %4221 = vmatpush1.bf16.msra.mxu0 0
    %4222 = vmatprep.subr.bf16.mxu0 0
    %4223 = vmatpush1.bf16.msra.mxu0 0
    %4224 = vmatprep.mubr.bf16.mxu0 0
    %4225 = vmatmul.mubr.bf16.gmra.mrb[0].mxu0 %v4148
    %v4226 = vpop.f32.mrb[0].mxu0
    %v4227 = vadd.f32 0.0, %v4226
    %v4228 = vpop.f32.mrb[0].mxu0
    %v4229 = vadd.f32 0.0, %v4228
    %v4230 = vpop.f32.mrb[0].mxu0
    %v4231 = vadd.f32 0.0, %v4230
    %v4232 = vpop.f32.mrb[0].mxu0
    %v4233 = vadd.f32 0.0, %v4232
    %4234 = vdwg.mxu0
    %v4235 = vadd.f32 %v3998, %v4184
    %v4236 = vadd.f32 %v3999, %v4186
    %v4237 = vadd.f32 %v4000, %v4227
    %v4238 = vadd.f32 %v4001, %v4229
    %v4239 = vadd.f32 %v4002, %v4188
    %v4240 = vadd.f32 %v4003, %v4190
    %v4241 = vadd.f32 %v4004, %v4231
    %v4242 = vadd.f32 %v4005, %v4233
    %v4243 = vxor.u32 %v4235, 2147483648
    %v4244 = vxor.u32 %v4239, 2147483648
    %v4245 = vmul.f32 %v4243, 1.442695
    %v4246 = vpow.pop %v4245
    %v4247 = vmul.f32 %v4244, 1.442695
    %v4248 = vpow.pop %v4247
    %v4249 = vadd.f32 %v4246, 1.0
    %v4250 = vadd.f32 %v4248, 1.0
    %v4251 = vrcp.pop %v4249
    %v4252 = vmul.f32 1.0, %v4251
    %v4253 = vrcp.pop %v4250
    %v4254 = vmul.f32 1.0, %v4253
    %v4255 = vxor.u32 %v4236, 2147483648
    %v4256 = vxor.u32 %v4240, 2147483648
    %v4257 = vmul.f32 %v4255, 1.442695
    %v4258 = vpow.pop %v4257
    %v4259 = vmul.f32 %v4256, 1.442695
    %v4260 = vpow.pop %v4259
    %v4261 = vadd.f32 %v4258, 1.0
    %v4262 = vadd.f32 %v4260, 1.0
    %v4263 = vrcp.pop %v4261
    %v4264 = vmul.f32 1.0, %v4263
    %v4265 = vrcp.pop %v4262
    %v4266 = vmul.f32 1.0, %v4265
    %v4267 = vtanh.pop %v4237
    %v4268 = vtanh.pop %v4241
    %v4269 = vxor.u32 %v4238, 2147483648
    %v4270 = vxor.u32 %v4242, 2147483648
    %v4271 = vmul.f32 %v4269, 1.442695
    %v4272 = vpow.pop %v4271
    %v4273 = vmul.f32 %v4270, 1.442695
    %v4274 = vpow.pop %v4273
    %v4275 = vadd.f32 %v4272, 1.0
    %v4276 = vadd.f32 %v4274, 1.0
    %v4277 = vrcp.pop %v4275
    %v4278 = vmul.f32 1.0, %v4277
    %v4279 = vrcp.pop %v4276
    %v4280 = vmul.f32 1.0, %v4279
    %v4281 = vmul.f32 %v4264, %v3897
    %v4282 = vmul.f32 %v4266, %v3898
    %v4283 = vmul.f32 %v4252, %v4267
    %v4284 = vmul.f32 %v4254, %v4268
    %v4285 = vadd.f32 %v4281, %v4283
    %v4286 = vadd.f32 %v4282, %v4284
    %v4287 = vtanh.pop %v4285
    %v4288 = vtanh.pop %v4286
    %v4289 = vmul.f32 %v4278, %v4287
    %v4290 = vmul.f32 %v4280, %v4288
    %vm4291 = vcmp.ne.f32.partialorder %v4289, %v4289
    %vm4292 = vcmp.ne.f32.partialorder %v4290, %v4290
    %v4293 = vsel %vm4291, 1, 0
    %v4294 = vsel %vm4292, 1, 0
    %v4295 = vcvt.s32.f32 %v4293
    %v4296 = vcvt.s32.f32 %v4294
    %v4297 = vmax.f32 %v3909, %v4295
    %v4298 = vmax.f32 %v3910, %v4296
    %v4299 = vlaneseq
    %v4300 = vshrl.u32 %v4299, 7
    %v4301 = vadd.s32 %v4300, 8
    %vm4302 = vcmp.lt.s32.totalorder %v4300, 2
    %vm4303 = vcmp.lt.s32.totalorder %v4301, 2
    %v4304 = vsel %vm4302, %v4297, 0.0
    %v4305 = vsel %vm4303, %v4298, 0.0
    %v4306 = vmax.f32 %v4304, %v4305
    %4307 = vmax.xlane.f32.xlu0 %v4306
    %v4308 = vpop.xlane.xlu0 %4307
    %v4309 = vrot.slane %v4308, 4
    %v4310 = vmax.f32 %v4308, %v4309
    %v4311 = vrot.slane %v4310, 2
    %v4312 = vmax.f32 %v4310, %v4311
    %v4313 = vrot.slane %v4312, 1
    %v4314 = vmax.f32 %v4312, %v4313
    %s4315 = vtos %v4314
    %p4316 = scmp.gt.f32.partialorder %s4315, 0.0
    %s4317 = scalar_select %p4316, 1, 0
    %v4318 = vstv %s4317
    %vm4319 = vcmp.eq.s32.totalorder %v4318, 1
    %v4320 = vsel %vm4319, 0.0, %v4289
    %v4321 = vsel %vm4319, 0.0, %v4290
    %s4322 = smul.u32 4, 16
    %s4323 = smul.u32 %s4322, 2
    %s4324 = sshll.u32 %s4323, 4
    %4325 = dma.done [#allocation6], %s4324
    %s4326 = smul.u32 4, 32
    %s4327 = smul.u32 %s4326, 4
    %s4328 = sshll.u32 %s4327, 4
    %4329 = dma.done %s247, %s4328
    %s4330 = smul.u32 4, 64
    %s4331 = smul.u32 %s4330, 1
    %s4332 = sshll.u32 %s4331, 4
    %4333 = dma.done %s283, %s4332
    %s4334 = smul.u32 %s4322, 1
    %s4335 = sshll.u32 %s4334, 4
    %4336 = dma.done %s295, %s4335
    %v4337 = vpack.c.bf16 %v4321, %v4320
    %v4338 = vld [vmem:[#allocation2] sm:$0xff]
    %v4339 = vld [vmem:[#allocation2 + $0x8] sm:$0xff]
    %v4340 = vld [vmem:[#allocation2 + $0x10] sm:$0xff]
    %v4341 = vld [vmem:[#allocation2 + $0x18] sm:$0xff]
    %v4342 = vld [vmem:[#allocation2 + $0x20] sm:$0xff]
    %v4343 = vld [vmem:[#allocation2 + $0x28] sm:$0xff]
    %v4344 = vld [vmem:[#allocation2 + $0x30] sm:$0xff]
    %v4345 = vld [vmem:[#allocation2 + $0x38] sm:$0xff]
    %v4346 = vld [vmem:[#allocation2 + $0x40] sm:$0xff]
    %v4347 = vld [vmem:[#allocation2 + $0x48] sm:$0xff]
    %v4348 = vld [vmem:[#allocation2 + $0x50] sm:$0xff]
    %v4349 = vld [vmem:[#allocation2 + $0x58] sm:$0xff]
    %v4350 = vld [vmem:[#allocation2 + $0x60] sm:$0xff]
    %v4351 = vld [vmem:[#allocation2 + $0x68] sm:$0xff]
    %v4352 = vld [vmem:[#allocation2 + $0x70] sm:$0xff]
    %v4353 = vld [vmem:[#allocation2 + $0x78] sm:$0xff]
    %v4354 = vld [vmem:[%s11] sm:$0x3]
    %v4356 = vlaneseq
    %v4357 = vshrl.u32 %v4356, 7
    %v4358 = vsub.s32 0, %v4357
    %v4359 = vrot.slane %v4354, %v4358
    %v4360 = vlaneseq
    %v4361 = vshrl.u32 %v4360, 7
    %v4362 = vsub.s32 1, %v4361
    %v4363 = vrot.slane %v4354, %v4362
    %4366 = vmatprep.subr.bf16.mxu0 %v4339
    %4367 = vmatpush1.bf16.msra.mxu0 %v4338
    %4368 = vmatprep.subr.bf16.mxu0 %v4341
    %4369 = vmatpush1.bf16.msra.mxu0 %v4340
    %4370 = vmatprep.subr.bf16.mxu0 %v4343
    %4371 = vmatpush1.bf16.msra.mxu0 %v4342
    %4372 = vmatprep.subr.bf16.mxu0 %v4345
    %4373 = vmatpush1.bf16.msra.mxu0 %v4344
    %4374 = vmatprep.subr.bf16.mxu0 %v4347
    %4375 = vmatpush1.bf16.msra.mxu0 %v4346
    %4376 = vmatprep.subr.bf16.mxu0 %v4349
    %4377 = vmatpush1.bf16.msra.mxu0 %v4348
    %4378 = vmatprep.subr.bf16.mxu0 %v4351
    %4379 = vmatpush1.bf16.msra.mxu0 %v4350
    %4380 = vmatprep.subr.bf16.mxu0 %v4353
    %4381 = vmatpush1.bf16.msra.mxu0 %v4352
    %4382 = vmatprep.subr.bf16.mxu0 0
    %4383 = vmatpush1.bf16.msra.mxu0 0
    %4384 = vmatprep.subr.bf16.mxu0 0
    %4385 = vmatpush1.bf16.msra.mxu0 0
    %4386 = vmatprep.subr.bf16.mxu0 0
    %4387 = vmatpush1.bf16.msra.mxu0 0
    %4388 = vmatprep.subr.bf16.mxu0 0
    %4389 = vmatpush1.bf16.msra.mxu0 0
    %4390 = vmatprep.subr.bf16.mxu0 0
    %4391 = vmatpush1.bf16.msra.mxu0 0
    %4392 = vmatprep.subr.bf16.mxu0 0
    %4393 = vmatpush1.bf16.msra.mxu0 0
    %4394 = vmatprep.subr.bf16.mxu0 0
    %4395 = vmatpush1.bf16.msra.mxu0 0
    %4396 = vmatprep.subr.bf16.mxu0 0
    %4397 = vmatpush1.bf16.msra.mxu0 0
    %4398 = vmatprep.mubr.bf16.mxu0 0
    %4399 = vmatmul.mubr.bf16.gmra.mrb[0].mxu0 %v4337
    %v4400 = vpop.f32.mrb[0].mxu0
    %v4401 = vadd.f32 %v4359, %v4400
    %v4402 = vpop.f32.mrb[0].mxu0
    %v4403 = vadd.f32 %v4363, %v4402
    %v4404 = vpop.f32.mrb[0].mxu0
    %v4405 = vadd.f32 %v4359, %v4404
    %v4406 = vpop.f32.mrb[0].mxu0
    %v4407 = vadd.f32 %v4363, %v4406
    %4408 = vdwg.mxu0
    %v4409 = vmul.f32 %v4401, 0.5
    %v4410 = vmul.f32 %v4403, 0.5
    %v4411 = vmul.f32 %v4405, 0.5
    %v4412 = vmul.f32 %v4407, 0.5
    %v4413 = vmul.f32 %v4401, 0.70710677
    %v4414 = vmul.f32 %v4403, 0.70710677
    %v4415 = vmul.f32 %v4405, 0.70710677
    %v4416 = vmul.f32 %v4407, 0.70710677
    %vm4417 = vcmp.ge.f32.partialorder %v4413, 0.0
    %vm4418 = vcmp.ge.f32.partialorder %v4414, 0.0
    %vm4419 = vcmp.ge.f32.partialorder %v4415, 0.0
    %vm4420 = vcmp.ge.f32.partialorder %v4416, 0.0
    %v4421 = vsel %vm4417, 1.0, -1.0
    %v4422 = vsel %vm4418, 1.0, -1.0
    %v4423 = vsel %vm4419, 1.0, -1.0
    %v4424 = vsel %vm4420, 1.0, -1.0
    %v4425 = vand.u32 2147483647, %v4413
    %v4426 = vand.u32 2147483647, %v4414
    %v4427 = vand.u32 2147483647, %v4415
    %v4428 = vand.u32 2147483647, %v4416
    %v4429 = vmul.f32 %v4425, 0.3275911
    %v4430 = vmul.f32 %v4426, 0.3275911
    %v4431 = vmul.f32 %v4427, 0.3275911
    %v4432 = vmul.f32 %v4428, 0.3275911
    %v4433 = vadd.f32 %v4429, 1.0
    %v4434 = vadd.f32 %v4430, 1.0
    %v4435 = vadd.f32 %v4431, 1.0
    %v4436 = vadd.f32 %v4432, 1.0
    %v4437 = vrcp.pop %v4433
    %v4438 = vmul.f32 1.0, %v4437
    %v4439 = vrcp.pop %v4434
    %v4440 = vmul.f32 1.0, %v4439
    %v4441 = vrcp.pop %v4435
    %v4442 = vmul.f32 1.0, %v4441
    %v4443 = vrcp.pop %v4436
    %v4444 = vmul.f32 1.0, %v4443
    %v4445 = vmul.f32 %v4438, 1.0614054
    %v4446 = vmul.f32 %v4440, 1.0614054
    %v4447 = vmul.f32 %v4442, 1.0614054
    %v4448 = vmul.f32 %v4444, 1.0614054
    %v4449 = vadd.f32 %v4445, -1.4531521
    %v4450 = vadd.f32 %v4446, -1.4531521
    %v4451 = vadd.f32 %v4447, -1.4531521
    %v4452 = vadd.f32 %v4448, -1.4531521
    %v4453 = vmul.f32 %v4449, %v4438
    %v4454 = vmul.f32 %v4450, %v4440
    %v4455 = vmul.f32 %v4451, %v4442
    %v4456 = vmul.f32 %v4452, %v4444
    %v4457 = vadd.f32 %v4453, 1.4214138
    %v4458 = vadd.f32 %v4454, 1.4214138
    %v4459 = vadd.f32 %v4455, 1.4214138
    %v4460 = vadd.f32 %v4456, 1.4214138
    %v4461 = vmul.f32 %v4457, %v4438
    %v4462 = vmul.f32 %v4458, %v4440
    %v4463 = vmul.f32 %v4459, %v4442
    %v4464 = vmul.f32 %v4460, %v4444
    %v4465 = vadd.f32 %v4461, -0.28449672
    %v4466 = vadd.f32 %v4462, -0.28449672
    %v4467 = vadd.f32 %v4463, -0.28449672
    %v4468 = vadd.f32 %v4464, -0.28449672
    %v4469 = vmul.f32 %v4465, %v4438
    %v4470 = vmul.f32 %v4466, %v4440
    %v4471 = vmul.f32 %v4467, %v4442
    %v4472 = vmul.f32 %v4468, %v4444
    %v4473 = vadd.f32 %v4469, 0.2548296
    %v4474 = vadd.f32 %v4470, 0.2548296
    %v4475 = vadd.f32 %v4471, 0.2548296
    %v4476 = vadd.f32 %v4472, 0.2548296
    %v4477 = vmul.f32 %v4473, %v4438
    %v4478 = vmul.f32 %v4474, %v4440
    %v4479 = vmul.f32 %v4475, %v4442
    %v4480 = vmul.f32 %v4476, %v4444
    %v4481 = vsub.f32 0.0, %v4425
    %v4482 = vsub.f32 0.0, %v4426
    %v4483 = vsub.f32 0.0, %v4427
    %v4484 = vsub.f32 0.0, %v4428
    %v4485 = vmul.f32 %v4481, %v4425
    %v4486 = vmul.f32 %v4482, %v4426
    %v4487 = vmul.f32 %v4483, %v4427
    %v4488 = vmul.f32 %v4484, %v4428
    %v4489 = vmul.f32 %v4485, 1.442695
    %v4490 = vpow.pop %v4489
    %v4491 = vmul.f32 %v4486, 1.442695
    %v4492 = vpow.pop %v4491
    %v4493 = vmul.f32 %v4487, 1.442695
    %v4494 = vpow.pop %v4493
    %v4495 = vmul.f32 %v4488, 1.442695
    %v4496 = vpow.pop %v4495
    %v4497 = vmul.f32 %v4477, %v4490
    %v4498 = vmul.f32 %v4478, %v4492
    %v4499 = vmul.f32 %v4479, %v4494
    %v4500 = vmul.f32 %v4480, %v4496
    %v4501 = vsub.f32 1.0, %v4497
    %v4502 = vsub.f32 1.0, %v4498
    %v4503 = vsub.f32 1.0, %v4499
    %v4504 = vsub.f32 1.0, %v4500
    %v4505 = vmul.f32 %v4421, %v4501
    %v4506 = vmul.f32 %v4422, %v4502
    %v4507 = vmul.f32 %v4423, %v4503
    %v4508 = vmul.f32 %v4424, %v4504
    %v4509 = vadd.f32 %v4505, 1.0
    %v4510 = vadd.f32 %v4506, 1.0
    %v4511 = vadd.f32 %v4507, 1.0
    %v4512 = vadd.f32 %v4508, 1.0
    %v4513 = vmul.f32 %v4409, %v4509
    %v4514 = vmul.f32 %v4410, %v4510
    %v4515 = vmul.f32 %v4411, %v4511
    %v4516 = vmul.f32 %v4412, %v4512
    %v4517 = vpack.c.bf16 %v4515, %v4513
    %v4518 = vpack.c.bf16 %v4516, %v4514
    %v4519 = vld [vmem:[#allocation3] sm:$0xff]
    %v4520 = vld [vmem:[#allocation3 + $0x8] sm:$0xff]
    %v4521 = vld [vmem:[#allocation3 + $0x10] sm:$0xff]
    %v4522 = vld [vmem:[#allocation3 + $0x18] sm:$0xff]
    %v4523 = vld [vmem:[#allocation3 + $0x20] sm:$0xff]
    %v4524 = vld [vmem:[#allocation3 + $0x28] sm:$0xff]
    %v4525 = vld [vmem:[#allocation3 + $0x30] sm:$0xff]
    %v4526 = vld [vmem:[#allocation3 + $0x38] sm:$0xff]
    %v4527 = vld [vmem:[#allocation3 + $0x40] sm:$0xff]
    %v4528 = vld [vmem:[#allocation3 + $0x48] sm:$0xff]
    %v4529 = vld [vmem:[#allocation3 + $0x50] sm:$0xff]
    %v4530 = vld [vmem:[#allocation3 + $0x58] sm:$0xff]
    %v4531 = vld [vmem:[#allocation3 + $0x60] sm:$0xff]
    %v4532 = vld [vmem:[#allocation3 + $0x68] sm:$0xff]
    %v4533 = vld [vmem:[#allocation3 + $0x70] sm:$0xff]
    %v4534 = vld [vmem:[#allocation3 + $0x78] sm:$0xff]
    %v4535 = vld [vmem:[#allocation3 + $0x80] sm:$0xff]
    %v4536 = vld [vmem:[#allocation3 + $0x88] sm:$0xff]
    %v4537 = vld [vmem:[#allocation3 + $0x90] sm:$0xff]
    %v4538 = vld [vmem:[#allocation3 + $0x98] sm:$0xff]
    %v4539 = vld [vmem:[#allocation3 + $0xa0] sm:$0xff]
    %v4540 = vld [vmem:[#allocation3 + $0xa8] sm:$0xff]
    %v4541 = vld [vmem:[#allocation3 + $0xb0] sm:$0xff]
    %v4542 = vld [vmem:[#allocation3 + $0xb8] sm:$0xff]
    %v4543 = vld [vmem:[#allocation3 + $0xc0] sm:$0xff]
    %v4544 = vld [vmem:[#allocation3 + $0xc8] sm:$0xff]
    %v4545 = vld [vmem:[#allocation3 + $0xd0] sm:$0xff]
    %v4546 = vld [vmem:[#allocation3 + $0xd8] sm:$0xff]
    %v4547 = vld [vmem:[#allocation3 + $0xe0] sm:$0xff]
    %v4548 = vld [vmem:[#allocation3 + $0xe8] sm:$0xff]
    %v4549 = vld [vmem:[#allocation3 + $0xf0] sm:$0xff]
    %v4550 = vld [vmem:[#allocation3 + $0xf8] sm:$0xff]
    %v4551 = vld [vmem:[#allocation3 + $0x100] sm:$0xff]
    %v4552 = vld [vmem:[#allocation3 + $0x108] sm:$0xff]
    %v4553 = vld [vmem:[#allocation3 + $0x110] sm:$0xff]
    %v4554 = vld [vmem:[#allocation3 + $0x118] sm:$0xff]
    %v4555 = vld [vmem:[#allocation3 + $0x120] sm:$0xff]
    %v4556 = vld [vmem:[#allocation3 + $0x128] sm:$0xff]
    %v4557 = vld [vmem:[#allocation3 + $0x130] sm:$0xff]
    %v4558 = vld [vmem:[#allocation3 + $0x138] sm:$0xff]
    %v4559 = vld [vmem:[#allocation3 + $0x140] sm:$0xff]
    %v4560 = vld [vmem:[#allocation3 + $0x148] sm:$0xff]
    %v4561 = vld [vmem:[#allocation3 + $0x150] sm:$0xff]
    %v4562 = vld [vmem:[#allocation3 + $0x158] sm:$0xff]
    %v4563 = vld [vmem:[#allocation3 + $0x160] sm:$0xff]
    %v4564 = vld [vmem:[#allocation3 + $0x168] sm:$0xff]
    %v4565 = vld [vmem:[#allocation3 + $0x170] sm:$0xff]
    %v4566 = vld [vmem:[#allocation3 + $0x178] sm:$0xff]
    %v4567 = vld [vmem:[#allocation3 + $0x180] sm:$0xff]
    %v4568 = vld [vmem:[#allocation3 + $0x188] sm:$0xff]
    %v4569 = vld [vmem:[#allocation3 + $0x190] sm:$0xff]
    %v4570 = vld [vmem:[#allocation3 + $0x198] sm:$0xff]
    %v4571 = vld [vmem:[#allocation3 + $0x1a0] sm:$0xff]
    %v4572 = vld [vmem:[#allocation3 + $0x1a8] sm:$0xff]
    %v4573 = vld [vmem:[#allocation3 + $0x1b0] sm:$0xff]
    %v4574 = vld [vmem:[#allocation3 + $0x1b8] sm:$0xff]
    %v4575 = vld [vmem:[#allocation3 + $0x1c0] sm:$0xff]
    %v4576 = vld [vmem:[#allocation3 + $0x1c8] sm:$0xff]
    %v4577 = vld [vmem:[#allocation3 + $0x1d0] sm:$0xff]
    %v4578 = vld [vmem:[#allocation3 + $0x1d8] sm:$0xff]
    %v4579 = vld [vmem:[#allocation3 + $0x1e0] sm:$0xff]
    %v4580 = vld [vmem:[#allocation3 + $0x1e8] sm:$0xff]
    %v4581 = vld [vmem:[#allocation3 + $0x1f0] sm:$0xff]
    %v4582 = vld [vmem:[#allocation3 + $0x1f8] sm:$0xff]
    %v4583 = vld [vmem:[%s12] sm:$0xf]
    %v4585 = vlaneseq
    %v4586 = vshrl.u32 %v4585, 7
    %v4587 = vsub.s32 0, %v4586
    %v4588 = vrot.slane %v4583, %v4587
    %v4589 = vlaneseq
    %v4590 = vshrl.u32 %v4589, 7
    %v4591 = vsub.s32 1, %v4590
    %v4592 = vrot.slane %v4583, %v4591
    %v4593 = vlaneseq
    %v4594 = vshrl.u32 %v4593, 7
    %v4595 = vsub.s32 2, %v4594
    %v4596 = vrot.slane %v4583, %v4595
    %v4597 = vlaneseq
    %v4598 = vshrl.u32 %v4597, 7
    %v4599 = vsub.s32 3, %v4598
    %v4600 = vrot.slane %v4583, %v4599
    %4605 = vmatprep.subr.bf16.mxu0 %v4520
    %4606 = vmatpush1.bf16.msra.mxu0 %v4519
    %4607 = vmatprep.subr.bf16.mxu0 %v4524
    %4608 = vmatpush1.bf16.msra.mxu0 %v4523
    %4609 = vmatprep.subr.bf16.mxu0 %v4528
    %4610 = vmatpush1.bf16.msra.mxu0 %v4527
    %4611 = vmatprep.subr.bf16.mxu0 %v4532
    %4612 = vmatpush1.bf16.msra.mxu0 %v4531
    %4613 = vmatprep.subr.bf16.mxu0 %v4536
    %4614 = vmatpush1.bf16.msra.mxu0 %v4535
    %4615 = vmatprep.subr.bf16.mxu0 %v4540
    %4616 = vmatpush1.bf16.msra.mxu0 %v4539
    %4617 = vmatprep.subr.bf16.mxu0 %v4544
    %4618 = vmatpush1.bf16.msra.mxu0 %v4543
    %4619 = vmatprep.subr.bf16.mxu0 %v4548
    %4620 = vmatpush1.bf16.msra.mxu0 %v4547
    %4621 = vmatprep.subr.bf16.mxu0 %v4552
    %4622 = vmatpush1.bf16.msra.mxu0 %v4551
    %4623 = vmatprep.subr.bf16.mxu0 %v4556
    %4624 = vmatpush1.bf16.msra.mxu0 %v4555
    %4625 = vmatprep.subr.bf16.mxu0 %v4560
    %4626 = vmatpush1.bf16.msra.mxu0 %v4559
    %4627 = vmatprep.subr.bf16.mxu0 %v4564
    %4628 = vmatpush1.bf16.msra.mxu0 %v4563
    %4629 = vmatprep.subr.bf16.mxu0 %v4568
    %4630 = vmatpush1.bf16.msra.mxu0 %v4567
    %4631 = vmatprep.subr.bf16.mxu0 %v4572
    %4632 = vmatpush1.bf16.msra.mxu0 %v4571
    %4633 = vmatprep.subr.bf16.mxu0 %v4576
    %4634 = vmatpush1.bf16.msra.mxu0 %v4575
    %4635 = vmatprep.subr.bf16.mxu0 %v4580
    %4636 = vmatpush1.bf16.msra.mxu0 %v4579
    %4637 = vmatprep.mubr.bf16.mxu0 %v4518
    %4638 = vmatmul.mubr.bf16.gmra.mrb[0].mxu0 %v4517
    %v4639 = vpop.f32.mrb[0].mxu0
    %v4640 = vadd.f32 %v4588, %v4639
    %v4641 = vpop.f32.mrb[0].mxu0
    %v4642 = vadd.f32 %v4592, %v4641
    %v4643 = vpop.f32.mrb[0].mxu0
    %v4644 = vadd.f32 %v4588, %v4643
    %v4645 = vpop.f32.mrb[0].mxu0
    %v4646 = vadd.f32 %v4592, %v4645
    %4647 = vdwg.mxu0
    %4648 = vmatprep.subr.bf16.mxu0 %v4522
    %4649 = vmatpush1.bf16.msra.mxu0 %v4521
    %4650 = vmatprep.subr.bf16.mxu0 %v4526
    %4651 = vmatpush1.bf16.msra.mxu0 %v4525
    %4652 = vmatprep.subr.bf16.mxu0 %v4530
    %4653 = vmatpush1.bf16.msra.mxu0 %v4529
    %4654 = vmatprep.subr.bf16.mxu0 %v4534
    %4655 = vmatpush1.bf16.msra.mxu0 %v4533
    %4656 = vmatprep.subr.bf16.mxu0 %v4538
    %4657 = vmatpush1.bf16.msra.mxu0 %v4537
    %4658 = vmatprep.subr.bf16.mxu0 %v4542
    %4659 = vmatpush1.bf16.msra.mxu0 %v4541
    %4660 = vmatprep.subr.bf16.mxu0 %v4546
    %4661 = vmatpush1.bf16.msra.mxu0 %v4545
    %4662 = vmatprep.subr.bf16.mxu0 %v4550
    %4663 = vmatpush1.bf16.msra.mxu0 %v4549
    %4664 = vmatprep.subr.bf16.mxu0 %v4554
    %4665 = vmatpush1.bf16.msra.mxu0 %v4553
    %4666 = vmatprep.subr.bf16.mxu0 %v4558
    %4667 = vmatpush1.bf16.msra.mxu0 %v4557
    %4668 = vmatprep.subr.bf16.mxu0 %v4562
    %4669 = vmatpush1.bf16.msra.mxu0 %v4561
    %4670 = vmatprep.subr.bf16.mxu0 %v4566
    %4671 = vmatpush1.bf16.msra.mxu0 %v4565
    %4672 = vmatprep.subr.bf16.mxu0 %v4570
    %4673 = vmatpush1.bf16.msra.mxu0 %v4569
    %4674 = vmatprep.subr.bf16.mxu0 %v4574
    %4675 = vmatpush1.bf16.msra.mxu0 %v4573
    %4676 = vmatprep.subr.bf16.mxu0 %v4578
    %4677 = vmatpush1.bf16.msra.mxu0 %v4577
    %4678 = vmatprep.subr.bf16.mxu0 %v4582
    %4679 = vmatpush1.bf16.msra.mxu0 %v4581
    %4680 = vmatprep.mubr.bf16.mxu0 %v4518
    %4681 = vmatmul.mubr.bf16.gmra.mrb[0].mxu0 %v4517
    %v4682 = vpop.f32.mrb[0].mxu0
    %v4683 = vadd.f32 %v4596, %v4682
    %v4684 = vpop.f32.mrb[0].mxu0
    %v4685 = vadd.f32 %v4600, %v4684
    %v4686 = vpop.f32.mrb[0].mxu0
    %v4687 = vadd.f32 %v4596, %v4686
    %v4688 = vpop.f32.mrb[0].mxu0
    %v4689 = vadd.f32 %v4600, %v4688
    %4690 = vdwg.mxu0
    %v4691 = vmul.f32 %v4640, 0.5
    %v4692 = vmul.f32 %v4642, 0.5
    %v4693 = vmul.f32 %v4683, 0.5
    %v4694 = vmul.f32 %v4685, 0.5
    %v4695 = vmul.f32 %v4644, 0.5
    %v4696 = vmul.f32 %v4646, 0.5
    %v4697 = vmul.f32 %v4687, 0.5
    %v4698 = vmul.f32 %v4689, 0.5
    %v4699 = vmul.f32 %v4640, 0.70710677
    %v4700 = vmul.f32 %v4642, 0.70710677
    %v4701 = vmul.f32 %v4683, 0.70710677
    %v4702 = vmul.f32 %v4685, 0.70710677
    %v4703 = vmul.f32 %v4644, 0.70710677
    %v4704 = vmul.f32 %v4646, 0.70710677
    %v4705 = vmul.f32 %v4687, 0.70710677
    %v4706 = vmul.f32 %v4689, 0.70710677
    %vm4707 = vcmp.ge.f32.partialorder %v4699, 0.0
    %vm4708 = vcmp.ge.f32.partialorder %v4700, 0.0
    %vm4709 = vcmp.ge.f32.partialorder %v4701, 0.0
    %vm4710 = vcmp.ge.f32.partialorder %v4702, 0.0
    %vm4711 = vcmp.ge.f32.partialorder %v4703, 0.0
    %vm4712 = vcmp.ge.f32.partialorder %v4704, 0.0
    %vm4713 = vcmp.ge.f32.partialorder %v4705, 0.0
    %vm4714 = vcmp.ge.f32.partialorder %v4706, 0.0
    %v4715 = vsel %vm4707, 1.0, -1.0
    %v4716 = vsel %vm4708, 1.0, -1.0
    %v4717 = vsel %vm4709, 1.0, -1.0
    %v4718 = vsel %vm4710, 1.0, -1.0
    %v4719 = vsel %vm4711, 1.0, -1.0
    %v4720 = vsel %vm4712, 1.0, -1.0
    %v4721 = vsel %vm4713, 1.0, -1.0
    %v4722 = vsel %vm4714, 1.0, -1.0
    %v4723 = vand.u32 2147483647, %v4699
    %v4724 = vand.u32 2147483647, %v4700
    %v4725 = vand.u32 2147483647, %v4701
    %v4726 = vand.u32 2147483647, %v4702
    %v4727 = vand.u32 2147483647, %v4703
    %v4728 = vand.u32 2147483647, %v4704
    %v4729 = vand.u32 2147483647, %v4705
    %v4730 = vand.u32 2147483647, %v4706
    %v4731 = vmul.f32 %v4723, 0.3275911
    %v4732 = vmul.f32 %v4724, 0.3275911
    %v4733 = vmul.f32 %v4725, 0.3275911
    %v4734 = vmul.f32 %v4726, 0.3275911
    %v4735 = vmul.f32 %v4727, 0.3275911
    %v4736 = vmul.f32 %v4728, 0.3275911
    %v4737 = vmul.f32 %v4729, 0.3275911
    %v4738 = vmul.f32 %v4730, 0.3275911
    %v4739 = vadd.f32 %v4731, 1.0
    %v4740 = vadd.f32 %v4732, 1.0
    %v4741 = vadd.f32 %v4733, 1.0
    %v4742 = vadd.f32 %v4734, 1.0
    %v4743 = vadd.f32 %v4735, 1.0
    %v4744 = vadd.f32 %v4736, 1.0
    %v4745 = vadd.f32 %v4737, 1.0
    %v4746 = vadd.f32 %v4738, 1.0
    %v4747 = vrcp.pop %v4739
    %v4748 = vmul.f32 1.0, %v4747
    %v4749 = vrcp.pop %v4740
    %v4750 = vmul.f32 1.0, %v4749
    %v4751 = vrcp.pop %v4741
    %v4752 = vmul.f32 1.0, %v4751
    %v4753 = vrcp.pop %v4742
    %v4754 = vmul.f32 1.0, %v4753
    %v4755 = vrcp.pop %v4743
    %v4756 = vmul.f32 1.0, %v4755
    %v4757 = vrcp.pop %v4744
    %v4758 = vmul.f32 1.0, %v4757
    %v4759 = vrcp.pop %v4745
    %v4760 = vmul.f32 1.0, %v4759
    %v4761 = vrcp.pop %v4746
    %v4762 = vmul.f32 1.0, %v4761
    %v4763 = vmul.f32 %v4748, 1.0614054
    %v4764 = vmul.f32 %v4750, 1.0614054
    %v4765 = vmul.f32 %v4752, 1.0614054
    %v4766 = vmul.f32 %v4754, 1.0614054
    %v4767 = vmul.f32 %v4756, 1.0614054
    %v4768 = vmul.f32 %v4758, 1.0614054
    %v4769 = vmul.f32 %v4760, 1.0614054
    %v4770 = vmul.f32 %v4762, 1.0614054
    %v4771 = vadd.f32 %v4763, -1.4531521
    %v4772 = vadd.f32 %v4764, -1.4531521
    %v4773 = vadd.f32 %v4765, -1.4531521
    %v4774 = vadd.f32 %v4766, -1.4531521
    %v4775 = vadd.f32 %v4767, -1.4531521
    %v4776 = vadd.f32 %v4768, -1.4531521
    %v4777 = vadd.f32 %v4769, -1.4531521
    %v4778 = vadd.f32 %v4770, -1.4531521
    %v4779 = vmul.f32 %v4771, %v4748
    %v4780 = vmul.f32 %v4772, %v4750
    %v4781 = vmul.f32 %v4773, %v4752
    %v4782 = vmul.f32 %v4774, %v4754
    %v4783 = vmul.f32 %v4775, %v4756
    %v4784 = vmul.f32 %v4776, %v4758
    %v4785 = vmul.f32 %v4777, %v4760
    %v4786 = vmul.f32 %v4778, %v4762
    %v4787 = vadd.f32 %v4779, 1.4214138
    %v4788 = vadd.f32 %v4780, 1.4214138
    %v4789 = vadd.f32 %v4781, 1.4214138
    %v4790 = vadd.f32 %v4782, 1.4214138
    %v4791 = vadd.f32 %v4783, 1.4214138
    %v4792 = vadd.f32 %v4784, 1.4214138
    %v4793 = vadd.f32 %v4785, 1.4214138
    %v4794 = vadd.f32 %v4786, 1.4214138
    %v4795 = vmul.f32 %v4787, %v4748
    %v4796 = vmul.f32 %v4788, %v4750
    %v4797 = vmul.f32 %v4789, %v4752
    %v4798 = vmul.f32 %v4790, %v4754
    %v4799 = vmul.f32 %v4791, %v4756
    %v4800 = vmul.f32 %v4792, %v4758
    %v4801 = vmul.f32 %v4793, %v4760
    %v4802 = vmul.f32 %v4794, %v4762
    %v4803 = vadd.f32 %v4795, -0.28449672
    %v4804 = vadd.f32 %v4796, -0.28449672
    %v4805 = vadd.f32 %v4797, -0.28449672
    %v4806 = vadd.f32 %v4798, -0.28449672
    %v4807 = vadd.f32 %v4799, -0.28449672
    %v4808 = vadd.f32 %v4800, -0.28449672
    %v4809 = vadd.f32 %v4801, -0.28449672
    %v4810 = vadd.f32 %v4802, -0.28449672
    %v4811 = vmul.f32 %v4803, %v4748
    %v4812 = vmul.f32 %v4804, %v4750
    %v4813 = vmul.f32 %v4805, %v4752
    %v4814 = vmul.f32 %v4806, %v4754
    %v4815 = vmul.f32 %v4807, %v4756
    %v4816 = vmul.f32 %v4808, %v4758
    %v4817 = vmul.f32 %v4809, %v4760
    %v4818 = vmul.f32 %v4810, %v4762
    %v4819 = vadd.f32 %v4811, 0.2548296
    %v4820 = vadd.f32 %v4812, 0.2548296
    %v4821 = vadd.f32 %v4813, 0.2548296
    %v4822 = vadd.f32 %v4814, 0.2548296
    %v4823 = vadd.f32 %v4815, 0.2548296
    %v4824 = vadd.f32 %v4816, 0.2548296
    %v4825 = vadd.f32 %v4817, 0.2548296
    %v4826 = vadd.f32 %v4818, 0.2548296
    %v4827 = vmul.f32 %v4819, %v4748
    %v4828 = vmul.f32 %v4820, %v4750
    %v4829 = vmul.f32 %v4821, %v4752
    %v4830 = vmul.f32 %v4822, %v4754
    %v4831 = vmul.f32 %v4823, %v4756
    %v4832 = vmul.f32 %v4824, %v4758
    %v4833 = vmul.f32 %v4825, %v4760
    %v4834 = vmul.f32 %v4826, %v4762
    %v4835 = vsub.f32 0.0, %v4723
    %v4836 = vsub.f32 0.0, %v4724
    %v4837 = vsub.f32 0.0, %v4725
    %v4838 = vsub.f32 0.0, %v4726
    %v4839 = vsub.f32 0.0, %v4727
    %v4840 = vsub.f32 0.0, %v4728
    %v4841 = vsub.f32 0.0, %v4729
    %v4842 = vsub.f32 0.0, %v4730
    %v4843 = vmul.f32 %v4835, %v4723
    %v4844 = vmul.f32 %v4836, %v4724
    %v4845 = vmul.f32 %v4837, %v4725
    %v4846 = vmul.f32 %v4838, %v4726
    %v4847 = vmul.f32 %v4839, %v4727
    %v4848 = vmul.f32 %v4840, %v4728
    %v4849 = vmul.f32 %v4841, %v4729
    %v4850 = vmul.f32 %v4842, %v4730
    %v4851 = vmul.f32 %v4843, 1.442695
    %v4852 = vpow.pop %v4851
    %v4853 = vmul.f32 %v4844, 1.442695
    %v4854 = vpow.pop %v4853
    %v4855 = vmul.f32 %v4845, 1.442695
    %v4856 = vpow.pop %v4855
    %v4857 = vmul.f32 %v4846, 1.442695
    %v4858 = vpow.pop %v4857
    %v4859 = vmul.f32 %v4847, 1.442695
    %v4860 = vpow.pop %v4859
    %v4861 = vmul.f32 %v4848, 1.442695
    %v4862 = vpow.pop %v4861
    %v4863 = vmul.f32 %v4849, 1.442695
    %v4864 = vpow.pop %v4863
    %v4865 = vmul.f32 %v4850, 1.442695
    %v4866 = vpow.pop %v4865
    %v4867 = vmul.f32 %v4827, %v4852
    %v4868 = vmul.f32 %v4828, %v4854
    %v4869 = vmul.f32 %v4829, %v4856
    %v4870 = vmul.f32 %v4830, %v4858
    %v4871 = vmul.f32 %v4831, %v4860
    %v4872 = vmul.f32 %v4832, %v4862
    %v4873 = vmul.f32 %v4833, %v4864
    %v4874 = vmul.f32 %v4834, %v4866
    %v4875 = vsub.f32 1.0, %v4867
    %v4876 = vsub.f32 1.0, %v4868
    %v4877 = vsub.f32 1.0, %v4869
    %v4878 = vsub.f32 1.0, %v4870
    %v4879 = vsub.f32 1.0, %v4871
    %v4880 = vsub.f32 1.0, %v4872
    %v4881 = vsub.f32 1.0, %v4873
    %v4882 = vsub.f32 1.0, %v4874
    %v4883 = vmul.f32 %v4715, %v4875
    %v4884 = vmul.f32 %v4716, %v4876
    %v4885 = vmul.f32 %v4717, %v4877
    %v4886 = vmul.f32 %v4718, %v4878
    %v4887 = vmul.f32 %v4719, %v4879
    %v4888 = vmul.f32 %v4720, %v4880
    %v4889 = vmul.f32 %v4721, %v4881
    %v4890 = vmul.f32 %v4722, %v4882
    %v4891 = vadd.f32 %v4883, 1.0
    %v4892 = vadd.f32 %v4884, 1.0
    %v4893 = vadd.f32 %v4885, 1.0
    %v4894 = vadd.f32 %v4886, 1.0
    %v4895 = vadd.f32 %v4887, 1.0
    %v4896 = vadd.f32 %v4888, 1.0
    %v4897 = vadd.f32 %v4889, 1.0
    %v4898 = vadd.f32 %v4890, 1.0
    %v4899 = vmul.f32 %v4691, %v4891
    %v4900 = vmul.f32 %v4692, %v4892
    %v4901 = vmul.f32 %v4693, %v4893
    %v4902 = vmul.f32 %v4694, %v4894
    %v4903 = vmul.f32 %v4695, %v4895
    %v4904 = vmul.f32 %v4696, %v4896
    %v4905 = vmul.f32 %v4697, %v4897
    %v4906 = vmul.f32 %v4698, %v4898
    %v4907 = vpack.c.bf16 %v4903, %v4899
    %v4908 = vpack.c.bf16 %v4904, %v4900
    %v4909 = vpack.c.bf16 %v4905, %v4901
    %v4910 = vpack.c.bf16 %v4906, %v4902
    %v4911 = vld [vmem:[#allocation4] sm:$0xff]
    %v4912 = vld [vmem:[#allocation4 + $0x8] sm:$0xff]
    %v4913 = vld [vmem:[#allocation4 + $0x10] sm:$0xff]
    %v4914 = vld [vmem:[#allocation4 + $0x18] sm:$0xff]
    %v4915 = vld [vmem:[#allocation4 + $0x20] sm:$0xff]
    %v4916 = vld [vmem:[#allocation4 + $0x28] sm:$0xff]
    %v4917 = vld [vmem:[#allocation4 + $0x30] sm:$0xff]
    %v4918 = vld [vmem:[#allocation4 + $0x38] sm:$0xff]
    %v4919 = vld [vmem:[#allocation4 + $0x40] sm:$0xff]
    %v4920 = vld [vmem:[#allocation4 + $0x48] sm:$0xff]
    %v4921 = vld [vmem:[#allocation4 + $0x50] sm:$0xff]
    %v4922 = vld [vmem:[#allocation4 + $0x58] sm:$0xff]
    %v4923 = vld [vmem:[#allocation4 + $0x60] sm:$0xff]
    %v4924 = vld [vmem:[#allocation4 + $0x68] sm:$0xff]
    %v4925 = vld [vmem:[#allocation4 + $0x70] sm:$0xff]
    %v4926 = vld [vmem:[#allocation4 + $0x78] sm:$0xff]
    %v4927 = vld [vmem:[#allocation4 + $0x80] sm:$0xff]
    %v4928 = vld [vmem:[#allocation4 + $0x88] sm:$0xff]
    %v4929 = vld [vmem:[#allocation4 + $0x90] sm:$0xff]
    %v4930 = vld [vmem:[#allocation4 + $0x98] sm:$0xff]
    %v4931 = vld [vmem:[#allocation4 + $0xa0] sm:$0xff]
    %v4932 = vld [vmem:[#allocation4 + $0xa8] sm:$0xff]
    %v4933 = vld [vmem:[#allocation4 + $0xb0] sm:$0xff]
    %v4934 = vld [vmem:[#allocation4 + $0xb8] sm:$0xff]
    %v4935 = vld [vmem:[#allocation4 + $0xc0] sm:$0xff]
    %v4936 = vld [vmem:[#allocation4 + $0xc8] sm:$0xff]
    %v4937 = vld [vmem:[#allocation4 + $0xd0] sm:$0xff]
    %v4938 = vld [vmem:[#allocation4 + $0xd8] sm:$0xff]
    %v4939 = vld [vmem:[#allocation4 + $0xe0] sm:$0xff]
    %v4940 = vld [vmem:[#allocation4 + $0xe8] sm:$0xff]
    %v4941 = vld [vmem:[#allocation4 + $0xf0] sm:$0xff]
    %v4942 = vld [vmem:[#allocation4 + $0xf8] sm:$0xff]
    %v4943 = vld [vmem:[%s13] sm:$0x1]
    %v4945 = vlaneseq
    %v4946 = vshrl.u32 %v4945, 7
    %v4947 = vsub.s32 0, %v4946
    %v4948 = vrot.slane %v4943, %v4947
    %4950 = vmatprep.subr.bf16.mxu0 0
    %4951 = vmatpush1.bf16.msra.mxu0 %v4911
    %4952 = vmatprep.subr.bf16.mxu0 0
    %4953 = vmatpush1.bf16.msra.mxu0 %v4912
    %4954 = vmatprep.subr.bf16.mxu0 0
    %4955 = vmatpush1.bf16.msra.mxu0 %v4913
    %4956 = vmatprep.subr.bf16.mxu0 0
    %4957 = vmatpush1.bf16.msra.mxu0 %v4914
    %4958 = vmatprep.subr.bf16.mxu0 0
    %4959 = vmatpush1.bf16.msra.mxu0 %v4915
    %4960 = vmatprep.subr.bf16.mxu0 0
    %4961 = vmatpush1.bf16.msra.mxu0 %v4916
    %4962 = vmatprep.subr.bf16.mxu0 0
    %4963 = vmatpush1.bf16.msra.mxu0 %v4917
    %4964 = vmatprep.subr.bf16.mxu0 0
    %4965 = vmatpush1.bf16.msra.mxu0 %v4918
    %4966 = vmatprep.subr.bf16.mxu0 0
    %4967 = vmatpush1.bf16.msra.mxu0 %v4919
    %4968 = vmatprep.subr.bf16.mxu0 0
    %4969 = vmatpush1.bf16.msra.mxu0 %v4920
    %4970 = vmatprep.subr.bf16.mxu0 0
    %4971 = vmatpush1.bf16.msra.mxu0 %v4921
    %4972 = vmatprep.subr.bf16.mxu0 0
    %4973 = vmatpush1.bf16.msra.mxu0 %v4922
    %4974 = vmatprep.subr.bf16.mxu0 0
    %4975 = vmatpush1.bf16.msra.mxu0 %v4923
    %4976 = vmatprep.subr.bf16.mxu0 0
    %4977 = vmatpush1.bf16.msra.mxu0 %v4924
    %4978 = vmatprep.subr.bf16.mxu0 0
    %4979 = vmatpush1.bf16.msra.mxu0 %v4925
    %4980 = vmatprep.subr.bf16.mxu0 0
    %4981 = vmatpush1.bf16.msra.mxu0 %v4926
    %4982 = vmatprep.mubr.bf16.mxu0 %v4908
    %4983 = vmatmul.mubr.bf16.gmra.mrb[0].mxu0 %v4907
    %v4984 = vpop.f32.mrb[0].mxu0
    %v4985 = vadd.f32 %v4948, %v4984
    %v4986 = vpop.f32.mrb[0].mxu0
    %v4987 = vpop.f32.mrb[0].mxu0
    %v4988 = vadd.f32 %v4948, %v4987
    %v4989 = vpop.f32.mrb[0].mxu0
    %4990 = vdwg.mxu0
    %4991 = vmatprep.subr.bf16.mxu0 0
    %4992 = vmatpush1.bf16.msra.mxu0 %v4927
    %4993 = vmatprep.subr.bf16.mxu0 0
    %4994 = vmatpush1.bf16.msra.mxu0 %v4928
    %4995 = vmatprep.subr.bf16.mxu0 0
    %4996 = vmatpush1.bf16.msra.mxu0 %v4929
    %4997 = vmatprep.subr.bf16.mxu0 0
    %4998 = vmatpush1.bf16.msra.mxu0 %v4930
    %4999 = vmatprep.subr.bf16.mxu0 0
    %5000 = vmatpush1.bf16.msra.mxu0 %v4931
    %5001 = vmatprep.subr.bf16.mxu0 0
    %5002 = vmatpush1.bf16.msra.mxu0 %v4932
    %5003 = vmatprep.subr.bf16.mxu0 0
    %5004 = vmatpush1.bf16.msra.mxu0 %v4933
    %5005 = vmatprep.subr.bf16.mxu0 0
    %5006 = vmatpush1.bf16.msra.mxu0 %v4934
    %5007 = vmatprep.subr.bf16.mxu0 0
    %5008 = vmatpush1.bf16.msra.mxu0 %v4935
    %5009 = vmatprep.subr.bf16.mxu0 0
    %5010 = vmatpush1.bf16.msra.mxu0 %v4936
    %5011 = vmatprep.subr.bf16.mxu0 0
    %5012 = vmatpush1.bf16.msra.mxu0 %v4937
    %5013 = vmatprep.subr.bf16.mxu0 0
    %5014 = vmatpush1.bf16.msra.mxu0 %v4938
    %5015 = vmatprep.subr.bf16.mxu0 0
    %5016 = vmatpush1.bf16.msra.mxu0 %v4939
    %5017 = vmatprep.subr.bf16.mxu0 0
    %5018 = vmatpush1.bf16.msra.mxu0 %v4940
    %5019 = vmatprep.subr.bf16.mxu0 0
    %5020 = vmatpush1.bf16.msra.mxu0 %v4941
    %5021 = vmatprep.subr.bf16.mxu0 0
    %5022 = vmatpush1.bf16.msra.mxu0 %v4942
    %5023 = vmatprep.mubr.bf16.mxu0 %v4910
    %5024 = vmatmul.mubr.bf16.gmra.mrb[0].mxu0 %v4909
    %v5025 = vpop.f32.mrb[0].mxu0
    %v5026 = vadd.f32 %v4985, %v5025
    %v5027 = vpop.f32.mrb[0].mxu0
    %v5028 = vpop.f32.mrb[0].mxu0
    %v5029 = vadd.f32 %v4988, %v5028
    %v5030 = vpop.f32.mrb[0].mxu0
    %5031 = vdwg.mxu0
    %v5032 = vmul.f32 %v5026, 0.5
    %v5033 = vmul.f32 %v5029, 0.5
    %v5034 = vmul.f32 %v5026, 0.70710677
    %v5035 = vmul.f32 %v5029, 0.70710677
    %vm5036 = vcmp.ge.f32.partialorder %v5034, 0.0
    %vm5037 = vcmp.ge.f32.partialorder %v5035, 0.0
    %v5038 = vsel %vm5036, 1.0, -1.0
    %v5039 = vsel %vm5037, 1.0, -1.0
    %v5040 = vand.u32 2147483647, %v5034
    %v5041 = vand.u32 2147483647, %v5035
    %v5042 = vmul.f32 %v5040, 0.3275911
    %v5043 = vmul.f32 %v5041, 0.3275911
    %v5044 = vadd.f32 %v5042, 1.0
    %v5045 = vadd.f32 %v5043, 1.0
    %v5046 = vrcp.pop %v5044
    %v5047 = vmul.f32 1.0, %v5046
    %v5048 = vrcp.pop %v5045
    %v5049 = vmul.f32 1.0, %v5048
    %v5050 = vmul.f32 %v5047, 1.0614054
    %v5051 = vmul.f32 %v5049, 1.0614054
    %v5052 = vadd.f32 %v5050, -1.4531521
    %v5053 = vadd.f32 %v5051, -1.4531521
    %v5054 = vmul.f32 %v5052, %v5047
    %v5055 = vmul.f32 %v5053, %v5049
    %v5056 = vadd.f32 %v5054, 1.4214138
    %v5057 = vadd.f32 %v5055, 1.4214138
    %v5058 = vmul.f32 %v5056, %v5047
    %v5059 = vmul.f32 %v5057, %v5049
    %v5060 = vadd.f32 %v5058, -0.28449672
    %v5061 = vadd.f32 %v5059, -0.28449672
    %v5062 = vmul.f32 %v5060, %v5047
    %v5063 = vmul.f32 %v5061, %v5049
    %v5064 = vadd.f32 %v5062, 0.2548296
    %v5065 = vadd.f32 %v5063, 0.2548296
    %v5066 = vmul.f32 %v5064, %v5047
    %v5067 = vmul.f32 %v5065, %v5049
    %v5068 = vsub.f32 0.0, %v5040
    %v5069 = vsub.f32 0.0, %v5041
    %v5070 = vmul.f32 %v5068, %v5040
    %v5071 = vmul.f32 %v5069, %v5041
    %v5072 = vmul.f32 %v5070, 1.442695
    %v5073 = vpow.pop %v5072
    %v5074 = vmul.f32 %v5071, 1.442695
    %v5075 = vpow.pop %v5074
    %v5076 = vmul.f32 %v5066, %v5073
    %v5077 = vmul.f32 %v5067, %v5075
    %v5078 = vsub.f32 1.0, %v5076
    %v5079 = vsub.f32 1.0, %v5077
    %v5080 = vmul.f32 %v5038, %v5078
    %v5081 = vmul.f32 %v5039, %v5079
    %v5082 = vadd.f32 %v5080, 1.0
    %v5083 = vadd.f32 %v5081, 1.0
    %v5084 = vmul.f32 %v5032, %v5082
    %v5085 = vmul.f32 %v5033, %v5083
    %v5086 = vpack.c.bf16 %v5085, %v5084
    %v5087 = vld [vmem:[#allocation5] sm:$0xff]
    %v5088 = vld [vmem:[#allocation5 + $0x8] sm:$0xff]
    %v5089 = vld [vmem:[#allocation5 + $0x10] sm:$0xff]
    %v5090 = vld [vmem:[#allocation5 + $0x18] sm:$0xff]
    %v5091 = vld [vmem:[#allocation5 + $0x20] sm:$0xff]
    %v5092 = vld [vmem:[#allocation5 + $0x28] sm:$0xff]
    %v5093 = vld [vmem:[#allocation5 + $0x30] sm:$0xff]
    %v5094 = vld [vmem:[#allocation5 + $0x38] sm:$0xff]
    %v5095 = vld [vmem:[%s14] sm:$0x1]
    %v5097 = vlaneseq
    %v5098 = vshrl.u32 %v5097, 7
    %v5099 = vsub.s32 0, %v5098
    %v5100 = vrot.slane %v5095, %v5099
    %5102 = vmatprep.subr.bf16.mxu0 0
    %5103 = vmatpush1.bf16.msra.mxu0 %v5087
    %5104 = vmatprep.subr.bf16.mxu0 0
    %5105 = vmatpush1.bf16.msra.mxu0 %v5088
    %5106 = vmatprep.subr.bf16.mxu0 0
    %5107 = vmatpush1.bf16.msra.mxu0 %v5089
    %5108 = vmatprep.subr.bf16.mxu0 0
    %5109 = vmatpush1.bf16.msra.mxu0 %v5090
    %5110 = vmatprep.subr.bf16.mxu0 0
    %5111 = vmatpush1.bf16.msra.mxu0 %v5091
    %5112 = vmatprep.subr.bf16.mxu0 0
    %5113 = vmatpush1.bf16.msra.mxu0 %v5092
    %5114 = vmatprep.subr.bf16.mxu0 0
    %5115 = vmatpush1.bf16.msra.mxu0 %v5093
    %5116 = vmatprep.subr.bf16.mxu0 0
    %5117 = vmatpush1.bf16.msra.mxu0 %v5094
    %5118 = vmatprep.subr.bf16.mxu0 0
    %5119 = vmatpush1.bf16.msra.mxu0 0
    %5120 = vmatprep.subr.bf16.mxu0 0
    %5121 = vmatpush1.bf16.msra.mxu0 0
    %5122 = vmatprep.subr.bf16.mxu0 0
    %5123 = vmatpush1.bf16.msra.mxu0 0
    %5124 = vmatprep.subr.bf16.mxu0 0
    %5125 = vmatpush1.bf16.msra.mxu0 0
    %5126 = vmatprep.subr.bf16.mxu0 0
    %5127 = vmatpush1.bf16.msra.mxu0 0
    %5128 = vmatprep.subr.bf16.mxu0 0
    %5129 = vmatpush1.bf16.msra.mxu0 0
    %5130 = vmatprep.subr.bf16.mxu0 0
    %5131 = vmatpush1.bf16.msra.mxu0 0
    %5132 = vmatprep.subr.bf16.mxu0 0
    %5133 = vmatpush1.bf16.msra.mxu0 0
    %5134 = vmatprep.mubr.bf16.mxu0 0
    %5135 = vmatmul.mubr.bf16.gmra.mrb[0].mxu0 %v5086
    %v5136 = vpop.f32.mrb[0].mxu0
    %v5137 = vadd.f32 %v5100, %v5136
    %v5138 = vpop.f32.mrb[0].mxu0
    %v5139 = vpop.f32.mrb[0].mxu0
    %v5140 = vadd.f32 %v5100, %v5139
    %v5141 = vpop.f32.mrb[0].mxu0
    %5142 = vdwg.mxu0
    %v5143 = vlaneseq
    %v5144 = vand.u32 %v5143, 127
    %vm5145 = vcmp.lt.s32.totalorder %v5144, 4
    %v5146 = vsel %vm5145, -50.0, -100.0
    %v5147 = vsel %vm5145, 50.0, 100.0
    %v5148 = vmax.f32 %v5146, %v5137
    %v5149 = vmax.f32 %v5146, %v5140
    %v5150 = vmin.f32 %v5147, %v5148
    %v5151 = vmin.f32 %v5147, %v5149
    %5152 = vst [vmem:[%s15] sm:$0xff] %v5150
    %5153 = vst [vmem:[%s15 + $0x8] sm:$0xff] %v5151
    // Predicated region
    $region99: #{actor_critic_lstm_forward.1} parent=1 // pred_check
      _
    $region100: #{actor_critic_lstm_forward.1} parent=1 // pred_check_branch
      %5155 = sbr.rel (0) target = $region102
    $region101: #{actor_critic_lstm_forward.1} parent=1 // pred_region
      _
    $region102: #{actor_critic_lstm_forward.1} parent=1 // pred_fallthru
      _
    // Predicated region
    $region103: #{actor_critic_lstm_forward.1} parent=1 // pred_check
      _
    $region104: #{actor_critic_lstm_forward.1} parent=1 // pred_check_branch
      %5157 = sbr.rel (0) target = $region106
    $region105: #{actor_critic_lstm_forward.1} parent=1 // pred_region
      _
    $region106: #{actor_critic_lstm_forward.1} parent=1 // pred_fallthru
      _
    %5158 = vsyncpa [#allocation8], 1
    %5159 = vsyncpa [#allocation10], 1
  %5160 = vsyncmov [#allocation6]
  %s5161 = vpop.sfrf %5160
  %p5162 = scmp.eq.s32.totalorder %s5161, 0
  %p5163 = pneg %p5162
  %5165 = shalt.err (%p5163)
  %s5166 = scalar_lea.sflag [#allocation6], 1
  %5167 = vsyncmov %s5166
  %s5168 = vpop.sfrf %5167
  %p5169 = scmp.eq.s32.totalorder %s5168, 0
  %p5170 = pneg %p5169
  %5172 = shalt.err (%p5170)
  %s5173 = scalar_lea.sflag [#allocation6], 2
  %5174 = vsyncmov %s5173
  %s5175 = vpop.sfrf %5174
  %p5176 = scmp.eq.s32.totalorder %s5175, 0
  %p5177 = pneg %p5176
  %5179 = shalt.err (%p5177)
  %s5180 = scalar_lea.sflag [#allocation6], 3
  %5181 = vsyncmov %s5180
  %s5182 = vpop.sfrf %5181
  %p5183 = scmp.eq.s32.totalorder %s5182, 0
  %p5184 = pneg %p5183
  %5186 = shalt.err (%p5184)

</llo_original>
